<compile_context>
chip_gen: v7x
topology: tpu7x:2x2x1
jax: 0.10.0
libtpu: 0.0.40
codegen_flags: <defaults>
</compile_context>

<pallas_src>
import functools

import jax
import jax.numpy as jnp
from jax.experimental import pallas as pl
from jax.experimental.pallas import tpu as pltpu


def _round_up(x, m):
    return (x + m - 1) // m * m


def _mm_bias_act_kernel(a_ref, w_ref, b_ref, o_ref, *, relu):
    # Single-shot GEMM tile: o = act(a @ w + b).  Full K per block, so no
    # accumulator scratch and no init/finalize phases.
    a = a_ref[...].astype(jnp.bfloat16)
    r = jnp.dot(a, w_ref[...], preferred_element_type=jnp.float32)
    r = r + b_ref[...]
    if relu:
        r = jnp.maximum(r, 0.0)
    o_ref[...] = r.astype(o_ref.dtype)


def matmul_bias_act(a, w, b, *, relu=False, tm=None, tn=None):
    """out = act(a @ w + b).  `w` is pre-transposed (K, N) bf16, `b` is (1, N) f32.

    Grid is only (M-tiles, N-tiles), both "parallel"; K is carried whole in
    each block (no reduction axis, no scratch)."""
    M, K = a.shape
    K2, N = w.shape
    assert K == K2 and b.shape == (1, N)

    if tm is None:
        # Tiny-M (FC at batch 2) -> one 8-row block; otherwise aim for >=2
        # parallel M blocks, capped at 128 rows.
        tm = _round_up(max(M, 1), 8) if M <= 16 else min(128, _round_up((M + 1) // 2, 8))
    if tn is None:
        # Split large N (fc1's 512) into 256-wide parallel blocks; small N
        # stays a single full-width block.
        tn = N if (N <= 256 or N % 256 != 0) else 256

    Mp = _round_up(M, tm)
    if Mp != M:
        a = jnp.pad(a, ((0, Mp - M), (0, 0)))

    kernel = functools.partial(_mm_bias_act_kernel, relu=relu)
    out = pl.pallas_call(
        kernel,
        out_shape=jax.ShapeDtypeStruct((Mp, N), jnp.float32),
        grid_spec=pltpu.PrefetchScalarGridSpec(
            num_scalar_prefetch=0,
            grid=(Mp // tm, N // tn),
            in_specs=[
                pl.BlockSpec((tm, K), lambda i, j: (i, 0)),
                pl.BlockSpec((K, tn), lambda i, j: (0, j)),
                pl.BlockSpec((1, tn), lambda i, j: (0, j)),
            ],
            out_specs=pl.BlockSpec((tm, tn), lambda i, j: (i, j)),
        ),
        compiler_params=pltpu.CompilerParams(
            dimension_semantics=("parallel", "parallel")),
    )(a, w, b)
    return out[:M] if Mp != M else out


def _im2col_nhwc(x, kh, kw, stride):
    # x: (B, H, W, C) -> rows (B*Ho*Wo, kh*kw*C) with patch element order
    # (dh, dw, c) — matches the (kh, kw, Cin, Cout) weight flattening below.
    B, H, W, C = x.shape
    Ho = (H - kh) // stride + 1
    Wo = (W - kw) // stride + 1
    cols = []
    for dh in range(kh):
        for dw in range(kw):
            cols.append(x[:, dh:dh + stride * Ho:stride,
                           dw:dw + stride * Wo:stride, :])   # (B, Ho, Wo, C)
    patches = jnp.concatenate(cols, axis=-1)                  # (B, Ho, Wo, kh*kw*C)
    return patches.reshape(B * Ho * Wo, kh * kw * C), Ho, Wo


def conv2d_relu_nhwc(x, w_mat, b_row, kh, kw, stride):
    # x NHWC, w_mat (kh*kw*Cin, Cout) bf16 (pre-prepared), VALID padding.
    B = x.shape[0]
    a, Ho, Wo = _im2col_nhwc(x, kh, kw, stride)
    y = matmul_bias_act(a, w_mat, b_row, relu=True)
    Cout = w_mat.shape[1]
    return y.reshape(B, Ho, Wo, Cout)


def init_params(key, n_actions=6):
    # Deterministic PyTorch-style uniform(-1/sqrt(fan_in), 1/sqrt(fan_in)) init,
    # in the original PyTorch layouts.
    ks = jax.random.split(key, 10)

    def unif(k, shape, fan_in):
        bound = 1.0 / (fan_in ** 0.5)
        return jax.random.uniform(k, shape, jnp.float32, -bound, bound)

    return {
        "c1_w": unif(ks[0], (32, 4, 8, 8), 4 * 8 * 8),
        "c1_b": unif(ks[1], (32,), 4 * 8 * 8),
        "c2_w": unif(ks[2], (64, 32, 4, 4), 32 * 4 * 4),
        "c2_b": unif(ks[3], (64,), 32 * 4 * 4),
        "c3_w": unif(ks[4], (64, 64, 3, 3), 64 * 3 * 3),
        "c3_b": unif(ks[5], (64,), 64 * 3 * 3),
        "fc1_w": unif(ks[6], (512, 3136), 3136),
        "fc1_b": unif(ks[7], (512,), 3136),
        "fc2_w": unif(ks[8], (n_actions, 512), 512),
        "fc2_b": unif(ks[9], (n_actions,), 512),
    }


def prepare_params(params, compute_dtype=jnp.bfloat16):
    """One-time conversion of PyTorch-layout params to kernel-ready form.

    - conv weights (Cout,Cin,kh,kw) -> (kh*kw*Cin, Cout) bf16; x/255 folded
      into conv1's weights (mathematically identical: (x/255)@W == x@(W/255)).
    - fc1 weight's input dim permuted from NCHW-flatten (C,H,W) to the
      NHWC-flatten (H,W,C) order used here, then transposed to (K, N) bf16.
    - biases kept f32, reshaped to (1, N) rows.
    """
    def conv_wmat(w, scale=1.0):
        cout, cin, kh, kw = w.shape
        wm = (w.astype(jnp.float32) * scale).transpose(2, 3, 1, 0)  # (kh,kw,Cin,Cout)
        return wm.reshape(kh * kw * cin, cout).astype(compute_dtype)

    def brow(b):
        return b.astype(jnp.float32).reshape(1, -1)

    fc1_w = params["fc1_w"].reshape(512, 64, 7, 7).transpose(0, 2, 3, 1)
    fc1_w = fc1_w.reshape(512, 3136).T.astype(compute_dtype)          # (3136, 512)
    fc2_w = params["fc2_w"].T.astype(compute_dtype)                   # (512, n_actions)

    return {
        "c1_w": conv_wmat(params["c1_w"], 1.0 / 255.0), "c1_b": brow(params["c1_b"]),
        "c2_w": conv_wmat(params["c2_w"]),              "c2_b": brow(params["c2_b"]),
        "c3_w": conv_wmat(params["c3_w"]),              "c3_b": brow(params["c3_b"]),
        "fc1_w": fc1_w, "fc1_b": brow(params["fc1_b"]),
        "fc2_w": fc2_w, "fc2_b": brow(params["fc2_b"]),
    }


def qnetwork_forward(prepared, x):
    # Matches QNetwork.forward: optional batch-dim expansion, x/255 (folded
    # into conv1 weights), conv(8,s4)+ReLU -> conv(4,s2)+ReLU -> conv(3,s1)+ReLU
    # -> Flatten -> Linear(3136,512)+ReLU -> Linear(512, n_actions).
    if x.ndim == 3:
        x = x[None]                      # torch `x.expand(1, -1, -1, -1)`
    x = x.astype(jnp.float32).transpose(0, 2, 3, 1)   # one-time NCHW -> NHWC
    h = conv2d_relu_nhwc(x, prepared["c1_w"], prepared["c1_b"], 8, 8, 4)
    h = conv2d_relu_nhwc(h, prepared["c2_w"], prepared["c2_b"], 4, 4, 2)
    h = conv2d_relu_nhwc(h, prepared["c3_w"], prepared["c3_b"], 3, 3, 1)
    B = h.shape[0]
    h = h.reshape(B, -1)                 # NHWC flatten; fc1_w pre-permuted to match
    h = matmul_bias_act(h, prepared["fc1_w"], prepared["fc1_b"], relu=True)
    q = matmul_bias_act(h, prepared["fc2_w"], prepared["fc2_b"], relu=False)
    return q


if __name__ == "__main__":
    key = jax.random.PRNGKey(0)
    pkey, xkey = jax.random.split(key)
    n_actions = 6  # ALE/SpaceInvaders-v5 single_action_space.n
    params = init_params(pkey, n_actions=n_actions)
    prepared = prepare_params(params)    # one-time weight prep (outside the hot path)

    # Linear(3136, 512) pins the input geometry to 4 stacked 84x84 frames;
    # batch kept small (2), matching the DQN inference workload.
    x = jax.random.uniform(xkey, (2, 4, 84, 84), jnp.float32, 0.0, 255.0)

    fwd = jax.jit(qnetwork_forward)
    q = fwd(prepared, x)
    jax.block_until_ready(q)
    assert q.shape == (2, n_actions) and q.dtype == jnp.float32
    assert bool(jnp.all(jnp.isfinite(q)))
    print("KERNEL_OK")
</pallas_src>

<mosaic_0001>
module attributes {stable_mosaic.version = 11 : i64} {
  func.func @_mm_bias_act_kernel(%arg0: i32, %arg1: i32, %arg2: memref<128x256xf32, #tpu.memory_space<vmem>>, %arg3: memref<256x32xbf16, #tpu.memory_space<vmem>>, %arg4: memref<1x32xf32, #tpu.memory_space<vmem>>, %arg5: memref<128x32xf32, #tpu.memory_space<vmem>>) attributes {dimension_semantics = [#tpu.dimension_semantics<parallel>, #tpu.dimension_semantics<parallel>], iteration_bounds = array<i64: 7, 1>, scalar_prefetch = 0 : i64, scratch_operands = 0 : i64, tpu.core_type = #tpu.core_type<tc>, window_params = [{transform_indices = @transform_0, window_bounds = array<i64: 128, 256>}, {transform_indices = @transform_1, window_bounds = array<i64: 256, 32>}, {transform_indices = @transform_2, window_bounds = array<i64: 1, 32>}, {transform_indices = @transform_3, window_bounds = array<i64: 128, 32>}]} {
    %c0 = arith.constant 0 : index
    %c0_0 = arith.constant 0 : index
    %0 = vector.load %arg2[%c0, %c0_0] : memref<128x256xf32, #tpu.memory_space<vmem>>, vector<128x256xf32>
    %1 = arith.truncf %0 : vector<128x256xf32> to vector<128x256xbf16>
    %c0_1 = arith.constant 0 : index
    %c0_2 = arith.constant 0 : index
    %2 = vector.load %arg3[%c0_1, %c0_2] : memref<256x32xbf16, #tpu.memory_space<vmem>>, vector<256x32xbf16>
    %cst = arith.constant dense<0.000000e+00> : vector<128x32xf32>
    %3 = tpu.matmul %1, %2, %cst {dimension_numbers = #tpu.dot_dimension_numbers<[1], [0], [0], [1], [0, 0, 1, 1], [], []>} : vector<128x256xbf16>, vector<256x32xbf16>, vector<128x32xf32> -> vector<128x32xf32>
    %c0_3 = arith.constant 0 : index
    %c0_4 = arith.constant 0 : index
    %4 = vector.load %arg4[%c0_3, %c0_4] : memref<1x32xf32, #tpu.memory_space<vmem>>, vector<1x32xf32>
    %5 = vector.broadcast %4 : vector<1x32xf32> to vector<128x32xf32>
    %6 = arith.addf %3, %5 : vector<128x32xf32>
    %cst_5 = arith.constant 0.000000e+00 : f32
    %7 = vector.broadcast %cst_5 : f32 to vector<128x32xf32>
    %8 = arith.maximumf %6, %7 : vector<128x32xf32>
    %c0_6 = arith.constant 0 : index
    %c0_7 = arith.constant 0 : index
    %9 = vector.load %arg5[%c0_6, %c0_7] : memref<128x32xf32, #tpu.memory_space<vmem>>, vector<128x32xf32>
    tpu.vector_store %arg5[%c0_6, %c0_7], %8 {strides = array<i32>} : memref<128x32xf32, #tpu.memory_space<vmem>>, vector<128x32xf32>,
    return
  }
  func.func @transform_0(%arg0: i32, %arg1: i32) -> (i32, i32) {
    %c0_i32 = arith.constant 0 : i32
    %c0_i32_0 = arith.constant 0 : i32
    return %arg0, %c0_i32 : i32, i32
  }
  func.func @transform_1(%arg0: i32, %arg1: i32) -> (i32, i32) {
    %c0_i32 = arith.constant 0 : i32
    %c0_i32_0 = arith.constant 0 : i32
    return %c0_i32, %arg1 : i32, i32
  }
  func.func @transform_2(%arg0: i32, %arg1: i32) -> (i32, i32) {
    %c0_i32 = arith.constant 0 : i32
    %c0_i32_0 = arith.constant 0 : i32
    return %c0_i32, %arg1 : i32, i32
  }
  func.func @transform_3(%arg0: i32, %arg1: i32) -> (i32, i32) {
    %c0_i32 = arith.constant 0 : i32
    return %arg0, %arg1 : i32, i32
  }
}

module attributes {stable_mosaic.version = 11 : i64} {
  func.func @_mm_bias_act_kernel(%arg0: i32, %arg1: i32, %arg2: memref<88x512xf32, #tpu.memory_space<vmem>>, %arg3: memref<512x64xbf16, #tpu.memory_space<vmem>>, %arg4: memref<1x64xf32, #tpu.memory_space<vmem>>, %arg5: memref<88x64xf32, #tpu.memory_space<vmem>>) attributes {dimension_semantics = [#tpu.dimension_semantics<parallel>, #tpu.dimension_semantics<parallel>], iteration_bounds = array<i64: 2, 1>, scalar_prefetch = 0 : i64, scratch_operands = 0 : i64, tpu.core_type = #tpu.core_type<tc>, window_params = [{transform_indices = @transform_0, window_bounds = array<i64: 88, 512>}, {transform_indices = @transform_1, window_bounds = array<i64: 512, 64>}, {transform_indices = @transform_2, window_bounds = array<i64: 1, 64>}, {transform_indices = @transform_3, window_bounds = array<i64: 88, 64>}]} {
    %c0 = arith.constant 0 : index
    %c0_0 = arith.constant 0 : index
    %0 = vector.load %arg2[%c0, %c0_0] : memref<88x512xf32, #tpu.memory_space<vmem>>, vector<88x512xf32>
    %1 = arith.truncf %0 : vector<88x512xf32> to vector<88x512xbf16>
    %c0_1 = arith.constant 0 : index
    %c0_2 = arith.constant 0 : index
    %2 = vector.load %arg3[%c0_1, %c0_2] : memref<512x64xbf16, #tpu.memory_space<vmem>>, vector<512x64xbf16>
    %cst = arith.constant dense<0.000000e+00> : vector<88x64xf32>
    %3 = tpu.matmul %1, %2, %cst {dimension_numbers = #tpu.dot_dimension_numbers<[1], [0], [0], [1], [0, 0, 1, 1], [], []>} : vector<88x512xbf16>, vector<512x64xbf16>, vector<88x64xf32> -> vector<88x64xf32>
    %c0_3 = arith.constant 0 : index
    %c0_4 = arith.constant 0 : index
    %4 = vector.load %arg4[%c0_3, %c0_4] : memref<1x64xf32, #tpu.memory_space<vmem>>, vector<1x64xf32>
    %5 = vector.broadcast %4 : vector<1x64xf32> to vector<88x64xf32>
    %6 = arith.addf %3, %5 : vector<88x64xf32>
    %cst_5 = arith.constant 0.000000e+00 : f32
    %7 = vector.broadcast %cst_5 : f32 to vector<88x64xf32>
    %8 = arith.maximumf %6, %7 : vector<88x64xf32>
    %c0_6 = arith.constant 0 : index
    %c0_7 = arith.constant 0 : index
    %9 = vector.load %arg5[%c0_6, %c0_7] : memref<88x64xf32, #tpu.memory_space<vmem>>, vector<88x64xf32>
    tpu.vector_store %arg5[%c0_6, %c0_7], %8 {strides = array<i32>} : memref<88x64xf32, #tpu.memory_space<vmem>>, vector<88x64xf32>,
    return
  }
  func.func @transform_0(%arg0: i32, %arg1: i32) -> (i32, i32) {
    %c0_i32 = arith.constant 0 : i32
    %c0_i32_0 = arith.constant 0 : i32
    return %arg0, %c0_i32 : i32, i32
  }
  func.func @transform_1(%arg0: i32, %arg1: i32) -> (i32, i32) {
    %c0_i32 = arith.constant 0 : i32
    %c0_i32_0 = arith.constant 0 : i32
    return %c0_i32, %arg1 : i32, i32
  }
  func.func @transform_2(%arg0: i32, %arg1: i32) -> (i32, i32) {
    %c0_i32 = arith.constant 0 : i32
    %c0_i32_0 = arith.constant 0 : i32
    return %c0_i32, %arg1 : i32, i32
  }
  func.func @transform_3(%arg0: i32, %arg1: i32) -> (i32, i32) {
    %c0_i32 = arith.constant 0 : i32
    return %arg0, %arg1 : i32, i32
  }
}

module attributes {stable_mosaic.version = 11 : i64} {
  func.func @_mm_bias_act_kernel(%arg0: i32, %arg1: i32, %arg2: memref<56x576xf32, #tpu.memory_space<vmem>>, %arg3: memref<576x64xbf16, #tpu.memory_space<vmem>>, %arg4: memref<1x64xf32, #tpu.memory_space<vmem>>, %arg5: memref<56x64xf32, #tpu.memory_space<vmem>>) attributes {dimension_semantics = [#tpu.dimension_semantics<parallel>, #tpu.dimension_semantics<parallel>], iteration_bounds = array<i64: 2, 1>, scalar_prefetch = 0 : i64, scratch_operands = 0 : i64, tpu.core_type = #tpu.core_type<tc>, window_params = [{transform_indices = @transform_0, window_bounds = array<i64: 56, 576>}, {transform_indices = @transform_1, window_bounds = array<i64: 576, 64>}, {transform_indices = @transform_2, window_bounds = array<i64: 1, 64>}, {transform_indices = @transform_3, window_bounds = array<i64: 56, 64>}]} {
    %c0 = arith.constant 0 : index
    %c0_0 = arith.constant 0 : index
    %0 = vector.load %arg2[%c0, %c0_0] : memref<56x576xf32, #tpu.memory_space<vmem>>, vector<56x576xf32>
    %1 = arith.truncf %0 : vector<56x576xf32> to vector<56x576xbf16>
    %c0_1 = arith.constant 0 : index
    %c0_2 = arith.constant 0 : index
    %2 = vector.load %arg3[%c0_1, %c0_2] : memref<576x64xbf16, #tpu.memory_space<vmem>>, vector<576x64xbf16>
    %cst = arith.constant dense<0.000000e+00> : vector<56x64xf32>
    %3 = tpu.matmul %1, %2, %cst {dimension_numbers = #tpu.dot_dimension_numbers<[1], [0], [0], [1], [0, 0, 1, 1], [], []>} : vector<56x576xbf16>, vector<576x64xbf16>, vector<56x64xf32> -> vector<56x64xf32>
    %c0_3 = arith.constant 0 : index
    %c0_4 = arith.constant 0 : index
    %4 = vector.load %arg4[%c0_3, %c0_4] : memref<1x64xf32, #tpu.memory_space<vmem>>, vector<1x64xf32>
    %5 = vector.broadcast %4 : vector<1x64xf32> to vector<56x64xf32>
    %6 = arith.addf %3, %5 : vector<56x64xf32>
    %cst_5 = arith.constant 0.000000e+00 : f32
    %7 = vector.broadcast %cst_5 : f32 to vector<56x64xf32>
    %8 = arith.maximumf %6, %7 : vector<56x64xf32>
    %c0_6 = arith.constant 0 : index
    %c0_7 = arith.constant 0 : index
    %9 = vector.load %arg5[%c0_6, %c0_7] : memref<56x64xf32, #tpu.memory_space<vmem>>, vector<56x64xf32>
    tpu.vector_store %arg5[%c0_6, %c0_7], %8 {strides = array<i32>} : memref<56x64xf32, #tpu.memory_space<vmem>>, vector<56x64xf32>,
    return
  }
  func.func @transform_0(%arg0: i32, %arg1: i32) -> (i32, i32) {
    %c0_i32 = arith.constant 0 : i32
    %c0_i32_0 = arith.constant 0 : i32
    return %arg0, %c0_i32 : i32, i32
  }
  func.func @transform_1(%arg0: i32, %arg1: i32) -> (i32, i32) {
    %c0_i32 = arith.constant 0 : i32
    %c0_i32_0 = arith.constant 0 : i32
    return %c0_i32, %arg1 : i32, i32
  }
  func.func @transform_2(%arg0: i32, %arg1: i32) -> (i32, i32) {
    %c0_i32 = arith.constant 0 : i32
    %c0_i32_0 = arith.constant 0 : i32
    return %c0_i32, %arg1 : i32, i32
  }
  func.func @transform_3(%arg0: i32, %arg1: i32) -> (i32, i32) {
    %c0_i32 = arith.constant 0 : i32
    return %arg0, %arg1 : i32, i32
  }
}

module attributes {stable_mosaic.version = 11 : i64} {
  func.func @_mm_bias_act_kernel(%arg0: i32, %arg1: i32, %arg2: memref<8x3136xf32, #tpu.memory_space<vmem>>, %arg3: memref<3136x256xbf16, #tpu.memory_space<vmem>>, %arg4: memref<1x256xf32, #tpu.memory_space<vmem>>, %arg5: memref<8x256xf32, #tpu.memory_space<vmem>>) attributes {dimension_semantics = [#tpu.dimension_semantics<parallel>, #tpu.dimension_semantics<parallel>], iteration_bounds = array<i64: 1, 2>, scalar_prefetch = 0 : i64, scratch_operands = 0 : i64, tpu.core_type = #tpu.core_type<tc>, window_params = [{transform_indices = @transform_0, window_bounds = array<i64: 8, 3136>}, {transform_indices = @transform_1, window_bounds = array<i64: 3136, 256>}, {transform_indices = @transform_2, window_bounds = array<i64: 1, 256>}, {transform_indices = @transform_3, window_bounds = array<i64: 8, 256>}]} {
    %c0 = arith.constant 0 : index
    %c0_0 = arith.constant 0 : index
    %0 = vector.load %arg2[%c0, %c0_0] : memref<8x3136xf32, #tpu.memory_space<vmem>>, vector<8x3136xf32>
    %1 = arith.truncf %0 : vector<8x3136xf32> to vector<8x3136xbf16>
    %c0_1 = arith.constant 0 : index
    %c0_2 = arith.constant 0 : index
    %2 = vector.load %arg3[%c0_1, %c0_2] : memref<3136x256xbf16, #tpu.memory_space<vmem>>, vector<3136x256xbf16>
    %cst = arith.constant dense<0.000000e+00> : vector<8x256xf32>
    %3 = tpu.matmul %1, %2, %cst {dimension_numbers = #tpu.dot_dimension_numbers<[1], [0], [0], [1], [0, 0, 1, 1], [], []>} : vector<8x3136xbf16>, vector<3136x256xbf16>, vector<8x256xf32> -> vector<8x256xf32>
    %c0_3 = arith.constant 0 : index
    %c0_4 = arith.constant 0 : index
    %4 = vector.load %arg4[%c0_3, %c0_4] : memref<1x256xf32, #tpu.memory_space<vmem>>, vector<1x256xf32>
    %5 = vector.broadcast %4 : vector<1x256xf32> to vector<8x256xf32>
    %6 = arith.addf %3, %5 : vector<8x256xf32>
    %cst_5 = arith.constant 0.000000e+00 : f32
    %7 = vector.broadcast %cst_5 : f32 to vector<8x256xf32>
    %8 = arith.maximumf %6, %7 : vector<8x256xf32>
    %c0_6 = arith.constant 0 : index
    %c0_7 = arith.constant 0 : index
    %9 = vector.load %arg5[%c0_6, %c0_7] : memref<8x256xf32, #tpu.memory_space<vmem>>, vector<8x256xf32>
    tpu.vector_store %arg5[%c0_6, %c0_7], %8 {strides = array<i32>} : memref<8x256xf32, #tpu.memory_space<vmem>>, vector<8x256xf32>,
    return
  }
  func.func @transform_0(%arg0: i32, %arg1: i32) -> (i32, i32) {
    %c0_i32 = arith.constant 0 : i32
    %c0_i32_0 = arith.constant 0 : i32
    return %arg0, %c0_i32 : i32, i32
  }
  func.func @transform_1(%arg0: i32, %arg1: i32) -> (i32, i32) {
    %c0_i32 = arith.constant 0 : i32
    %c0_i32_0 = arith.constant 0 : i32
    return %c0_i32, %arg1 : i32, i32
  }
  func.func @transform_2(%arg0: i32, %arg1: i32) -> (i32, i32) {
    %c0_i32 = arith.constant 0 : i32
    %c0_i32_0 = arith.constant 0 : i32
    return %c0_i32, %arg1 : i32, i32
  }
  func.func @transform_3(%arg0: i32, %arg1: i32) -> (i32, i32) {
    %c0_i32 = arith.constant 0 : i32
    return %arg0, %arg1 : i32, i32
  }
}

module attributes {stable_mosaic.version = 11 : i64} {
  func.func @_mm_bias_act_kernel(%arg0: i32, %arg1: i32, %arg2: memref<8x512xf32, #tpu.memory_space<vmem>>, %arg3: memref<512x6xbf16, #tpu.memory_space<vmem>>, %arg4: memref<1x6xf32, #tpu.memory_space<vmem>>, %arg5: memref<8x6xf32, #tpu.memory_space<vmem>>) attributes {dimension_semantics = [#tpu.dimension_semantics<parallel>, #tpu.dimension_semantics<parallel>], iteration_bounds = array<i64: 1, 1>, scalar_prefetch = 0 : i64, scratch_operands = 0 : i64, tpu.core_type = #tpu.core_type<tc>, window_params = [{transform_indices = @transform_0, window_bounds = array<i64: 8, 512>}, {transform_indices = @transform_1, window_bounds = array<i64: 512, 6>}, {transform_indices = @transform_2, window_bounds = array<i64: 1, 6>}, {transform_indices = @transform_3, window_bounds = array<i64: 8, 6>}]} {
    %c0 = arith.constant 0 : index
    %c0_0 = arith.constant 0 : index
    %0 = vector.load %arg2[%c0, %c0_0] : memref<8x512xf32, #tpu.memory_space<vmem>>, vector<8x512xf32>
    %1 = arith.truncf %0 : vector<8x512xf32> to vector<8x512xbf16>
    %c0_1 = arith.constant 0 : index
    %c0_2 = arith.constant 0 : index
    %2 = vector.load %arg3[%c0_1, %c0_2] : memref<512x6xbf16, #tpu.memory_space<vmem>>, vector<512x6xbf16>
    %cst = arith.constant dense<0.000000e+00> : vector<8x6xf32>
    %3 = tpu.matmul %1, %2, %cst {dimension_numbers = #tpu.dot_dimension_numbers<[1], [0], [0], [1], [0, 0, 1, 1], [], []>} : vector<8x512xbf16>, vector<512x6xbf16>, vector<8x6xf32> -> vector<8x6xf32>
    %c0_3 = arith.constant 0 : index
    %c0_4 = arith.constant 0 : index
    %4 = vector.load %arg4[%c0_3, %c0_4] : memref<1x6xf32, #tpu.memory_space<vmem>>, vector<1x6xf32>
    %5 = vector.broadcast %4 : vector<1x6xf32> to vector<8x6xf32>
    %6 = arith.addf %3, %5 : vector<8x6xf32>
    %c0_5 = arith.constant 0 : index
    %c0_6 = arith.constant 0 : index
    %7 = vector.load %arg5[%c0_5, %c0_6] : memref<8x6xf32, #tpu.memory_space<vmem>>, vector<8x6xf32>
    tpu.vector_store %arg5[%c0_5, %c0_6], %6 {strides = array<i32>} : memref<8x6xf32, #tpu.memory_space<vmem>>, vector<8x6xf32>,
    return
  }
  func.func @transform_0(%arg0: i32, %arg1: i32) -> (i32, i32) {
    %c0_i32 = arith.constant 0 : i32
    %c0_i32_0 = arith.constant 0 : i32
    return %arg0, %c0_i32 : i32, i32
  }
  func.func @transform_1(%arg0: i32, %arg1: i32) -> (i32, i32) {
    %c0_i32 = arith.constant 0 : i32
    %c0_i32_0 = arith.constant 0 : i32
    return %c0_i32, %arg1 : i32, i32
  }
  func.func @transform_2(%arg0: i32, %arg1: i32) -> (i32, i32) {
    %c0_i32 = arith.constant 0 : i32
    %c0_i32_0 = arith.constant 0 : i32
    return %c0_i32, %arg1 : i32, i32
  }
  func.func @transform_3(%arg0: i32, %arg1: i32) -> (i32, i32) {
    %c0_i32 = arith.constant 0 : i32
    return %arg0, %arg1 : i32, i32
  }
}

</mosaic_0001>

<llo_original>
// kernel: qnetwork_forward.5
$region0: #{qnetwork_forward.5}
  #allocation0 [shape = 'u32[]', space=smem, size = 0x4, offset = 0x4, fixed_abs, tag = 'smem constant byte address 0x4 - core index']
  #allocation1 [shape = 'u32[144,128]{1,0:T(1,128)}', space=vmem, size = 0x12000, scoped, tag = 'internal scratch']
  %s0 = inlined_call_operand.vmem [shape: f32[896,256], index: 0, kind: input, shape index: {}]
  %s1 = inlined_call_operand.vmem [shape: bf16[256,32], index: 1, kind: input, shape index: {}]
  %s2 = inlined_call_operand.vmem [shape: f32[1,32], index: 2, kind: input, shape index: {}]
  %s3 = inlined_call_operand.vmem [shape: f32[896,32], index: 3, kind: output, shape index: {}]
  %s4 = sld [smem:[#allocation0]]
  $region45: #{qnetwork_forward.5} parent=0
    _
  %s6 = ssub.s32 1, %s4
  %s7 = scalar_select 0, %s6, %s4
  loop: start=0, step=1, limit=9
  $region2: #{qnetwork_forward.5} parent=0 // loop_pre_header
    _
  $region3: #{qnetwork_forward.5} parent=0 // loop_header
    %s9 = sphi 0, %s13
    %p10 = scmp.ge.s32.totalorder %s9, 9
    %s16 = sphi 0, %s28
    %s17 = sphi 0, %s24
    %s18 = sphi 0, %s16
    %s19 = sphi 0, %s17
    %s20 = sphi 0, %s18
    %s21 = sphi 0, %s19
    %s31 = sphi 0, %s33
    %s34 = sphi 0, %s31
    %s35 = sphi 0, %s34
    %s51 = sphi 0, %s35
    %s57 = sphi 0, %s59
    %s60 = sphi 0, %s57
    %s61 = sphi 0, %s60
    %s77 = sphi 0, %s61
    %s83 = sphi 0, %s85
    %s86 = sphi 0, %s83
    %s87 = sphi 0, %s86
    %s103 = sphi 0, %s87
    %s111 = sphi 0, %s113
    %s114 = sphi 0, %s111
    %s115 = sphi 0, %s114
    %s131 = sphi 0, %s115
  $region4: #{qnetwork_forward.5} parent=0 // loop_header_branch
    %12 = sbr.rel (%p10) target = $region8
  $region5: #{qnetwork_forward.5} parent=0 // loop_body
    %s14 = ssub.s32 %s9, 1
    %s15 = ssub.s32 %s9, 2
    %s22 = sadd.s32 1, %s17
    %p23 = scmp.ge.s32.totalorder %s22, 1
    %s24 = scalar_select %p23, 0, %s22
    %s25 = sadd.s32 1, %s16
    %s26 = scalar_select %p23, %s25, %s16
    %p27 = scmp.ge.s32.totalorder %s26, 7
    %s28 = scalar_select %p27, 0, %s26
    %s29 = ssub.s32 %s16, %s28
    %p30 = scmp.eq.s32.totalorder %s29, 0
    %s32 = sadd.s32 %s31, 1
    %s33 = scalar_select %p30, %s31, %s32
    %p36 = pneg %p30
    %p37 = scmp.eq.s32.totalorder %s9, 6
    %p38 = por %p36, %p37
    %p39 = scmp.ne.s32.totalorder %s31, %s34
    %p40 = scmp.eq.s32.totalorder %s9, 0
    %p41 = por %p39, %p40
    %p42 = scmp.ne.s32.totalorder %s31, %s34
    %p43 = scmp.eq.s32.totalorder %s14, 6
    %p44 = por %p42, %p43
    %p45 = scmp.ne.s32.totalorder %s34, %s35
    %p46 = scmp.eq.s32.totalorder %s14, 0
    %p47 = por %p45, %p46
    %p48 = scmp.ne.s32.totalorder %s34, %s35
    %p49 = scmp.eq.s32.totalorder %s15, 6
    %p50 = por %p48, %p49
    %p52 = scmp.ne.s32.totalorder %s35, %s51
    %p53 = scmp.eq.s32.totalorder %s15, 0
    %p54 = por %p52, %p53
    %s55 = ssub.s32 %s17, %s24
    %p56 = scmp.eq.s32.totalorder %s55, 0
    %s58 = sadd.s32 %s57, 1
    %s59 = scalar_select %p56, %s57, %s58
    %p62 = pneg %p56
    %p63 = scmp.eq.s32.totalorder %s9, 6
    %p64 = por %p62, %p63
    %p65 = scmp.ne.s32.totalorder %s57, %s60
    %p66 = scmp.eq.s32.totalorder %s9, 0
    %p67 = por %p65, %p66
    %p68 = scmp.ne.s32.totalorder %s57, %s60
    %p69 = scmp.eq.s32.totalorder %s14, 6
    %p70 = por %p68, %p69
    %p71 = scmp.ne.s32.totalorder %s60, %s61
    %p72 = scmp.eq.s32.totalorder %s14, 0
    %p73 = por %p71, %p72
    %p74 = scmp.ne.s32.totalorder %s60, %s61
    %p75 = scmp.eq.s32.totalorder %s15, 6
    %p76 = por %p74, %p75
    %p78 = scmp.ne.s32.totalorder %s61, %s77
    %p79 = scmp.eq.s32.totalorder %s15, 0
    %p80 = por %p78, %p79
    %s81 = ssub.s32 %s17, %s24
    %p82 = scmp.eq.s32.totalorder %s81, 0
    %s84 = sadd.s32 %s83, 1
    %s85 = scalar_select %p82, %s83, %s84
    %p88 = pneg %p82
    %p89 = scmp.eq.s32.totalorder %s9, 6
    %p90 = por %p88, %p89
    %p91 = scmp.ne.s32.totalorder %s83, %s86
    %p92 = scmp.eq.s32.totalorder %s9, 0
    %p93 = por %p91, %p92
    %p94 = scmp.ne.s32.totalorder %s83, %s86
    %p95 = scmp.eq.s32.totalorder %s14, 6
    %p96 = por %p94, %p95
    %p97 = scmp.ne.s32.totalorder %s86, %s87
    %p98 = scmp.eq.s32.totalorder %s14, 0
    %p99 = por %p97, %p98
    %p100 = scmp.ne.s32.totalorder %s86, %s87
    %p101 = scmp.eq.s32.totalorder %s15, 6
    %p102 = por %p100, %p101
    %p104 = scmp.ne.s32.totalorder %s87, %s103
    %p105 = scmp.eq.s32.totalorder %s15, 0
    %p106 = por %p104, %p105
    %s107 = ssub.s32 %s16, %s28
    %s108 = ssub.s32 %s17, %s24
    %s109 = sor.u32 %s107, %s108
    %p110 = scmp.eq.s32.totalorder %s109, 0
    %s112 = sadd.s32 %s111, 1
    %s113 = scalar_select %p110, %s111, %s112
    %p116 = pneg %p110
    %p117 = scmp.eq.s32.totalorder %s9, 6
    %p118 = por %p116, %p117
    %p119 = scmp.ne.s32.totalorder %s111, %s114
    %p120 = scmp.eq.s32.totalorder %s9, 0
    %p121 = por %p119, %p120
    %p122 = scmp.ne.s32.totalorder %s111, %s114
    %p123 = scmp.eq.s32.totalorder %s14, 6
    %p124 = por %p122, %p123
    %p125 = scmp.ne.s32.totalorder %s114, %s115
    %p126 = scmp.eq.s32.totalorder %s14, 0
    %p127 = por %p125, %p126
    %p128 = scmp.ne.s32.totalorder %s114, %s115
    %p129 = scmp.eq.s32.totalorder %s15, 6
    %p130 = por %p128, %p129
    %p132 = scmp.ne.s32.totalorder %s115, %s131
    %p133 = scmp.eq.s32.totalorder %s15, 0
    %p134 = por %p132, %p133
    %p135 = scmp.le.s32.totalorder 1, %s9
    %p136 = scmp.lt.s32.totalorder %s9, 8
    %p137 = pnand %p135, %p136
    %p138 = pneg %p137
    // Predicated region
    $region9: #{qnetwork_forward.5} parent=5 // pred_check
      _
    $region10: #{qnetwork_forward.5} parent=5 // pred_check_branch
      %140 = sbr.rel (%p137) target = $region12
    $region11: #{qnetwork_forward.5} parent=5 // pred_region
      %s141 = ssub.s32 %s9, 1
      // Predicated region
      $region13: #{qnetwork_forward.5} parent=11 // pred_check
        %p142 = pneg %p73
      $region14: #{qnetwork_forward.5} parent=11 // pred_check_branch
        %144 = sbr.rel (%p142) target = $region16
      $region15: #{qnetwork_forward.5} parent=11 // pred_region
        %p145 = scmp.lt.s32.totalorder %s19, 0
        %s146 = scalar_select %p145, %s19, 0
        %s147 = smul.addr %s146, 4
        %s148 = scalar_lea.vmem %s1, %s147
      $region16: #{qnetwork_forward.5} parent=11 // pred_fallthru
        _
      // Predicated region
      $region17: #{qnetwork_forward.5} parent=11 // pred_check
        %p149 = pneg %p99
      $region18: #{qnetwork_forward.5} parent=11 // pred_check_branch
        %151 = sbr.rel (%p149) target = $region20
      $region19: #{qnetwork_forward.5} parent=11 // pred_region
        %p152 = scmp.lt.s32.totalorder %s19, 0
        %s153 = scalar_select %p152, %s19, 0
        %s154 = scalar_lea.vmem %s2, %s153
      $region20: #{qnetwork_forward.5} parent=11 // pred_fallthru
        _
    $region12: #{qnetwork_forward.5} parent=5 // pred_fallthru
      _
    %p155 = scmp.lt.s32.totalorder %s9, 7
    // Predicated region
    $region21: #{qnetwork_forward.5} parent=5 // pred_check
      %p156 = pneg %p155
    $region22: #{qnetwork_forward.5} parent=5 // pred_check_branch
      %158 = sbr.rel (%p156) target = $region24
    $region23: #{qnetwork_forward.5} parent=5 // pred_region
      // Predicated region
      $region25: #{qnetwork_forward.5} parent=23 // pred_check
        %p159 = pneg %p41
      $region26: #{qnetwork_forward.5} parent=23 // pred_check_branch
        %161 = sbr.rel (%p159) target = $region28
      $region27: #{qnetwork_forward.5} parent=23 // pred_region
        %s162 = smul.u32 16, %s16
        %p163 = scmp.lt.s32.totalorder %s162, 111
        %s164 = scalar_select %p163, %s162, 111
        %s165 = smul.addr %s164, 2
        %s166 = smul.addr %s165, 8
        %s167 = scalar_lea.vmem %s0, %s166
        %s168 = smul.u32 16, %s16
      $region28: #{qnetwork_forward.5} parent=23 // pred_fallthru
        _
    $region24: #{qnetwork_forward.5} parent=5 // pred_fallthru
      _
    %p169 = scmp.le.s32.totalorder 1, %s9
    %p170 = scmp.lt.s32.totalorder %s9, 8
    %p171 = pnand %p169, %p170
    %p172 = pneg %p171
    // Predicated region
    $region29: #{qnetwork_forward.5} parent=5 // pred_check
      _
    $region30: #{qnetwork_forward.5} parent=5 // pred_check_branch
      %174 = sbr.rel (%p171) target = $region32
    $region31: #{qnetwork_forward.5} parent=5 // pred_region
      %s175 = ssub.s32 %s9, 1
      %s176 = smul.u32 16, %s18
      %p177 = scmp.lt.s32.totalorder %s176, 111
      %s178 = scalar_select %p177, %s176, 111
      %s179 = smul.addr %s178, 2
      %s180 = smul.addr %s179, 8
      %s181 = scalar_lea.vmem %s0, %s180
      %p182 = pneg %p47
      %p183 = pneg %p44
      %p184 = scmp.lt.s32.totalorder %s19, 0
      %s185 = scalar_select %p184, %s19, 0
      %s186 = smul.addr %s185, 4
      %s187 = scalar_lea.vmem %s1, %s186
      %p188 = pneg %p73
      %p189 = pneg %p70
      %p190 = scmp.lt.s32.totalorder %s19, 0
      %s191 = scalar_select %p190, %s19, 0
      %s192 = scalar_lea.vmem %s2, %s191
      %p193 = pneg %p99
      %p194 = pneg %p96
      %p195 = pneg %p127
      %p196 = pneg %p124
      %s197 = smul.u32 16, %s18
      %p198 = scmp.lt.s32.totalorder %s197, 111
      %s199 = scalar_select %p198, %s197, 111
      %p200 = scmp.lt.s32.totalorder %s19, 0
      %s201 = scalar_select %p200, %s19, 0
      %s202 = sadd.s32 %s201, %s199
      %s203 = smul.addr %s202, 8
      %s204 = scalar_lea.vmem %s3, %s203
      %s205 = smul.u32 16, %s18
      %p206 = scmp.lt.s32.totalorder %s205, 111
      %s207 = scalar_select %p206, %s205, 111
      %s208 = smul.addr %s207, 2
      %s209 = smul.addr %s208, 8
      %s210 = scalar_lea.vmem %s0, %s209
      %s211 = smul.u32 16, %s18
      %p212 = scmp.lt.s32.totalorder %s19, 0
      %s213 = scalar_select %p212, %s19, 0
      %s214 = smul.addr %s213, 4
      %s215 = scalar_lea.vmem %s1, %s214
      %p216 = scmp.lt.s32.totalorder %s19, 0
      %s217 = scalar_select %p216, %s19, 0
      %s218 = scalar_lea.vmem %s2, %s217
      %s219 = smul.u32 16, %s18
      %p220 = scmp.lt.s32.totalorder %s219, 111
      %s221 = scalar_select %p220, %s219, 111
      %p222 = scmp.lt.s32.totalorder %s19, 0
      %s223 = scalar_select %p222, %s19, 0
      %s224 = sadd.s32 %s223, %s221
      %s225 = smul.addr %s224, 8
      %s226 = scalar_lea.vmem %s3, %s225
      %s227 = smul.u32 16, %s18
      %v229 = vld [vmem:[%s210] sm:$0xff]
      %v230 = vld [vmem:[%s210 + $0x8] sm:$0xff]
      %v231 = vld [vmem:[%s210 + $0x10] sm:$0xff]
      %v232 = vld [vmem:[%s210 + $0x18] sm:$0xff]
      %v233 = vld [vmem:[%s210 + $0x20] sm:$0xff]
      %v234 = vld [vmem:[%s210 + $0x28] sm:$0xff]
      %v235 = vld [vmem:[%s210 + $0x30] sm:$0xff]
      %v236 = vld [vmem:[%s210 + $0x38] sm:$0xff]
      %v237 = vld [vmem:[%s210 + $0x40] sm:$0xff]
      %v238 = vld [vmem:[%s210 + $0x48] sm:$0xff]
      %v239 = vld [vmem:[%s210 + $0x50] sm:$0xff]
      %v240 = vld [vmem:[%s210 + $0x58] sm:$0xff]
      %v241 = vld [vmem:[%s210 + $0x60] sm:$0xff]
      %v242 = vld [vmem:[%s210 + $0x68] sm:$0xff]
      %v243 = vld [vmem:[%s210 + $0x70] sm:$0xff]
      %v244 = vld [vmem:[%s210 + $0x78] sm:$0xff]
      %v245 = vld [vmem:[%s210 + $0x80] sm:$0xff]
      %v246 = vld [vmem:[%s210 + $0x88] sm:$0xff]
      %v247 = vld [vmem:[%s210 + $0x90] sm:$0xff]
      %v248 = vld [vmem:[%s210 + $0x98] sm:$0xff]
      %v249 = vld [vmem:[%s210 + $0xa0] sm:$0xff]
      %v250 = vld [vmem:[%s210 + $0xa8] sm:$0xff]
      %v251 = vld [vmem:[%s210 + $0xb0] sm:$0xff]
      %v252 = vld [vmem:[%s210 + $0xb8] sm:$0xff]
      %v253 = vld [vmem:[%s210 + $0xc0] sm:$0xff]
      %v254 = vld [vmem:[%s210 + $0xc8] sm:$0xff]
      %v255 = vld [vmem:[%s210 + $0xd0] sm:$0xff]
      %v256 = vld [vmem:[%s210 + $0xd8] sm:$0xff]
      %v257 = vld [vmem:[%s210 + $0xe0] sm:$0xff]
      %v258 = vld [vmem:[%s210 + $0xe8] sm:$0xff]
      %v259 = vld [vmem:[%s210 + $0xf0] sm:$0xff]
      %v260 = vld [vmem:[%s210 + $0xf8] sm:$0xff]
      %v261 = vpack.c.bf16 %v231, %v229
      %v262 = vpack.c.bf16 %v232, %v230
      %v263 = vpack.c.bf16 %v235, %v233
      %v264 = vpack.c.bf16 %v236, %v234
      %v265 = vpack.c.bf16 %v239, %v237
      %v266 = vpack.c.bf16 %v240, %v238
      %v267 = vpack.c.bf16 %v243, %v241
      %v268 = vpack.c.bf16 %v244, %v242
      %v269 = vpack.c.bf16 %v247, %v245
      %v270 = vpack.c.bf16 %v248, %v246
      %v271 = vpack.c.bf16 %v251, %v249
      %v272 = vpack.c.bf16 %v252, %v250
      %v273 = vpack.c.bf16 %v255, %v253
      %v274 = vpack.c.bf16 %v256, %v254
      %v275 = vpack.c.bf16 %v259, %v257
      %v276 = vpack.c.bf16 %v260, %v258
      %v277 = vld [vmem:[%s215] sm:$0xf]
      %v278 = vld [vmem:[%s215 + $0x4] sm:$0xf]
      %v279 = vld [vmem:[%s215 + $0x8] sm:$0xf]
      %v280 = vld [vmem:[%s215 + $0xc] sm:$0xf]
      %v281 = vld [vmem:[%s215 + $0x10] sm:$0xf]
      %v282 = vld [vmem:[%s215 + $0x14] sm:$0xf]
      %v283 = vld [vmem:[%s215 + $0x18] sm:$0xf]
      %v284 = vld [vmem:[%s215 + $0x1c] sm:$0xf]
      %v285 = vld [vmem:[%s215 + $0x20] sm:$0xf]
      %v286 = vld [vmem:[%s215 + $0x24] sm:$0xf]
      %v287 = vld [vmem:[%s215 + $0x28] sm:$0xf]
      %v288 = vld [vmem:[%s215 + $0x2c] sm:$0xf]
      %v289 = vld [vmem:[%s215 + $0x30] sm:$0xf]
      %v290 = vld [vmem:[%s215 + $0x34] sm:$0xf]
      %v291 = vld [vmem:[%s215 + $0x38] sm:$0xf]
      %v292 = vld [vmem:[%s215 + $0x3c] sm:$0xf]
      %v293 = vld [vmem:[%s215 + $0x40] sm:$0xf]
      %v294 = vld [vmem:[%s215 + $0x44] sm:$0xf]
      %v295 = vld [vmem:[%s215 + $0x48] sm:$0xf]
      %v296 = vld [vmem:[%s215 + $0x4c] sm:$0xf]
      %v297 = vld [vmem:[%s215 + $0x50] sm:$0xf]
      %v298 = vld [vmem:[%s215 + $0x54] sm:$0xf]
      %v299 = vld [vmem:[%s215 + $0x58] sm:$0xf]
      %v300 = vld [vmem:[%s215 + $0x5c] sm:$0xf]
      %v301 = vld [vmem:[%s215 + $0x60] sm:$0xf]
      %v302 = vld [vmem:[%s215 + $0x64] sm:$0xf]
      %v303 = vld [vmem:[%s215 + $0x68] sm:$0xf]
      %v304 = vld [vmem:[%s215 + $0x6c] sm:$0xf]
      %v305 = vld [vmem:[%s215 + $0x70] sm:$0xf]
      %v306 = vld [vmem:[%s215 + $0x74] sm:$0xf]
      %v307 = vld [vmem:[%s215 + $0x78] sm:$0xf]
      %v308 = vld [vmem:[%s215 + $0x7c] sm:$0xf]
      %v309 = vld [vmem:[%s218] sm:$0x1]
      %v311 = vlaneseq
      %v312 = vshrl.u32 %v311, 7
      %v313 = vsub.s32 0, %v312
      %v314 = vrot.slane %v309, %v313
      %v348 = vunpack.c.l.b16 %v277
      %v349 = vunpack.c.l.b16 %v278
      %v350 = vunpack.c.l.b16 %v279
      %v351 = vunpack.c.l.b16 %v280
      %v352 = vunpack.c.l.b16 %v281
      %v353 = vunpack.c.l.b16 %v282
      %v354 = vunpack.c.l.b16 %v283
      %v355 = vunpack.c.l.b16 %v284
      %v356 = vunpack.c.l.b16 %v285
      %v357 = vunpack.c.l.b16 %v286
      %v358 = vunpack.c.l.b16 %v287
      %v359 = vunpack.c.l.b16 %v288
      %v360 = vunpack.c.l.b16 %v289
      %v361 = vunpack.c.l.b16 %v290
      %v362 = vunpack.c.l.b16 %v291
      %v363 = vunpack.c.l.b16 %v292
      %v364 = vunpack.c.l.b16 %v293
      %v365 = vunpack.c.l.b16 %v294
      %v366 = vunpack.c.l.b16 %v295
      %v367 = vunpack.c.l.b16 %v296
      %v368 = vunpack.c.l.b16 %v297
      %v369 = vunpack.c.l.b16 %v298
      %v370 = vunpack.c.l.b16 %v299
      %v371 = vunpack.c.l.b16 %v300
      %v372 = vunpack.c.l.b16 %v301
      %v373 = vunpack.c.l.b16 %v302
      %v374 = vunpack.c.l.b16 %v303
      %v375 = vunpack.c.l.b16 %v304
      %v376 = vunpack.c.l.b16 %v305
      %v377 = vunpack.c.l.b16 %v306
      %v378 = vunpack.c.l.b16 %v307
      %v379 = vunpack.c.l.b16 %v308
      %v380 = vpack.c.b16 %v349, %v348
      %v381 = vpack.c.b16 %v351, %v350
      %v382 = vpack.c.b16 %v353, %v352
      %v383 = vpack.c.b16 %v355, %v354
      %v384 = vpack.c.b16 %v357, %v356
      %v385 = vpack.c.b16 %v359, %v358
      %v386 = vpack.c.b16 %v361, %v360
      %v387 = vpack.c.b16 %v363, %v362
      %v388 = vpack.c.b16 %v365, %v364
      %v389 = vpack.c.b16 %v367, %v366
      %v390 = vpack.c.b16 %v369, %v368
      %v391 = vpack.c.b16 %v371, %v370
      %v392 = vpack.c.b16 %v373, %v372
      %v393 = vpack.c.b16 %v375, %v374
      %v394 = vpack.c.b16 %v377, %v376
      %v395 = vpack.c.b16 %v379, %v378
      %412 = vmatprep.subr.bf16.mxu0 0
      %413 = vmatpush1.bf16.msra.mxu0 %v380
      %414 = vmatprep.subr.bf16.mxu0 0
      %415 = vmatpush1.bf16.msra.mxu0 %v381
      %416 = vmatprep.subr.bf16.mxu0 0
      %417 = vmatpush1.bf16.msra.mxu0 %v382
      %418 = vmatprep.subr.bf16.mxu0 0
      %419 = vmatpush1.bf16.msra.mxu0 %v383
      %420 = vmatprep.subr.bf16.mxu0 0
      %421 = vmatpush1.bf16.msra.mxu0 %v384
      %422 = vmatprep.subr.bf16.mxu0 0
      %423 = vmatpush1.bf16.msra.mxu0 %v385
      %424 = vmatprep.subr.bf16.mxu0 0
      %425 = vmatpush1.bf16.msra.mxu0 %v386
      %426 = vmatprep.subr.bf16.mxu0 0
      %427 = vmatpush1.bf16.msra.mxu0 %v387
      %428 = vmatprep.subr.bf16.mxu0 0
      %429 = vmatpush1.bf16.msra.mxu0 %v388
      %430 = vmatprep.subr.bf16.mxu0 0
      %431 = vmatpush1.bf16.msra.mxu0 %v389
      %432 = vmatprep.subr.bf16.mxu0 0
      %433 = vmatpush1.bf16.msra.mxu0 %v390
      %434 = vmatprep.subr.bf16.mxu0 0
      %435 = vmatpush1.bf16.msra.mxu0 %v391
      %436 = vmatprep.subr.bf16.mxu0 0
      %437 = vmatpush1.bf16.msra.mxu0 %v392
      %438 = vmatprep.subr.bf16.mxu0 0
      %439 = vmatpush1.bf16.msra.mxu0 %v393
      %440 = vmatprep.subr.bf16.mxu0 0
      %441 = vmatpush1.bf16.msra.mxu0 %v394
      %442 = vmatprep.subr.bf16.mxu0 0
      %443 = vmatpush1.bf16.msra.mxu0 %v395
      %444 = vmatprep.mubr.bf16.mxu0 %v262
      %445 = vmatmul.mubr.bf16.gmra.mrb[0].mxu0 %v261
      %v446 = vpop.f32.mrb[0].mxu0
      %v447 = vadd.f32 %v314, %v446
      %v448 = vpop.f32.mrb[0].mxu0
      %v449 = vpop.f32.mrb[0].mxu0
      %v450 = vadd.f32 %v314, %v449
      %v451 = vpop.f32.mrb[0].mxu0
      %452 = vmatprep.mubr.bf16.mxu0 %v264
      %453 = vmatmul.mubr.bf16.gmra.mrb[0].mxu0 %v263
      %v454 = vpop.f32.mrb[0].mxu0
      %v455 = vadd.f32 %v314, %v454
      %v456 = vpop.f32.mrb[0].mxu0
      %v457 = vpop.f32.mrb[0].mxu0
      %v458 = vadd.f32 %v314, %v457
      %v459 = vpop.f32.mrb[0].mxu0
      %460 = vmatprep.mubr.bf16.mxu0 %v266
      %461 = vmatmul.mubr.bf16.gmra.mrb[0].mxu0 %v265
      %v462 = vpop.f32.mrb[0].mxu0
      %v463 = vadd.f32 %v314, %v462
      %v464 = vpop.f32.mrb[0].mxu0
      %v465 = vpop.f32.mrb[0].mxu0
      %v466 = vadd.f32 %v314, %v465
      %v467 = vpop.f32.mrb[0].mxu0
      %468 = vmatprep.mubr.bf16.mxu0 %v268
      %469 = vmatmul.mubr.bf16.gmra.mrb[0].mxu0 %v267
      %v470 = vpop.f32.mrb[0].mxu0
      %v471 = vadd.f32 %v314, %v470
      %v472 = vpop.f32.mrb[0].mxu0
      %v473 = vpop.f32.mrb[0].mxu0
      %v474 = vadd.f32 %v314, %v473
      %v475 = vpop.f32.mrb[0].mxu0
      %476 = vmatprep.mubr.bf16.mxu0 %v270
      %477 = vmatmul.mubr.bf16.gmra.mrb[0].mxu0 %v269
      %v478 = vpop.f32.mrb[0].mxu0
      %v479 = vadd.f32 %v314, %v478
      %v480 = vpop.f32.mrb[0].mxu0
      %v481 = vpop.f32.mrb[0].mxu0
      %v482 = vadd.f32 %v314, %v481
      %v483 = vpop.f32.mrb[0].mxu0
      %484 = vmatprep.mubr.bf16.mxu0 %v272
      %485 = vmatmul.mubr.bf16.gmra.mrb[0].mxu0 %v271
      %v486 = vpop.f32.mrb[0].mxu0
      %v487 = vadd.f32 %v314, %v486
      %v488 = vpop.f32.mrb[0].mxu0
      %v489 = vpop.f32.mrb[0].mxu0
      %v490 = vadd.f32 %v314, %v489
      %v491 = vpop.f32.mrb[0].mxu0
      %492 = vmatprep.mubr.bf16.mxu0 %v274
      %493 = vmatmul.mubr.bf16.gmra.mrb[0].mxu0 %v273
      %v494 = vpop.f32.mrb[0].mxu0
      %v495 = vadd.f32 %v314, %v494
      %v496 = vpop.f32.mrb[0].mxu0
      %v497 = vpop.f32.mrb[0].mxu0
      %v498 = vadd.f32 %v314, %v497
      %v499 = vpop.f32.mrb[0].mxu0
      %500 = vmatprep.mubr.bf16.mxu0 %v276
      %501 = vmatmul.mubr.bf16.gmra.mrb[0].mxu0 %v275
      %v502 = vpop.f32.mrb[0].mxu0
      %v503 = vadd.f32 %v314, %v502
      %v504 = vpop.f32.mrb[0].mxu0
      %v505 = vpop.f32.mrb[0].mxu0
      %v506 = vadd.f32 %v314, %v505
      %v507 = vpop.f32.mrb[0].mxu0
      %508 = vdwg.mxu0
      %v509 = vmax.f32 %v447, 0.0
      %v510 = vmax.f32 %v450, 0.0
      %v511 = vmax.f32 %v455, 0.0
      %v512 = vmax.f32 %v458, 0.0
      %v513 = vmax.f32 %v463, 0.0
      %v514 = vmax.f32 %v466, 0.0
      %v515 = vmax.f32 %v471, 0.0
      %v516 = vmax.f32 %v474, 0.0
      %v517 = vmax.f32 %v479, 0.0
      %v518 = vmax.f32 %v482, 0.0
      %v519 = vmax.f32 %v487, 0.0
      %v520 = vmax.f32 %v490, 0.0
      %v521 = vmax.f32 %v495, 0.0
      %v522 = vmax.f32 %v498, 0.0
      %v523 = vmax.f32 %v503, 0.0
      %v524 = vmax.f32 %v506, 0.0
      %vm525 = vcmask 261120
      %526 = vst.msk [vmem:[%s226] sm:$0xff] %vm525, %v509
      %527 = vst.msk [vmem:[%s226 + $0x8] sm:$0xff] %vm525, %v510
      %528 = vst.msk [vmem:[%s226 + $0x10] sm:$0xff] %vm525, %v511
      %529 = vst.msk [vmem:[%s226 + $0x18] sm:$0xff] %vm525, %v512
      %530 = vst.msk [vmem:[%s226 + $0x20] sm:$0xff] %vm525, %v513
      %531 = vst.msk [vmem:[%s226 + $0x28] sm:$0xff] %vm525, %v514
      %532 = vst.msk [vmem:[%s226 + $0x30] sm:$0xff] %vm525, %v515
      %533 = vst.msk [vmem:[%s226 + $0x38] sm:$0xff] %vm525, %v516
      %534 = vst.msk [vmem:[%s226 + $0x40] sm:$0xff] %vm525, %v517
      %535 = vst.msk [vmem:[%s226 + $0x48] sm:$0xff] %vm525, %v518
      %536 = vst.msk [vmem:[%s226 + $0x50] sm:$0xff] %vm525, %v519
      %537 = vst.msk [vmem:[%s226 + $0x58] sm:$0xff] %vm525, %v520
      %538 = vst.msk [vmem:[%s226 + $0x60] sm:$0xff] %vm525, %v521
      %539 = vst.msk [vmem:[%s226 + $0x68] sm:$0xff] %vm525, %v522
      %540 = vst.msk [vmem:[%s226 + $0x70] sm:$0xff] %vm525, %v523
      %541 = vst.msk [vmem:[%s226 + $0x78] sm:$0xff] %vm525, %v524
      %s542 = smul.u32 16, %s18
      %p543 = scmp.lt.s32.totalorder %s542, 111
      %s544 = scalar_select %p543, %s542, 111
      %p545 = scmp.lt.s32.totalorder %s19, 0
      %s546 = scalar_select %p545, %s19, 0
      %s547 = sadd.s32 %s546, %s544
      %s548 = smul.addr %s547, 8
      %s549 = scalar_lea.vmem %s3, %s548
      // Predicated region
      $region33: #{qnetwork_forward.5} parent=31 // pred_check
        %p550 = pneg %p124
      $region34: #{qnetwork_forward.5} parent=31 // pred_check_branch
        %552 = sbr.rel (%p550) target = $region36
      $region35: #{qnetwork_forward.5} parent=31 // pred_region
        %s553 = smul.u32 16, %s18
      $region36: #{qnetwork_forward.5} parent=31 // pred_fallthru
        _
    $region32: #{qnetwork_forward.5} parent=5 // pred_fallthru
      _
    %p554 = scmp.le.s32.totalorder 2, %s9
    // Predicated region
    $region37: #{qnetwork_forward.5} parent=5 // pred_check
      %p555 = pneg %p554
    $region38: #{qnetwork_forward.5} parent=5 // pred_check_branch
      %557 = sbr.rel (%p555) target = $region40
    $region39: #{qnetwork_forward.5} parent=5 // pred_region
      %s558 = ssub.s32 %s9, 2
      // Predicated region
      $region41: #{qnetwork_forward.5} parent=39 // pred_check
        %p559 = pneg %p130
      $region42: #{qnetwork_forward.5} parent=39 // pred_check_branch
        %561 = sbr.rel (%p559) target = $region44
      $region43: #{qnetwork_forward.5} parent=39 // pred_region
        %s562 = smul.u32 16, %s20
        %p563 = scmp.lt.s32.totalorder %s562, 111
        %s564 = scalar_select %p563, %s562, 111
        %p565 = scmp.lt.s32.totalorder %s21, 0
        %s566 = scalar_select %p565, %s21, 0
        %s567 = sadd.s32 %s566, %s564
        %s568 = smul.addr %s567, 8
        %s569 = scalar_lea.vmem %s3, %s568
      $region44: #{qnetwork_forward.5} parent=39 // pred_fallthru
        _
    $region40: #{qnetwork_forward.5} parent=5 // pred_fallthru
      _
  $region6: #{qnetwork_forward.5} parent=0 // loop_footer
    %s13 = sadd.s32 1, %s9
  $region7: #{qnetwork_forward.5} parent=0 // loop_footer_branch
    %8 = sbr.rel target = $region3
  $region8: #{qnetwork_forward.5} parent=0 // loop_exit
    _

// kernel: qnetwork_forward.6
$region0: #{qnetwork_forward.6}
  #allocation0 [shape = 'u32[]', space=smem, size = 0x4, offset = 0x4, fixed_abs, tag = 'smem constant byte address 0x4 - core index']
  #allocation1 [shape = 'u32[144,128]{1,0:T(1,128)}', space=vmem, size = 0x12000, scoped, tag = 'internal scratch']
  %s0 = inlined_call_operand.vmem [shape: f32[176,512], index: 0, kind: input, shape index: {}]
  %s1 = inlined_call_operand.vmem [shape: bf16[512,64], index: 1, kind: input, shape index: {}]
  %s2 = inlined_call_operand.vmem [shape: f32[1,64], index: 2, kind: input, shape index: {}]
  %s3 = inlined_call_operand.vmem [shape: f32[176,64], index: 3, kind: output, shape index: {}]
  %s4 = sld [smem:[#allocation0]]
  $region45: #{qnetwork_forward.6} parent=0
    _
  %s6 = ssub.s32 1, %s4
  %s7 = scalar_select 0, %s6, %s4
  loop: start=0, step=1, limit=4
  $region2: #{qnetwork_forward.6} parent=0 // loop_pre_header
    _
  $region3: #{qnetwork_forward.6} parent=0 // loop_header
    %s9 = sphi 0, %s13
    %p10 = scmp.ge.s32.totalorder %s9, 4
    %s16 = sphi 0, %s28
    %s17 = sphi 0, %s24
    %s18 = sphi 0, %s16
    %s19 = sphi 0, %s17
    %s20 = sphi 0, %s18
    %s21 = sphi 0, %s19
    %s31 = sphi 0, %s33
    %s34 = sphi 0, %s31
    %s35 = sphi 0, %s34
    %s51 = sphi 0, %s35
    %s57 = sphi 0, %s59
    %s60 = sphi 0, %s57
    %s61 = sphi 0, %s60
    %s77 = sphi 0, %s61
    %s83 = sphi 0, %s85
    %s86 = sphi 0, %s83
    %s87 = sphi 0, %s86
    %s103 = sphi 0, %s87
    %s111 = sphi 0, %s113
    %s114 = sphi 0, %s111
    %s115 = sphi 0, %s114
    %s131 = sphi 0, %s115
  $region4: #{qnetwork_forward.6} parent=0 // loop_header_branch
    %12 = sbr.rel (%p10) target = $region8
  $region5: #{qnetwork_forward.6} parent=0 // loop_body
    %s14 = ssub.s32 %s9, 1
    %s15 = ssub.s32 %s9, 2
    %s22 = sadd.s32 1, %s17
    %p23 = scmp.ge.s32.totalorder %s22, 1
    %s24 = scalar_select %p23, 0, %s22
    %s25 = sadd.s32 1, %s16
    %s26 = scalar_select %p23, %s25, %s16
    %p27 = scmp.ge.s32.totalorder %s26, 2
    %s28 = scalar_select %p27, 0, %s26
    %s29 = ssub.s32 %s16, %s28
    %p30 = scmp.eq.s32.totalorder %s29, 0
    %s32 = sadd.s32 %s31, 1
    %s33 = scalar_select %p30, %s31, %s32
    %p36 = pneg %p30
    %p37 = scmp.eq.s32.totalorder %s9, 1
    %p38 = por %p36, %p37
    %p39 = scmp.ne.s32.totalorder %s31, %s34
    %p40 = scmp.eq.s32.totalorder %s9, 0
    %p41 = por %p39, %p40
    %p42 = scmp.ne.s32.totalorder %s31, %s34
    %p43 = scmp.eq.s32.totalorder %s14, 1
    %p44 = por %p42, %p43
    %p45 = scmp.ne.s32.totalorder %s34, %s35
    %p46 = scmp.eq.s32.totalorder %s14, 0
    %p47 = por %p45, %p46
    %p48 = scmp.ne.s32.totalorder %s34, %s35
    %p49 = scmp.eq.s32.totalorder %s15, 1
    %p50 = por %p48, %p49
    %p52 = scmp.ne.s32.totalorder %s35, %s51
    %p53 = scmp.eq.s32.totalorder %s15, 0
    %p54 = por %p52, %p53
    %s55 = ssub.s32 %s17, %s24
    %p56 = scmp.eq.s32.totalorder %s55, 0
    %s58 = sadd.s32 %s57, 1
    %s59 = scalar_select %p56, %s57, %s58
    %p62 = pneg %p56
    %p63 = scmp.eq.s32.totalorder %s9, 1
    %p64 = por %p62, %p63
    %p65 = scmp.ne.s32.totalorder %s57, %s60
    %p66 = scmp.eq.s32.totalorder %s9, 0
    %p67 = por %p65, %p66
    %p68 = scmp.ne.s32.totalorder %s57, %s60
    %p69 = scmp.eq.s32.totalorder %s14, 1
    %p70 = por %p68, %p69
    %p71 = scmp.ne.s32.totalorder %s60, %s61
    %p72 = scmp.eq.s32.totalorder %s14, 0
    %p73 = por %p71, %p72
    %p74 = scmp.ne.s32.totalorder %s60, %s61
    %p75 = scmp.eq.s32.totalorder %s15, 1
    %p76 = por %p74, %p75
    %p78 = scmp.ne.s32.totalorder %s61, %s77
    %p79 = scmp.eq.s32.totalorder %s15, 0
    %p80 = por %p78, %p79
    %s81 = ssub.s32 %s17, %s24
    %p82 = scmp.eq.s32.totalorder %s81, 0
    %s84 = sadd.s32 %s83, 1
    %s85 = scalar_select %p82, %s83, %s84
    %p88 = pneg %p82
    %p89 = scmp.eq.s32.totalorder %s9, 1
    %p90 = por %p88, %p89
    %p91 = scmp.ne.s32.totalorder %s83, %s86
    %p92 = scmp.eq.s32.totalorder %s9, 0
    %p93 = por %p91, %p92
    %p94 = scmp.ne.s32.totalorder %s83, %s86
    %p95 = scmp.eq.s32.totalorder %s14, 1
    %p96 = por %p94, %p95
    %p97 = scmp.ne.s32.totalorder %s86, %s87
    %p98 = scmp.eq.s32.totalorder %s14, 0
    %p99 = por %p97, %p98
    %p100 = scmp.ne.s32.totalorder %s86, %s87
    %p101 = scmp.eq.s32.totalorder %s15, 1
    %p102 = por %p100, %p101
    %p104 = scmp.ne.s32.totalorder %s87, %s103
    %p105 = scmp.eq.s32.totalorder %s15, 0
    %p106 = por %p104, %p105
    %s107 = ssub.s32 %s16, %s28
    %s108 = ssub.s32 %s17, %s24
    %s109 = sor.u32 %s107, %s108
    %p110 = scmp.eq.s32.totalorder %s109, 0
    %s112 = sadd.s32 %s111, 1
    %s113 = scalar_select %p110, %s111, %s112
    %p116 = pneg %p110
    %p117 = scmp.eq.s32.totalorder %s9, 1
    %p118 = por %p116, %p117
    %p119 = scmp.ne.s32.totalorder %s111, %s114
    %p120 = scmp.eq.s32.totalorder %s9, 0
    %p121 = por %p119, %p120
    %p122 = scmp.ne.s32.totalorder %s111, %s114
    %p123 = scmp.eq.s32.totalorder %s14, 1
    %p124 = por %p122, %p123
    %p125 = scmp.ne.s32.totalorder %s114, %s115
    %p126 = scmp.eq.s32.totalorder %s14, 0
    %p127 = por %p125, %p126
    %p128 = scmp.ne.s32.totalorder %s114, %s115
    %p129 = scmp.eq.s32.totalorder %s15, 1
    %p130 = por %p128, %p129
    %p132 = scmp.ne.s32.totalorder %s115, %s131
    %p133 = scmp.eq.s32.totalorder %s15, 0
    %p134 = por %p132, %p133
    %p135 = scmp.le.s32.totalorder 1, %s9
    %p136 = scmp.lt.s32.totalorder %s9, 3
    %p137 = pnand %p135, %p136
    %p138 = pneg %p137
    // Predicated region
    $region9: #{qnetwork_forward.6} parent=5 // pred_check
      _
    $region10: #{qnetwork_forward.6} parent=5 // pred_check_branch
      %140 = sbr.rel (%p137) target = $region12
    $region11: #{qnetwork_forward.6} parent=5 // pred_region
      %s141 = ssub.s32 %s9, 1
      // Predicated region
      $region13: #{qnetwork_forward.6} parent=11 // pred_check
        %p142 = pneg %p73
      $region14: #{qnetwork_forward.6} parent=11 // pred_check_branch
        %144 = sbr.rel (%p142) target = $region16
      $region15: #{qnetwork_forward.6} parent=11 // pred_region
        %p145 = scmp.lt.s32.totalorder %s19, 0
        %s146 = scalar_select %p145, %s19, 0
        %s147 = smul.addr %s146, 4
        %s148 = scalar_lea.vmem %s1, %s147
      $region16: #{qnetwork_forward.6} parent=11 // pred_fallthru
        _
      // Predicated region
      $region17: #{qnetwork_forward.6} parent=11 // pred_check
        %p149 = pneg %p99
      $region18: #{qnetwork_forward.6} parent=11 // pred_check_branch
        %151 = sbr.rel (%p149) target = $region20
      $region19: #{qnetwork_forward.6} parent=11 // pred_region
        %p152 = scmp.lt.s32.totalorder %s19, 0
        %s153 = scalar_select %p152, %s19, 0
        %s154 = scalar_lea.vmem %s2, %s153
      $region20: #{qnetwork_forward.6} parent=11 // pred_fallthru
        _
    $region12: #{qnetwork_forward.6} parent=5 // pred_fallthru
      _
    %p155 = scmp.lt.s32.totalorder %s9, 2
    // Predicated region
    $region21: #{qnetwork_forward.6} parent=5 // pred_check
      %p156 = pneg %p155
    $region22: #{qnetwork_forward.6} parent=5 // pred_check_branch
      %158 = sbr.rel (%p156) target = $region24
    $region23: #{qnetwork_forward.6} parent=5 // pred_region
      // Predicated region
      $region25: #{qnetwork_forward.6} parent=23 // pred_check
        %p159 = pneg %p41
      $region26: #{qnetwork_forward.6} parent=23 // pred_check_branch
        %161 = sbr.rel (%p159) target = $region28
      $region27: #{qnetwork_forward.6} parent=23 // pred_region
        %s162 = smul.u32 11, %s16
        %p163 = scmp.lt.s32.totalorder %s162, 21
        %s164 = scalar_select %p163, %s162, 21
        %s165 = smul.addr %s164, 4
        %s166 = smul.addr %s165, 8
        %s167 = scalar_lea.vmem %s0, %s166
        %s168 = smul.u32 11, %s16
      $region28: #{qnetwork_forward.6} parent=23 // pred_fallthru
        _
    $region24: #{qnetwork_forward.6} parent=5 // pred_fallthru
      _
    %p169 = scmp.le.s32.totalorder 1, %s9
    %p170 = scmp.lt.s32.totalorder %s9, 3
    %p171 = pnand %p169, %p170
    %p172 = pneg %p171
    // Predicated region
    $region29: #{qnetwork_forward.6} parent=5 // pred_check
      _
    $region30: #{qnetwork_forward.6} parent=5 // pred_check_branch
      %174 = sbr.rel (%p171) target = $region32
    $region31: #{qnetwork_forward.6} parent=5 // pred_region
      %s175 = ssub.s32 %s9, 1
      %s176 = smul.u32 11, %s18
      %p177 = scmp.lt.s32.totalorder %s176, 21
      %s178 = scalar_select %p177, %s176, 21
      %s179 = smul.addr %s178, 4
      %s180 = smul.addr %s179, 8
      %s181 = scalar_lea.vmem %s0, %s180
      %p182 = pneg %p47
      %p183 = pneg %p44
      %p184 = scmp.lt.s32.totalorder %s19, 0
      %s185 = scalar_select %p184, %s19, 0
      %s186 = smul.addr %s185, 4
      %s187 = scalar_lea.vmem %s1, %s186
      %p188 = pneg %p73
      %p189 = pneg %p70
      %p190 = scmp.lt.s32.totalorder %s19, 0
      %s191 = scalar_select %p190, %s19, 0
      %s192 = scalar_lea.vmem %s2, %s191
      %p193 = pneg %p99
      %p194 = pneg %p96
      %p195 = pneg %p127
      %p196 = pneg %p124
      %s197 = smul.u32 11, %s18
      %p198 = scmp.lt.s32.totalorder %s197, 21
      %s199 = scalar_select %p198, %s197, 21
      %p200 = scmp.lt.s32.totalorder %s19, 0
      %s201 = scalar_select %p200, %s19, 0
      %s202 = sadd.s32 %s201, %s199
      %s203 = smul.addr %s202, 8
      %s204 = scalar_lea.vmem %s3, %s203
      %s205 = smul.u32 11, %s18
      %p206 = scmp.lt.s32.totalorder %s205, 21
      %s207 = scalar_select %p206, %s205, 21
      %s208 = smul.addr %s207, 4
      %s209 = smul.addr %s208, 8
      %s210 = scalar_lea.vmem %s0, %s209
      %s211 = smul.u32 11, %s18
      %p212 = scmp.lt.s32.totalorder %s19, 0
      %s213 = scalar_select %p212, %s19, 0
      %s214 = smul.addr %s213, 4
      %s215 = scalar_lea.vmem %s1, %s214
      %p216 = scmp.lt.s32.totalorder %s19, 0
      %s217 = scalar_select %p216, %s19, 0
      %s218 = scalar_lea.vmem %s2, %s217
      %s219 = smul.u32 11, %s18
      %p220 = scmp.lt.s32.totalorder %s219, 21
      %s221 = scalar_select %p220, %s219, 21
      %p222 = scmp.lt.s32.totalorder %s19, 0
      %s223 = scalar_select %p222, %s19, 0
      %s224 = sadd.s32 %s223, %s221
      %s225 = smul.addr %s224, 8
      %s226 = scalar_lea.vmem %s3, %s225
      %s227 = smul.u32 11, %s18
      %v229 = vld [vmem:[%s210] sm:$0xff]
      %v230 = vld [vmem:[%s210 + $0x8] sm:$0xff]
      %v231 = vld [vmem:[%s210 + $0x10] sm:$0xff]
      %v232 = vld [vmem:[%s210 + $0x18] sm:$0xff]
      %v233 = vld [vmem:[%s210 + $0x20] sm:$0xff]
      %v234 = vld [vmem:[%s210 + $0x28] sm:$0xff]
      %v235 = vld [vmem:[%s210 + $0x30] sm:$0xff]
      %v236 = vld [vmem:[%s210 + $0x38] sm:$0xff]
      %v237 = vld [vmem:[%s210 + $0x40] sm:$0xff]
      %v238 = vld [vmem:[%s210 + $0x48] sm:$0xff]
      %v239 = vld [vmem:[%s210 + $0x50] sm:$0xff]
      %v240 = vld [vmem:[%s210 + $0x58] sm:$0xff]
      %v241 = vld [vmem:[%s210 + $0x60] sm:$0xff]
      %v242 = vld [vmem:[%s210 + $0x68] sm:$0xff]
      %v243 = vld [vmem:[%s210 + $0x70] sm:$0xff]
      %v244 = vld [vmem:[%s210 + $0x78] sm:$0xff]
      %v245 = vld [vmem:[%s210 + $0x80] sm:$0xff]
      %v246 = vld [vmem:[%s210 + $0x88] sm:$0xff]
      %v247 = vld [vmem:[%s210 + $0x90] sm:$0xff]
      %v248 = vld [vmem:[%s210 + $0x98] sm:$0xff]
      %v249 = vld [vmem:[%s210 + $0xa0] sm:$0xff]
      %v250 = vld [vmem:[%s210 + $0xa8] sm:$0xff]
      %v251 = vld [vmem:[%s210 + $0xb0] sm:$0xff]
      %v252 = vld [vmem:[%s210 + $0xb8] sm:$0xff]
      %v253 = vld [vmem:[%s210 + $0xc0] sm:$0xff]
      %v254 = vld [vmem:[%s210 + $0xc8] sm:$0xff]
      %v255 = vld [vmem:[%s210 + $0xd0] sm:$0xff]
      %v256 = vld [vmem:[%s210 + $0xd8] sm:$0xff]
      %v257 = vld [vmem:[%s210 + $0xe0] sm:$0xff]
      %v258 = vld [vmem:[%s210 + $0xe8] sm:$0xff]
      %v259 = vld [vmem:[%s210 + $0xf0] sm:$0xff]
      %v260 = vld [vmem:[%s210 + $0xf8] sm:$0xff]
      %v261 = vld [vmem:[%s210 + $0x100] sm:$0xff]
      %v262 = vld [vmem:[%s210 + $0x108] sm:$0xff]
      %v263 = vld [vmem:[%s210 + $0x110] sm:$0xff]
      %v264 = vld [vmem:[%s210 + $0x118] sm:$0xff]
      %v265 = vld [vmem:[%s210 + $0x120] sm:$0xff]
      %v266 = vld [vmem:[%s210 + $0x128] sm:$0xff]
      %v267 = vld [vmem:[%s210 + $0x130] sm:$0xff]
      %v268 = vld [vmem:[%s210 + $0x138] sm:$0xff]
      %v269 = vld [vmem:[%s210 + $0x140] sm:$0xff]
      %v270 = vld [vmem:[%s210 + $0x148] sm:$0xff]
      %v271 = vld [vmem:[%s210 + $0x150] sm:$0xff]
      %v272 = vld [vmem:[%s210 + $0x158] sm:$0xff]
      %v273 = vpack.c.bf16 %v233, %v229
      %v274 = vpack.c.bf16 %v234, %v230
      %v275 = vpack.c.bf16 %v235, %v231
      %v276 = vpack.c.bf16 %v236, %v232
      %v277 = vpack.c.bf16 %v241, %v237
      %v278 = vpack.c.bf16 %v242, %v238
      %v279 = vpack.c.bf16 %v243, %v239
      %v280 = vpack.c.bf16 %v244, %v240
      %v281 = vpack.c.bf16 %v249, %v245
      %v282 = vpack.c.bf16 %v250, %v246
      %v283 = vpack.c.bf16 %v251, %v247
      %v284 = vpack.c.bf16 %v252, %v248
      %v285 = vpack.c.bf16 %v257, %v253
      %v286 = vpack.c.bf16 %v258, %v254
      %v287 = vpack.c.bf16 %v259, %v255
      %v288 = vpack.c.bf16 %v260, %v256
      %v289 = vpack.c.bf16 %v265, %v261
      %v290 = vpack.c.bf16 %v266, %v262
      %v291 = vpack.c.bf16 %v267, %v263
      %v292 = vpack.c.bf16 %v268, %v264
      %v293 = vpack.c.bf16 %v269, %v269
      %v294 = vpack.c.bf16 %v270, %v270
      %v295 = vpack.c.bf16 %v271, %v271
      %v296 = vpack.c.bf16 %v272, %v272
      %v297 = vld [vmem:[%s215] sm:$0xf]
      %v298 = vld [vmem:[%s215 + $0x4] sm:$0xf]
      %v299 = vld [vmem:[%s215 + $0x8] sm:$0xf]
      %v300 = vld [vmem:[%s215 + $0xc] sm:$0xf]
      %v301 = vld [vmem:[%s215 + $0x10] sm:$0xf]
      %v302 = vld [vmem:[%s215 + $0x14] sm:$0xf]
      %v303 = vld [vmem:[%s215 + $0x18] sm:$0xf]
      %v304 = vld [vmem:[%s215 + $0x1c] sm:$0xf]
      %v305 = vld [vmem:[%s215 + $0x20] sm:$0xf]
      %v306 = vld [vmem:[%s215 + $0x24] sm:$0xf]
      %v307 = vld [vmem:[%s215 + $0x28] sm:$0xf]
      %v308 = vld [vmem:[%s215 + $0x2c] sm:$0xf]
      %v309 = vld [vmem:[%s215 + $0x30] sm:$0xf]
      %v310 = vld [vmem:[%s215 + $0x34] sm:$0xf]
      %v311 = vld [vmem:[%s215 + $0x38] sm:$0xf]
      %v312 = vld [vmem:[%s215 + $0x3c] sm:$0xf]
      %v313 = vld [vmem:[%s215 + $0x40] sm:$0xf]
      %v314 = vld [vmem:[%s215 + $0x44] sm:$0xf]
      %v315 = vld [vmem:[%s215 + $0x48] sm:$0xf]
      %v316 = vld [vmem:[%s215 + $0x4c] sm:$0xf]
      %v317 = vld [vmem:[%s215 + $0x50] sm:$0xf]
      %v318 = vld [vmem:[%s215 + $0x54] sm:$0xf]
      %v319 = vld [vmem:[%s215 + $0x58] sm:$0xf]
      %v320 = vld [vmem:[%s215 + $0x5c] sm:$0xf]
      %v321 = vld [vmem:[%s215 + $0x60] sm:$0xf]
      %v322 = vld [vmem:[%s215 + $0x64] sm:$0xf]
      %v323 = vld [vmem:[%s215 + $0x68] sm:$0xf]
      %v324 = vld [vmem:[%s215 + $0x6c] sm:$0xf]
      %v325 = vld [vmem:[%s215 + $0x70] sm:$0xf]
      %v326 = vld [vmem:[%s215 + $0x74] sm:$0xf]
      %v327 = vld [vmem:[%s215 + $0x78] sm:$0xf]
      %v328 = vld [vmem:[%s215 + $0x7c] sm:$0xf]
      %v329 = vld [vmem:[%s215 + $0x80] sm:$0xf]
      %v330 = vld [vmem:[%s215 + $0x84] sm:$0xf]
      %v331 = vld [vmem:[%s215 + $0x88] sm:$0xf]
      %v332 = vld [vmem:[%s215 + $0x8c] sm:$0xf]
      %v333 = vld [vmem:[%s215 + $0x90] sm:$0xf]
      %v334 = vld [vmem:[%s215 + $0x94] sm:$0xf]
      %v335 = vld [vmem:[%s215 + $0x98] sm:$0xf]
      %v336 = vld [vmem:[%s215 + $0x9c] sm:$0xf]
      %v337 = vld [vmem:[%s215 + $0xa0] sm:$0xf]
      %v338 = vld [vmem:[%s215 + $0xa4] sm:$0xf]
      %v339 = vld [vmem:[%s215 + $0xa8] sm:$0xf]
      %v340 = vld [vmem:[%s215 + $0xac] sm:$0xf]
      %v341 = vld [vmem:[%s215 + $0xb0] sm:$0xf]
      %v342 = vld [vmem:[%s215 + $0xb4] sm:$0xf]
      %v343 = vld [vmem:[%s215 + $0xb8] sm:$0xf]
      %v344 = vld [vmem:[%s215 + $0xbc] sm:$0xf]
      %v345 = vld [vmem:[%s215 + $0xc0] sm:$0xf]
      %v346 = vld [vmem:[%s215 + $0xc4] sm:$0xf]
      %v347 = vld [vmem:[%s215 + $0xc8] sm:$0xf]
      %v348 = vld [vmem:[%s215 + $0xcc] sm:$0xf]
      %v349 = vld [vmem:[%s215 + $0xd0] sm:$0xf]
      %v350 = vld [vmem:[%s215 + $0xd4] sm:$0xf]
      %v351 = vld [vmem:[%s215 + $0xd8] sm:$0xf]
      %v352 = vld [vmem:[%s215 + $0xdc] sm:$0xf]
      %v353 = vld [vmem:[%s215 + $0xe0] sm:$0xf]
      %v354 = vld [vmem:[%s215 + $0xe4] sm:$0xf]
      %v355 = vld [vmem:[%s215 + $0xe8] sm:$0xf]
      %v356 = vld [vmem:[%s215 + $0xec] sm:$0xf]
      %v357 = vld [vmem:[%s215 + $0xf0] sm:$0xf]
      %v358 = vld [vmem:[%s215 + $0xf4] sm:$0xf]
      %v359 = vld [vmem:[%s215 + $0xf8] sm:$0xf]
      %v360 = vld [vmem:[%s215 + $0xfc] sm:$0xf]
      %v361 = vld [vmem:[%s218] sm:$0x1]
      %v363 = vlaneseq
      %v364 = vshrl.u32 %v363, 7
      %v365 = vsub.s32 0, %v364
      %v366 = vrot.slane %v361, %v365
      %v432 = vunpack.c.l.b16 %v297
      %v433 = vunpack.c.l.b16 %v298
      %v434 = vunpack.c.l.b16 %v299
      %v435 = vunpack.c.l.b16 %v300
      %v436 = vunpack.c.l.b16 %v301
      %v437 = vunpack.c.l.b16 %v302
      %v438 = vunpack.c.l.b16 %v303
      %v439 = vunpack.c.l.b16 %v304
      %v440 = vunpack.c.l.b16 %v305
      %v441 = vunpack.c.l.b16 %v306
      %v442 = vunpack.c.l.b16 %v307
      %v443 = vunpack.c.l.b16 %v308
      %v444 = vunpack.c.l.b16 %v309
      %v445 = vunpack.c.l.b16 %v310
      %v446 = vunpack.c.l.b16 %v311
      %v447 = vunpack.c.l.b16 %v312
      %v448 = vunpack.c.l.b16 %v313
      %v449 = vunpack.c.l.b16 %v314
      %v450 = vunpack.c.l.b16 %v315
      %v451 = vunpack.c.l.b16 %v316
      %v452 = vunpack.c.l.b16 %v317
      %v453 = vunpack.c.l.b16 %v318
      %v454 = vunpack.c.l.b16 %v319
      %v455 = vunpack.c.l.b16 %v320
      %v456 = vunpack.c.l.b16 %v321
      %v457 = vunpack.c.l.b16 %v322
      %v458 = vunpack.c.l.b16 %v323
      %v459 = vunpack.c.l.b16 %v324
      %v460 = vunpack.c.l.b16 %v325
      %v461 = vunpack.c.l.b16 %v326
      %v462 = vunpack.c.l.b16 %v327
      %v463 = vunpack.c.l.b16 %v328
      %v464 = vunpack.c.l.b16 %v329
      %v465 = vunpack.c.l.b16 %v330
      %v466 = vunpack.c.l.b16 %v331
      %v467 = vunpack.c.l.b16 %v332
      %v468 = vunpack.c.l.b16 %v333
      %v469 = vunpack.c.l.b16 %v334
      %v470 = vunpack.c.l.b16 %v335
      %v471 = vunpack.c.l.b16 %v336
      %v472 = vunpack.c.l.b16 %v337
      %v473 = vunpack.c.l.b16 %v338
      %v474 = vunpack.c.l.b16 %v339
      %v475 = vunpack.c.l.b16 %v340
      %v476 = vunpack.c.l.b16 %v341
      %v477 = vunpack.c.l.b16 %v342
      %v478 = vunpack.c.l.b16 %v343
      %v479 = vunpack.c.l.b16 %v344
      %v480 = vunpack.c.l.b16 %v345
      %v481 = vunpack.c.l.b16 %v346
      %v482 = vunpack.c.l.b16 %v347
      %v483 = vunpack.c.l.b16 %v348
      %v484 = vunpack.c.l.b16 %v349
      %v485 = vunpack.c.l.b16 %v350
      %v486 = vunpack.c.l.b16 %v351
      %v487 = vunpack.c.l.b16 %v352
      %v488 = vunpack.c.l.b16 %v353
      %v489 = vunpack.c.l.b16 %v354
      %v490 = vunpack.c.l.b16 %v355
      %v491 = vunpack.c.l.b16 %v356
      %v492 = vunpack.c.l.b16 %v357
      %v493 = vunpack.c.l.b16 %v358
      %v494 = vunpack.c.l.b16 %v359
      %v495 = vunpack.c.l.b16 %v360
      %v496 = vpack.c.b16 %v433, %v432
      %v497 = vpack.c.b16 %v435, %v434
      %v498 = vpack.c.b16 %v437, %v436
      %v499 = vpack.c.b16 %v439, %v438
      %v500 = vpack.c.b16 %v441, %v440
      %v501 = vpack.c.b16 %v443, %v442
      %v502 = vpack.c.b16 %v445, %v444
      %v503 = vpack.c.b16 %v447, %v446
      %v504 = vpack.c.b16 %v449, %v448
      %v505 = vpack.c.b16 %v451, %v450
      %v506 = vpack.c.b16 %v453, %v452
      %v507 = vpack.c.b16 %v455, %v454
      %v508 = vpack.c.b16 %v457, %v456
      %v509 = vpack.c.b16 %v459, %v458
      %v510 = vpack.c.b16 %v461, %v460
      %v511 = vpack.c.b16 %v463, %v462
      %v512 = vpack.c.b16 %v465, %v464
      %v513 = vpack.c.b16 %v467, %v466
      %v514 = vpack.c.b16 %v469, %v468
      %v515 = vpack.c.b16 %v471, %v470
      %v516 = vpack.c.b16 %v473, %v472
      %v517 = vpack.c.b16 %v475, %v474
      %v518 = vpack.c.b16 %v477, %v476
      %v519 = vpack.c.b16 %v479, %v478
      %v520 = vpack.c.b16 %v481, %v480
      %v521 = vpack.c.b16 %v483, %v482
      %v522 = vpack.c.b16 %v485, %v484
      %v523 = vpack.c.b16 %v487, %v486
      %v524 = vpack.c.b16 %v489, %v488
      %v525 = vpack.c.b16 %v491, %v490
      %v526 = vpack.c.b16 %v493, %v492
      %v527 = vpack.c.b16 %v495, %v494
      %560 = vmatprep.subr.bf16.mxu0 0
      %561 = vmatpush1.bf16.msra.mxu0 %v496
      %562 = vmatprep.subr.bf16.mxu0 0
      %563 = vmatpush1.bf16.msra.mxu0 %v497
      %564 = vmatprep.subr.bf16.mxu0 0
      %565 = vmatpush1.bf16.msra.mxu0 %v498
      %566 = vmatprep.subr.bf16.mxu0 0
      %567 = vmatpush1.bf16.msra.mxu0 %v499
      %568 = vmatprep.subr.bf16.mxu0 0
      %569 = vmatpush1.bf16.msra.mxu0 %v500
      %570 = vmatprep.subr.bf16.mxu0 0
      %571 = vmatpush1.bf16.msra.mxu0 %v501
      %572 = vmatprep.subr.bf16.mxu0 0
      %573 = vmatpush1.bf16.msra.mxu0 %v502
      %574 = vmatprep.subr.bf16.mxu0 0
      %575 = vmatpush1.bf16.msra.mxu0 %v503
      %576 = vmatprep.subr.bf16.mxu0 0
      %577 = vmatpush1.bf16.msra.mxu0 %v504
      %578 = vmatprep.subr.bf16.mxu0 0
      %579 = vmatpush1.bf16.msra.mxu0 %v505
      %580 = vmatprep.subr.bf16.mxu0 0
      %581 = vmatpush1.bf16.msra.mxu0 %v506
      %582 = vmatprep.subr.bf16.mxu0 0
      %583 = vmatpush1.bf16.msra.mxu0 %v507
      %584 = vmatprep.subr.bf16.mxu0 0
      %585 = vmatpush1.bf16.msra.mxu0 %v508
      %586 = vmatprep.subr.bf16.mxu0 0
      %587 = vmatpush1.bf16.msra.mxu0 %v509
      %588 = vmatprep.subr.bf16.mxu0 0
      %589 = vmatpush1.bf16.msra.mxu0 %v510
      %590 = vmatprep.subr.bf16.mxu0 0
      %591 = vmatpush1.bf16.msra.mxu0 %v511
      %592 = vmatprep.mubr.bf16.mxu0 %v274
      %593 = vmatmul.mubr.bf16.gmra.mrb[0].mxu0 %v273
      %v594 = vpop.f32.mrb[0].mxu0
      %v595 = vadd.f32 %v366, %v594
      %v596 = vpop.f32.mrb[0].mxu0
      %v597 = vpop.f32.mrb[0].mxu0
      %v598 = vadd.f32 %v366, %v597
      %v599 = vpop.f32.mrb[0].mxu0
      %600 = vmatprep.mubr.bf16.mxu0 %v278
      %601 = vmatmul.mubr.bf16.gmra.mrb[0].mxu0 %v277
      %v602 = vpop.f32.mrb[0].mxu0
      %v603 = vadd.f32 %v366, %v602
      %v604 = vpop.f32.mrb[0].mxu0
      %v605 = vpop.f32.mrb[0].mxu0
      %v606 = vadd.f32 %v366, %v605
      %v607 = vpop.f32.mrb[0].mxu0
      %608 = vmatprep.mubr.bf16.mxu0 %v282
      %609 = vmatmul.mubr.bf16.gmra.mrb[0].mxu0 %v281
      %v610 = vpop.f32.mrb[0].mxu0
      %v611 = vadd.f32 %v366, %v610
      %v612 = vpop.f32.mrb[0].mxu0
      %v613 = vpop.f32.mrb[0].mxu0
      %v614 = vadd.f32 %v366, %v613
      %v615 = vpop.f32.mrb[0].mxu0
      %616 = vmatprep.mubr.bf16.mxu0 %v286
      %617 = vmatmul.mubr.bf16.gmra.mrb[0].mxu0 %v285
      %v618 = vpop.f32.mrb[0].mxu0
      %v619 = vadd.f32 %v366, %v618
      %v620 = vpop.f32.mrb[0].mxu0
      %v621 = vpop.f32.mrb[0].mxu0
      %v622 = vadd.f32 %v366, %v621
      %v623 = vpop.f32.mrb[0].mxu0
      %624 = vmatprep.mubr.bf16.mxu0 %v290
      %625 = vmatmul.mubr.bf16.gmra.mrb[0].mxu0 %v289
      %v626 = vpop.f32.mrb[0].mxu0
      %v627 = vadd.f32 %v366, %v626
      %v628 = vpop.f32.mrb[0].mxu0
      %v629 = vpop.f32.mrb[0].mxu0
      %v630 = vadd.f32 %v366, %v629
      %v631 = vpop.f32.mrb[0].mxu0
      %632 = vmatprep.mubr.bf16.mxu0 %v294
      %633 = vmatmul.mubr.bf16.gmra.mrb[0].mxu0 %v293
      %v634 = vpop.f32.mrb[0].mxu0
      %v635 = vadd.f32 %v366, %v634
      %v636 = vpop.f32.mrb[0].mxu0
      %v637 = vpop.f32.mrb[0].mxu0
      %v638 = vpop.f32.mrb[0].mxu0
      %639 = vdwg.mxu0
      %640 = vmatprep.subr.bf16.mxu0 0
      %641 = vmatpush1.bf16.msra.mxu0 %v512
      %642 = vmatprep.subr.bf16.mxu0 0
      %643 = vmatpush1.bf16.msra.mxu0 %v513
      %644 = vmatprep.subr.bf16.mxu0 0
      %645 = vmatpush1.bf16.msra.mxu0 %v514
      %646 = vmatprep.subr.bf16.mxu0 0
      %647 = vmatpush1.bf16.msra.mxu0 %v515
      %648 = vmatprep.subr.bf16.mxu0 0
      %649 = vmatpush1.bf16.msra.mxu0 %v516
      %650 = vmatprep.subr.bf16.mxu0 0
      %651 = vmatpush1.bf16.msra.mxu0 %v517
      %652 = vmatprep.subr.bf16.mxu0 0
      %653 = vmatpush1.bf16.msra.mxu0 %v518
      %654 = vmatprep.subr.bf16.mxu0 0
      %655 = vmatpush1.bf16.msra.mxu0 %v519
      %656 = vmatprep.subr.bf16.mxu0 0
      %657 = vmatpush1.bf16.msra.mxu0 %v520
      %658 = vmatprep.subr.bf16.mxu0 0
      %659 = vmatpush1.bf16.msra.mxu0 %v521
      %660 = vmatprep.subr.bf16.mxu0 0
      %661 = vmatpush1.bf16.msra.mxu0 %v522
      %662 = vmatprep.subr.bf16.mxu0 0
      %663 = vmatpush1.bf16.msra.mxu0 %v523
      %664 = vmatprep.subr.bf16.mxu0 0
      %665 = vmatpush1.bf16.msra.mxu0 %v524
      %666 = vmatprep.subr.bf16.mxu0 0
      %667 = vmatpush1.bf16.msra.mxu0 %v525
      %668 = vmatprep.subr.bf16.mxu0 0
      %669 = vmatpush1.bf16.msra.mxu0 %v526
      %670 = vmatprep.subr.bf16.mxu0 0
      %671 = vmatpush1.bf16.msra.mxu0 %v527
      %672 = vmatprep.mubr.bf16.mxu0 %v276
      %673 = vmatmul.mubr.bf16.gmra.mrb[0].mxu0 %v275
      %v674 = vpop.f32.mrb[0].mxu0
      %v675 = vadd.f32 %v595, %v674
      %v676 = vpop.f32.mrb[0].mxu0
      %v677 = vpop.f32.mrb[0].mxu0
      %v678 = vadd.f32 %v598, %v677
      %v679 = vpop.f32.mrb[0].mxu0
      %680 = vmatprep.mubr.bf16.mxu0 %v280
      %681 = vmatmul.mubr.bf16.gmra.mrb[0].mxu0 %v279
      %v682 = vpop.f32.mrb[0].mxu0
      %v683 = vadd.f32 %v603, %v682
      %v684 = vpop.f32.mrb[0].mxu0
      %v685 = vpop.f32.mrb[0].mxu0
      %v686 = vadd.f32 %v606, %v685
      %v687 = vpop.f32.mrb[0].mxu0
      %688 = vmatprep.mubr.bf16.mxu0 %v284
      %689 = vmatmul.mubr.bf16.gmra.mrb[0].mxu0 %v283
      %v690 = vpop.f32.mrb[0].mxu0
      %v691 = vadd.f32 %v611, %v690
      %v692 = vpop.f32.mrb[0].mxu0
      %v693 = vpop.f32.mrb[0].mxu0
      %v694 = vadd.f32 %v614, %v693
      %v695 = vpop.f32.mrb[0].mxu0
      %696 = vmatprep.mubr.bf16.mxu0 %v288
      %697 = vmatmul.mubr.bf16.gmra.mrb[0].mxu0 %v287
      %v698 = vpop.f32.mrb[0].mxu0
      %v699 = vadd.f32 %v619, %v698
      %v700 = vpop.f32.mrb[0].mxu0
      %v701 = vpop.f32.mrb[0].mxu0
      %v702 = vadd.f32 %v622, %v701
      %v703 = vpop.f32.mrb[0].mxu0
      %704 = vmatprep.mubr.bf16.mxu0 %v292
      %705 = vmatmul.mubr.bf16.gmra.mrb[0].mxu0 %v291
      %v706 = vpop.f32.mrb[0].mxu0
      %v707 = vadd.f32 %v627, %v706
      %v708 = vpop.f32.mrb[0].mxu0
      %v709 = vpop.f32.mrb[0].mxu0
      %v710 = vadd.f32 %v630, %v709
      %v711 = vpop.f32.mrb[0].mxu0
      %712 = vmatprep.mubr.bf16.mxu0 %v296
      %713 = vmatmul.mubr.bf16.gmra.mrb[0].mxu0 %v295
      %v714 = vpop.f32.mrb[0].mxu0
      %v715 = vadd.f32 %v635, %v714
      %v716 = vpop.f32.mrb[0].mxu0
      %v717 = vpop.f32.mrb[0].mxu0
      %v718 = vpop.f32.mrb[0].mxu0
      %719 = vdwg.mxu0
      %v720 = vmax.f32 %v675, 0.0
      %v721 = vmax.f32 %v678, 0.0
      %v722 = vmax.f32 %v683, 0.0
      %v723 = vmax.f32 %v686, 0.0
      %v724 = vmax.f32 %v691, 0.0
      %v725 = vmax.f32 %v694, 0.0
      %v726 = vmax.f32 %v699, 0.0
      %v727 = vmax.f32 %v702, 0.0
      %v728 = vmax.f32 %v707, 0.0
      %v729 = vmax.f32 %v710, 0.0
      %v730 = vmax.f32 %v715, 0.0
      %vm731 = vcmask 523264
      %732 = vst.msk [vmem:[%s226] sm:$0xff] %vm731, %v720
      %733 = vst.msk [vmem:[%s226 + $0x8] sm:$0xff] %vm731, %v721
      %734 = vst.msk [vmem:[%s226 + $0x10] sm:$0xff] %vm731, %v722
      %735 = vst.msk [vmem:[%s226 + $0x18] sm:$0xff] %vm731, %v723
      %736 = vst.msk [vmem:[%s226 + $0x20] sm:$0xff] %vm731, %v724
      %737 = vst.msk [vmem:[%s226 + $0x28] sm:$0xff] %vm731, %v725
      %738 = vst.msk [vmem:[%s226 + $0x30] sm:$0xff] %vm731, %v726
      %739 = vst.msk [vmem:[%s226 + $0x38] sm:$0xff] %vm731, %v727
      %740 = vst.msk [vmem:[%s226 + $0x40] sm:$0xff] %vm731, %v728
      %741 = vst.msk [vmem:[%s226 + $0x48] sm:$0xff] %vm731, %v729
      %742 = vst.msk [vmem:[%s226 + $0x50] sm:$0xff] %vm731, %v730
      %s743 = smul.u32 11, %s18
      %p744 = scmp.lt.s32.totalorder %s743, 21
      %s745 = scalar_select %p744, %s743, 21
      %p746 = scmp.lt.s32.totalorder %s19, 0
      %s747 = scalar_select %p746, %s19, 0
      %s748 = sadd.s32 %s747, %s745
      %s749 = smul.addr %s748, 8
      %s750 = scalar_lea.vmem %s3, %s749
      // Predicated region
      $region33: #{qnetwork_forward.6} parent=31 // pred_check
        %p751 = pneg %p124
      $region34: #{qnetwork_forward.6} parent=31 // pred_check_branch
        %753 = sbr.rel (%p751) target = $region36
      $region35: #{qnetwork_forward.6} parent=31 // pred_region
        %s754 = smul.u32 11, %s18
      $region36: #{qnetwork_forward.6} parent=31 // pred_fallthru
        _
    $region32: #{qnetwork_forward.6} parent=5 // pred_fallthru
      _
    %p755 = scmp.le.s32.totalorder 2, %s9
    // Predicated region
    $region37: #{qnetwork_forward.6} parent=5 // pred_check
      %p756 = pneg %p755
    $region38: #{qnetwork_forward.6} parent=5 // pred_check_branch
      %758 = sbr.rel (%p756) target = $region40
    $region39: #{qnetwork_forward.6} parent=5 // pred_region
      %s759 = ssub.s32 %s9, 2
      // Predicated region
      $region41: #{qnetwork_forward.6} parent=39 // pred_check
        %p760 = pneg %p130
      $region42: #{qnetwork_forward.6} parent=39 // pred_check_branch
        %762 = sbr.rel (%p760) target = $region44
      $region43: #{qnetwork_forward.6} parent=39 // pred_region
        %s763 = smul.u32 11, %s20
        %p764 = scmp.lt.s32.totalorder %s763, 21
        %s765 = scalar_select %p764, %s763, 21
        %p766 = scmp.lt.s32.totalorder %s21, 0
        %s767 = scalar_select %p766, %s21, 0
        %s768 = sadd.s32 %s767, %s765
        %s769 = smul.addr %s768, 8
        %s770 = scalar_lea.vmem %s3, %s769
      $region44: #{qnetwork_forward.6} parent=39 // pred_fallthru
        _
    $region40: #{qnetwork_forward.6} parent=5 // pred_fallthru
      _
  $region6: #{qnetwork_forward.6} parent=0 // loop_footer
    %s13 = sadd.s32 1, %s9
  $region7: #{qnetwork_forward.6} parent=0 // loop_footer_branch
    %8 = sbr.rel target = $region3
  $region8: #{qnetwork_forward.6} parent=0 // loop_exit
    _

// kernel: qnetwork_forward.7
$region0: #{qnetwork_forward.7}
  #allocation0 [shape = 'u32[]', space=smem, size = 0x4, offset = 0x4, fixed_abs, tag = 'smem constant byte address 0x4 - core index']
  #allocation1 [shape = 'u32[144,128]{1,0:T(1,128)}', space=vmem, size = 0x12000, scoped, tag = 'internal scratch']
  %s0 = inlined_call_operand.vmem [shape: f32[112,576], index: 0, kind: input, shape index: {}]
  %s1 = inlined_call_operand.vmem [shape: bf16[576,64], index: 1, kind: input, shape index: {}]
  %s2 = inlined_call_operand.vmem [shape: f32[1,64], index: 2, kind: input, shape index: {}]
  %s3 = inlined_call_operand.vmem [shape: f32[112,64], index: 3, kind: output, shape index: {}]
  %s4 = sld [smem:[#allocation0]]
  $region45: #{qnetwork_forward.7} parent=0
    _
  %s6 = ssub.s32 1, %s4
  %s7 = scalar_select 0, %s6, %s4
  loop: start=0, step=1, limit=4
  $region2: #{qnetwork_forward.7} parent=0 // loop_pre_header
    _
  $region3: #{qnetwork_forward.7} parent=0 // loop_header
    %s9 = sphi 0, %s13
    %p10 = scmp.ge.s32.totalorder %s9, 4
    %s16 = sphi 0, %s28
    %s17 = sphi 0, %s24
    %s18 = sphi 0, %s16
    %s19 = sphi 0, %s17
    %s20 = sphi 0, %s18
    %s21 = sphi 0, %s19
    %s31 = sphi 0, %s33
    %s34 = sphi 0, %s31
    %s35 = sphi 0, %s34
    %s51 = sphi 0, %s35
    %s57 = sphi 0, %s59
    %s60 = sphi 0, %s57
    %s61 = sphi 0, %s60
    %s77 = sphi 0, %s61
    %s83 = sphi 0, %s85
    %s86 = sphi 0, %s83
    %s87 = sphi 0, %s86
    %s103 = sphi 0, %s87
    %s111 = sphi 0, %s113
    %s114 = sphi 0, %s111
    %s115 = sphi 0, %s114
    %s131 = sphi 0, %s115
  $region4: #{qnetwork_forward.7} parent=0 // loop_header_branch
    %12 = sbr.rel (%p10) target = $region8
  $region5: #{qnetwork_forward.7} parent=0 // loop_body
    %s14 = ssub.s32 %s9, 1
    %s15 = ssub.s32 %s9, 2
    %s22 = sadd.s32 1, %s17
    %p23 = scmp.ge.s32.totalorder %s22, 1
    %s24 = scalar_select %p23, 0, %s22
    %s25 = sadd.s32 1, %s16
    %s26 = scalar_select %p23, %s25, %s16
    %p27 = scmp.ge.s32.totalorder %s26, 2
    %s28 = scalar_select %p27, 0, %s26
    %s29 = ssub.s32 %s16, %s28
    %p30 = scmp.eq.s32.totalorder %s29, 0
    %s32 = sadd.s32 %s31, 1
    %s33 = scalar_select %p30, %s31, %s32
    %p36 = pneg %p30
    %p37 = scmp.eq.s32.totalorder %s9, 1
    %p38 = por %p36, %p37
    %p39 = scmp.ne.s32.totalorder %s31, %s34
    %p40 = scmp.eq.s32.totalorder %s9, 0
    %p41 = por %p39, %p40
    %p42 = scmp.ne.s32.totalorder %s31, %s34
    %p43 = scmp.eq.s32.totalorder %s14, 1
    %p44 = por %p42, %p43
    %p45 = scmp.ne.s32.totalorder %s34, %s35
    %p46 = scmp.eq.s32.totalorder %s14, 0
    %p47 = por %p45, %p46
    %p48 = scmp.ne.s32.totalorder %s34, %s35
    %p49 = scmp.eq.s32.totalorder %s15, 1
    %p50 = por %p48, %p49
    %p52 = scmp.ne.s32.totalorder %s35, %s51
    %p53 = scmp.eq.s32.totalorder %s15, 0
    %p54 = por %p52, %p53
    %s55 = ssub.s32 %s17, %s24
    %p56 = scmp.eq.s32.totalorder %s55, 0
    %s58 = sadd.s32 %s57, 1
    %s59 = scalar_select %p56, %s57, %s58
    %p62 = pneg %p56
    %p63 = scmp.eq.s32.totalorder %s9, 1
    %p64 = por %p62, %p63
    %p65 = scmp.ne.s32.totalorder %s57, %s60
    %p66 = scmp.eq.s32.totalorder %s9, 0
    %p67 = por %p65, %p66
    %p68 = scmp.ne.s32.totalorder %s57, %s60
    %p69 = scmp.eq.s32.totalorder %s14, 1
    %p70 = por %p68, %p69
    %p71 = scmp.ne.s32.totalorder %s60, %s61
    %p72 = scmp.eq.s32.totalorder %s14, 0
    %p73 = por %p71, %p72
    %p74 = scmp.ne.s32.totalorder %s60, %s61
    %p75 = scmp.eq.s32.totalorder %s15, 1
    %p76 = por %p74, %p75
    %p78 = scmp.ne.s32.totalorder %s61, %s77
    %p79 = scmp.eq.s32.totalorder %s15, 0
    %p80 = por %p78, %p79
    %s81 = ssub.s32 %s17, %s24
    %p82 = scmp.eq.s32.totalorder %s81, 0
    %s84 = sadd.s32 %s83, 1
    %s85 = scalar_select %p82, %s83, %s84
    %p88 = pneg %p82
    %p89 = scmp.eq.s32.totalorder %s9, 1
    %p90 = por %p88, %p89
    %p91 = scmp.ne.s32.totalorder %s83, %s86
    %p92 = scmp.eq.s32.totalorder %s9, 0
    %p93 = por %p91, %p92
    %p94 = scmp.ne.s32.totalorder %s83, %s86
    %p95 = scmp.eq.s32.totalorder %s14, 1
    %p96 = por %p94, %p95
    %p97 = scmp.ne.s32.totalorder %s86, %s87
    %p98 = scmp.eq.s32.totalorder %s14, 0
    %p99 = por %p97, %p98
    %p100 = scmp.ne.s32.totalorder %s86, %s87
    %p101 = scmp.eq.s32.totalorder %s15, 1
    %p102 = por %p100, %p101
    %p104 = scmp.ne.s32.totalorder %s87, %s103
    %p105 = scmp.eq.s32.totalorder %s15, 0
    %p106 = por %p104, %p105
    %s107 = ssub.s32 %s16, %s28
    %s108 = ssub.s32 %s17, %s24
    %s109 = sor.u32 %s107, %s108
    %p110 = scmp.eq.s32.totalorder %s109, 0
    %s112 = sadd.s32 %s111, 1
    %s113 = scalar_select %p110, %s111, %s112
    %p116 = pneg %p110
    %p117 = scmp.eq.s32.totalorder %s9, 1
    %p118 = por %p116, %p117
    %p119 = scmp.ne.s32.totalorder %s111, %s114
    %p120 = scmp.eq.s32.totalorder %s9, 0
    %p121 = por %p119, %p120
    %p122 = scmp.ne.s32.totalorder %s111, %s114
    %p123 = scmp.eq.s32.totalorder %s14, 1
    %p124 = por %p122, %p123
    %p125 = scmp.ne.s32.totalorder %s114, %s115
    %p126 = scmp.eq.s32.totalorder %s14, 0
    %p127 = por %p125, %p126
    %p128 = scmp.ne.s32.totalorder %s114, %s115
    %p129 = scmp.eq.s32.totalorder %s15, 1
    %p130 = por %p128, %p129
    %p132 = scmp.ne.s32.totalorder %s115, %s131
    %p133 = scmp.eq.s32.totalorder %s15, 0
    %p134 = por %p132, %p133
    %p135 = scmp.le.s32.totalorder 1, %s9
    %p136 = scmp.lt.s32.totalorder %s9, 3
    %p137 = pnand %p135, %p136
    %p138 = pneg %p137
    // Predicated region
    $region9: #{qnetwork_forward.7} parent=5 // pred_check
      _
    $region10: #{qnetwork_forward.7} parent=5 // pred_check_branch
      %140 = sbr.rel (%p137) target = $region12
    $region11: #{qnetwork_forward.7} parent=5 // pred_region
      %s141 = ssub.s32 %s9, 1
      // Predicated region
      $region13: #{qnetwork_forward.7} parent=11 // pred_check
        %p142 = pneg %p73
      $region14: #{qnetwork_forward.7} parent=11 // pred_check_branch
        %144 = sbr.rel (%p142) target = $region16
      $region15: #{qnetwork_forward.7} parent=11 // pred_region
        %p145 = scmp.lt.s32.totalorder %s19, 0
        %s146 = scalar_select %p145, %s19, 0
        %s147 = smul.addr %s146, 4
        %s148 = scalar_lea.vmem %s1, %s147
      $region16: #{qnetwork_forward.7} parent=11 // pred_fallthru
        _
      // Predicated region
      $region17: #{qnetwork_forward.7} parent=11 // pred_check
        %p149 = pneg %p99
      $region18: #{qnetwork_forward.7} parent=11 // pred_check_branch
        %151 = sbr.rel (%p149) target = $region20
      $region19: #{qnetwork_forward.7} parent=11 // pred_region
        %p152 = scmp.lt.s32.totalorder %s19, 0
        %s153 = scalar_select %p152, %s19, 0
        %s154 = scalar_lea.vmem %s2, %s153
      $region20: #{qnetwork_forward.7} parent=11 // pred_fallthru
        _
    $region12: #{qnetwork_forward.7} parent=5 // pred_fallthru
      _
    %p155 = scmp.lt.s32.totalorder %s9, 2
    // Predicated region
    $region21: #{qnetwork_forward.7} parent=5 // pred_check
      %p156 = pneg %p155
    $region22: #{qnetwork_forward.7} parent=5 // pred_check_branch
      %158 = sbr.rel (%p156) target = $region24
    $region23: #{qnetwork_forward.7} parent=5 // pred_region
      // Predicated region
      $region25: #{qnetwork_forward.7} parent=23 // pred_check
        %p159 = pneg %p41
      $region26: #{qnetwork_forward.7} parent=23 // pred_check_branch
        %161 = sbr.rel (%p159) target = $region28
      $region27: #{qnetwork_forward.7} parent=23 // pred_region
        %s162 = smul.u32 7, %s16
        %p163 = scmp.lt.s32.totalorder %s162, 13
        %s164 = scalar_select %p163, %s162, 13
        %s165 = smul.addr %s164, 5
        %s166 = smul.addr %s165, 8
        %s167 = scalar_lea.vmem %s0, %s166
        %s168 = smul.u32 7, %s16
      $region28: #{qnetwork_forward.7} parent=23 // pred_fallthru
        _
    $region24: #{qnetwork_forward.7} parent=5 // pred_fallthru
      _
    %p169 = scmp.le.s32.totalorder 1, %s9
    %p170 = scmp.lt.s32.totalorder %s9, 3
    %p171 = pnand %p169, %p170
    %p172 = pneg %p171
    // Predicated region
    $region29: #{qnetwork_forward.7} parent=5 // pred_check
      _
    $region30: #{qnetwork_forward.7} parent=5 // pred_check_branch
      %174 = sbr.rel (%p171) target = $region32
    $region31: #{qnetwork_forward.7} parent=5 // pred_region
      %s175 = ssub.s32 %s9, 1
      %s176 = smul.u32 7, %s18
      %p177 = scmp.lt.s32.totalorder %s176, 13
      %s178 = scalar_select %p177, %s176, 13
      %s179 = smul.addr %s178, 5
      %s180 = smul.addr %s179, 8
      %s181 = scalar_lea.vmem %s0, %s180
      %p182 = pneg %p47
      %p183 = pneg %p44
      %p184 = scmp.lt.s32.totalorder %s19, 0
      %s185 = scalar_select %p184, %s19, 0
      %s186 = smul.addr %s185, 4
      %s187 = scalar_lea.vmem %s1, %s186
      %p188 = pneg %p73
      %p189 = pneg %p70
      %p190 = scmp.lt.s32.totalorder %s19, 0
      %s191 = scalar_select %p190, %s19, 0
      %s192 = scalar_lea.vmem %s2, %s191
      %p193 = pneg %p99
      %p194 = pneg %p96
      %p195 = pneg %p127
      %p196 = pneg %p124
      %s197 = smul.u32 7, %s18
      %p198 = scmp.lt.s32.totalorder %s197, 13
      %s199 = scalar_select %p198, %s197, 13
      %p200 = scmp.lt.s32.totalorder %s19, 0
      %s201 = scalar_select %p200, %s19, 0
      %s202 = sadd.s32 %s201, %s199
      %s203 = smul.addr %s202, 8
      %s204 = scalar_lea.vmem %s3, %s203
      %s205 = smul.u32 7, %s18
      %p206 = scmp.lt.s32.totalorder %s205, 13
      %s207 = scalar_select %p206, %s205, 13
      %s208 = smul.addr %s207, 5
      %s209 = smul.addr %s208, 8
      %s210 = scalar_lea.vmem %s0, %s209
      %s211 = smul.u32 7, %s18
      %p212 = scmp.lt.s32.totalorder %s19, 0
      %s213 = scalar_select %p212, %s19, 0
      %s214 = smul.addr %s213, 4
      %s215 = scalar_lea.vmem %s1, %s214
      %p216 = scmp.lt.s32.totalorder %s19, 0
      %s217 = scalar_select %p216, %s19, 0
      %s218 = scalar_lea.vmem %s2, %s217
      %s219 = smul.u32 7, %s18
      %p220 = scmp.lt.s32.totalorder %s219, 13
      %s221 = scalar_select %p220, %s219, 13
      %p222 = scmp.lt.s32.totalorder %s19, 0
      %s223 = scalar_select %p222, %s19, 0
      %s224 = sadd.s32 %s223, %s221
      %s225 = smul.addr %s224, 8
      %s226 = scalar_lea.vmem %s3, %s225
      %s227 = smul.u32 7, %s18
      %v229 = vld [vmem:[%s210] sm:$0xff]
      %v230 = vld [vmem:[%s210 + $0x8] sm:$0xff]
      %v231 = vld [vmem:[%s210 + $0x10] sm:$0xff]
      %v232 = vld [vmem:[%s210 + $0x18] sm:$0xff]
      %v233 = vld [vmem:[%s210 + $0x20] sm:$0xff]
      %v234 = vld [vmem:[%s210 + $0x28] sm:$0xff]
      %v235 = vld [vmem:[%s210 + $0x30] sm:$0xff]
      %v236 = vld [vmem:[%s210 + $0x38] sm:$0xff]
      %v237 = vld [vmem:[%s210 + $0x40] sm:$0xff]
      %v238 = vld [vmem:[%s210 + $0x48] sm:$0xff]
      %v239 = vld [vmem:[%s210 + $0x50] sm:$0xff]
      %v240 = vld [vmem:[%s210 + $0x58] sm:$0xff]
      %v241 = vld [vmem:[%s210 + $0x60] sm:$0xff]
      %v242 = vld [vmem:[%s210 + $0x68] sm:$0xff]
      %v243 = vld [vmem:[%s210 + $0x70] sm:$0xff]
      %v244 = vld [vmem:[%s210 + $0x78] sm:$0xff]
      %v245 = vld [vmem:[%s210 + $0x80] sm:$0xff]
      %v246 = vld [vmem:[%s210 + $0x88] sm:$0xff]
      %v247 = vld [vmem:[%s210 + $0x90] sm:$0xff]
      %v248 = vld [vmem:[%s210 + $0x98] sm:$0xff]
      %v249 = vld [vmem:[%s210 + $0xa0] sm:$0xff]
      %v250 = vld [vmem:[%s210 + $0xa8] sm:$0xff]
      %v251 = vld [vmem:[%s210 + $0xb0] sm:$0xff]
      %v252 = vld [vmem:[%s210 + $0xb8] sm:$0xff]
      %v253 = vld [vmem:[%s210 + $0xc0] sm:$0xff]
      %v254 = vld [vmem:[%s210 + $0xc8] sm:$0xff]
      %v255 = vld [vmem:[%s210 + $0xd0] sm:$0xff]
      %v256 = vld [vmem:[%s210 + $0xd8] sm:$0xff]
      %v257 = vld [vmem:[%s210 + $0xe0] sm:$0xff]
      %v258 = vld [vmem:[%s210 + $0xe8] sm:$0xff]
      %v259 = vld [vmem:[%s210 + $0xf0] sm:$0xff]
      %v260 = vld [vmem:[%s210 + $0xf8] sm:$0xff]
      %v261 = vld [vmem:[%s210 + $0x100] sm:$0xff]
      %v262 = vld [vmem:[%s210 + $0x108] sm:$0xff]
      %v263 = vld [vmem:[%s210 + $0x110] sm:$0xff]
      %v264 = vpack.c.bf16 %v234, %v229
      %v265 = vpack.c.bf16 %v235, %v230
      %v266 = vpack.c.bf16 %v236, %v231
      %v267 = vpack.c.bf16 %v237, %v232
      %v268 = vpack.c.bf16 %v238, %v233
      %v269 = vpack.c.bf16 %v244, %v239
      %v270 = vpack.c.bf16 %v245, %v240
      %v271 = vpack.c.bf16 %v246, %v241
      %v272 = vpack.c.bf16 %v247, %v242
      %v273 = vpack.c.bf16 %v248, %v243
      %v274 = vpack.c.bf16 %v254, %v249
      %v275 = vpack.c.bf16 %v255, %v250
      %v276 = vpack.c.bf16 %v256, %v251
      %v277 = vpack.c.bf16 %v257, %v252
      %v278 = vpack.c.bf16 %v258, %v253
      %v279 = vpack.c.bf16 %v259, %v259
      %v280 = vpack.c.bf16 %v260, %v260
      %v281 = vpack.c.bf16 %v261, %v261
      %v282 = vpack.c.bf16 %v262, %v262
      %v283 = vpack.c.bf16 %v263, %v263
      %v284 = vld [vmem:[%s215] sm:$0xf]
      %v285 = vld [vmem:[%s215 + $0x4] sm:$0xf]
      %v286 = vld [vmem:[%s215 + $0x8] sm:$0xf]
      %v287 = vld [vmem:[%s215 + $0xc] sm:$0xf]
      %v288 = vld [vmem:[%s215 + $0x10] sm:$0xf]
      %v289 = vld [vmem:[%s215 + $0x14] sm:$0xf]
      %v290 = vld [vmem:[%s215 + $0x18] sm:$0xf]
      %v291 = vld [vmem:[%s215 + $0x1c] sm:$0xf]
      %v292 = vld [vmem:[%s215 + $0x20] sm:$0xf]
      %v293 = vld [vmem:[%s215 + $0x24] sm:$0xf]
      %v294 = vld [vmem:[%s215 + $0x28] sm:$0xf]
      %v295 = vld [vmem:[%s215 + $0x2c] sm:$0xf]
      %v296 = vld [vmem:[%s215 + $0x30] sm:$0xf]
      %v297 = vld [vmem:[%s215 + $0x34] sm:$0xf]
      %v298 = vld [vmem:[%s215 + $0x38] sm:$0xf]
      %v299 = vld [vmem:[%s215 + $0x3c] sm:$0xf]
      %v300 = vld [vmem:[%s215 + $0x40] sm:$0xf]
      %v301 = vld [vmem:[%s215 + $0x44] sm:$0xf]
      %v302 = vld [vmem:[%s215 + $0x48] sm:$0xf]
      %v303 = vld [vmem:[%s215 + $0x4c] sm:$0xf]
      %v304 = vld [vmem:[%s215 + $0x50] sm:$0xf]
      %v305 = vld [vmem:[%s215 + $0x54] sm:$0xf]
      %v306 = vld [vmem:[%s215 + $0x58] sm:$0xf]
      %v307 = vld [vmem:[%s215 + $0x5c] sm:$0xf]
      %v308 = vld [vmem:[%s215 + $0x60] sm:$0xf]
      %v309 = vld [vmem:[%s215 + $0x64] sm:$0xf]
      %v310 = vld [vmem:[%s215 + $0x68] sm:$0xf]
      %v311 = vld [vmem:[%s215 + $0x6c] sm:$0xf]
      %v312 = vld [vmem:[%s215 + $0x70] sm:$0xf]
      %v313 = vld [vmem:[%s215 + $0x74] sm:$0xf]
      %v314 = vld [vmem:[%s215 + $0x78] sm:$0xf]
      %v315 = vld [vmem:[%s215 + $0x7c] sm:$0xf]
      %v316 = vld [vmem:[%s215 + $0x80] sm:$0xf]
      %v317 = vld [vmem:[%s215 + $0x84] sm:$0xf]
      %v318 = vld [vmem:[%s215 + $0x88] sm:$0xf]
      %v319 = vld [vmem:[%s215 + $0x8c] sm:$0xf]
      %v320 = vld [vmem:[%s215 + $0x90] sm:$0xf]
      %v321 = vld [vmem:[%s215 + $0x94] sm:$0xf]
      %v322 = vld [vmem:[%s215 + $0x98] sm:$0xf]
      %v323 = vld [vmem:[%s215 + $0x9c] sm:$0xf]
      %v324 = vld [vmem:[%s215 + $0xa0] sm:$0xf]
      %v325 = vld [vmem:[%s215 + $0xa4] sm:$0xf]
      %v326 = vld [vmem:[%s215 + $0xa8] sm:$0xf]
      %v327 = vld [vmem:[%s215 + $0xac] sm:$0xf]
      %v328 = vld [vmem:[%s215 + $0xb0] sm:$0xf]
      %v329 = vld [vmem:[%s215 + $0xb4] sm:$0xf]
      %v330 = vld [vmem:[%s215 + $0xb8] sm:$0xf]
      %v331 = vld [vmem:[%s215 + $0xbc] sm:$0xf]
      %v332 = vld [vmem:[%s215 + $0xc0] sm:$0xf]
      %v333 = vld [vmem:[%s215 + $0xc4] sm:$0xf]
      %v334 = vld [vmem:[%s215 + $0xc8] sm:$0xf]
      %v335 = vld [vmem:[%s215 + $0xcc] sm:$0xf]
      %v336 = vld [vmem:[%s215 + $0xd0] sm:$0xf]
      %v337 = vld [vmem:[%s215 + $0xd4] sm:$0xf]
      %v338 = vld [vmem:[%s215 + $0xd8] sm:$0xf]
      %v339 = vld [vmem:[%s215 + $0xdc] sm:$0xf]
      %v340 = vld [vmem:[%s215 + $0xe0] sm:$0xf]
      %v341 = vld [vmem:[%s215 + $0xe4] sm:$0xf]
      %v342 = vld [vmem:[%s215 + $0xe8] sm:$0xf]
      %v343 = vld [vmem:[%s215 + $0xec] sm:$0xf]
      %v344 = vld [vmem:[%s215 + $0xf0] sm:$0xf]
      %v345 = vld [vmem:[%s215 + $0xf4] sm:$0xf]
      %v346 = vld [vmem:[%s215 + $0xf8] sm:$0xf]
      %v347 = vld [vmem:[%s215 + $0xfc] sm:$0xf]
      %v348 = vld [vmem:[%s215 + $0x100] sm:$0xf]
      %v349 = vld [vmem:[%s215 + $0x104] sm:$0xf]
      %v350 = vld [vmem:[%s215 + $0x108] sm:$0xf]
      %v351 = vld [vmem:[%s215 + $0x10c] sm:$0xf]
      %v352 = vld [vmem:[%s215 + $0x110] sm:$0xf]
      %v353 = vld [vmem:[%s215 + $0x114] sm:$0xf]
      %v354 = vld [vmem:[%s215 + $0x118] sm:$0xf]
      %v355 = vld [vmem:[%s215 + $0x11c] sm:$0xf]
      %v356 = vld [vmem:[%s218] sm:$0x1]
      %v358 = vlaneseq
      %v359 = vshrl.u32 %v358, 7
      %v360 = vsub.s32 0, %v359
      %v361 = vrot.slane %v356, %v360
      %v435 = vunpack.c.l.b16 %v284
      %v436 = vunpack.c.l.b16 %v285
      %v437 = vunpack.c.l.b16 %v286
      %v438 = vunpack.c.l.b16 %v287
      %v439 = vunpack.c.l.b16 %v288
      %v440 = vunpack.c.l.b16 %v289
      %v441 = vunpack.c.l.b16 %v290
      %v442 = vunpack.c.l.b16 %v291
      %v443 = vunpack.c.l.b16 %v292
      %v444 = vunpack.c.l.b16 %v293
      %v445 = vunpack.c.l.b16 %v294
      %v446 = vunpack.c.l.b16 %v295
      %v447 = vunpack.c.l.b16 %v296
      %v448 = vunpack.c.l.b16 %v297
      %v449 = vunpack.c.l.b16 %v298
      %v450 = vunpack.c.l.b16 %v299
      %v451 = vunpack.c.l.b16 %v300
      %v452 = vunpack.c.l.b16 %v301
      %v453 = vunpack.c.l.b16 %v302
      %v454 = vunpack.c.l.b16 %v303
      %v455 = vunpack.c.l.b16 %v304
      %v456 = vunpack.c.l.b16 %v305
      %v457 = vunpack.c.l.b16 %v306
      %v458 = vunpack.c.l.b16 %v307
      %v459 = vunpack.c.l.b16 %v308
      %v460 = vunpack.c.l.b16 %v309
      %v461 = vunpack.c.l.b16 %v310
      %v462 = vunpack.c.l.b16 %v311
      %v463 = vunpack.c.l.b16 %v312
      %v464 = vunpack.c.l.b16 %v313
      %v465 = vunpack.c.l.b16 %v314
      %v466 = vunpack.c.l.b16 %v315
      %v467 = vunpack.c.l.b16 %v316
      %v468 = vunpack.c.l.b16 %v317
      %v469 = vunpack.c.l.b16 %v318
      %v470 = vunpack.c.l.b16 %v319
      %v471 = vunpack.c.l.b16 %v320
      %v472 = vunpack.c.l.b16 %v321
      %v473 = vunpack.c.l.b16 %v322
      %v474 = vunpack.c.l.b16 %v323
      %v475 = vunpack.c.l.b16 %v324
      %v476 = vunpack.c.l.b16 %v325
      %v477 = vunpack.c.l.b16 %v326
      %v478 = vunpack.c.l.b16 %v327
      %v479 = vunpack.c.l.b16 %v328
      %v480 = vunpack.c.l.b16 %v329
      %v481 = vunpack.c.l.b16 %v330
      %v482 = vunpack.c.l.b16 %v331
      %v483 = vunpack.c.l.b16 %v332
      %v484 = vunpack.c.l.b16 %v333
      %v485 = vunpack.c.l.b16 %v334
      %v486 = vunpack.c.l.b16 %v335
      %v487 = vunpack.c.l.b16 %v336
      %v488 = vunpack.c.l.b16 %v337
      %v489 = vunpack.c.l.b16 %v338
      %v490 = vunpack.c.l.b16 %v339
      %v491 = vunpack.c.l.b16 %v340
      %v492 = vunpack.c.l.b16 %v341
      %v493 = vunpack.c.l.b16 %v342
      %v494 = vunpack.c.l.b16 %v343
      %v495 = vunpack.c.l.b16 %v344
      %v496 = vunpack.c.l.b16 %v345
      %v497 = vunpack.c.l.b16 %v346
      %v498 = vunpack.c.l.b16 %v347
      %v499 = vunpack.c.l.b16 %v348
      %v500 = vunpack.c.l.b16 %v349
      %v501 = vunpack.c.l.b16 %v350
      %v502 = vunpack.c.l.b16 %v351
      %v503 = vunpack.c.l.b16 %v352
      %v504 = vunpack.c.l.b16 %v353
      %v505 = vunpack.c.l.b16 %v354
      %v506 = vunpack.c.l.b16 %v355
      %v507 = vpack.c.b16 %v436, %v435
      %v508 = vpack.c.b16 %v438, %v437
      %v509 = vpack.c.b16 %v440, %v439
      %v510 = vpack.c.b16 %v442, %v441
      %v511 = vpack.c.b16 %v444, %v443
      %v512 = vpack.c.b16 %v446, %v445
      %v513 = vpack.c.b16 %v448, %v447
      %v514 = vpack.c.b16 %v450, %v449
      %v515 = vpack.c.b16 %v452, %v451
      %v516 = vpack.c.b16 %v454, %v453
      %v517 = vpack.c.b16 %v456, %v455
      %v518 = vpack.c.b16 %v458, %v457
      %v519 = vpack.c.b16 %v460, %v459
      %v520 = vpack.c.b16 %v462, %v461
      %v521 = vpack.c.b16 %v464, %v463
      %v522 = vpack.c.b16 %v466, %v465
      %v523 = vpack.c.b16 %v468, %v467
      %v524 = vpack.c.b16 %v470, %v469
      %v525 = vpack.c.b16 %v472, %v471
      %v526 = vpack.c.b16 %v474, %v473
      %v527 = vpack.c.b16 %v476, %v475
      %v528 = vpack.c.b16 %v478, %v477
      %v529 = vpack.c.b16 %v480, %v479
      %v530 = vpack.c.b16 %v482, %v481
      %v531 = vpack.c.b16 %v484, %v483
      %v532 = vpack.c.b16 %v486, %v485
      %v533 = vpack.c.b16 %v488, %v487
      %v534 = vpack.c.b16 %v490, %v489
      %v535 = vpack.c.b16 %v492, %v491
      %v536 = vpack.c.b16 %v494, %v493
      %v537 = vpack.c.b16 %v496, %v495
      %v538 = vpack.c.b16 %v498, %v497
      %v539 = vpack.c.b16 %v500, %v499
      %v540 = vpack.c.b16 %v502, %v501
      %v541 = vpack.c.b16 %v504, %v503
      %v542 = vpack.c.b16 %v506, %v505
      %vm579 = vcmask 523264
      %v581 = vsel %vm579, %v268, 0
      %v584 = vsel %vm579, %v273, 0
      %v587 = vsel %vm579, %v278, 0
      %v590 = vsel %vm579, %v283, 0
      %592 = vmatprep.subr.bf16.mxu0 0
      %593 = vmatpush1.bf16.msra.mxu0 %v507
      %594 = vmatprep.subr.bf16.mxu0 0
      %595 = vmatpush1.bf16.msra.mxu0 %v508
      %596 = vmatprep.subr.bf16.mxu0 0
      %597 = vmatpush1.bf16.msra.mxu0 %v509
      %598 = vmatprep.subr.bf16.mxu0 0
      %599 = vmatpush1.bf16.msra.mxu0 %v510
      %600 = vmatprep.subr.bf16.mxu0 0
      %601 = vmatpush1.bf16.msra.mxu0 %v511
      %602 = vmatprep.subr.bf16.mxu0 0
      %603 = vmatpush1.bf16.msra.mxu0 %v512
      %604 = vmatprep.subr.bf16.mxu0 0
      %605 = vmatpush1.bf16.msra.mxu0 %v513
      %606 = vmatprep.subr.bf16.mxu0 0
      %607 = vmatpush1.bf16.msra.mxu0 %v514
      %608 = vmatprep.subr.bf16.mxu0 0
      %609 = vmatpush1.bf16.msra.mxu0 %v515
      %610 = vmatprep.subr.bf16.mxu0 0
      %611 = vmatpush1.bf16.msra.mxu0 %v516
      %612 = vmatprep.subr.bf16.mxu0 0
      %613 = vmatpush1.bf16.msra.mxu0 %v517
      %614 = vmatprep.subr.bf16.mxu0 0
      %615 = vmatpush1.bf16.msra.mxu0 %v518
      %616 = vmatprep.subr.bf16.mxu0 0
      %617 = vmatpush1.bf16.msra.mxu0 %v519
      %618 = vmatprep.subr.bf16.mxu0 0
      %619 = vmatpush1.bf16.msra.mxu0 %v520
      %620 = vmatprep.subr.bf16.mxu0 0
      %621 = vmatpush1.bf16.msra.mxu0 %v521
      %622 = vmatprep.subr.bf16.mxu0 0
      %623 = vmatpush1.bf16.msra.mxu0 %v522
      %624 = vmatprep.mubr.bf16.mxu0 %v265
      %625 = vmatmul.mubr.bf16.gmra.mrb[0].mxu0 %v264
      %v626 = vpop.f32.mrb[0].mxu0
      %v627 = vadd.f32 %v361, %v626
      %v628 = vpop.f32.mrb[0].mxu0
      %v629 = vpop.f32.mrb[0].mxu0
      %v630 = vadd.f32 %v361, %v629
      %v631 = vpop.f32.mrb[0].mxu0
      %632 = vmatprep.mubr.bf16.mxu0 %v270
      %633 = vmatmul.mubr.bf16.gmra.mrb[0].mxu0 %v269
      %v634 = vpop.f32.mrb[0].mxu0
      %v635 = vadd.f32 %v361, %v634
      %v636 = vpop.f32.mrb[0].mxu0
      %v637 = vpop.f32.mrb[0].mxu0
      %v638 = vadd.f32 %v361, %v637
      %v639 = vpop.f32.mrb[0].mxu0
      %640 = vmatprep.mubr.bf16.mxu0 %v275
      %641 = vmatmul.mubr.bf16.gmra.mrb[0].mxu0 %v274
      %v642 = vpop.f32.mrb[0].mxu0
      %v643 = vadd.f32 %v361, %v642
      %v644 = vpop.f32.mrb[0].mxu0
      %v645 = vpop.f32.mrb[0].mxu0
      %v646 = vadd.f32 %v361, %v645
      %v647 = vpop.f32.mrb[0].mxu0
      %648 = vmatprep.mubr.bf16.mxu0 %v280
      %649 = vmatmul.mubr.bf16.gmra.mrb[0].mxu0 %v279
      %v650 = vpop.f32.mrb[0].mxu0
      %v651 = vadd.f32 %v361, %v650
      %v652 = vpop.f32.mrb[0].mxu0
      %v653 = vpop.f32.mrb[0].mxu0
      %v654 = vpop.f32.mrb[0].mxu0
      %655 = vdwg.mxu0
      %656 = vmatprep.subr.bf16.mxu0 0
      %657 = vmatpush1.bf16.msra.mxu0 %v523
      %658 = vmatprep.subr.bf16.mxu0 0
      %659 = vmatpush1.bf16.msra.mxu0 %v524
      %660 = vmatprep.subr.bf16.mxu0 0
      %661 = vmatpush1.bf16.msra.mxu0 %v525
      %662 = vmatprep.subr.bf16.mxu0 0
      %663 = vmatpush1.bf16.msra.mxu0 %v526
      %664 = vmatprep.subr.bf16.mxu0 0
      %665 = vmatpush1.bf16.msra.mxu0 %v527
      %666 = vmatprep.subr.bf16.mxu0 0
      %667 = vmatpush1.bf16.msra.mxu0 %v528
      %668 = vmatprep.subr.bf16.mxu0 0
      %669 = vmatpush1.bf16.msra.mxu0 %v529
      %670 = vmatprep.subr.bf16.mxu0 0
      %671 = vmatpush1.bf16.msra.mxu0 %v530
      %672 = vmatprep.subr.bf16.mxu0 0
      %673 = vmatpush1.bf16.msra.mxu0 %v531
      %674 = vmatprep.subr.bf16.mxu0 0
      %675 = vmatpush1.bf16.msra.mxu0 %v532
      %676 = vmatprep.subr.bf16.mxu0 0
      %677 = vmatpush1.bf16.msra.mxu0 %v533
      %678 = vmatprep.subr.bf16.mxu0 0
      %679 = vmatpush1.bf16.msra.mxu0 %v534
      %680 = vmatprep.subr.bf16.mxu0 0
      %681 = vmatpush1.bf16.msra.mxu0 %v535
      %682 = vmatprep.subr.bf16.mxu0 0
      %683 = vmatpush1.bf16.msra.mxu0 %v536
      %684 = vmatprep.subr.bf16.mxu0 0
      %685 = vmatpush1.bf16.msra.mxu0 %v537
      %686 = vmatprep.subr.bf16.mxu0 0
      %687 = vmatpush1.bf16.msra.mxu0 %v538
      %688 = vmatprep.mubr.bf16.mxu0 %v267
      %689 = vmatmul.mubr.bf16.gmra.mrb[0].mxu0 %v266
      %v690 = vpop.f32.mrb[0].mxu0
      %v691 = vadd.f32 %v627, %v690
      %v692 = vpop.f32.mrb[0].mxu0
      %v693 = vpop.f32.mrb[0].mxu0
      %v694 = vadd.f32 %v630, %v693
      %v695 = vpop.f32.mrb[0].mxu0
      %696 = vmatprep.mubr.bf16.mxu0 %v272
      %697 = vmatmul.mubr.bf16.gmra.mrb[0].mxu0 %v271
      %v698 = vpop.f32.mrb[0].mxu0
      %v699 = vadd.f32 %v635, %v698
      %v700 = vpop.f32.mrb[0].mxu0
      %v701 = vpop.f32.mrb[0].mxu0
      %v702 = vadd.f32 %v638, %v701
      %v703 = vpop.f32.mrb[0].mxu0
      %704 = vmatprep.mubr.bf16.mxu0 %v277
      %705 = vmatmul.mubr.bf16.gmra.mrb[0].mxu0 %v276
      %v706 = vpop.f32.mrb[0].mxu0
      %v707 = vadd.f32 %v643, %v706
      %v708 = vpop.f32.mrb[0].mxu0
      %v709 = vpop.f32.mrb[0].mxu0
      %v710 = vadd.f32 %v646, %v709
      %v711 = vpop.f32.mrb[0].mxu0
      %712 = vmatprep.mubr.bf16.mxu0 %v282
      %713 = vmatmul.mubr.bf16.gmra.mrb[0].mxu0 %v281
      %v714 = vpop.f32.mrb[0].mxu0
      %v715 = vadd.f32 %v651, %v714
      %v716 = vpop.f32.mrb[0].mxu0
      %v717 = vpop.f32.mrb[0].mxu0
      %v718 = vpop.f32.mrb[0].mxu0
      %719 = vdwg.mxu0
      %720 = vmatprep.subr.bf16.mxu0 0
      %721 = vmatpush1.bf16.msra.mxu0 %v539
      %722 = vmatprep.subr.bf16.mxu0 0
      %723 = vmatpush1.bf16.msra.mxu0 %v540
      %724 = vmatprep.subr.bf16.mxu0 0
      %725 = vmatpush1.bf16.msra.mxu0 %v541
      %726 = vmatprep.subr.bf16.mxu0 0
      %727 = vmatpush1.bf16.msra.mxu0 %v542
      %728 = vmatprep.subr.bf16.mxu0 0
      %729 = vmatpush1.bf16.msra.mxu0 0
      %730 = vmatprep.subr.bf16.mxu0 0
      %731 = vmatpush1.bf16.msra.mxu0 0
      %732 = vmatprep.subr.bf16.mxu0 0
      %733 = vmatpush1.bf16.msra.mxu0 0
      %734 = vmatprep.subr.bf16.mxu0 0
      %735 = vmatpush1.bf16.msra.mxu0 0
      %736 = vmatprep.subr.bf16.mxu0 0
      %737 = vmatpush1.bf16.msra.mxu0 0
      %738 = vmatprep.subr.bf16.mxu0 0
      %739 = vmatpush1.bf16.msra.mxu0 0
      %740 = vmatprep.subr.bf16.mxu0 0
      %741 = vmatpush1.bf16.msra.mxu0 0
      %742 = vmatprep.subr.bf16.mxu0 0
      %743 = vmatpush1.bf16.msra.mxu0 0
      %744 = vmatprep.subr.bf16.mxu0 0
      %745 = vmatpush1.bf16.msra.mxu0 0
      %746 = vmatprep.subr.bf16.mxu0 0
      %747 = vmatpush1.bf16.msra.mxu0 0
      %748 = vmatprep.subr.bf16.mxu0 0
      %749 = vmatpush1.bf16.msra.mxu0 0
      %750 = vmatprep.subr.bf16.mxu0 0
      %751 = vmatpush1.bf16.msra.mxu0 0
      %752 = vmatprep.mubr.bf16.mxu0 0
      %753 = vmatmul.mubr.bf16.gmra.mrb[0].mxu0 %v581
      %v754 = vpop.f32.mrb[0].mxu0
      %v755 = vadd.f32 %v691, %v754
      %v756 = vpop.f32.mrb[0].mxu0
      %v757 = vpop.f32.mrb[0].mxu0
      %v758 = vadd.f32 %v694, %v757
      %v759 = vpop.f32.mrb[0].mxu0
      %760 = vmatprep.mubr.bf16.mxu0 0
      %761 = vmatmul.mubr.bf16.gmra.mrb[0].mxu0 %v584
      %v762 = vpop.f32.mrb[0].mxu0
      %v763 = vadd.f32 %v699, %v762
      %v764 = vpop.f32.mrb[0].mxu0
      %v765 = vpop.f32.mrb[0].mxu0
      %v766 = vadd.f32 %v702, %v765
      %v767 = vpop.f32.mrb[0].mxu0
      %768 = vmatprep.mubr.bf16.mxu0 0
      %769 = vmatmul.mubr.bf16.gmra.mrb[0].mxu0 %v587
      %v770 = vpop.f32.mrb[0].mxu0
      %v771 = vadd.f32 %v707, %v770
      %v772 = vpop.f32.mrb[0].mxu0
      %v773 = vpop.f32.mrb[0].mxu0
      %v774 = vadd.f32 %v710, %v773
      %v775 = vpop.f32.mrb[0].mxu0
      %776 = vmatprep.mubr.bf16.mxu0 0
      %777 = vmatmul.mubr.bf16.gmra.mrb[0].mxu0 %v590
      %v778 = vpop.f32.mrb[0].mxu0
      %v779 = vadd.f32 %v715, %v778
      %v780 = vpop.f32.mrb[0].mxu0
      %v781 = vpop.f32.mrb[0].mxu0
      %v782 = vpop.f32.mrb[0].mxu0
      %783 = vdwg.mxu0
      %v784 = vmax.f32 %v755, 0.0
      %v785 = vmax.f32 %v758, 0.0
      %v786 = vmax.f32 %v763, 0.0
      %v787 = vmax.f32 %v766, 0.0
      %v788 = vmax.f32 %v771, 0.0
      %v789 = vmax.f32 %v774, 0.0
      %v790 = vmax.f32 %v779, 0.0
      %791 = vst.msk [vmem:[%s226] sm:$0xff] %vm579, %v784
      %792 = vst.msk [vmem:[%s226 + $0x8] sm:$0xff] %vm579, %v785
      %793 = vst.msk [vmem:[%s226 + $0x10] sm:$0xff] %vm579, %v786
      %794 = vst.msk [vmem:[%s226 + $0x18] sm:$0xff] %vm579, %v787
      %795 = vst.msk [vmem:[%s226 + $0x20] sm:$0xff] %vm579, %v788
      %796 = vst.msk [vmem:[%s226 + $0x28] sm:$0xff] %vm579, %v789
      %797 = vst.msk [vmem:[%s226 + $0x30] sm:$0xff] %vm579, %v790
      %s798 = smul.u32 7, %s18
      %p799 = scmp.lt.s32.totalorder %s798, 13
      %s800 = scalar_select %p799, %s798, 13
      %p801 = scmp.lt.s32.totalorder %s19, 0
      %s802 = scalar_select %p801, %s19, 0
      %s803 = sadd.s32 %s802, %s800
      %s804 = smul.addr %s803, 8
      %s805 = scalar_lea.vmem %s3, %s804
      // Predicated region
      $region33: #{qnetwork_forward.7} parent=31 // pred_check
        %p806 = pneg %p124
      $region34: #{qnetwork_forward.7} parent=31 // pred_check_branch
        %808 = sbr.rel (%p806) target = $region36
      $region35: #{qnetwork_forward.7} parent=31 // pred_region
        %s809 = smul.u32 7, %s18
      $region36: #{qnetwork_forward.7} parent=31 // pred_fallthru
        _
    $region32: #{qnetwork_forward.7} parent=5 // pred_fallthru
      _
    %p810 = scmp.le.s32.totalorder 2, %s9
    // Predicated region
    $region37: #{qnetwork_forward.7} parent=5 // pred_check
      %p811 = pneg %p810
    $region38: #{qnetwork_forward.7} parent=5 // pred_check_branch
      %813 = sbr.rel (%p811) target = $region40
    $region39: #{qnetwork_forward.7} parent=5 // pred_region
      %s814 = ssub.s32 %s9, 2
      // Predicated region
      $region41: #{qnetwork_forward.7} parent=39 // pred_check
        %p815 = pneg %p130
      $region42: #{qnetwork_forward.7} parent=39 // pred_check_branch
        %817 = sbr.rel (%p815) target = $region44
      $region43: #{qnetwork_forward.7} parent=39 // pred_region
        %s818 = smul.u32 7, %s20
        %p819 = scmp.lt.s32.totalorder %s818, 13
        %s820 = scalar_select %p819, %s818, 13
        %p821 = scmp.lt.s32.totalorder %s21, 0
        %s822 = scalar_select %p821, %s21, 0
        %s823 = sadd.s32 %s822, %s820
        %s824 = smul.addr %s823, 8
        %s825 = scalar_lea.vmem %s3, %s824
      $region44: #{qnetwork_forward.7} parent=39 // pred_fallthru
        _
    $region40: #{qnetwork_forward.7} parent=5 // pred_fallthru
      _
  $region6: #{qnetwork_forward.7} parent=0 // loop_footer
    %s13 = sadd.s32 1, %s9
  $region7: #{qnetwork_forward.7} parent=0 // loop_footer_branch
    %8 = sbr.rel target = $region3
  $region8: #{qnetwork_forward.7} parent=0 // loop_exit
    _

// kernel: qnetwork_forward.9
$region0: #{qnetwork_forward.9}
  #allocation0 [shape = 'u32[]', space=smem, size = 0x4, offset = 0x4, fixed_abs, tag = 'smem constant byte address 0x4 - core index']
  #allocation1 [shape = 'u32[144,128]{1,0:T(1,128)}', space=vmem, size = 0x12000, scoped, tag = 'internal scratch']
  %s0 = inlined_call_operand.vmem [shape: f32[8,512], index: 0, kind: input, shape index: {}]
  %s1 = inlined_call_operand.vmem [shape: bf16[512,6], index: 1, kind: input, shape index: {}]
  %s2 = inlined_call_operand.vmem [shape: f32[1,6], index: 2, kind: input, shape index: {}]
  %s3 = inlined_call_operand.vmem [shape: f32[8,6], index: 3, kind: output, shape index: {}]
  %s4 = sld [smem:[#allocation0]]
  $region22: #{qnetwork_forward.9} parent=0
    _
  %s6 = ssub.s32 1, %s4
  %s7 = scalar_select 0, %s6, %s4
  // Predicated region
  $region2: #{qnetwork_forward.9} parent=0 // pred_check
    _
  $region3: #{qnetwork_forward.9} parent=0 // pred_check_branch
    %9 = sbr.rel (0) target = $region5
  $region4: #{qnetwork_forward.9} parent=0 // pred_region
    _
  $region5: #{qnetwork_forward.9} parent=0 // pred_fallthru
    _
  // Predicated region
  $region6: #{qnetwork_forward.9} parent=0 // pred_check
    _
  $region7: #{qnetwork_forward.9} parent=0 // pred_check_branch
    %11 = sbr.rel (0) target = $region9
  $region8: #{qnetwork_forward.9} parent=0 // pred_region
    _
  $region9: #{qnetwork_forward.9} parent=0 // pred_fallthru
    _
  // Predicated region
  $region10: #{qnetwork_forward.9} parent=0 // pred_check
    _
  $region11: #{qnetwork_forward.9} parent=0 // pred_check_branch
    %13 = sbr.rel (0) target = $region13
  $region12: #{qnetwork_forward.9} parent=0 // pred_region
    _
  $region13: #{qnetwork_forward.9} parent=0 // pred_fallthru
    _
  %v15 = vld [vmem:[%s0] sm:$0xff]
  %v16 = vld [vmem:[%s0 + $0x8] sm:$0xff]
  %v17 = vld [vmem:[%s0 + $0x10] sm:$0xff]
  %v18 = vld [vmem:[%s0 + $0x18] sm:$0xff]
  %v19 = vpack.c.bf16 %v15, %v15
  %v20 = vpack.c.bf16 %v16, %v16
  %v21 = vpack.c.bf16 %v17, %v17
  %v22 = vpack.c.bf16 %v18, %v18
  %v23 = vld [vmem:[%s1] sm:$0xf]
  %v24 = vld [vmem:[%s1 + $0x4] sm:$0xf]
  %v25 = vld [vmem:[%s1 + $0x8] sm:$0xf]
  %v26 = vld [vmem:[%s1 + $0xc] sm:$0xf]
  %v27 = vld [vmem:[%s1 + $0x10] sm:$0xf]
  %v28 = vld [vmem:[%s1 + $0x14] sm:$0xf]
  %v29 = vld [vmem:[%s1 + $0x18] sm:$0xf]
  %v30 = vld [vmem:[%s1 + $0x1c] sm:$0xf]
  %v31 = vld [vmem:[%s1 + $0x20] sm:$0xf]
  %v32 = vld [vmem:[%s1 + $0x24] sm:$0xf]
  %v33 = vld [vmem:[%s1 + $0x28] sm:$0xf]
  %v34 = vld [vmem:[%s1 + $0x2c] sm:$0xf]
  %v35 = vld [vmem:[%s1 + $0x30] sm:$0xf]
  %v36 = vld [vmem:[%s1 + $0x34] sm:$0xf]
  %v37 = vld [vmem:[%s1 + $0x38] sm:$0xf]
  %v38 = vld [vmem:[%s1 + $0x3c] sm:$0xf]
  %v39 = vld [vmem:[%s1 + $0x40] sm:$0xf]
  %v40 = vld [vmem:[%s1 + $0x44] sm:$0xf]
  %v41 = vld [vmem:[%s1 + $0x48] sm:$0xf]
  %v42 = vld [vmem:[%s1 + $0x4c] sm:$0xf]
  %v43 = vld [vmem:[%s1 + $0x50] sm:$0xf]
  %v44 = vld [vmem:[%s1 + $0x54] sm:$0xf]
  %v45 = vld [vmem:[%s1 + $0x58] sm:$0xf]
  %v46 = vld [vmem:[%s1 + $0x5c] sm:$0xf]
  %v47 = vld [vmem:[%s1 + $0x60] sm:$0xf]
  %v48 = vld [vmem:[%s1 + $0x64] sm:$0xf]
  %v49 = vld [vmem:[%s1 + $0x68] sm:$0xf]
  %v50 = vld [vmem:[%s1 + $0x6c] sm:$0xf]
  %v51 = vld [vmem:[%s1 + $0x70] sm:$0xf]
  %v52 = vld [vmem:[%s1 + $0x74] sm:$0xf]
  %v53 = vld [vmem:[%s1 + $0x78] sm:$0xf]
  %v54 = vld [vmem:[%s1 + $0x7c] sm:$0xf]
  %v55 = vld [vmem:[%s1 + $0x80] sm:$0xf]
  %v56 = vld [vmem:[%s1 + $0x84] sm:$0xf]
  %v57 = vld [vmem:[%s1 + $0x88] sm:$0xf]
  %v58 = vld [vmem:[%s1 + $0x8c] sm:$0xf]
  %v59 = vld [vmem:[%s1 + $0x90] sm:$0xf]
  %v60 = vld [vmem:[%s1 + $0x94] sm:$0xf]
  %v61 = vld [vmem:[%s1 + $0x98] sm:$0xf]
  %v62 = vld [vmem:[%s1 + $0x9c] sm:$0xf]
  %v63 = vld [vmem:[%s1 + $0xa0] sm:$0xf]
  %v64 = vld [vmem:[%s1 + $0xa4] sm:$0xf]
  %v65 = vld [vmem:[%s1 + $0xa8] sm:$0xf]
  %v66 = vld [vmem:[%s1 + $0xac] sm:$0xf]
  %v67 = vld [vmem:[%s1 + $0xb0] sm:$0xf]
  %v68 = vld [vmem:[%s1 + $0xb4] sm:$0xf]
  %v69 = vld [vmem:[%s1 + $0xb8] sm:$0xf]
  %v70 = vld [vmem:[%s1 + $0xbc] sm:$0xf]
  %v71 = vld [vmem:[%s1 + $0xc0] sm:$0xf]
  %v72 = vld [vmem:[%s1 + $0xc4] sm:$0xf]
  %v73 = vld [vmem:[%s1 + $0xc8] sm:$0xf]
  %v74 = vld [vmem:[%s1 + $0xcc] sm:$0xf]
  %v75 = vld [vmem:[%s1 + $0xd0] sm:$0xf]
  %v76 = vld [vmem:[%s1 + $0xd4] sm:$0xf]
  %v77 = vld [vmem:[%s1 + $0xd8] sm:$0xf]
  %v78 = vld [vmem:[%s1 + $0xdc] sm:$0xf]
  %v79 = vld [vmem:[%s1 + $0xe0] sm:$0xf]
  %v80 = vld [vmem:[%s1 + $0xe4] sm:$0xf]
  %v81 = vld [vmem:[%s1 + $0xe8] sm:$0xf]
  %v82 = vld [vmem:[%s1 + $0xec] sm:$0xf]
  %v83 = vld [vmem:[%s1 + $0xf0] sm:$0xf]
  %v84 = vld [vmem:[%s1 + $0xf4] sm:$0xf]
  %v85 = vld [vmem:[%s1 + $0xf8] sm:$0xf]
  %v86 = vld [vmem:[%s1 + $0xfc] sm:$0xf]
  %v87 = vld [vmem:[%s2] sm:$0x1]
  %v89 = vlaneseq
  %v90 = vshrl.u32 %v89, 7
  %v91 = vsub.s32 0, %v90
  %v92 = vrot.slane %v87, %v91
  %v158 = vunpack.c.l.b16 %v23
  %v159 = vunpack.c.l.b16 %v24
  %v160 = vunpack.c.l.b16 %v25
  %v161 = vunpack.c.l.b16 %v26
  %v162 = vunpack.c.l.b16 %v27
  %v163 = vunpack.c.l.b16 %v28
  %v164 = vunpack.c.l.b16 %v29
  %v165 = vunpack.c.l.b16 %v30
  %v166 = vunpack.c.l.b16 %v31
  %v167 = vunpack.c.l.b16 %v32
  %v168 = vunpack.c.l.b16 %v33
  %v169 = vunpack.c.l.b16 %v34
  %v170 = vunpack.c.l.b16 %v35
  %v171 = vunpack.c.l.b16 %v36
  %v172 = vunpack.c.l.b16 %v37
  %v173 = vunpack.c.l.b16 %v38
  %v174 = vunpack.c.l.b16 %v39
  %v175 = vunpack.c.l.b16 %v40
  %v176 = vunpack.c.l.b16 %v41
  %v177 = vunpack.c.l.b16 %v42
  %v178 = vunpack.c.l.b16 %v43
  %v179 = vunpack.c.l.b16 %v44
  %v180 = vunpack.c.l.b16 %v45
  %v181 = vunpack.c.l.b16 %v46
  %v182 = vunpack.c.l.b16 %v47
  %v183 = vunpack.c.l.b16 %v48
  %v184 = vunpack.c.l.b16 %v49
  %v185 = vunpack.c.l.b16 %v50
  %v186 = vunpack.c.l.b16 %v51
  %v187 = vunpack.c.l.b16 %v52
  %v188 = vunpack.c.l.b16 %v53
  %v189 = vunpack.c.l.b16 %v54
  %v190 = vunpack.c.l.b16 %v55
  %v191 = vunpack.c.l.b16 %v56
  %v192 = vunpack.c.l.b16 %v57
  %v193 = vunpack.c.l.b16 %v58
  %v194 = vunpack.c.l.b16 %v59
  %v195 = vunpack.c.l.b16 %v60
  %v196 = vunpack.c.l.b16 %v61
  %v197 = vunpack.c.l.b16 %v62
  %v198 = vunpack.c.l.b16 %v63
  %v199 = vunpack.c.l.b16 %v64
  %v200 = vunpack.c.l.b16 %v65
  %v201 = vunpack.c.l.b16 %v66
  %v202 = vunpack.c.l.b16 %v67
  %v203 = vunpack.c.l.b16 %v68
  %v204 = vunpack.c.l.b16 %v69
  %v205 = vunpack.c.l.b16 %v70
  %v206 = vunpack.c.l.b16 %v71
  %v207 = vunpack.c.l.b16 %v72
  %v208 = vunpack.c.l.b16 %v73
  %v209 = vunpack.c.l.b16 %v74
  %v210 = vunpack.c.l.b16 %v75
  %v211 = vunpack.c.l.b16 %v76
  %v212 = vunpack.c.l.b16 %v77
  %v213 = vunpack.c.l.b16 %v78
  %v214 = vunpack.c.l.b16 %v79
  %v215 = vunpack.c.l.b16 %v80
  %v216 = vunpack.c.l.b16 %v81
  %v217 = vunpack.c.l.b16 %v82
  %v218 = vunpack.c.l.b16 %v83
  %v219 = vunpack.c.l.b16 %v84
  %v220 = vunpack.c.l.b16 %v85
  %v221 = vunpack.c.l.b16 %v86
  %v222 = vpack.c.b16 %v159, %v158
  %v223 = vpack.c.b16 %v161, %v160
  %v224 = vpack.c.b16 %v163, %v162
  %v225 = vpack.c.b16 %v165, %v164
  %v226 = vpack.c.b16 %v167, %v166
  %v227 = vpack.c.b16 %v169, %v168
  %v228 = vpack.c.b16 %v171, %v170
  %v229 = vpack.c.b16 %v173, %v172
  %v230 = vpack.c.b16 %v175, %v174
  %v231 = vpack.c.b16 %v177, %v176
  %v232 = vpack.c.b16 %v179, %v178
  %v233 = vpack.c.b16 %v181, %v180
  %v234 = vpack.c.b16 %v183, %v182
  %v235 = vpack.c.b16 %v185, %v184
  %v236 = vpack.c.b16 %v187, %v186
  %v237 = vpack.c.b16 %v189, %v188
  %v238 = vpack.c.b16 %v191, %v190
  %v239 = vpack.c.b16 %v193, %v192
  %v240 = vpack.c.b16 %v195, %v194
  %v241 = vpack.c.b16 %v197, %v196
  %v242 = vpack.c.b16 %v199, %v198
  %v243 = vpack.c.b16 %v201, %v200
  %v244 = vpack.c.b16 %v203, %v202
  %v245 = vpack.c.b16 %v205, %v204
  %v246 = vpack.c.b16 %v207, %v206
  %v247 = vpack.c.b16 %v209, %v208
  %v248 = vpack.c.b16 %v211, %v210
  %v249 = vpack.c.b16 %v213, %v212
  %v250 = vpack.c.b16 %v215, %v214
  %v251 = vpack.c.b16 %v217, %v216
  %v252 = vpack.c.b16 %v219, %v218
  %v253 = vpack.c.b16 %v221, %v220
  %286 = vmatprep.subr.bf16.mxu0 0
  %287 = vmatpush1.bf16.msra.mxu0 %v222
  %288 = vmatprep.subr.bf16.mxu0 0
  %289 = vmatpush1.bf16.msra.mxu0 %v223
  %290 = vmatprep.subr.bf16.mxu0 0
  %291 = vmatpush1.bf16.msra.mxu0 %v224
  %292 = vmatprep.subr.bf16.mxu0 0
  %293 = vmatpush1.bf16.msra.mxu0 %v225
  %294 = vmatprep.subr.bf16.mxu0 0
  %295 = vmatpush1.bf16.msra.mxu0 %v226
  %296 = vmatprep.subr.bf16.mxu0 0
  %297 = vmatpush1.bf16.msra.mxu0 %v227
  %298 = vmatprep.subr.bf16.mxu0 0
  %299 = vmatpush1.bf16.msra.mxu0 %v228
  %300 = vmatprep.subr.bf16.mxu0 0
  %301 = vmatpush1.bf16.msra.mxu0 %v229
  %302 = vmatprep.subr.bf16.mxu0 0
  %303 = vmatpush1.bf16.msra.mxu0 %v230
  %304 = vmatprep.subr.bf16.mxu0 0
  %305 = vmatpush1.bf16.msra.mxu0 %v231
  %306 = vmatprep.subr.bf16.mxu0 0
  %307 = vmatpush1.bf16.msra.mxu0 %v232
  %308 = vmatprep.subr.bf16.mxu0 0
  %309 = vmatpush1.bf16.msra.mxu0 %v233
  %310 = vmatprep.subr.bf16.mxu0 0
  %311 = vmatpush1.bf16.msra.mxu0 %v234
  %312 = vmatprep.subr.bf16.mxu0 0
  %313 = vmatpush1.bf16.msra.mxu0 %v235
  %314 = vmatprep.subr.bf16.mxu0 0
  %315 = vmatpush1.bf16.msra.mxu0 %v236
  %316 = vmatprep.subr.bf16.mxu0 0
  %317 = vmatpush1.bf16.msra.mxu0 %v237
  %318 = vmatprep.mubr.bf16.mxu0 %v20
  %319 = vmatmul.mubr.bf16.gmra.mrb[0].mxu0 %v19
  %v320 = vpop.f32.mrb[0].mxu0
  %v321 = vadd.f32 %v92, %v320
  %v322 = vpop.f32.mrb[0].mxu0
  %v323 = vpop.f32.mrb[0].mxu0
  %v324 = vpop.f32.mrb[0].mxu0
  %325 = vdwg.mxu0
  %326 = vmatprep.subr.bf16.mxu0 0
  %327 = vmatpush1.bf16.msra.mxu0 %v238
  %328 = vmatprep.subr.bf16.mxu0 0
  %329 = vmatpush1.bf16.msra.mxu0 %v239
  %330 = vmatprep.subr.bf16.mxu0 0
  %331 = vmatpush1.bf16.msra.mxu0 %v240
  %332 = vmatprep.subr.bf16.mxu0 0
  %333 = vmatpush1.bf16.msra.mxu0 %v241
  %334 = vmatprep.subr.bf16.mxu0 0
  %335 = vmatpush1.bf16.msra.mxu0 %v242
  %336 = vmatprep.subr.bf16.mxu0 0
  %337 = vmatpush1.bf16.msra.mxu0 %v243
  %338 = vmatprep.subr.bf16.mxu0 0
  %339 = vmatpush1.bf16.msra.mxu0 %v244
  %340 = vmatprep.subr.bf16.mxu0 0
  %341 = vmatpush1.bf16.msra.mxu0 %v245
  %342 = vmatprep.subr.bf16.mxu0 0
  %343 = vmatpush1.bf16.msra.mxu0 %v246
  %344 = vmatprep.subr.bf16.mxu0 0
  %345 = vmatpush1.bf16.msra.mxu0 %v247
  %346 = vmatprep.subr.bf16.mxu0 0
  %347 = vmatpush1.bf16.msra.mxu0 %v248
  %348 = vmatprep.subr.bf16.mxu0 0
  %349 = vmatpush1.bf16.msra.mxu0 %v249
  %350 = vmatprep.subr.bf16.mxu0 0
  %351 = vmatpush1.bf16.msra.mxu0 %v250
  %352 = vmatprep.subr.bf16.mxu0 0
  %353 = vmatpush1.bf16.msra.mxu0 %v251
  %354 = vmatprep.subr.bf16.mxu0 0
  %355 = vmatpush1.bf16.msra.mxu0 %v252
  %356 = vmatprep.subr.bf16.mxu0 0
  %357 = vmatpush1.bf16.msra.mxu0 %v253
  %358 = vmatprep.mubr.bf16.mxu0 %v22
  %359 = vmatmul.mubr.bf16.gmra.mrb[0].mxu0 %v21
  %v360 = vpop.f32.mrb[0].mxu0
  %v361 = vadd.f32 %v321, %v360
  %v362 = vpop.f32.mrb[0].mxu0
  %v363 = vpop.f32.mrb[0].mxu0
  %v364 = vpop.f32.mrb[0].mxu0
  %365 = vdwg.mxu0
  %vm366 = vcmask 48128
  %367 = vst.msk [vmem:[%s3] sm:$0xff] %vm366, %v361
  // Predicated region
  $region14: #{qnetwork_forward.9} parent=0 // pred_check
    _
  $region15: #{qnetwork_forward.9} parent=0 // pred_check_branch
    %369 = sbr.rel (0) target = $region17
  $region16: #{qnetwork_forward.9} parent=0 // pred_region
    _
  $region17: #{qnetwork_forward.9} parent=0 // pred_fallthru
    _
  // Predicated region
  $region18: #{qnetwork_forward.9} parent=0 // pred_check
    _
  $region19: #{qnetwork_forward.9} parent=0 // pred_check_branch
    %371 = sbr.rel (0) target = $region21
  $region20: #{qnetwork_forward.9} parent=0 // pred_region
    _
  $region21: #{qnetwork_forward.9} parent=0 // pred_fallthru
    _

// kernel: qnetwork_forward.8
$region0: #{qnetwork_forward.8}
  #allocation0 [shape = 'u32[]', space=smem, size = 0x4, offset = 0x4, fixed_abs, tag = 'smem constant byte address 0x4 - core index']
  #allocation1 [shape = 'u32[144,128]{1,0:T(1,128)}', space=vmem, size = 0x12000, scoped, tag = 'internal scratch']
  %s0 = inlined_call_operand.vmem [shape: f32[8,3136], index: 0, kind: input, shape index: {}]
  %s1 = inlined_call_operand.vmem [shape: bf16[3136,512], index: 1, kind: input, shape index: {}]
  %s2 = inlined_call_operand.vmem [shape: f32[1,512], index: 2, kind: input, shape index: {}]
  %s3 = inlined_call_operand.vmem [shape: f32[8,512], index: 3, kind: output, shape index: {}]
  %s4 = sld [smem:[#allocation0]]
  $region83: #{qnetwork_forward.8} parent=0
    _
  %s6 = ssub.s32 1, %s4
  %s7 = scalar_select 0, %s6, %s4
  $region1: #{qnetwork_forward.8} parent=0
    #allocation2 [shape = 'u8[3211264]{0}', space=vmem, size = 0x310000, scoped, tag = 'input window, operand 1']
    loop: start=0, step=1, limit=4
    $region2: #{qnetwork_forward.8} parent=1 // loop_pre_header
      _
    $region3: #{qnetwork_forward.8} parent=1 // loop_header
      %s9 = sphi 0, %s13
      %p10 = scmp.ge.s32.totalorder %s9, 4
      %s16 = sphi 0, %s28
      %s17 = sphi 0, %s24
      %s18 = sphi 0, %s16
      %s19 = sphi 0, %s17
      %s20 = sphi 0, %s18
      %s21 = sphi 0, %s19
      %s31 = sphi 0, %s33
      %s34 = sphi 0, %s31
      %s35 = sphi 0, %s34
      %s51 = sphi 0, %s35
      %s57 = sphi 0, %s59
      %s60 = sphi 0, %s57
      %s61 = sphi 0, %s60
      %s77 = sphi 0, %s61
      %s83 = sphi 0, %s85
      %s86 = sphi 0, %s83
      %s87 = sphi 0, %s86
      %s103 = sphi 0, %s87
      %s111 = sphi 0, %s113
      %s114 = sphi 0, %s111
      %s115 = sphi 0, %s114
      %s131 = sphi 0, %s115
    $region4: #{qnetwork_forward.8} parent=1 // loop_header_branch
      %12 = sbr.rel (%p10) target = $region8
    $region5: #{qnetwork_forward.8} parent=1 // loop_body
      %s14 = ssub.s32 %s9, 1
      %s15 = ssub.s32 %s9, 2
      %s22 = sadd.s32 1, %s17
      %p23 = scmp.ge.s32.totalorder %s22, 2
      %s24 = scalar_select %p23, 0, %s22
      %s25 = sadd.s32 1, %s16
      %s26 = scalar_select %p23, %s25, %s16
      %p27 = scmp.ge.s32.totalorder %s26, 1
      %s28 = scalar_select %p27, 0, %s26
      %s29 = ssub.s32 %s16, %s28
      %p30 = scmp.eq.s32.totalorder %s29, 0
      %s32 = sadd.s32 %s31, 1
      %s33 = scalar_select %p30, %s31, %s32
      %p36 = pneg %p30
      %p37 = scmp.eq.s32.totalorder %s9, 1
      %p38 = por %p36, %p37
      %p39 = scmp.ne.s32.totalorder %s31, %s34
      %p40 = scmp.eq.s32.totalorder %s9, 0
      %p41 = por %p39, %p40
      %p42 = scmp.ne.s32.totalorder %s31, %s34
      %p43 = scmp.eq.s32.totalorder %s14, 1
      %p44 = por %p42, %p43
      %p45 = scmp.ne.s32.totalorder %s34, %s35
      %p46 = scmp.eq.s32.totalorder %s14, 0
      %p47 = por %p45, %p46
      %p48 = scmp.ne.s32.totalorder %s34, %s35
      %p49 = scmp.eq.s32.totalorder %s15, 1
      %p50 = por %p48, %p49
      %p52 = scmp.ne.s32.totalorder %s35, %s51
      %p53 = scmp.eq.s32.totalorder %s15, 0
      %p54 = por %p52, %p53
      %s55 = ssub.s32 %s17, %s24
      %p56 = scmp.eq.s32.totalorder %s55, 0
      %s58 = sadd.s32 %s57, 1
      %s59 = scalar_select %p56, %s57, %s58
      %p62 = pneg %p56
      %p63 = scmp.eq.s32.totalorder %s9, 1
      %p64 = por %p62, %p63
      %p65 = scmp.ne.s32.totalorder %s57, %s60
      %p66 = scmp.eq.s32.totalorder %s9, 0
      %p67 = por %p65, %p66
      %p68 = scmp.ne.s32.totalorder %s57, %s60
      %p69 = scmp.eq.s32.totalorder %s14, 1
      %p70 = por %p68, %p69
      %p71 = scmp.ne.s32.totalorder %s60, %s61
      %p72 = scmp.eq.s32.totalorder %s14, 0
      %p73 = por %p71, %p72
      %p74 = scmp.ne.s32.totalorder %s60, %s61
      %p75 = scmp.eq.s32.totalorder %s15, 1
      %p76 = por %p74, %p75
      %p78 = scmp.ne.s32.totalorder %s61, %s77
      %p79 = scmp.eq.s32.totalorder %s15, 0
      %p80 = por %p78, %p79
      %s81 = ssub.s32 %s17, %s24
      %p82 = scmp.eq.s32.totalorder %s81, 0
      %s84 = sadd.s32 %s83, 1
      %s85 = scalar_select %p82, %s83, %s84
      %p88 = pneg %p82
      %p89 = scmp.eq.s32.totalorder %s9, 1
      %p90 = por %p88, %p89
      %p91 = scmp.ne.s32.totalorder %s83, %s86
      %p92 = scmp.eq.s32.totalorder %s9, 0
      %p93 = por %p91, %p92
      %p94 = scmp.ne.s32.totalorder %s83, %s86
      %p95 = scmp.eq.s32.totalorder %s14, 1
      %p96 = por %p94, %p95
      %p97 = scmp.ne.s32.totalorder %s86, %s87
      %p98 = scmp.eq.s32.totalorder %s14, 0
      %p99 = por %p97, %p98
      %p100 = scmp.ne.s32.totalorder %s86, %s87
      %p101 = scmp.eq.s32.totalorder %s15, 1
      %p102 = por %p100, %p101
      %p104 = scmp.ne.s32.totalorder %s87, %s103
      %p105 = scmp.eq.s32.totalorder %s15, 0
      %p106 = por %p104, %p105
      %s107 = ssub.s32 %s16, %s28
      %s108 = ssub.s32 %s17, %s24
      %s109 = sor.u32 %s107, %s108
      %p110 = scmp.eq.s32.totalorder %s109, 0
      %s112 = sadd.s32 %s111, 1
      %s113 = scalar_select %p110, %s111, %s112
      %p116 = pneg %p110
      %p117 = scmp.eq.s32.totalorder %s9, 1
      %p118 = por %p116, %p117
      %p119 = scmp.ne.s32.totalorder %s111, %s114
      %p120 = scmp.eq.s32.totalorder %s9, 0
      %p121 = por %p119, %p120
      %p122 = scmp.ne.s32.totalorder %s111, %s114
      %p123 = scmp.eq.s32.totalorder %s14, 1
      %p124 = por %p122, %p123
      %p125 = scmp.ne.s32.totalorder %s114, %s115
      %p126 = scmp.eq.s32.totalorder %s14, 0
      %p127 = por %p125, %p126
      %p128 = scmp.ne.s32.totalorder %s114, %s115
      %p129 = scmp.eq.s32.totalorder %s15, 1
      %p130 = por %p128, %p129
      %p132 = scmp.ne.s32.totalorder %s115, %s131
      %p133 = scmp.eq.s32.totalorder %s15, 0
      %p134 = por %p132, %p133
      %p135 = scmp.le.s32.totalorder 1, %s9
      %p136 = scmp.lt.s32.totalorder %s9, 3
      %p137 = pnand %p135, %p136
      %p138 = pneg %p137
      // Predicated region
      $region9: #{qnetwork_forward.8} parent=5 // pred_check
        _
      $region10: #{qnetwork_forward.8} parent=5 // pred_check_branch
        %140 = sbr.rel (%p137) target = $region12
      $region11: #{qnetwork_forward.8} parent=5 // pred_region
        %s141 = ssub.s32 %s9, 1
        // Predicated region
        $region13: #{qnetwork_forward.8} parent=11 // pred_check
          %p142 = pneg %p47
        $region14: #{qnetwork_forward.8} parent=11 // pred_check_branch
          %144 = sbr.rel (%p142) target = $region16
        $region15: #{qnetwork_forward.8} parent=11 // pred_region
          %p145 = scmp.lt.s32.totalorder %s18, 0
          %s146 = scalar_select %p145, %s18, 0
          %s147 = smul.addr %s146, 25
          %s148 = smul.addr %s147, 8
          %s149 = scalar_lea.vmem %s0, %s148
        $region16: #{qnetwork_forward.8} parent=11 // pred_fallthru
          _
      $region12: #{qnetwork_forward.8} parent=5 // pred_fallthru
        _
      %p150 = scmp.lt.s32.totalorder %s9, 2
      // Predicated region
      $region17: #{qnetwork_forward.8} parent=5 // pred_check
        %p151 = pneg %p150
      $region18: #{qnetwork_forward.8} parent=5 // pred_check_branch
        %153 = sbr.rel (%p151) target = $region20
      $region19: #{qnetwork_forward.8} parent=5 // pred_region
        // Predicated region
        $region21: #{qnetwork_forward.8} parent=19 // pred_check
          %p154 = pneg %p67
        $region22: #{qnetwork_forward.8} parent=19 // pred_check_branch
          %156 = sbr.rel (%p154) target = $region24
        $region23: #{qnetwork_forward.8} parent=19 // pred_region
          %s157 = sand.u32 %s57, 1
          %s158 = sand.u32 %s57, 1
          %s159 = smul.addr %s158, 3136
          %s160 = scalar_lea.vmem [#allocation2], %s159
          %s161 = smul.u32 2, %s17
          %s162 = smul.addr %s161, 4
          %s163 = scalar_lea.vmem %s1, %s162
          // Predicated region
          $region25: #{qnetwork_forward.8} parent=23 // pred_check
            _
          $region26: #{qnetwork_forward.8} parent=23 // pred_check_branch
            %165 = sbr.rel (0) target = $region28
          $region27: #{qnetwork_forward.8} parent=23 // pred_region
            // Predicated region
            $region29: #{qnetwork_forward.8} parent=27 // pred_check
              _
            $region30: #{qnetwork_forward.8} parent=27 // pred_check_branch
              %167 = sbr.rel (0) target = $region32
            $region31: #{qnetwork_forward.8} parent=27 // pred_region
              // Predicated region
              $region44: #{qnetwork_forward.8} parent=31 // pred_check
                _
              $region45: #{qnetwork_forward.8} parent=31 // pred_check_branch
                %964 = sbr.rel (0) target = $region47
              $region46: #{qnetwork_forward.8} parent=31 // pred_region
                loop: start=0, step=1, limit=1
                $region48: #{qnetwork_forward.8} parent=46 // loop_pre_header
                  _
                $region49: #{qnetwork_forward.8} parent=46 // loop_header
                  %s966 = sphi 0, %s970
                  %p967 = scmp.ge.s32.totalorder %s966, 1
                  %s971 = sphi %s163, %s163
                  %s972 = sphi %s160, %s160
                $region50: #{qnetwork_forward.8} parent=46 // loop_header_branch
                  %969 = sbr.rel (%p967) target = $region54
                $region51: #{qnetwork_forward.8} parent=46 // loop_body
                  %v973 = vld [vmem:[%s971] sm:$0xff]
                  %974 = vst [vmem:[%s972] sm:$0xff] %v973
                  %v975 = vld [vmem:[%s971 + $0x10] sm:$0xff]
                  %976 = vst [vmem:[%s972 + $0x8] sm:$0xff] %v975
                  %v977 = vld [vmem:[%s971 + $0x20] sm:$0xff]
                  %978 = vst [vmem:[%s972 + $0x10] sm:$0xff] %v977
                  %v979 = vld [vmem:[%s971 + $0x30] sm:$0xff]
                  %980 = vst [vmem:[%s972 + $0x18] sm:$0xff] %v979
                  %v981 = vld [vmem:[%s971 + $0x40] sm:$0xff]
                  %982 = vst [vmem:[%s972 + $0x20] sm:$0xff] %v981
                  %v983 = vld [vmem:[%s971 + $0x50] sm:$0xff]
                  %984 = vst [vmem:[%s972 + $0x28] sm:$0xff] %v983
                  %v985 = vld [vmem:[%s971 + $0x60] sm:$0xff]
                  %986 = vst [vmem:[%s972 + $0x30] sm:$0xff] %v985
                  %v987 = vld [vmem:[%s971 + $0x70] sm:$0xff]
                  %988 = vst [vmem:[%s972 + $0x38] sm:$0xff] %v987
                  %v989 = vld [vmem:[%s971 + $0x80] sm:$0xff]
                  %990 = vst [vmem:[%s972 + $0x40] sm:$0xff] %v989
                  %v991 = vld [vmem:[%s971 + $0x90] sm:$0xff]
                  %992 = vst [vmem:[%s972 + $0x48] sm:$0xff] %v991
                  %v993 = vld [vmem:[%s971 + $0xa0] sm:$0xff]
                  %994 = vst [vmem:[%s972 + $0x50] sm:$0xff] %v993
                  %v995 = vld [vmem:[%s971 + $0xb0] sm:$0xff]
                  %996 = vst [vmem:[%s972 + $0x58] sm:$0xff] %v995
                  %v997 = vld [vmem:[%s971 + $0xc0] sm:$0xff]
                  %998 = vst [vmem:[%s972 + $0x60] sm:$0xff] %v997
                  %v999 = vld [vmem:[%s971 + $0xd0] sm:$0xff]
                  %1000 = vst [vmem:[%s972 + $0x68] sm:$0xff] %v999
                  %v1001 = vld [vmem:[%s971 + $0xe0] sm:$0xff]
                  %1002 = vst [vmem:[%s972 + $0x70] sm:$0xff] %v1001
                  %v1003 = vld [vmem:[%s971 + $0xf0] sm:$0xff]
                  %1004 = vst [vmem:[%s972 + $0x78] sm:$0xff] %v1003
                  %v1005 = vld [vmem:[%s971 + $0x100] sm:$0xff]
                  %1006 = vst [vmem:[%s972 + $0x80] sm:$0xff] %v1005
                  %v1007 = vld [vmem:[%s971 + $0x110] sm:$0xff]
                  %1008 = vst [vmem:[%s972 + $0x88] sm:$0xff] %v1007
                  %v1009 = vld [vmem:[%s971 + $0x120] sm:$0xff]
                  %1010 = vst [vmem:[%s972 + $0x90] sm:$0xff] %v1009
                  %v1011 = vld [vmem:[%s971 + $0x130] sm:$0xff]
                  %1012 = vst [vmem:[%s972 + $0x98] sm:$0xff] %v1011
                  %v1013 = vld [vmem:[%s971 + $0x140] sm:$0xff]
                  %1014 = vst [vmem:[%s972 + $0xa0] sm:$0xff] %v1013
                  %v1015 = vld [vmem:[%s971 + $0x150] sm:$0xff]
                  %1016 = vst [vmem:[%s972 + $0xa8] sm:$0xff] %v1015
                  %v1017 = vld [vmem:[%s971 + $0x160] sm:$0xff]
                  %1018 = vst [vmem:[%s972 + $0xb0] sm:$0xff] %v1017
                  %v1019 = vld [vmem:[%s971 + $0x170] sm:$0xff]
                  %1020 = vst [vmem:[%s972 + $0xb8] sm:$0xff] %v1019
                  %v1021 = vld [vmem:[%s971 + $0x180] sm:$0xff]
                  %1022 = vst [vmem:[%s972 + $0xc0] sm:$0xff] %v1021
                  %v1023 = vld [vmem:[%s971 + $0x190] sm:$0xff]
                  %1024 = vst [vmem:[%s972 + $0xc8] sm:$0xff] %v1023
                  %v1025 = vld [vmem:[%s971 + $0x1a0] sm:$0xff]
                  %1026 = vst [vmem:[%s972 + $0xd0] sm:$0xff] %v1025
                  %v1027 = vld [vmem:[%s971 + $0x1b0] sm:$0xff]
                  %1028 = vst [vmem:[%s972 + $0xd8] sm:$0xff] %v1027
                  %v1029 = vld [vmem:[%s971 + $0x1c0] sm:$0xff]
                  %1030 = vst [vmem:[%s972 + $0xe0] sm:$0xff] %v1029
                  %v1031 = vld [vmem:[%s971 + $0x1d0] sm:$0xff]
                  %1032 = vst [vmem:[%s972 + $0xe8] sm:$0xff] %v1031
                  %v1033 = vld [vmem:[%s971 + $0x1e0] sm:$0xff]
                  %1034 = vst [vmem:[%s972 + $0xf0] sm:$0xff] %v1033
                  %v1035 = vld [vmem:[%s971 + $0x1f0] sm:$0xff]
                  %1036 = vst [vmem:[%s972 + $0xf8] sm:$0xff] %v1035
                  %v1037 = vld [vmem:[%s971 + $0x200] sm:$0xff]
                  %1038 = vst [vmem:[%s972 + $0x100] sm:$0xff] %v1037
                  %v1039 = vld [vmem:[%s971 + $0x210] sm:$0xff]
                  %1040 = vst [vmem:[%s972 + $0x108] sm:$0xff] %v1039
                  %v1041 = vld [vmem:[%s971 + $0x220] sm:$0xff]
                  %1042 = vst [vmem:[%s972 + $0x110] sm:$0xff] %v1041
                  %v1043 = vld [vmem:[%s971 + $0x230] sm:$0xff]
                  %1044 = vst [vmem:[%s972 + $0x118] sm:$0xff] %v1043
                  %v1045 = vld [vmem:[%s971 + $0x240] sm:$0xff]
                  %1046 = vst [vmem:[%s972 + $0x120] sm:$0xff] %v1045
                  %v1047 = vld [vmem:[%s971 + $0x250] sm:$0xff]
                  %1048 = vst [vmem:[%s972 + $0x128] sm:$0xff] %v1047
                  %v1049 = vld [vmem:[%s971 + $0x260] sm:$0xff]
                  %1050 = vst [vmem:[%s972 + $0x130] sm:$0xff] %v1049
                  %v1051 = vld [vmem:[%s971 + $0x270] sm:$0xff]
                  %1052 = vst [vmem:[%s972 + $0x138] sm:$0xff] %v1051
                  %v1053 = vld [vmem:[%s971 + $0x280] sm:$0xff]
                  %1054 = vst [vmem:[%s972 + $0x140] sm:$0xff] %v1053
                  %v1055 = vld [vmem:[%s971 + $0x290] sm:$0xff]
                  %1056 = vst [vmem:[%s972 + $0x148] sm:$0xff] %v1055
                  %v1057 = vld [vmem:[%s971 + $0x2a0] sm:$0xff]
                  %1058 = vst [vmem:[%s972 + $0x150] sm:$0xff] %v1057
                  %v1059 = vld [vmem:[%s971 + $0x2b0] sm:$0xff]
                  %1060 = vst [vmem:[%s972 + $0x158] sm:$0xff] %v1059
                  %v1061 = vld [vmem:[%s971 + $0x2c0] sm:$0xff]
                  %1062 = vst [vmem:[%s972 + $0x160] sm:$0xff] %v1061
                  %v1063 = vld [vmem:[%s971 + $0x2d0] sm:$0xff]
                  %1064 = vst [vmem:[%s972 + $0x168] sm:$0xff] %v1063
                  %v1065 = vld [vmem:[%s971 + $0x2e0] sm:$0xff]
                  %1066 = vst [vmem:[%s972 + $0x170] sm:$0xff] %v1065
                  %v1067 = vld [vmem:[%s971 + $0x2f0] sm:$0xff]
                  %1068 = vst [vmem:[%s972 + $0x178] sm:$0xff] %v1067
                  %v1069 = vld [vmem:[%s971 + $0x300] sm:$0xff]
                  %1070 = vst [vmem:[%s972 + $0x180] sm:$0xff] %v1069
                  %v1071 = vld [vmem:[%s971 + $0x310] sm:$0xff]
                  %1072 = vst [vmem:[%s972 + $0x188] sm:$0xff] %v1071
                  %v1073 = vld [vmem:[%s971 + $0x320] sm:$0xff]
                  %1074 = vst [vmem:[%s972 + $0x190] sm:$0xff] %v1073
                  %v1075 = vld [vmem:[%s971 + $0x330] sm:$0xff]
                  %1076 = vst [vmem:[%s972 + $0x198] sm:$0xff] %v1075
                  %v1077 = vld [vmem:[%s971 + $0x340] sm:$0xff]
                  %1078 = vst [vmem:[%s972 + $0x1a0] sm:$0xff] %v1077
                  %v1079 = vld [vmem:[%s971 + $0x350] sm:$0xff]
                  %1080 = vst [vmem:[%s972 + $0x1a8] sm:$0xff] %v1079
                  %v1081 = vld [vmem:[%s971 + $0x360] sm:$0xff]
                  %1082 = vst [vmem:[%s972 + $0x1b0] sm:$0xff] %v1081
                  %v1083 = vld [vmem:[%s971 + $0x370] sm:$0xff]
                  %1084 = vst [vmem:[%s972 + $0x1b8] sm:$0xff] %v1083
                  %v1085 = vld [vmem:[%s971 + $0x380] sm:$0xff]
                  %1086 = vst [vmem:[%s972 + $0x1c0] sm:$0xff] %v1085
                  %v1087 = vld [vmem:[%s971 + $0x390] sm:$0xff]
                  %1088 = vst [vmem:[%s972 + $0x1c8] sm:$0xff] %v1087
                  %v1089 = vld [vmem:[%s971 + $0x3a0] sm:$0xff]
                  %1090 = vst [vmem:[%s972 + $0x1d0] sm:$0xff] %v1089
                  %v1091 = vld [vmem:[%s971 + $0x3b0] sm:$0xff]
                  %1092 = vst [vmem:[%s972 + $0x1d8] sm:$0xff] %v1091
                  %v1093 = vld [vmem:[%s971 + $0x3c0] sm:$0xff]
                  %1094 = vst [vmem:[%s972 + $0x1e0] sm:$0xff] %v1093
                  %v1095 = vld [vmem:[%s971 + $0x3d0] sm:$0xff]
                  %1096 = vst [vmem:[%s972 + $0x1e8] sm:$0xff] %v1095
                  %v1097 = vld [vmem:[%s971 + $0x3e0] sm:$0xff]
                  %1098 = vst [vmem:[%s972 + $0x1f0] sm:$0xff] %v1097
                  %v1099 = vld [vmem:[%s971 + $0x3f0] sm:$0xff]
                  %1100 = vst [vmem:[%s972 + $0x1f8] sm:$0xff] %v1099
                  %v1101 = vld [vmem:[%s971 + $0x400] sm:$0xff]
                  %1102 = vst [vmem:[%s972 + $0x200] sm:$0xff] %v1101
                  %v1103 = vld [vmem:[%s971 + $0x410] sm:$0xff]
                  %1104 = vst [vmem:[%s972 + $0x208] sm:$0xff] %v1103
                  %v1105 = vld [vmem:[%s971 + $0x420] sm:$0xff]
                  %1106 = vst [vmem:[%s972 + $0x210] sm:$0xff] %v1105
                  %v1107 = vld [vmem:[%s971 + $0x430] sm:$0xff]
                  %1108 = vst [vmem:[%s972 + $0x218] sm:$0xff] %v1107
                  %v1109 = vld [vmem:[%s971 + $0x440] sm:$0xff]
                  %1110 = vst [vmem:[%s972 + $0x220] sm:$0xff] %v1109
                  %v1111 = vld [vmem:[%s971 + $0x450] sm:$0xff]
                  %1112 = vst [vmem:[%s972 + $0x228] sm:$0xff] %v1111
                  %v1113 = vld [vmem:[%s971 + $0x460] sm:$0xff]
                  %1114 = vst [vmem:[%s972 + $0x230] sm:$0xff] %v1113
                  %v1115 = vld [vmem:[%s971 + $0x470] sm:$0xff]
                  %1116 = vst [vmem:[%s972 + $0x238] sm:$0xff] %v1115
                  %v1117 = vld [vmem:[%s971 + $0x480] sm:$0xff]
                  %1118 = vst [vmem:[%s972 + $0x240] sm:$0xff] %v1117
                  %v1119 = vld [vmem:[%s971 + $0x490] sm:$0xff]
                  %1120 = vst [vmem:[%s972 + $0x248] sm:$0xff] %v1119
                  %v1121 = vld [vmem:[%s971 + $0x4a0] sm:$0xff]
                  %1122 = vst [vmem:[%s972 + $0x250] sm:$0xff] %v1121
                  %v1123 = vld [vmem:[%s971 + $0x4b0] sm:$0xff]
                  %1124 = vst [vmem:[%s972 + $0x258] sm:$0xff] %v1123
                  %v1125 = vld [vmem:[%s971 + $0x4c0] sm:$0xff]
                  %1126 = vst [vmem:[%s972 + $0x260] sm:$0xff] %v1125
                  %v1127 = vld [vmem:[%s971 + $0x4d0] sm:$0xff]
                  %1128 = vst [vmem:[%s972 + $0x268] sm:$0xff] %v1127
                  %v1129 = vld [vmem:[%s971 + $0x4e0] sm:$0xff]
                  %1130 = vst [vmem:[%s972 + $0x270] sm:$0xff] %v1129
                  %v1131 = vld [vmem:[%s971 + $0x4f0] sm:$0xff]
                  %1132 = vst [vmem:[%s972 + $0x278] sm:$0xff] %v1131
                  %v1133 = vld [vmem:[%s971 + $0x500] sm:$0xff]
                  %1134 = vst [vmem:[%s972 + $0x280] sm:$0xff] %v1133
                  %v1135 = vld [vmem:[%s971 + $0x510] sm:$0xff]
                  %1136 = vst [vmem:[%s972 + $0x288] sm:$0xff] %v1135
                  %v1137 = vld [vmem:[%s971 + $0x520] sm:$0xff]
                  %1138 = vst [vmem:[%s972 + $0x290] sm:$0xff] %v1137
                  %v1139 = vld [vmem:[%s971 + $0x530] sm:$0xff]
                  %1140 = vst [vmem:[%s972 + $0x298] sm:$0xff] %v1139
                  %v1141 = vld [vmem:[%s971 + $0x540] sm:$0xff]
                  %1142 = vst [vmem:[%s972 + $0x2a0] sm:$0xff] %v1141
                  %v1143 = vld [vmem:[%s971 + $0x550] sm:$0xff]
                  %1144 = vst [vmem:[%s972 + $0x2a8] sm:$0xff] %v1143
                  %v1145 = vld [vmem:[%s971 + $0x560] sm:$0xff]
                  %1146 = vst [vmem:[%s972 + $0x2b0] sm:$0xff] %v1145
                  %v1147 = vld [vmem:[%s971 + $0x570] sm:$0xff]
                  %1148 = vst [vmem:[%s972 + $0x2b8] sm:$0xff] %v1147
                  %v1149 = vld [vmem:[%s971 + $0x580] sm:$0xff]
                  %1150 = vst [vmem:[%s972 + $0x2c0] sm:$0xff] %v1149
                  %v1151 = vld [vmem:[%s971 + $0x590] sm:$0xff]
                  %1152 = vst [vmem:[%s972 + $0x2c8] sm:$0xff] %v1151
                  %v1153 = vld [vmem:[%s971 + $0x5a0] sm:$0xff]
                  %1154 = vst [vmem:[%s972 + $0x2d0] sm:$0xff] %v1153
                  %v1155 = vld [vmem:[%s971 + $0x5b0] sm:$0xff]
                  %1156 = vst [vmem:[%s972 + $0x2d8] sm:$0xff] %v1155
                  %v1157 = vld [vmem:[%s971 + $0x5c0] sm:$0xff]
                  %1158 = vst [vmem:[%s972 + $0x2e0] sm:$0xff] %v1157
                  %v1159 = vld [vmem:[%s971 + $0x5d0] sm:$0xff]
                  %1160 = vst [vmem:[%s972 + $0x2e8] sm:$0xff] %v1159
                  %v1161 = vld [vmem:[%s971 + $0x5e0] sm:$0xff]
                  %1162 = vst [vmem:[%s972 + $0x2f0] sm:$0xff] %v1161
                  %v1163 = vld [vmem:[%s971 + $0x5f0] sm:$0xff]
                  %1164 = vst [vmem:[%s972 + $0x2f8] sm:$0xff] %v1163
                  %v1165 = vld [vmem:[%s971 + $0x600] sm:$0xff]
                  %1166 = vst [vmem:[%s972 + $0x300] sm:$0xff] %v1165
                  %v1167 = vld [vmem:[%s971 + $0x610] sm:$0xff]
                  %1168 = vst [vmem:[%s972 + $0x308] sm:$0xff] %v1167
                  %v1169 = vld [vmem:[%s971 + $0x620] sm:$0xff]
                  %1170 = vst [vmem:[%s972 + $0x310] sm:$0xff] %v1169
                  %v1171 = vld [vmem:[%s971 + $0x630] sm:$0xff]
                  %1172 = vst [vmem:[%s972 + $0x318] sm:$0xff] %v1171
                  %v1173 = vld [vmem:[%s971 + $0x640] sm:$0xff]
                  %1174 = vst [vmem:[%s972 + $0x320] sm:$0xff] %v1173
                  %v1175 = vld [vmem:[%s971 + $0x650] sm:$0xff]
                  %1176 = vst [vmem:[%s972 + $0x328] sm:$0xff] %v1175
                  %v1177 = vld [vmem:[%s971 + $0x660] sm:$0xff]
                  %1178 = vst [vmem:[%s972 + $0x330] sm:$0xff] %v1177
                  %v1179 = vld [vmem:[%s971 + $0x670] sm:$0xff]
                  %1180 = vst [vmem:[%s972 + $0x338] sm:$0xff] %v1179
                  %v1181 = vld [vmem:[%s971 + $0x680] sm:$0xff]
                  %1182 = vst [vmem:[%s972 + $0x340] sm:$0xff] %v1181
                  %v1183 = vld [vmem:[%s971 + $0x690] sm:$0xff]
                  %1184 = vst [vmem:[%s972 + $0x348] sm:$0xff] %v1183
                  %v1185 = vld [vmem:[%s971 + $0x6a0] sm:$0xff]
                  %1186 = vst [vmem:[%s972 + $0x350] sm:$0xff] %v1185
                  %v1187 = vld [vmem:[%s971 + $0x6b0] sm:$0xff]
                  %1188 = vst [vmem:[%s972 + $0x358] sm:$0xff] %v1187
                  %v1189 = vld [vmem:[%s971 + $0x6c0] sm:$0xff]
                  %1190 = vst [vmem:[%s972 + $0x360] sm:$0xff] %v1189
                  %v1191 = vld [vmem:[%s971 + $0x6d0] sm:$0xff]
                  %1192 = vst [vmem:[%s972 + $0x368] sm:$0xff] %v1191
                  %v1193 = vld [vmem:[%s971 + $0x6e0] sm:$0xff]
                  %1194 = vst [vmem:[%s972 + $0x370] sm:$0xff] %v1193
                  %v1195 = vld [vmem:[%s971 + $0x6f0] sm:$0xff]
                  %1196 = vst [vmem:[%s972 + $0x378] sm:$0xff] %v1195
                  %v1197 = vld [vmem:[%s971 + $0x700] sm:$0xff]
                  %1198 = vst [vmem:[%s972 + $0x380] sm:$0xff] %v1197
                  %v1199 = vld [vmem:[%s971 + $0x710] sm:$0xff]
                  %1200 = vst [vmem:[%s972 + $0x388] sm:$0xff] %v1199
                  %v1201 = vld [vmem:[%s971 + $0x720] sm:$0xff]
                  %1202 = vst [vmem:[%s972 + $0x390] sm:$0xff] %v1201
                  %v1203 = vld [vmem:[%s971 + $0x730] sm:$0xff]
                  %1204 = vst [vmem:[%s972 + $0x398] sm:$0xff] %v1203
                  %v1205 = vld [vmem:[%s971 + $0x740] sm:$0xff]
                  %1206 = vst [vmem:[%s972 + $0x3a0] sm:$0xff] %v1205
                  %v1207 = vld [vmem:[%s971 + $0x750] sm:$0xff]
                  %1208 = vst [vmem:[%s972 + $0x3a8] sm:$0xff] %v1207
                  %v1209 = vld [vmem:[%s971 + $0x760] sm:$0xff]
                  %1210 = vst [vmem:[%s972 + $0x3b0] sm:$0xff] %v1209
                  %v1211 = vld [vmem:[%s971 + $0x770] sm:$0xff]
                  %1212 = vst [vmem:[%s972 + $0x3b8] sm:$0xff] %v1211
                  %v1213 = vld [vmem:[%s971 + $0x780] sm:$0xff]
                  %1214 = vst [vmem:[%s972 + $0x3c0] sm:$0xff] %v1213
                  %v1215 = vld [vmem:[%s971 + $0x790] sm:$0xff]
                  %1216 = vst [vmem:[%s972 + $0x3c8] sm:$0xff] %v1215
                  %v1217 = vld [vmem:[%s971 + $0x7a0] sm:$0xff]
                  %1218 = vst [vmem:[%s972 + $0x3d0] sm:$0xff] %v1217
                  %v1219 = vld [vmem:[%s971 + $0x7b0] sm:$0xff]
                  %1220 = vst [vmem:[%s972 + $0x3d8] sm:$0xff] %v1219
                  %v1221 = vld [vmem:[%s971 + $0x7c0] sm:$0xff]
                  %1222 = vst [vmem:[%s972 + $0x3e0] sm:$0xff] %v1221
                  %v1223 = vld [vmem:[%s971 + $0x7d0] sm:$0xff]
                  %1224 = vst [vmem:[%s972 + $0x3e8] sm:$0xff] %v1223
                  %v1225 = vld [vmem:[%s971 + $0x7e0] sm:$0xff]
                  %1226 = vst [vmem:[%s972 + $0x3f0] sm:$0xff] %v1225
                  %v1227 = vld [vmem:[%s971 + $0x7f0] sm:$0xff]
                  %1228 = vst [vmem:[%s972 + $0x3f8] sm:$0xff] %v1227
                  %v1229 = vld [vmem:[%s971 + $0x800] sm:$0xff]
                  %1230 = vst [vmem:[%s972 + $0x400] sm:$0xff] %v1229
                  %v1231 = vld [vmem:[%s971 + $0x810] sm:$0xff]
                  %1232 = vst [vmem:[%s972 + $0x408] sm:$0xff] %v1231
                  %v1233 = vld [vmem:[%s971 + $0x820] sm:$0xff]
                  %1234 = vst [vmem:[%s972 + $0x410] sm:$0xff] %v1233
                  %v1235 = vld [vmem:[%s971 + $0x830] sm:$0xff]
                  %1236 = vst [vmem:[%s972 + $0x418] sm:$0xff] %v1235
                  %v1237 = vld [vmem:[%s971 + $0x840] sm:$0xff]
                  %1238 = vst [vmem:[%s972 + $0x420] sm:$0xff] %v1237
                  %v1239 = vld [vmem:[%s971 + $0x850] sm:$0xff]
                  %1240 = vst [vmem:[%s972 + $0x428] sm:$0xff] %v1239
                  %v1241 = vld [vmem:[%s971 + $0x860] sm:$0xff]
                  %1242 = vst [vmem:[%s972 + $0x430] sm:$0xff] %v1241
                  %v1243 = vld [vmem:[%s971 + $0x870] sm:$0xff]
                  %1244 = vst [vmem:[%s972 + $0x438] sm:$0xff] %v1243
                  %v1245 = vld [vmem:[%s971 + $0x880] sm:$0xff]
                  %1246 = vst [vmem:[%s972 + $0x440] sm:$0xff] %v1245
                  %v1247 = vld [vmem:[%s971 + $0x890] sm:$0xff]
                  %1248 = vst [vmem:[%s972 + $0x448] sm:$0xff] %v1247
                  %v1249 = vld [vmem:[%s971 + $0x8a0] sm:$0xff]
                  %1250 = vst [vmem:[%s972 + $0x450] sm:$0xff] %v1249
                  %v1251 = vld [vmem:[%s971 + $0x8b0] sm:$0xff]
                  %1252 = vst [vmem:[%s972 + $0x458] sm:$0xff] %v1251
                  %v1253 = vld [vmem:[%s971 + $0x8c0] sm:$0xff]
                  %1254 = vst [vmem:[%s972 + $0x460] sm:$0xff] %v1253
                  %v1255 = vld [vmem:[%s971 + $0x8d0] sm:$0xff]
                  %1256 = vst [vmem:[%s972 + $0x468] sm:$0xff] %v1255
                  %v1257 = vld [vmem:[%s971 + $0x8e0] sm:$0xff]
                  %1258 = vst [vmem:[%s972 + $0x470] sm:$0xff] %v1257
                  %v1259 = vld [vmem:[%s971 + $0x8f0] sm:$0xff]
                  %1260 = vst [vmem:[%s972 + $0x478] sm:$0xff] %v1259
                  %v1261 = vld [vmem:[%s971 + $0x900] sm:$0xff]
                  %1262 = vst [vmem:[%s972 + $0x480] sm:$0xff] %v1261
                  %v1263 = vld [vmem:[%s971 + $0x910] sm:$0xff]
                  %1264 = vst [vmem:[%s972 + $0x488] sm:$0xff] %v1263
                  %v1265 = vld [vmem:[%s971 + $0x920] sm:$0xff]
                  %1266 = vst [vmem:[%s972 + $0x490] sm:$0xff] %v1265
                  %v1267 = vld [vmem:[%s971 + $0x930] sm:$0xff]
                  %1268 = vst [vmem:[%s972 + $0x498] sm:$0xff] %v1267
                  %v1269 = vld [vmem:[%s971 + $0x940] sm:$0xff]
                  %1270 = vst [vmem:[%s972 + $0x4a0] sm:$0xff] %v1269
                  %v1271 = vld [vmem:[%s971 + $0x950] sm:$0xff]
                  %1272 = vst [vmem:[%s972 + $0x4a8] sm:$0xff] %v1271
                  %v1273 = vld [vmem:[%s971 + $0x960] sm:$0xff]
                  %1274 = vst [vmem:[%s972 + $0x4b0] sm:$0xff] %v1273
                  %v1275 = vld [vmem:[%s971 + $0x970] sm:$0xff]
                  %1276 = vst [vmem:[%s972 + $0x4b8] sm:$0xff] %v1275
                  %v1277 = vld [vmem:[%s971 + $0x980] sm:$0xff]
                  %1278 = vst [vmem:[%s972 + $0x4c0] sm:$0xff] %v1277
                  %v1279 = vld [vmem:[%s971 + $0x990] sm:$0xff]
                  %1280 = vst [vmem:[%s972 + $0x4c8] sm:$0xff] %v1279
                  %v1281 = vld [vmem:[%s971 + $0x9a0] sm:$0xff]
                  %1282 = vst [vmem:[%s972 + $0x4d0] sm:$0xff] %v1281
                  %v1283 = vld [vmem:[%s971 + $0x9b0] sm:$0xff]
                  %1284 = vst [vmem:[%s972 + $0x4d8] sm:$0xff] %v1283
                  %v1285 = vld [vmem:[%s971 + $0x9c0] sm:$0xff]
                  %1286 = vst [vmem:[%s972 + $0x4e0] sm:$0xff] %v1285
                  %v1287 = vld [vmem:[%s971 + $0x9d0] sm:$0xff]
                  %1288 = vst [vmem:[%s972 + $0x4e8] sm:$0xff] %v1287
                  %v1289 = vld [vmem:[%s971 + $0x9e0] sm:$0xff]
                  %1290 = vst [vmem:[%s972 + $0x4f0] sm:$0xff] %v1289
                  %v1291 = vld [vmem:[%s971 + $0x9f0] sm:$0xff]
                  %1292 = vst [vmem:[%s972 + $0x4f8] sm:$0xff] %v1291
                  %v1293 = vld [vmem:[%s971 + $0xa00] sm:$0xff]
                  %1294 = vst [vmem:[%s972 + $0x500] sm:$0xff] %v1293
                  %v1295 = vld [vmem:[%s971 + $0xa10] sm:$0xff]
                  %1296 = vst [vmem:[%s972 + $0x508] sm:$0xff] %v1295
                  %v1297 = vld [vmem:[%s971 + $0xa20] sm:$0xff]
                  %1298 = vst [vmem:[%s972 + $0x510] sm:$0xff] %v1297
                  %v1299 = vld [vmem:[%s971 + $0xa30] sm:$0xff]
                  %1300 = vst [vmem:[%s972 + $0x518] sm:$0xff] %v1299
                  %v1301 = vld [vmem:[%s971 + $0xa40] sm:$0xff]
                  %1302 = vst [vmem:[%s972 + $0x520] sm:$0xff] %v1301
                  %v1303 = vld [vmem:[%s971 + $0xa50] sm:$0xff]
                  %1304 = vst [vmem:[%s972 + $0x528] sm:$0xff] %v1303
                  %v1305 = vld [vmem:[%s971 + $0xa60] sm:$0xff]
                  %1306 = vst [vmem:[%s972 + $0x530] sm:$0xff] %v1305
                  %v1307 = vld [vmem:[%s971 + $0xa70] sm:$0xff]
                  %1308 = vst [vmem:[%s972 + $0x538] sm:$0xff] %v1307
                  %v1309 = vld [vmem:[%s971 + $0xa80] sm:$0xff]
                  %1310 = vst [vmem:[%s972 + $0x540] sm:$0xff] %v1309
                  %v1311 = vld [vmem:[%s971 + $0xa90] sm:$0xff]
                  %1312 = vst [vmem:[%s972 + $0x548] sm:$0xff] %v1311
                  %v1313 = vld [vmem:[%s971 + $0xaa0] sm:$0xff]
                  %1314 = vst [vmem:[%s972 + $0x550] sm:$0xff] %v1313
                  %v1315 = vld [vmem:[%s971 + $0xab0] sm:$0xff]
                  %1316 = vst [vmem:[%s972 + $0x558] sm:$0xff] %v1315
                  %v1317 = vld [vmem:[%s971 + $0xac0] sm:$0xff]
                  %1318 = vst [vmem:[%s972 + $0x560] sm:$0xff] %v1317
                  %v1319 = vld [vmem:[%s971 + $0xad0] sm:$0xff]
                  %1320 = vst [vmem:[%s972 + $0x568] sm:$0xff] %v1319
                  %v1321 = vld [vmem:[%s971 + $0xae0] sm:$0xff]
                  %1322 = vst [vmem:[%s972 + $0x570] sm:$0xff] %v1321
                  %v1323 = vld [vmem:[%s971 + $0xaf0] sm:$0xff]
                  %1324 = vst [vmem:[%s972 + $0x578] sm:$0xff] %v1323
                  %v1325 = vld [vmem:[%s971 + $0xb00] sm:$0xff]
                  %1326 = vst [vmem:[%s972 + $0x580] sm:$0xff] %v1325
                  %v1327 = vld [vmem:[%s971 + $0xb10] sm:$0xff]
                  %1328 = vst [vmem:[%s972 + $0x588] sm:$0xff] %v1327
                  %v1329 = vld [vmem:[%s971 + $0xb20] sm:$0xff]
                  %1330 = vst [vmem:[%s972 + $0x590] sm:$0xff] %v1329
                  %v1331 = vld [vmem:[%s971 + $0xb30] sm:$0xff]
                  %1332 = vst [vmem:[%s972 + $0x598] sm:$0xff] %v1331
                  %v1333 = vld [vmem:[%s971 + $0xb40] sm:$0xff]
                  %1334 = vst [vmem:[%s972 + $0x5a0] sm:$0xff] %v1333
                  %v1335 = vld [vmem:[%s971 + $0xb50] sm:$0xff]
                  %1336 = vst [vmem:[%s972 + $0x5a8] sm:$0xff] %v1335
                  %v1337 = vld [vmem:[%s971 + $0xb60] sm:$0xff]
                  %1338 = vst [vmem:[%s972 + $0x5b0] sm:$0xff] %v1337
                  %v1339 = vld [vmem:[%s971 + $0xb70] sm:$0xff]
                  %1340 = vst [vmem:[%s972 + $0x5b8] sm:$0xff] %v1339
                  %v1341 = vld [vmem:[%s971 + $0xb80] sm:$0xff]
                  %1342 = vst [vmem:[%s972 + $0x5c0] sm:$0xff] %v1341
                  %v1343 = vld [vmem:[%s971 + $0xb90] sm:$0xff]
                  %1344 = vst [vmem:[%s972 + $0x5c8] sm:$0xff] %v1343
                  %v1345 = vld [vmem:[%s971 + $0xba0] sm:$0xff]
                  %1346 = vst [vmem:[%s972 + $0x5d0] sm:$0xff] %v1345
                  %v1347 = vld [vmem:[%s971 + $0xbb0] sm:$0xff]
                  %1348 = vst [vmem:[%s972 + $0x5d8] sm:$0xff] %v1347
                  %v1349 = vld [vmem:[%s971 + $0xbc0] sm:$0xff]
                  %1350 = vst [vmem:[%s972 + $0x5e0] sm:$0xff] %v1349
                  %v1351 = vld [vmem:[%s971 + $0xbd0] sm:$0xff]
                  %1352 = vst [vmem:[%s972 + $0x5e8] sm:$0xff] %v1351
                  %v1353 = vld [vmem:[%s971 + $0xbe0] sm:$0xff]
                  %1354 = vst [vmem:[%s972 + $0x5f0] sm:$0xff] %v1353
                  %v1355 = vld [vmem:[%s971 + $0xbf0] sm:$0xff]
                  %1356 = vst [vmem:[%s972 + $0x5f8] sm:$0xff] %v1355
                  %v1357 = vld [vmem:[%s971 + $0xc00] sm:$0xff]
                  %1358 = vst [vmem:[%s972 + $0x600] sm:$0xff] %v1357
                  %v1359 = vld [vmem:[%s971 + $0xc10] sm:$0xff]
                  %1360 = vst [vmem:[%s972 + $0x608] sm:$0xff] %v1359
                  %v1361 = vld [vmem:[%s971 + $0xc20] sm:$0xff]
                  %1362 = vst [vmem:[%s972 + $0x610] sm:$0xff] %v1361
                  %v1363 = vld [vmem:[%s971 + $0xc30] sm:$0xff]
                  %1364 = vst [vmem:[%s972 + $0x618] sm:$0xff] %v1363
                  %v1365 = vld [vmem:[%s971 + $0xc40] sm:$0xff]
                  %1366 = vst [vmem:[%s972 + $0x620] sm:$0xff] %v1365
                  %v1367 = vld [vmem:[%s971 + $0xc50] sm:$0xff]
                  %1368 = vst [vmem:[%s972 + $0x628] sm:$0xff] %v1367
                  %v1369 = vld [vmem:[%s971 + $0xc60] sm:$0xff]
                  %1370 = vst [vmem:[%s972 + $0x630] sm:$0xff] %v1369
                  %v1371 = vld [vmem:[%s971 + $0xc70] sm:$0xff]
                  %1372 = vst [vmem:[%s972 + $0x638] sm:$0xff] %v1371
                  %v1373 = vld [vmem:[%s971 + $0xc80] sm:$0xff]
                  %1374 = vst [vmem:[%s972 + $0x640] sm:$0xff] %v1373
                  %v1375 = vld [vmem:[%s971 + $0xc90] sm:$0xff]
                  %1376 = vst [vmem:[%s972 + $0x648] sm:$0xff] %v1375
                  %v1377 = vld [vmem:[%s971 + $0xca0] sm:$0xff]
                  %1378 = vst [vmem:[%s972 + $0x650] sm:$0xff] %v1377
                  %v1379 = vld [vmem:[%s971 + $0xcb0] sm:$0xff]
                  %1380 = vst [vmem:[%s972 + $0x658] sm:$0xff] %v1379
                  %v1381 = vld [vmem:[%s971 + $0xcc0] sm:$0xff]
                  %1382 = vst [vmem:[%s972 + $0x660] sm:$0xff] %v1381
                  %v1383 = vld [vmem:[%s971 + $0xcd0] sm:$0xff]
                  %1384 = vst [vmem:[%s972 + $0x668] sm:$0xff] %v1383
                  %v1385 = vld [vmem:[%s971 + $0xce0] sm:$0xff]
                  %1386 = vst [vmem:[%s972 + $0x670] sm:$0xff] %v1385
                  %v1387 = vld [vmem:[%s971 + $0xcf0] sm:$0xff]
                  %1388 = vst [vmem:[%s972 + $0x678] sm:$0xff] %v1387
                  %v1389 = vld [vmem:[%s971 + $0xd00] sm:$0xff]
                  %1390 = vst [vmem:[%s972 + $0x680] sm:$0xff] %v1389
                  %v1391 = vld [vmem:[%s971 + $0xd10] sm:$0xff]
                  %1392 = vst [vmem:[%s972 + $0x688] sm:$0xff] %v1391
                  %v1393 = vld [vmem:[%s971 + $0xd20] sm:$0xff]
                  %1394 = vst [vmem:[%s972 + $0x690] sm:$0xff] %v1393
                  %v1395 = vld [vmem:[%s971 + $0xd30] sm:$0xff]
                  %1396 = vst [vmem:[%s972 + $0x698] sm:$0xff] %v1395
                  %v1397 = vld [vmem:[%s971 + $0xd40] sm:$0xff]
                  %1398 = vst [vmem:[%s972 + $0x6a0] sm:$0xff] %v1397
                  %v1399 = vld [vmem:[%s971 + $0xd50] sm:$0xff]
                  %1400 = vst [vmem:[%s972 + $0x6a8] sm:$0xff] %v1399
                  %v1401 = vld [vmem:[%s971 + $0xd60] sm:$0xff]
                  %1402 = vst [vmem:[%s972 + $0x6b0] sm:$0xff] %v1401
                  %v1403 = vld [vmem:[%s971 + $0xd70] sm:$0xff]
                  %1404 = vst [vmem:[%s972 + $0x6b8] sm:$0xff] %v1403
                  %v1405 = vld [vmem:[%s971 + $0xd80] sm:$0xff]
                  %1406 = vst [vmem:[%s972 + $0x6c0] sm:$0xff] %v1405
                  %v1407 = vld [vmem:[%s971 + $0xd90] sm:$0xff]
                  %1408 = vst [vmem:[%s972 + $0x6c8] sm:$0xff] %v1407
                  %v1409 = vld [vmem:[%s971 + $0xda0] sm:$0xff]
                  %1410 = vst [vmem:[%s972 + $0x6d0] sm:$0xff] %v1409
                  %v1411 = vld [vmem:[%s971 + $0xdb0] sm:$0xff]
                  %1412 = vst [vmem:[%s972 + $0x6d8] sm:$0xff] %v1411
                  %v1413 = vld [vmem:[%s971 + $0xdc0] sm:$0xff]
                  %1414 = vst [vmem:[%s972 + $0x6e0] sm:$0xff] %v1413
                  %v1415 = vld [vmem:[%s971 + $0xdd0] sm:$0xff]
                  %1416 = vst [vmem:[%s972 + $0x6e8] sm:$0xff] %v1415
                  %v1417 = vld [vmem:[%s971 + $0xde0] sm:$0xff]
                  %1418 = vst [vmem:[%s972 + $0x6f0] sm:$0xff] %v1417
                  %v1419 = vld [vmem:[%s971 + $0xdf0] sm:$0xff]
                  %1420 = vst [vmem:[%s972 + $0x6f8] sm:$0xff] %v1419
                  %v1421 = vld [vmem:[%s971 + $0xe00] sm:$0xff]
                  %1422 = vst [vmem:[%s972 + $0x700] sm:$0xff] %v1421
                  %v1423 = vld [vmem:[%s971 + $0xe10] sm:$0xff]
                  %1424 = vst [vmem:[%s972 + $0x708] sm:$0xff] %v1423
                  %v1425 = vld [vmem:[%s971 + $0xe20] sm:$0xff]
                  %1426 = vst [vmem:[%s972 + $0x710] sm:$0xff] %v1425
                  %v1427 = vld [vmem:[%s971 + $0xe30] sm:$0xff]
                  %1428 = vst [vmem:[%s972 + $0x718] sm:$0xff] %v1427
                  %v1429 = vld [vmem:[%s971 + $0xe40] sm:$0xff]
                  %1430 = vst [vmem:[%s972 + $0x720] sm:$0xff] %v1429
                  %v1431 = vld [vmem:[%s971 + $0xe50] sm:$0xff]
                  %1432 = vst [vmem:[%s972 + $0x728] sm:$0xff] %v1431
                  %v1433 = vld [vmem:[%s971 + $0xe60] sm:$0xff]
                  %1434 = vst [vmem:[%s972 + $0x730] sm:$0xff] %v1433
                  %v1435 = vld [vmem:[%s971 + $0xe70] sm:$0xff]
                  %1436 = vst [vmem:[%s972 + $0x738] sm:$0xff] %v1435
                  %v1437 = vld [vmem:[%s971 + $0xe80] sm:$0xff]
                  %1438 = vst [vmem:[%s972 + $0x740] sm:$0xff] %v1437
                  %v1439 = vld [vmem:[%s971 + $0xe90] sm:$0xff]
                  %1440 = vst [vmem:[%s972 + $0x748] sm:$0xff] %v1439
                  %v1441 = vld [vmem:[%s971 + $0xea0] sm:$0xff]
                  %1442 = vst [vmem:[%s972 + $0x750] sm:$0xff] %v1441
                  %v1443 = vld [vmem:[%s971 + $0xeb0] sm:$0xff]
                  %1444 = vst [vmem:[%s972 + $0x758] sm:$0xff] %v1443
                  %v1445 = vld [vmem:[%s971 + $0xec0] sm:$0xff]
                  %1446 = vst [vmem:[%s972 + $0x760] sm:$0xff] %v1445
                  %v1447 = vld [vmem:[%s971 + $0xed0] sm:$0xff]
                  %1448 = vst [vmem:[%s972 + $0x768] sm:$0xff] %v1447
                  %v1449 = vld [vmem:[%s971 + $0xee0] sm:$0xff]
                  %1450 = vst [vmem:[%s972 + $0x770] sm:$0xff] %v1449
                  %v1451 = vld [vmem:[%s971 + $0xef0] sm:$0xff]
                  %1452 = vst [vmem:[%s972 + $0x778] sm:$0xff] %v1451
                  %v1453 = vld [vmem:[%s971 + $0xf00] sm:$0xff]
                  %1454 = vst [vmem:[%s972 + $0x780] sm:$0xff] %v1453
                  %v1455 = vld [vmem:[%s971 + $0xf10] sm:$0xff]
                  %1456 = vst [vmem:[%s972 + $0x788] sm:$0xff] %v1455
                  %v1457 = vld [vmem:[%s971 + $0xf20] sm:$0xff]
                  %1458 = vst [vmem:[%s972 + $0x790] sm:$0xff] %v1457
                  %v1459 = vld [vmem:[%s971 + $0xf30] sm:$0xff]
                  %1460 = vst [vmem:[%s972 + $0x798] sm:$0xff] %v1459
                  %v1461 = vld [vmem:[%s971 + $0xf40] sm:$0xff]
                  %1462 = vst [vmem:[%s972 + $0x7a0] sm:$0xff] %v1461
                  %v1463 = vld [vmem:[%s971 + $0xf50] sm:$0xff]
                  %1464 = vst [vmem:[%s972 + $0x7a8] sm:$0xff] %v1463
                  %v1465 = vld [vmem:[%s971 + $0xf60] sm:$0xff]
                  %1466 = vst [vmem:[%s972 + $0x7b0] sm:$0xff] %v1465
                  %v1467 = vld [vmem:[%s971 + $0xf70] sm:$0xff]
                  %1468 = vst [vmem:[%s972 + $0x7b8] sm:$0xff] %v1467
                  %v1469 = vld [vmem:[%s971 + $0xf80] sm:$0xff]
                  %1470 = vst [vmem:[%s972 + $0x7c0] sm:$0xff] %v1469
                  %v1471 = vld [vmem:[%s971 + $0xf90] sm:$0xff]
                  %1472 = vst [vmem:[%s972 + $0x7c8] sm:$0xff] %v1471
                  %v1473 = vld [vmem:[%s971 + $0xfa0] sm:$0xff]
                  %1474 = vst [vmem:[%s972 + $0x7d0] sm:$0xff] %v1473
                  %v1475 = vld [vmem:[%s971 + $0xfb0] sm:$0xff]
                  %1476 = vst [vmem:[%s972 + $0x7d8] sm:$0xff] %v1475
                  %v1477 = vld [vmem:[%s971 + $0xfc0] sm:$0xff]
                  %1478 = vst [vmem:[%s972 + $0x7e0] sm:$0xff] %v1477
                  %v1479 = vld [vmem:[%s971 + $0xfd0] sm:$0xff]
                  %1480 = vst [vmem:[%s972 + $0x7e8] sm:$0xff] %v1479
                  %v1481 = vld [vmem:[%s971 + $0xfe0] sm:$0xff]
                  %1482 = vst [vmem:[%s972 + $0x7f0] sm:$0xff] %v1481
                  %v1483 = vld [vmem:[%s971 + $0xff0] sm:$0xff]
                  %1484 = vst [vmem:[%s972 + $0x7f8] sm:$0xff] %v1483
                  %v1485 = vld [vmem:[%s971 + $0x1000] sm:$0xff]
                  %1486 = vst [vmem:[%s972 + $0x800] sm:$0xff] %v1485
                  %v1487 = vld [vmem:[%s971 + $0x1010] sm:$0xff]
                  %1488 = vst [vmem:[%s972 + $0x808] sm:$0xff] %v1487
                  %v1489 = vld [vmem:[%s971 + $0x1020] sm:$0xff]
                  %1490 = vst [vmem:[%s972 + $0x810] sm:$0xff] %v1489
                  %v1491 = vld [vmem:[%s971 + $0x1030] sm:$0xff]
                  %1492 = vst [vmem:[%s972 + $0x818] sm:$0xff] %v1491
                  %v1493 = vld [vmem:[%s971 + $0x1040] sm:$0xff]
                  %1494 = vst [vmem:[%s972 + $0x820] sm:$0xff] %v1493
                  %v1495 = vld [vmem:[%s971 + $0x1050] sm:$0xff]
                  %1496 = vst [vmem:[%s972 + $0x828] sm:$0xff] %v1495
                  %v1497 = vld [vmem:[%s971 + $0x1060] sm:$0xff]
                  %1498 = vst [vmem:[%s972 + $0x830] sm:$0xff] %v1497
                  %v1499 = vld [vmem:[%s971 + $0x1070] sm:$0xff]
                  %1500 = vst [vmem:[%s972 + $0x838] sm:$0xff] %v1499
                  %v1501 = vld [vmem:[%s971 + $0x1080] sm:$0xff]
                  %1502 = vst [vmem:[%s972 + $0x840] sm:$0xff] %v1501
                  %v1503 = vld [vmem:[%s971 + $0x1090] sm:$0xff]
                  %1504 = vst [vmem:[%s972 + $0x848] sm:$0xff] %v1503
                  %v1505 = vld [vmem:[%s971 + $0x10a0] sm:$0xff]
                  %1506 = vst [vmem:[%s972 + $0x850] sm:$0xff] %v1505
                  %v1507 = vld [vmem:[%s971 + $0x10b0] sm:$0xff]
                  %1508 = vst [vmem:[%s972 + $0x858] sm:$0xff] %v1507
                  %v1509 = vld [vmem:[%s971 + $0x10c0] sm:$0xff]
                  %1510 = vst [vmem:[%s972 + $0x860] sm:$0xff] %v1509
                  %v1511 = vld [vmem:[%s971 + $0x10d0] sm:$0xff]
                  %1512 = vst [vmem:[%s972 + $0x868] sm:$0xff] %v1511
                  %v1513 = vld [vmem:[%s971 + $0x10e0] sm:$0xff]
                  %1514 = vst [vmem:[%s972 + $0x870] sm:$0xff] %v1513
                  %v1515 = vld [vmem:[%s971 + $0x10f0] sm:$0xff]
                  %1516 = vst [vmem:[%s972 + $0x878] sm:$0xff] %v1515
                  %v1517 = vld [vmem:[%s971 + $0x1100] sm:$0xff]
                  %1518 = vst [vmem:[%s972 + $0x880] sm:$0xff] %v1517
                  %v1519 = vld [vmem:[%s971 + $0x1110] sm:$0xff]
                  %1520 = vst [vmem:[%s972 + $0x888] sm:$0xff] %v1519
                  %v1521 = vld [vmem:[%s971 + $0x1120] sm:$0xff]
                  %1522 = vst [vmem:[%s972 + $0x890] sm:$0xff] %v1521
                  %v1523 = vld [vmem:[%s971 + $0x1130] sm:$0xff]
                  %1524 = vst [vmem:[%s972 + $0x898] sm:$0xff] %v1523
                  %v1525 = vld [vmem:[%s971 + $0x1140] sm:$0xff]
                  %1526 = vst [vmem:[%s972 + $0x8a0] sm:$0xff] %v1525
                  %v1527 = vld [vmem:[%s971 + $0x1150] sm:$0xff]
                  %1528 = vst [vmem:[%s972 + $0x8a8] sm:$0xff] %v1527
                  %v1529 = vld [vmem:[%s971 + $0x1160] sm:$0xff]
                  %1530 = vst [vmem:[%s972 + $0x8b0] sm:$0xff] %v1529
                  %v1531 = vld [vmem:[%s971 + $0x1170] sm:$0xff]
                  %1532 = vst [vmem:[%s972 + $0x8b8] sm:$0xff] %v1531
                  %v1533 = vld [vmem:[%s971 + $0x1180] sm:$0xff]
                  %1534 = vst [vmem:[%s972 + $0x8c0] sm:$0xff] %v1533
                  %v1535 = vld [vmem:[%s971 + $0x1190] sm:$0xff]
                  %1536 = vst [vmem:[%s972 + $0x8c8] sm:$0xff] %v1535
                  %v1537 = vld [vmem:[%s971 + $0x11a0] sm:$0xff]
                  %1538 = vst [vmem:[%s972 + $0x8d0] sm:$0xff] %v1537
                  %v1539 = vld [vmem:[%s971 + $0x11b0] sm:$0xff]
                  %1540 = vst [vmem:[%s972 + $0x8d8] sm:$0xff] %v1539
                  %v1541 = vld [vmem:[%s971 + $0x11c0] sm:$0xff]
                  %1542 = vst [vmem:[%s972 + $0x8e0] sm:$0xff] %v1541
                  %v1543 = vld [vmem:[%s971 + $0x11d0] sm:$0xff]
                  %1544 = vst [vmem:[%s972 + $0x8e8] sm:$0xff] %v1543
                  %v1545 = vld [vmem:[%s971 + $0x11e0] sm:$0xff]
                  %1546 = vst [vmem:[%s972 + $0x8f0] sm:$0xff] %v1545
                  %v1547 = vld [vmem:[%s971 + $0x11f0] sm:$0xff]
                  %1548 = vst [vmem:[%s972 + $0x8f8] sm:$0xff] %v1547
                  %v1549 = vld [vmem:[%s971 + $0x1200] sm:$0xff]
                  %1550 = vst [vmem:[%s972 + $0x900] sm:$0xff] %v1549
                  %v1551 = vld [vmem:[%s971 + $0x1210] sm:$0xff]
                  %1552 = vst [vmem:[%s972 + $0x908] sm:$0xff] %v1551
                  %v1553 = vld [vmem:[%s971 + $0x1220] sm:$0xff]
                  %1554 = vst [vmem:[%s972 + $0x910] sm:$0xff] %v1553
                  %v1555 = vld [vmem:[%s971 + $0x1230] sm:$0xff]
                  %1556 = vst [vmem:[%s972 + $0x918] sm:$0xff] %v1555
                  %v1557 = vld [vmem:[%s971 + $0x1240] sm:$0xff]
                  %1558 = vst [vmem:[%s972 + $0x920] sm:$0xff] %v1557
                  %v1559 = vld [vmem:[%s971 + $0x1250] sm:$0xff]
                  %1560 = vst [vmem:[%s972 + $0x928] sm:$0xff] %v1559
                  %v1561 = vld [vmem:[%s971 + $0x1260] sm:$0xff]
                  %1562 = vst [vmem:[%s972 + $0x930] sm:$0xff] %v1561
                  %v1563 = vld [vmem:[%s971 + $0x1270] sm:$0xff]
                  %1564 = vst [vmem:[%s972 + $0x938] sm:$0xff] %v1563
                  %v1565 = vld [vmem:[%s971 + $0x1280] sm:$0xff]
                  %1566 = vst [vmem:[%s972 + $0x940] sm:$0xff] %v1565
                  %v1567 = vld [vmem:[%s971 + $0x1290] sm:$0xff]
                  %1568 = vst [vmem:[%s972 + $0x948] sm:$0xff] %v1567
                  %v1569 = vld [vmem:[%s971 + $0x12a0] sm:$0xff]
                  %1570 = vst [vmem:[%s972 + $0x950] sm:$0xff] %v1569
                  %v1571 = vld [vmem:[%s971 + $0x12b0] sm:$0xff]
                  %1572 = vst [vmem:[%s972 + $0x958] sm:$0xff] %v1571
                  %v1573 = vld [vmem:[%s971 + $0x12c0] sm:$0xff]
                  %1574 = vst [vmem:[%s972 + $0x960] sm:$0xff] %v1573
                  %v1575 = vld [vmem:[%s971 + $0x12d0] sm:$0xff]
                  %1576 = vst [vmem:[%s972 + $0x968] sm:$0xff] %v1575
                  %v1577 = vld [vmem:[%s971 + $0x12e0] sm:$0xff]
                  %1578 = vst [vmem:[%s972 + $0x970] sm:$0xff] %v1577
                  %v1579 = vld [vmem:[%s971 + $0x12f0] sm:$0xff]
                  %1580 = vst [vmem:[%s972 + $0x978] sm:$0xff] %v1579
                  %v1581 = vld [vmem:[%s971 + $0x1300] sm:$0xff]
                  %1582 = vst [vmem:[%s972 + $0x980] sm:$0xff] %v1581
                  %v1583 = vld [vmem:[%s971 + $0x1310] sm:$0xff]
                  %1584 = vst [vmem:[%s972 + $0x988] sm:$0xff] %v1583
                  %v1585 = vld [vmem:[%s971 + $0x1320] sm:$0xff]
                  %1586 = vst [vmem:[%s972 + $0x990] sm:$0xff] %v1585
                  %v1587 = vld [vmem:[%s971 + $0x1330] sm:$0xff]
                  %1588 = vst [vmem:[%s972 + $0x998] sm:$0xff] %v1587
                  %v1589 = vld [vmem:[%s971 + $0x1340] sm:$0xff]
                  %1590 = vst [vmem:[%s972 + $0x9a0] sm:$0xff] %v1589
                  %v1591 = vld [vmem:[%s971 + $0x1350] sm:$0xff]
                  %1592 = vst [vmem:[%s972 + $0x9a8] sm:$0xff] %v1591
                  %v1593 = vld [vmem:[%s971 + $0x1360] sm:$0xff]
                  %1594 = vst [vmem:[%s972 + $0x9b0] sm:$0xff] %v1593
                  %v1595 = vld [vmem:[%s971 + $0x1370] sm:$0xff]
                  %1596 = vst [vmem:[%s972 + $0x9b8] sm:$0xff] %v1595
                  %v1597 = vld [vmem:[%s971 + $0x1380] sm:$0xff]
                  %1598 = vst [vmem:[%s972 + $0x9c0] sm:$0xff] %v1597
                  %v1599 = vld [vmem:[%s971 + $0x1390] sm:$0xff]
                  %1600 = vst [vmem:[%s972 + $0x9c8] sm:$0xff] %v1599
                  %v1601 = vld [vmem:[%s971 + $0x13a0] sm:$0xff]
                  %1602 = vst [vmem:[%s972 + $0x9d0] sm:$0xff] %v1601
                  %v1603 = vld [vmem:[%s971 + $0x13b0] sm:$0xff]
                  %1604 = vst [vmem:[%s972 + $0x9d8] sm:$0xff] %v1603
                  %v1605 = vld [vmem:[%s971 + $0x13c0] sm:$0xff]
                  %1606 = vst [vmem:[%s972 + $0x9e0] sm:$0xff] %v1605
                  %v1607 = vld [vmem:[%s971 + $0x13d0] sm:$0xff]
                  %1608 = vst [vmem:[%s972 + $0x9e8] sm:$0xff] %v1607
                  %v1609 = vld [vmem:[%s971 + $0x13e0] sm:$0xff]
                  %1610 = vst [vmem:[%s972 + $0x9f0] sm:$0xff] %v1609
                  %v1611 = vld [vmem:[%s971 + $0x13f0] sm:$0xff]
                  %1612 = vst [vmem:[%s972 + $0x9f8] sm:$0xff] %v1611
                  %v1613 = vld [vmem:[%s971 + $0x1400] sm:$0xff]
                  %1614 = vst [vmem:[%s972 + $0xa00] sm:$0xff] %v1613
                  %v1615 = vld [vmem:[%s971 + $0x1410] sm:$0xff]
                  %1616 = vst [vmem:[%s972 + $0xa08] sm:$0xff] %v1615
                  %v1617 = vld [vmem:[%s971 + $0x1420] sm:$0xff]
                  %1618 = vst [vmem:[%s972 + $0xa10] sm:$0xff] %v1617
                  %v1619 = vld [vmem:[%s971 + $0x1430] sm:$0xff]
                  %1620 = vst [vmem:[%s972 + $0xa18] sm:$0xff] %v1619
                  %v1621 = vld [vmem:[%s971 + $0x1440] sm:$0xff]
                  %1622 = vst [vmem:[%s972 + $0xa20] sm:$0xff] %v1621
                  %v1623 = vld [vmem:[%s971 + $0x1450] sm:$0xff]
                  %1624 = vst [vmem:[%s972 + $0xa28] sm:$0xff] %v1623
                  %v1625 = vld [vmem:[%s971 + $0x1460] sm:$0xff]
                  %1626 = vst [vmem:[%s972 + $0xa30] sm:$0xff] %v1625
                  %v1627 = vld [vmem:[%s971 + $0x1470] sm:$0xff]
                  %1628 = vst [vmem:[%s972 + $0xa38] sm:$0xff] %v1627
                  %v1629 = vld [vmem:[%s971 + $0x1480] sm:$0xff]
                  %1630 = vst [vmem:[%s972 + $0xa40] sm:$0xff] %v1629
                  %v1631 = vld [vmem:[%s971 + $0x1490] sm:$0xff]
                  %1632 = vst [vmem:[%s972 + $0xa48] sm:$0xff] %v1631
                  %v1633 = vld [vmem:[%s971 + $0x14a0] sm:$0xff]
                  %1634 = vst [vmem:[%s972 + $0xa50] sm:$0xff] %v1633
                  %v1635 = vld [vmem:[%s971 + $0x14b0] sm:$0xff]
                  %1636 = vst [vmem:[%s972 + $0xa58] sm:$0xff] %v1635
                  %v1637 = vld [vmem:[%s971 + $0x14c0] sm:$0xff]
                  %1638 = vst [vmem:[%s972 + $0xa60] sm:$0xff] %v1637
                  %v1639 = vld [vmem:[%s971 + $0x14d0] sm:$0xff]
                  %1640 = vst [vmem:[%s972 + $0xa68] sm:$0xff] %v1639
                  %v1641 = vld [vmem:[%s971 + $0x14e0] sm:$0xff]
                  %1642 = vst [vmem:[%s972 + $0xa70] sm:$0xff] %v1641
                  %v1643 = vld [vmem:[%s971 + $0x14f0] sm:$0xff]
                  %1644 = vst [vmem:[%s972 + $0xa78] sm:$0xff] %v1643
                  %v1645 = vld [vmem:[%s971 + $0x1500] sm:$0xff]
                  %1646 = vst [vmem:[%s972 + $0xa80] sm:$0xff] %v1645
                  %v1647 = vld [vmem:[%s971 + $0x1510] sm:$0xff]
                  %1648 = vst [vmem:[%s972 + $0xa88] sm:$0xff] %v1647
                  %v1649 = vld [vmem:[%s971 + $0x1520] sm:$0xff]
                  %1650 = vst [vmem:[%s972 + $0xa90] sm:$0xff] %v1649
                  %v1651 = vld [vmem:[%s971 + $0x1530] sm:$0xff]
                  %1652 = vst [vmem:[%s972 + $0xa98] sm:$0xff] %v1651
                  %v1653 = vld [vmem:[%s971 + $0x1540] sm:$0xff]
                  %1654 = vst [vmem:[%s972 + $0xaa0] sm:$0xff] %v1653
                  %v1655 = vld [vmem:[%s971 + $0x1550] sm:$0xff]
                  %1656 = vst [vmem:[%s972 + $0xaa8] sm:$0xff] %v1655
                  %v1657 = vld [vmem:[%s971 + $0x1560] sm:$0xff]
                  %1658 = vst [vmem:[%s972 + $0xab0] sm:$0xff] %v1657
                  %v1659 = vld [vmem:[%s971 + $0x1570] sm:$0xff]
                  %1660 = vst [vmem:[%s972 + $0xab8] sm:$0xff] %v1659
                  %v1661 = vld [vmem:[%s971 + $0x1580] sm:$0xff]
                  %1662 = vst [vmem:[%s972 + $0xac0] sm:$0xff] %v1661
                  %v1663 = vld [vmem:[%s971 + $0x1590] sm:$0xff]
                  %1664 = vst [vmem:[%s972 + $0xac8] sm:$0xff] %v1663
                  %v1665 = vld [vmem:[%s971 + $0x15a0] sm:$0xff]
                  %1666 = vst [vmem:[%s972 + $0xad0] sm:$0xff] %v1665
                  %v1667 = vld [vmem:[%s971 + $0x15b0] sm:$0xff]
                  %1668 = vst [vmem:[%s972 + $0xad8] sm:$0xff] %v1667
                  %v1669 = vld [vmem:[%s971 + $0x15c0] sm:$0xff]
                  %1670 = vst [vmem:[%s972 + $0xae0] sm:$0xff] %v1669
                  %v1671 = vld [vmem:[%s971 + $0x15d0] sm:$0xff]
                  %1672 = vst [vmem:[%s972 + $0xae8] sm:$0xff] %v1671
                  %v1673 = vld [vmem:[%s971 + $0x15e0] sm:$0xff]
                  %1674 = vst [vmem:[%s972 + $0xaf0] sm:$0xff] %v1673
                  %v1675 = vld [vmem:[%s971 + $0x15f0] sm:$0xff]
                  %1676 = vst [vmem:[%s972 + $0xaf8] sm:$0xff] %v1675
                  %v1677 = vld [vmem:[%s971 + $0x1600] sm:$0xff]
                  %1678 = vst [vmem:[%s972 + $0xb00] sm:$0xff] %v1677
                  %v1679 = vld [vmem:[%s971 + $0x1610] sm:$0xff]
                  %1680 = vst [vmem:[%s972 + $0xb08] sm:$0xff] %v1679
                  %v1681 = vld [vmem:[%s971 + $0x1620] sm:$0xff]
                  %1682 = vst [vmem:[%s972 + $0xb10] sm:$0xff] %v1681
                  %v1683 = vld [vmem:[%s971 + $0x1630] sm:$0xff]
                  %1684 = vst [vmem:[%s972 + $0xb18] sm:$0xff] %v1683
                  %v1685 = vld [vmem:[%s971 + $0x1640] sm:$0xff]
                  %1686 = vst [vmem:[%s972 + $0xb20] sm:$0xff] %v1685
                  %v1687 = vld [vmem:[%s971 + $0x1650] sm:$0xff]
                  %1688 = vst [vmem:[%s972 + $0xb28] sm:$0xff] %v1687
                  %v1689 = vld [vmem:[%s971 + $0x1660] sm:$0xff]
                  %1690 = vst [vmem:[%s972 + $0xb30] sm:$0xff] %v1689
                  %v1691 = vld [vmem:[%s971 + $0x1670] sm:$0xff]
                  %1692 = vst [vmem:[%s972 + $0xb38] sm:$0xff] %v1691
                  %v1693 = vld [vmem:[%s971 + $0x1680] sm:$0xff]
                  %1694 = vst [vmem:[%s972 + $0xb40] sm:$0xff] %v1693
                  %v1695 = vld [vmem:[%s971 + $0x1690] sm:$0xff]
                  %1696 = vst [vmem:[%s972 + $0xb48] sm:$0xff] %v1695
                  %v1697 = vld [vmem:[%s971 + $0x16a0] sm:$0xff]
                  %1698 = vst [vmem:[%s972 + $0xb50] sm:$0xff] %v1697
                  %v1699 = vld [vmem:[%s971 + $0x16b0] sm:$0xff]
                  %1700 = vst [vmem:[%s972 + $0xb58] sm:$0xff] %v1699
                  %v1701 = vld [vmem:[%s971 + $0x16c0] sm:$0xff]
                  %1702 = vst [vmem:[%s972 + $0xb60] sm:$0xff] %v1701
                  %v1703 = vld [vmem:[%s971 + $0x16d0] sm:$0xff]
                  %1704 = vst [vmem:[%s972 + $0xb68] sm:$0xff] %v1703
                  %v1705 = vld [vmem:[%s971 + $0x16e0] sm:$0xff]
                  %1706 = vst [vmem:[%s972 + $0xb70] sm:$0xff] %v1705
                  %v1707 = vld [vmem:[%s971 + $0x16f0] sm:$0xff]
                  %1708 = vst [vmem:[%s972 + $0xb78] sm:$0xff] %v1707
                  %v1709 = vld [vmem:[%s971 + $0x1700] sm:$0xff]
                  %1710 = vst [vmem:[%s972 + $0xb80] sm:$0xff] %v1709
                  %v1711 = vld [vmem:[%s971 + $0x1710] sm:$0xff]
                  %1712 = vst [vmem:[%s972 + $0xb88] sm:$0xff] %v1711
                  %v1713 = vld [vmem:[%s971 + $0x1720] sm:$0xff]
                  %1714 = vst [vmem:[%s972 + $0xb90] sm:$0xff] %v1713
                  %v1715 = vld [vmem:[%s971 + $0x1730] sm:$0xff]
                  %1716 = vst [vmem:[%s972 + $0xb98] sm:$0xff] %v1715
                  %v1717 = vld [vmem:[%s971 + $0x1740] sm:$0xff]
                  %1718 = vst [vmem:[%s972 + $0xba0] sm:$0xff] %v1717
                  %v1719 = vld [vmem:[%s971 + $0x1750] sm:$0xff]
                  %1720 = vst [vmem:[%s972 + $0xba8] sm:$0xff] %v1719
                  %v1721 = vld [vmem:[%s971 + $0x1760] sm:$0xff]
                  %1722 = vst [vmem:[%s972 + $0xbb0] sm:$0xff] %v1721
                  %v1723 = vld [vmem:[%s971 + $0x1770] sm:$0xff]
                  %1724 = vst [vmem:[%s972 + $0xbb8] sm:$0xff] %v1723
                  %v1725 = vld [vmem:[%s971 + $0x1780] sm:$0xff]
                  %1726 = vst [vmem:[%s972 + $0xbc0] sm:$0xff] %v1725
                  %v1727 = vld [vmem:[%s971 + $0x1790] sm:$0xff]
                  %1728 = vst [vmem:[%s972 + $0xbc8] sm:$0xff] %v1727
                  %v1729 = vld [vmem:[%s971 + $0x17a0] sm:$0xff]
                  %1730 = vst [vmem:[%s972 + $0xbd0] sm:$0xff] %v1729
                  %v1731 = vld [vmem:[%s971 + $0x17b0] sm:$0xff]
                  %1732 = vst [vmem:[%s972 + $0xbd8] sm:$0xff] %v1731
                  %v1733 = vld [vmem:[%s971 + $0x17c0] sm:$0xff]
                  %1734 = vst [vmem:[%s972 + $0xbe0] sm:$0xff] %v1733
                  %v1735 = vld [vmem:[%s971 + $0x17d0] sm:$0xff]
                  %1736 = vst [vmem:[%s972 + $0xbe8] sm:$0xff] %v1735
                  %v1737 = vld [vmem:[%s971 + $0x17e0] sm:$0xff]
                  %1738 = vst [vmem:[%s972 + $0xbf0] sm:$0xff] %v1737
                  %v1739 = vld [vmem:[%s971 + $0x17f0] sm:$0xff]
                  %1740 = vst [vmem:[%s972 + $0xbf8] sm:$0xff] %v1739
                  %v1741 = vld [vmem:[%s971 + $0x1800] sm:$0xff]
                  %1742 = vst [vmem:[%s972 + $0xc00] sm:$0xff] %v1741
                  %v1743 = vld [vmem:[%s971 + $0x1810] sm:$0xff]
                  %1744 = vst [vmem:[%s972 + $0xc08] sm:$0xff] %v1743
                  %v1745 = vld [vmem:[%s971 + $0x1820] sm:$0xff]
                  %1746 = vst [vmem:[%s972 + $0xc10] sm:$0xff] %v1745
                  %v1747 = vld [vmem:[%s971 + $0x1830] sm:$0xff]
                  %1748 = vst [vmem:[%s972 + $0xc18] sm:$0xff] %v1747
                  %v1749 = vld [vmem:[%s971 + $0x1840] sm:$0xff]
                  %1750 = vst [vmem:[%s972 + $0xc20] sm:$0xff] %v1749
                  %v1751 = vld [vmem:[%s971 + $0x1850] sm:$0xff]
                  %1752 = vst [vmem:[%s972 + $0xc28] sm:$0xff] %v1751
                  %v1753 = vld [vmem:[%s971 + $0x1860] sm:$0xff]
                  %1754 = vst [vmem:[%s972 + $0xc30] sm:$0xff] %v1753
                  %v1755 = vld [vmem:[%s971 + $0x1870] sm:$0xff]
                  %1756 = vst [vmem:[%s972 + $0xc38] sm:$0xff] %v1755
                $region52: #{qnetwork_forward.8} parent=46 // loop_footer
                  %s970 = sadd.s32 1, %s966
                $region53: #{qnetwork_forward.8} parent=46 // loop_footer_branch
                  %965 = sbr.rel target = $region49
                $region54: #{qnetwork_forward.8} parent=46 // loop_exit
                  _
              $region47: #{qnetwork_forward.8} parent=31 // pred_fallthru
                _
              // Predicated region
              $region55: #{qnetwork_forward.8} parent=31 // pred_check
                _
              $region56: #{qnetwork_forward.8} parent=31 // pred_check_branch
                %1758 = sbr.rel target = $region58
              $region57: #{qnetwork_forward.8} parent=31 // pred_region
                _
              $region58: #{qnetwork_forward.8} parent=31 // pred_fallthru
                _
            $region32: #{qnetwork_forward.8} parent=27 // pred_fallthru
              _
            // Predicated region
            $region33: #{qnetwork_forward.8} parent=27 // pred_check
              _
            $region34: #{qnetwork_forward.8} parent=27 // pred_check_branch
              %169 = sbr.rel target = $region36
            $region35: #{qnetwork_forward.8} parent=27 // pred_region
              loop: start=0, step=1, limit=1
              $region37: #{qnetwork_forward.8} parent=35 // loop_pre_header
                _
              $region38: #{qnetwork_forward.8} parent=35 // loop_header
                %s172 = sphi 0, %s176
                %p173 = scmp.ge.s32.totalorder %s172, 1
                %s177 = sphi %s163, %s163
                %s178 = sphi %s160, %s160
              $region39: #{qnetwork_forward.8} parent=35 // loop_header_branch
                %175 = sbr.rel (%p173) target = $region43
              $region40: #{qnetwork_forward.8} parent=35 // loop_body
                %v179 = vld [vmem:[%s177] sm:$0xff]
                %180 = vst [vmem:[%s178] sm:$0xff] %v179
                %v181 = vld [vmem:[%s177 + $0x10] sm:$0xff]
                %182 = vst [vmem:[%s178 + $0x8] sm:$0xff] %v181
                %v183 = vld [vmem:[%s177 + $0x20] sm:$0xff]
                %184 = vst [vmem:[%s178 + $0x10] sm:$0xff] %v183
                %v185 = vld [vmem:[%s177 + $0x30] sm:$0xff]
                %186 = vst [vmem:[%s178 + $0x18] sm:$0xff] %v185
                %v187 = vld [vmem:[%s177 + $0x40] sm:$0xff]
                %188 = vst [vmem:[%s178 + $0x20] sm:$0xff] %v187
                %v189 = vld [vmem:[%s177 + $0x50] sm:$0xff]
                %190 = vst [vmem:[%s178 + $0x28] sm:$0xff] %v189
                %v191 = vld [vmem:[%s177 + $0x60] sm:$0xff]
                %192 = vst [vmem:[%s178 + $0x30] sm:$0xff] %v191
                %v193 = vld [vmem:[%s177 + $0x70] sm:$0xff]
                %194 = vst [vmem:[%s178 + $0x38] sm:$0xff] %v193
                %v195 = vld [vmem:[%s177 + $0x80] sm:$0xff]
                %196 = vst [vmem:[%s178 + $0x40] sm:$0xff] %v195
                %v197 = vld [vmem:[%s177 + $0x90] sm:$0xff]
                %198 = vst [vmem:[%s178 + $0x48] sm:$0xff] %v197
                %v199 = vld [vmem:[%s177 + $0xa0] sm:$0xff]
                %200 = vst [vmem:[%s178 + $0x50] sm:$0xff] %v199
                %v201 = vld [vmem:[%s177 + $0xb0] sm:$0xff]
                %202 = vst [vmem:[%s178 + $0x58] sm:$0xff] %v201
                %v203 = vld [vmem:[%s177 + $0xc0] sm:$0xff]
                %204 = vst [vmem:[%s178 + $0x60] sm:$0xff] %v203
                %v205 = vld [vmem:[%s177 + $0xd0] sm:$0xff]
                %206 = vst [vmem:[%s178 + $0x68] sm:$0xff] %v205
                %v207 = vld [vmem:[%s177 + $0xe0] sm:$0xff]
                %208 = vst [vmem:[%s178 + $0x70] sm:$0xff] %v207
                %v209 = vld [vmem:[%s177 + $0xf0] sm:$0xff]
                %210 = vst [vmem:[%s178 + $0x78] sm:$0xff] %v209
                %v211 = vld [vmem:[%s177 + $0x100] sm:$0xff]
                %212 = vst [vmem:[%s178 + $0x80] sm:$0xff] %v211
                %v213 = vld [vmem:[%s177 + $0x110] sm:$0xff]
                %214 = vst [vmem:[%s178 + $0x88] sm:$0xff] %v213
                %v215 = vld [vmem:[%s177 + $0x120] sm:$0xff]
                %216 = vst [vmem:[%s178 + $0x90] sm:$0xff] %v215
                %v217 = vld [vmem:[%s177 + $0x130] sm:$0xff]
                %218 = vst [vmem:[%s178 + $0x98] sm:$0xff] %v217
                %v219 = vld [vmem:[%s177 + $0x140] sm:$0xff]
                %220 = vst [vmem:[%s178 + $0xa0] sm:$0xff] %v219
                %v221 = vld [vmem:[%s177 + $0x150] sm:$0xff]
                %222 = vst [vmem:[%s178 + $0xa8] sm:$0xff] %v221
                %v223 = vld [vmem:[%s177 + $0x160] sm:$0xff]
                %224 = vst [vmem:[%s178 + $0xb0] sm:$0xff] %v223
                %v225 = vld [vmem:[%s177 + $0x170] sm:$0xff]
                %226 = vst [vmem:[%s178 + $0xb8] sm:$0xff] %v225
                %v227 = vld [vmem:[%s177 + $0x180] sm:$0xff]
                %228 = vst [vmem:[%s178 + $0xc0] sm:$0xff] %v227
                %v229 = vld [vmem:[%s177 + $0x190] sm:$0xff]
                %230 = vst [vmem:[%s178 + $0xc8] sm:$0xff] %v229
                %v231 = vld [vmem:[%s177 + $0x1a0] sm:$0xff]
                %232 = vst [vmem:[%s178 + $0xd0] sm:$0xff] %v231
                %v233 = vld [vmem:[%s177 + $0x1b0] sm:$0xff]
                %234 = vst [vmem:[%s178 + $0xd8] sm:$0xff] %v233
                %v235 = vld [vmem:[%s177 + $0x1c0] sm:$0xff]
                %236 = vst [vmem:[%s178 + $0xe0] sm:$0xff] %v235
                %v237 = vld [vmem:[%s177 + $0x1d0] sm:$0xff]
                %238 = vst [vmem:[%s178 + $0xe8] sm:$0xff] %v237
                %v239 = vld [vmem:[%s177 + $0x1e0] sm:$0xff]
                %240 = vst [vmem:[%s178 + $0xf0] sm:$0xff] %v239
                %v241 = vld [vmem:[%s177 + $0x1f0] sm:$0xff]
                %242 = vst [vmem:[%s178 + $0xf8] sm:$0xff] %v241
                %v243 = vld [vmem:[%s177 + $0x200] sm:$0xff]
                %244 = vst [vmem:[%s178 + $0x100] sm:$0xff] %v243
                %v245 = vld [vmem:[%s177 + $0x210] sm:$0xff]
                %246 = vst [vmem:[%s178 + $0x108] sm:$0xff] %v245
                %v247 = vld [vmem:[%s177 + $0x220] sm:$0xff]
                %248 = vst [vmem:[%s178 + $0x110] sm:$0xff] %v247
                %v249 = vld [vmem:[%s177 + $0x230] sm:$0xff]
                %250 = vst [vmem:[%s178 + $0x118] sm:$0xff] %v249
                %v251 = vld [vmem:[%s177 + $0x240] sm:$0xff]
                %252 = vst [vmem:[%s178 + $0x120] sm:$0xff] %v251
                %v253 = vld [vmem:[%s177 + $0x250] sm:$0xff]
                %254 = vst [vmem:[%s178 + $0x128] sm:$0xff] %v253
                %v255 = vld [vmem:[%s177 + $0x260] sm:$0xff]
                %256 = vst [vmem:[%s178 + $0x130] sm:$0xff] %v255
                %v257 = vld [vmem:[%s177 + $0x270] sm:$0xff]
                %258 = vst [vmem:[%s178 + $0x138] sm:$0xff] %v257
                %v259 = vld [vmem:[%s177 + $0x280] sm:$0xff]
                %260 = vst [vmem:[%s178 + $0x140] sm:$0xff] %v259
                %v261 = vld [vmem:[%s177 + $0x290] sm:$0xff]
                %262 = vst [vmem:[%s178 + $0x148] sm:$0xff] %v261
                %v263 = vld [vmem:[%s177 + $0x2a0] sm:$0xff]
                %264 = vst [vmem:[%s178 + $0x150] sm:$0xff] %v263
                %v265 = vld [vmem:[%s177 + $0x2b0] sm:$0xff]
                %266 = vst [vmem:[%s178 + $0x158] sm:$0xff] %v265
                %v267 = vld [vmem:[%s177 + $0x2c0] sm:$0xff]
                %268 = vst [vmem:[%s178 + $0x160] sm:$0xff] %v267
                %v269 = vld [vmem:[%s177 + $0x2d0] sm:$0xff]
                %270 = vst [vmem:[%s178 + $0x168] sm:$0xff] %v269
                %v271 = vld [vmem:[%s177 + $0x2e0] sm:$0xff]
                %272 = vst [vmem:[%s178 + $0x170] sm:$0xff] %v271
                %v273 = vld [vmem:[%s177 + $0x2f0] sm:$0xff]
                %274 = vst [vmem:[%s178 + $0x178] sm:$0xff] %v273
                %v275 = vld [vmem:[%s177 + $0x300] sm:$0xff]
                %276 = vst [vmem:[%s178 + $0x180] sm:$0xff] %v275
                %v277 = vld [vmem:[%s177 + $0x310] sm:$0xff]
                %278 = vst [vmem:[%s178 + $0x188] sm:$0xff] %v277
                %v279 = vld [vmem:[%s177 + $0x320] sm:$0xff]
                %280 = vst [vmem:[%s178 + $0x190] sm:$0xff] %v279
                %v281 = vld [vmem:[%s177 + $0x330] sm:$0xff]
                %282 = vst [vmem:[%s178 + $0x198] sm:$0xff] %v281
                %v283 = vld [vmem:[%s177 + $0x340] sm:$0xff]
                %284 = vst [vmem:[%s178 + $0x1a0] sm:$0xff] %v283
                %v285 = vld [vmem:[%s177 + $0x350] sm:$0xff]
                %286 = vst [vmem:[%s178 + $0x1a8] sm:$0xff] %v285
                %v287 = vld [vmem:[%s177 + $0x360] sm:$0xff]
                %288 = vst [vmem:[%s178 + $0x1b0] sm:$0xff] %v287
                %v289 = vld [vmem:[%s177 + $0x370] sm:$0xff]
                %290 = vst [vmem:[%s178 + $0x1b8] sm:$0xff] %v289
                %v291 = vld [vmem:[%s177 + $0x380] sm:$0xff]
                %292 = vst [vmem:[%s178 + $0x1c0] sm:$0xff] %v291
                %v293 = vld [vmem:[%s177 + $0x390] sm:$0xff]
                %294 = vst [vmem:[%s178 + $0x1c8] sm:$0xff] %v293
                %v295 = vld [vmem:[%s177 + $0x3a0] sm:$0xff]
                %296 = vst [vmem:[%s178 + $0x1d0] sm:$0xff] %v295
                %v297 = vld [vmem:[%s177 + $0x3b0] sm:$0xff]
                %298 = vst [vmem:[%s178 + $0x1d8] sm:$0xff] %v297
                %v299 = vld [vmem:[%s177 + $0x3c0] sm:$0xff]
                %300 = vst [vmem:[%s178 + $0x1e0] sm:$0xff] %v299
                %v301 = vld [vmem:[%s177 + $0x3d0] sm:$0xff]
                %302 = vst [vmem:[%s178 + $0x1e8] sm:$0xff] %v301
                %v303 = vld [vmem:[%s177 + $0x3e0] sm:$0xff]
                %304 = vst [vmem:[%s178 + $0x1f0] sm:$0xff] %v303
                %v305 = vld [vmem:[%s177 + $0x3f0] sm:$0xff]
                %306 = vst [vmem:[%s178 + $0x1f8] sm:$0xff] %v305
                %v307 = vld [vmem:[%s177 + $0x400] sm:$0xff]
                %308 = vst [vmem:[%s178 + $0x200] sm:$0xff] %v307
                %v309 = vld [vmem:[%s177 + $0x410] sm:$0xff]
                %310 = vst [vmem:[%s178 + $0x208] sm:$0xff] %v309
                %v311 = vld [vmem:[%s177 + $0x420] sm:$0xff]
                %312 = vst [vmem:[%s178 + $0x210] sm:$0xff] %v311
                %v313 = vld [vmem:[%s177 + $0x430] sm:$0xff]
                %314 = vst [vmem:[%s178 + $0x218] sm:$0xff] %v313
                %v315 = vld [vmem:[%s177 + $0x440] sm:$0xff]
                %316 = vst [vmem:[%s178 + $0x220] sm:$0xff] %v315
                %v317 = vld [vmem:[%s177 + $0x450] sm:$0xff]
                %318 = vst [vmem:[%s178 + $0x228] sm:$0xff] %v317
                %v319 = vld [vmem:[%s177 + $0x460] sm:$0xff]
                %320 = vst [vmem:[%s178 + $0x230] sm:$0xff] %v319
                %v321 = vld [vmem:[%s177 + $0x470] sm:$0xff]
                %322 = vst [vmem:[%s178 + $0x238] sm:$0xff] %v321
                %v323 = vld [vmem:[%s177 + $0x480] sm:$0xff]
                %324 = vst [vmem:[%s178 + $0x240] sm:$0xff] %v323
                %v325 = vld [vmem:[%s177 + $0x490] sm:$0xff]
                %326 = vst [vmem:[%s178 + $0x248] sm:$0xff] %v325
                %v327 = vld [vmem:[%s177 + $0x4a0] sm:$0xff]
                %328 = vst [vmem:[%s178 + $0x250] sm:$0xff] %v327
                %v329 = vld [vmem:[%s177 + $0x4b0] sm:$0xff]
                %330 = vst [vmem:[%s178 + $0x258] sm:$0xff] %v329
                %v331 = vld [vmem:[%s177 + $0x4c0] sm:$0xff]
                %332 = vst [vmem:[%s178 + $0x260] sm:$0xff] %v331
                %v333 = vld [vmem:[%s177 + $0x4d0] sm:$0xff]
                %334 = vst [vmem:[%s178 + $0x268] sm:$0xff] %v333
                %v335 = vld [vmem:[%s177 + $0x4e0] sm:$0xff]
                %336 = vst [vmem:[%s178 + $0x270] sm:$0xff] %v335
                %v337 = vld [vmem:[%s177 + $0x4f0] sm:$0xff]
                %338 = vst [vmem:[%s178 + $0x278] sm:$0xff] %v337
                %v339 = vld [vmem:[%s177 + $0x500] sm:$0xff]
                %340 = vst [vmem:[%s178 + $0x280] sm:$0xff] %v339
                %v341 = vld [vmem:[%s177 + $0x510] sm:$0xff]
                %342 = vst [vmem:[%s178 + $0x288] sm:$0xff] %v341
                %v343 = vld [vmem:[%s177 + $0x520] sm:$0xff]
                %344 = vst [vmem:[%s178 + $0x290] sm:$0xff] %v343
                %v345 = vld [vmem:[%s177 + $0x530] sm:$0xff]
                %346 = vst [vmem:[%s178 + $0x298] sm:$0xff] %v345
                %v347 = vld [vmem:[%s177 + $0x540] sm:$0xff]
                %348 = vst [vmem:[%s178 + $0x2a0] sm:$0xff] %v347
                %v349 = vld [vmem:[%s177 + $0x550] sm:$0xff]
                %350 = vst [vmem:[%s178 + $0x2a8] sm:$0xff] %v349
                %v351 = vld [vmem:[%s177 + $0x560] sm:$0xff]
                %352 = vst [vmem:[%s178 + $0x2b0] sm:$0xff] %v351
                %v353 = vld [vmem:[%s177 + $0x570] sm:$0xff]
                %354 = vst [vmem:[%s178 + $0x2b8] sm:$0xff] %v353
                %v355 = vld [vmem:[%s177 + $0x580] sm:$0xff]
                %356 = vst [vmem:[%s178 + $0x2c0] sm:$0xff] %v355
                %v357 = vld [vmem:[%s177 + $0x590] sm:$0xff]
                %358 = vst [vmem:[%s178 + $0x2c8] sm:$0xff] %v357
                %v359 = vld [vmem:[%s177 + $0x5a0] sm:$0xff]
                %360 = vst [vmem:[%s178 + $0x2d0] sm:$0xff] %v359
                %v361 = vld [vmem:[%s177 + $0x5b0] sm:$0xff]
                %362 = vst [vmem:[%s178 + $0x2d8] sm:$0xff] %v361
                %v363 = vld [vmem:[%s177 + $0x5c0] sm:$0xff]
                %364 = vst [vmem:[%s178 + $0x2e0] sm:$0xff] %v363
                %v365 = vld [vmem:[%s177 + $0x5d0] sm:$0xff]
                %366 = vst [vmem:[%s178 + $0x2e8] sm:$0xff] %v365
                %v367 = vld [vmem:[%s177 + $0x5e0] sm:$0xff]
                %368 = vst [vmem:[%s178 + $0x2f0] sm:$0xff] %v367
                %v369 = vld [vmem:[%s177 + $0x5f0] sm:$0xff]
                %370 = vst [vmem:[%s178 + $0x2f8] sm:$0xff] %v369
                %v371 = vld [vmem:[%s177 + $0x600] sm:$0xff]
                %372 = vst [vmem:[%s178 + $0x300] sm:$0xff] %v371
                %v373 = vld [vmem:[%s177 + $0x610] sm:$0xff]
                %374 = vst [vmem:[%s178 + $0x308] sm:$0xff] %v373
                %v375 = vld [vmem:[%s177 + $0x620] sm:$0xff]
                %376 = vst [vmem:[%s178 + $0x310] sm:$0xff] %v375
                %v377 = vld [vmem:[%s177 + $0x630] sm:$0xff]
                %378 = vst [vmem:[%s178 + $0x318] sm:$0xff] %v377
                %v379 = vld [vmem:[%s177 + $0x640] sm:$0xff]
                %380 = vst [vmem:[%s178 + $0x320] sm:$0xff] %v379
                %v381 = vld [vmem:[%s177 + $0x650] sm:$0xff]
                %382 = vst [vmem:[%s178 + $0x328] sm:$0xff] %v381
                %v383 = vld [vmem:[%s177 + $0x660] sm:$0xff]
                %384 = vst [vmem:[%s178 + $0x330] sm:$0xff] %v383
                %v385 = vld [vmem:[%s177 + $0x670] sm:$0xff]
                %386 = vst [vmem:[%s178 + $0x338] sm:$0xff] %v385
                %v387 = vld [vmem:[%s177 + $0x680] sm:$0xff]
                %388 = vst [vmem:[%s178 + $0x340] sm:$0xff] %v387
                %v389 = vld [vmem:[%s177 + $0x690] sm:$0xff]
                %390 = vst [vmem:[%s178 + $0x348] sm:$0xff] %v389
                %v391 = vld [vmem:[%s177 + $0x6a0] sm:$0xff]
                %392 = vst [vmem:[%s178 + $0x350] sm:$0xff] %v391
                %v393 = vld [vmem:[%s177 + $0x6b0] sm:$0xff]
                %394 = vst [vmem:[%s178 + $0x358] sm:$0xff] %v393
                %v395 = vld [vmem:[%s177 + $0x6c0] sm:$0xff]
                %396 = vst [vmem:[%s178 + $0x360] sm:$0xff] %v395
                %v397 = vld [vmem:[%s177 + $0x6d0] sm:$0xff]
                %398 = vst [vmem:[%s178 + $0x368] sm:$0xff] %v397
                %v399 = vld [vmem:[%s177 + $0x6e0] sm:$0xff]
                %400 = vst [vmem:[%s178 + $0x370] sm:$0xff] %v399
                %v401 = vld [vmem:[%s177 + $0x6f0] sm:$0xff]
                %402 = vst [vmem:[%s178 + $0x378] sm:$0xff] %v401
                %v403 = vld [vmem:[%s177 + $0x700] sm:$0xff]
                %404 = vst [vmem:[%s178 + $0x380] sm:$0xff] %v403
                %v405 = vld [vmem:[%s177 + $0x710] sm:$0xff]
                %406 = vst [vmem:[%s178 + $0x388] sm:$0xff] %v405
                %v407 = vld [vmem:[%s177 + $0x720] sm:$0xff]
                %408 = vst [vmem:[%s178 + $0x390] sm:$0xff] %v407
                %v409 = vld [vmem:[%s177 + $0x730] sm:$0xff]
                %410 = vst [vmem:[%s178 + $0x398] sm:$0xff] %v409
                %v411 = vld [vmem:[%s177 + $0x740] sm:$0xff]
                %412 = vst [vmem:[%s178 + $0x3a0] sm:$0xff] %v411
                %v413 = vld [vmem:[%s177 + $0x750] sm:$0xff]
                %414 = vst [vmem:[%s178 + $0x3a8] sm:$0xff] %v413
                %v415 = vld [vmem:[%s177 + $0x760] sm:$0xff]
                %416 = vst [vmem:[%s178 + $0x3b0] sm:$0xff] %v415
                %v417 = vld [vmem:[%s177 + $0x770] sm:$0xff]
                %418 = vst [vmem:[%s178 + $0x3b8] sm:$0xff] %v417
                %v419 = vld [vmem:[%s177 + $0x780] sm:$0xff]
                %420 = vst [vmem:[%s178 + $0x3c0] sm:$0xff] %v419
                %v421 = vld [vmem:[%s177 + $0x790] sm:$0xff]
                %422 = vst [vmem:[%s178 + $0x3c8] sm:$0xff] %v421
                %v423 = vld [vmem:[%s177 + $0x7a0] sm:$0xff]
                %424 = vst [vmem:[%s178 + $0x3d0] sm:$0xff] %v423
                %v425 = vld [vmem:[%s177 + $0x7b0] sm:$0xff]
                %426 = vst [vmem:[%s178 + $0x3d8] sm:$0xff] %v425
                %v427 = vld [vmem:[%s177 + $0x7c0] sm:$0xff]
                %428 = vst [vmem:[%s178 + $0x3e0] sm:$0xff] %v427
                %v429 = vld [vmem:[%s177 + $0x7d0] sm:$0xff]
                %430 = vst [vmem:[%s178 + $0x3e8] sm:$0xff] %v429
                %v431 = vld [vmem:[%s177 + $0x7e0] sm:$0xff]
                %432 = vst [vmem:[%s178 + $0x3f0] sm:$0xff] %v431
                %v433 = vld [vmem:[%s177 + $0x7f0] sm:$0xff]
                %434 = vst [vmem:[%s178 + $0x3f8] sm:$0xff] %v433
                %v435 = vld [vmem:[%s177 + $0x800] sm:$0xff]
                %436 = vst [vmem:[%s178 + $0x400] sm:$0xff] %v435
                %v437 = vld [vmem:[%s177 + $0x810] sm:$0xff]
                %438 = vst [vmem:[%s178 + $0x408] sm:$0xff] %v437
                %v439 = vld [vmem:[%s177 + $0x820] sm:$0xff]
                %440 = vst [vmem:[%s178 + $0x410] sm:$0xff] %v439
                %v441 = vld [vmem:[%s177 + $0x830] sm:$0xff]
                %442 = vst [vmem:[%s178 + $0x418] sm:$0xff] %v441
                %v443 = vld [vmem:[%s177 + $0x840] sm:$0xff]
                %444 = vst [vmem:[%s178 + $0x420] sm:$0xff] %v443
                %v445 = vld [vmem:[%s177 + $0x850] sm:$0xff]
                %446 = vst [vmem:[%s178 + $0x428] sm:$0xff] %v445
                %v447 = vld [vmem:[%s177 + $0x860] sm:$0xff]
                %448 = vst [vmem:[%s178 + $0x430] sm:$0xff] %v447
                %v449 = vld [vmem:[%s177 + $0x870] sm:$0xff]
                %450 = vst [vmem:[%s178 + $0x438] sm:$0xff] %v449
                %v451 = vld [vmem:[%s177 + $0x880] sm:$0xff]
                %452 = vst [vmem:[%s178 + $0x440] sm:$0xff] %v451
                %v453 = vld [vmem:[%s177 + $0x890] sm:$0xff]
                %454 = vst [vmem:[%s178 + $0x448] sm:$0xff] %v453
                %v455 = vld [vmem:[%s177 + $0x8a0] sm:$0xff]
                %456 = vst [vmem:[%s178 + $0x450] sm:$0xff] %v455
                %v457 = vld [vmem:[%s177 + $0x8b0] sm:$0xff]
                %458 = vst [vmem:[%s178 + $0x458] sm:$0xff] %v457
                %v459 = vld [vmem:[%s177 + $0x8c0] sm:$0xff]
                %460 = vst [vmem:[%s178 + $0x460] sm:$0xff] %v459
                %v461 = vld [vmem:[%s177 + $0x8d0] sm:$0xff]
                %462 = vst [vmem:[%s178 + $0x468] sm:$0xff] %v461
                %v463 = vld [vmem:[%s177 + $0x8e0] sm:$0xff]
                %464 = vst [vmem:[%s178 + $0x470] sm:$0xff] %v463
                %v465 = vld [vmem:[%s177 + $0x8f0] sm:$0xff]
                %466 = vst [vmem:[%s178 + $0x478] sm:$0xff] %v465
                %v467 = vld [vmem:[%s177 + $0x900] sm:$0xff]
                %468 = vst [vmem:[%s178 + $0x480] sm:$0xff] %v467
                %v469 = vld [vmem:[%s177 + $0x910] sm:$0xff]
                %470 = vst [vmem:[%s178 + $0x488] sm:$0xff] %v469
                %v471 = vld [vmem:[%s177 + $0x920] sm:$0xff]
                %472 = vst [vmem:[%s178 + $0x490] sm:$0xff] %v471
                %v473 = vld [vmem:[%s177 + $0x930] sm:$0xff]
                %474 = vst [vmem:[%s178 + $0x498] sm:$0xff] %v473
                %v475 = vld [vmem:[%s177 + $0x940] sm:$0xff]
                %476 = vst [vmem:[%s178 + $0x4a0] sm:$0xff] %v475
                %v477 = vld [vmem:[%s177 + $0x950] sm:$0xff]
                %478 = vst [vmem:[%s178 + $0x4a8] sm:$0xff] %v477
                %v479 = vld [vmem:[%s177 + $0x960] sm:$0xff]
                %480 = vst [vmem:[%s178 + $0x4b0] sm:$0xff] %v479
                %v481 = vld [vmem:[%s177 + $0x970] sm:$0xff]
                %482 = vst [vmem:[%s178 + $0x4b8] sm:$0xff] %v481
                %v483 = vld [vmem:[%s177 + $0x980] sm:$0xff]
                %484 = vst [vmem:[%s178 + $0x4c0] sm:$0xff] %v483
                %v485 = vld [vmem:[%s177 + $0x990] sm:$0xff]
                %486 = vst [vmem:[%s178 + $0x4c8] sm:$0xff] %v485
                %v487 = vld [vmem:[%s177 + $0x9a0] sm:$0xff]
                %488 = vst [vmem:[%s178 + $0x4d0] sm:$0xff] %v487
                %v489 = vld [vmem:[%s177 + $0x9b0] sm:$0xff]
                %490 = vst [vmem:[%s178 + $0x4d8] sm:$0xff] %v489
                %v491 = vld [vmem:[%s177 + $0x9c0] sm:$0xff]
                %492 = vst [vmem:[%s178 + $0x4e0] sm:$0xff] %v491
                %v493 = vld [vmem:[%s177 + $0x9d0] sm:$0xff]
                %494 = vst [vmem:[%s178 + $0x4e8] sm:$0xff] %v493
                %v495 = vld [vmem:[%s177 + $0x9e0] sm:$0xff]
                %496 = vst [vmem:[%s178 + $0x4f0] sm:$0xff] %v495
                %v497 = vld [vmem:[%s177 + $0x9f0] sm:$0xff]
                %498 = vst [vmem:[%s178 + $0x4f8] sm:$0xff] %v497
                %v499 = vld [vmem:[%s177 + $0xa00] sm:$0xff]
                %500 = vst [vmem:[%s178 + $0x500] sm:$0xff] %v499
                %v501 = vld [vmem:[%s177 + $0xa10] sm:$0xff]
                %502 = vst [vmem:[%s178 + $0x508] sm:$0xff] %v501
                %v503 = vld [vmem:[%s177 + $0xa20] sm:$0xff]
                %504 = vst [vmem:[%s178 + $0x510] sm:$0xff] %v503
                %v505 = vld [vmem:[%s177 + $0xa30] sm:$0xff]
                %506 = vst [vmem:[%s178 + $0x518] sm:$0xff] %v505
                %v507 = vld [vmem:[%s177 + $0xa40] sm:$0xff]
                %508 = vst [vmem:[%s178 + $0x520] sm:$0xff] %v507
                %v509 = vld [vmem:[%s177 + $0xa50] sm:$0xff]
                %510 = vst [vmem:[%s178 + $0x528] sm:$0xff] %v509
                %v511 = vld [vmem:[%s177 + $0xa60] sm:$0xff]
                %512 = vst [vmem:[%s178 + $0x530] sm:$0xff] %v511
                %v513 = vld [vmem:[%s177 + $0xa70] sm:$0xff]
                %514 = vst [vmem:[%s178 + $0x538] sm:$0xff] %v513
                %v515 = vld [vmem:[%s177 + $0xa80] sm:$0xff]
                %516 = vst [vmem:[%s178 + $0x540] sm:$0xff] %v515
                %v517 = vld [vmem:[%s177 + $0xa90] sm:$0xff]
                %518 = vst [vmem:[%s178 + $0x548] sm:$0xff] %v517
                %v519 = vld [vmem:[%s177 + $0xaa0] sm:$0xff]
                %520 = vst [vmem:[%s178 + $0x550] sm:$0xff] %v519
                %v521 = vld [vmem:[%s177 + $0xab0] sm:$0xff]
                %522 = vst [vmem:[%s178 + $0x558] sm:$0xff] %v521
                %v523 = vld [vmem:[%s177 + $0xac0] sm:$0xff]
                %524 = vst [vmem:[%s178 + $0x560] sm:$0xff] %v523
                %v525 = vld [vmem:[%s177 + $0xad0] sm:$0xff]
                %526 = vst [vmem:[%s178 + $0x568] sm:$0xff] %v525
                %v527 = vld [vmem:[%s177 + $0xae0] sm:$0xff]
                %528 = vst [vmem:[%s178 + $0x570] sm:$0xff] %v527
                %v529 = vld [vmem:[%s177 + $0xaf0] sm:$0xff]
                %530 = vst [vmem:[%s178 + $0x578] sm:$0xff] %v529
                %v531 = vld [vmem:[%s177 + $0xb00] sm:$0xff]
                %532 = vst [vmem:[%s178 + $0x580] sm:$0xff] %v531
                %v533 = vld [vmem:[%s177 + $0xb10] sm:$0xff]
                %534 = vst [vmem:[%s178 + $0x588] sm:$0xff] %v533
                %v535 = vld [vmem:[%s177 + $0xb20] sm:$0xff]
                %536 = vst [vmem:[%s178 + $0x590] sm:$0xff] %v535
                %v537 = vld [vmem:[%s177 + $0xb30] sm:$0xff]
                %538 = vst [vmem:[%s178 + $0x598] sm:$0xff] %v537
                %v539 = vld [vmem:[%s177 + $0xb40] sm:$0xff]
                %540 = vst [vmem:[%s178 + $0x5a0] sm:$0xff] %v539
                %v541 = vld [vmem:[%s177 + $0xb50] sm:$0xff]
                %542 = vst [vmem:[%s178 + $0x5a8] sm:$0xff] %v541
                %v543 = vld [vmem:[%s177 + $0xb60] sm:$0xff]
                %544 = vst [vmem:[%s178 + $0x5b0] sm:$0xff] %v543
                %v545 = vld [vmem:[%s177 + $0xb70] sm:$0xff]
                %546 = vst [vmem:[%s178 + $0x5b8] sm:$0xff] %v545
                %v547 = vld [vmem:[%s177 + $0xb80] sm:$0xff]
                %548 = vst [vmem:[%s178 + $0x5c0] sm:$0xff] %v547
                %v549 = vld [vmem:[%s177 + $0xb90] sm:$0xff]
                %550 = vst [vmem:[%s178 + $0x5c8] sm:$0xff] %v549
                %v551 = vld [vmem:[%s177 + $0xba0] sm:$0xff]
                %552 = vst [vmem:[%s178 + $0x5d0] sm:$0xff] %v551
                %v553 = vld [vmem:[%s177 + $0xbb0] sm:$0xff]
                %554 = vst [vmem:[%s178 + $0x5d8] sm:$0xff] %v553
                %v555 = vld [vmem:[%s177 + $0xbc0] sm:$0xff]
                %556 = vst [vmem:[%s178 + $0x5e0] sm:$0xff] %v555
                %v557 = vld [vmem:[%s177 + $0xbd0] sm:$0xff]
                %558 = vst [vmem:[%s178 + $0x5e8] sm:$0xff] %v557
                %v559 = vld [vmem:[%s177 + $0xbe0] sm:$0xff]
                %560 = vst [vmem:[%s178 + $0x5f0] sm:$0xff] %v559
                %v561 = vld [vmem:[%s177 + $0xbf0] sm:$0xff]
                %562 = vst [vmem:[%s178 + $0x5f8] sm:$0xff] %v561
                %v563 = vld [vmem:[%s177 + $0xc00] sm:$0xff]
                %564 = vst [vmem:[%s178 + $0x600] sm:$0xff] %v563
                %v565 = vld [vmem:[%s177 + $0xc10] sm:$0xff]
                %566 = vst [vmem:[%s178 + $0x608] sm:$0xff] %v565
                %v567 = vld [vmem:[%s177 + $0xc20] sm:$0xff]
                %568 = vst [vmem:[%s178 + $0x610] sm:$0xff] %v567
                %v569 = vld [vmem:[%s177 + $0xc30] sm:$0xff]
                %570 = vst [vmem:[%s178 + $0x618] sm:$0xff] %v569
                %v571 = vld [vmem:[%s177 + $0xc40] sm:$0xff]
                %572 = vst [vmem:[%s178 + $0x620] sm:$0xff] %v571
                %v573 = vld [vmem:[%s177 + $0xc50] sm:$0xff]
                %574 = vst [vmem:[%s178 + $0x628] sm:$0xff] %v573
                %v575 = vld [vmem:[%s177 + $0xc60] sm:$0xff]
                %576 = vst [vmem:[%s178 + $0x630] sm:$0xff] %v575
                %v577 = vld [vmem:[%s177 + $0xc70] sm:$0xff]
                %578 = vst [vmem:[%s178 + $0x638] sm:$0xff] %v577
                %v579 = vld [vmem:[%s177 + $0xc80] sm:$0xff]
                %580 = vst [vmem:[%s178 + $0x640] sm:$0xff] %v579
                %v581 = vld [vmem:[%s177 + $0xc90] sm:$0xff]
                %582 = vst [vmem:[%s178 + $0x648] sm:$0xff] %v581
                %v583 = vld [vmem:[%s177 + $0xca0] sm:$0xff]
                %584 = vst [vmem:[%s178 + $0x650] sm:$0xff] %v583
                %v585 = vld [vmem:[%s177 + $0xcb0] sm:$0xff]
                %586 = vst [vmem:[%s178 + $0x658] sm:$0xff] %v585
                %v587 = vld [vmem:[%s177 + $0xcc0] sm:$0xff]
                %588 = vst [vmem:[%s178 + $0x660] sm:$0xff] %v587
                %v589 = vld [vmem:[%s177 + $0xcd0] sm:$0xff]
                %590 = vst [vmem:[%s178 + $0x668] sm:$0xff] %v589
                %v591 = vld [vmem:[%s177 + $0xce0] sm:$0xff]
                %592 = vst [vmem:[%s178 + $0x670] sm:$0xff] %v591
                %v593 = vld [vmem:[%s177 + $0xcf0] sm:$0xff]
                %594 = vst [vmem:[%s178 + $0x678] sm:$0xff] %v593
                %v595 = vld [vmem:[%s177 + $0xd00] sm:$0xff]
                %596 = vst [vmem:[%s178 + $0x680] sm:$0xff] %v595
                %v597 = vld [vmem:[%s177 + $0xd10] sm:$0xff]
                %598 = vst [vmem:[%s178 + $0x688] sm:$0xff] %v597
                %v599 = vld [vmem:[%s177 + $0xd20] sm:$0xff]
                %600 = vst [vmem:[%s178 + $0x690] sm:$0xff] %v599
                %v601 = vld [vmem:[%s177 + $0xd30] sm:$0xff]
                %602 = vst [vmem:[%s178 + $0x698] sm:$0xff] %v601
                %v603 = vld [vmem:[%s177 + $0xd40] sm:$0xff]
                %604 = vst [vmem:[%s178 + $0x6a0] sm:$0xff] %v603
                %v605 = vld [vmem:[%s177 + $0xd50] sm:$0xff]
                %606 = vst [vmem:[%s178 + $0x6a8] sm:$0xff] %v605
                %v607 = vld [vmem:[%s177 + $0xd60] sm:$0xff]
                %608 = vst [vmem:[%s178 + $0x6b0] sm:$0xff] %v607
                %v609 = vld [vmem:[%s177 + $0xd70] sm:$0xff]
                %610 = vst [vmem:[%s178 + $0x6b8] sm:$0xff] %v609
                %v611 = vld [vmem:[%s177 + $0xd80] sm:$0xff]
                %612 = vst [vmem:[%s178 + $0x6c0] sm:$0xff] %v611
                %v613 = vld [vmem:[%s177 + $0xd90] sm:$0xff]
                %614 = vst [vmem:[%s178 + $0x6c8] sm:$0xff] %v613
                %v615 = vld [vmem:[%s177 + $0xda0] sm:$0xff]
                %616 = vst [vmem:[%s178 + $0x6d0] sm:$0xff] %v615
                %v617 = vld [vmem:[%s177 + $0xdb0] sm:$0xff]
                %618 = vst [vmem:[%s178 + $0x6d8] sm:$0xff] %v617
                %v619 = vld [vmem:[%s177 + $0xdc0] sm:$0xff]
                %620 = vst [vmem:[%s178 + $0x6e0] sm:$0xff] %v619
                %v621 = vld [vmem:[%s177 + $0xdd0] sm:$0xff]
                %622 = vst [vmem:[%s178 + $0x6e8] sm:$0xff] %v621
                %v623 = vld [vmem:[%s177 + $0xde0] sm:$0xff]
                %624 = vst [vmem:[%s178 + $0x6f0] sm:$0xff] %v623
                %v625 = vld [vmem:[%s177 + $0xdf0] sm:$0xff]
                %626 = vst [vmem:[%s178 + $0x6f8] sm:$0xff] %v625
                %v627 = vld [vmem:[%s177 + $0xe00] sm:$0xff]
                %628 = vst [vmem:[%s178 + $0x700] sm:$0xff] %v627
                %v629 = vld [vmem:[%s177 + $0xe10] sm:$0xff]
                %630 = vst [vmem:[%s178 + $0x708] sm:$0xff] %v629
                %v631 = vld [vmem:[%s177 + $0xe20] sm:$0xff]
                %632 = vst [vmem:[%s178 + $0x710] sm:$0xff] %v631
                %v633 = vld [vmem:[%s177 + $0xe30] sm:$0xff]
                %634 = vst [vmem:[%s178 + $0x718] sm:$0xff] %v633
                %v635 = vld [vmem:[%s177 + $0xe40] sm:$0xff]
                %636 = vst [vmem:[%s178 + $0x720] sm:$0xff] %v635
                %v637 = vld [vmem:[%s177 + $0xe50] sm:$0xff]
                %638 = vst [vmem:[%s178 + $0x728] sm:$0xff] %v637
                %v639 = vld [vmem:[%s177 + $0xe60] sm:$0xff]
                %640 = vst [vmem:[%s178 + $0x730] sm:$0xff] %v639
                %v641 = vld [vmem:[%s177 + $0xe70] sm:$0xff]
                %642 = vst [vmem:[%s178 + $0x738] sm:$0xff] %v641
                %v643 = vld [vmem:[%s177 + $0xe80] sm:$0xff]
                %644 = vst [vmem:[%s178 + $0x740] sm:$0xff] %v643
                %v645 = vld [vmem:[%s177 + $0xe90] sm:$0xff]
                %646 = vst [vmem:[%s178 + $0x748] sm:$0xff] %v645
                %v647 = vld [vmem:[%s177 + $0xea0] sm:$0xff]
                %648 = vst [vmem:[%s178 + $0x750] sm:$0xff] %v647
                %v649 = vld [vmem:[%s177 + $0xeb0] sm:$0xff]
                %650 = vst [vmem:[%s178 + $0x758] sm:$0xff] %v649
                %v651 = vld [vmem:[%s177 + $0xec0] sm:$0xff]
                %652 = vst [vmem:[%s178 + $0x760] sm:$0xff] %v651
                %v653 = vld [vmem:[%s177 + $0xed0] sm:$0xff]
                %654 = vst [vmem:[%s178 + $0x768] sm:$0xff] %v653
                %v655 = vld [vmem:[%s177 + $0xee0] sm:$0xff]
                %656 = vst [vmem:[%s178 + $0x770] sm:$0xff] %v655
                %v657 = vld [vmem:[%s177 + $0xef0] sm:$0xff]
                %658 = vst [vmem:[%s178 + $0x778] sm:$0xff] %v657
                %v659 = vld [vmem:[%s177 + $0xf00] sm:$0xff]
                %660 = vst [vmem:[%s178 + $0x780] sm:$0xff] %v659
                %v661 = vld [vmem:[%s177 + $0xf10] sm:$0xff]
                %662 = vst [vmem:[%s178 + $0x788] sm:$0xff] %v661
                %v663 = vld [vmem:[%s177 + $0xf20] sm:$0xff]
                %664 = vst [vmem:[%s178 + $0x790] sm:$0xff] %v663
                %v665 = vld [vmem:[%s177 + $0xf30] sm:$0xff]
                %666 = vst [vmem:[%s178 + $0x798] sm:$0xff] %v665
                %v667 = vld [vmem:[%s177 + $0xf40] sm:$0xff]
                %668 = vst [vmem:[%s178 + $0x7a0] sm:$0xff] %v667
                %v669 = vld [vmem:[%s177 + $0xf50] sm:$0xff]
                %670 = vst [vmem:[%s178 + $0x7a8] sm:$0xff] %v669
                %v671 = vld [vmem:[%s177 + $0xf60] sm:$0xff]
                %672 = vst [vmem:[%s178 + $0x7b0] sm:$0xff] %v671
                %v673 = vld [vmem:[%s177 + $0xf70] sm:$0xff]
                %674 = vst [vmem:[%s178 + $0x7b8] sm:$0xff] %v673
                %v675 = vld [vmem:[%s177 + $0xf80] sm:$0xff]
                %676 = vst [vmem:[%s178 + $0x7c0] sm:$0xff] %v675
                %v677 = vld [vmem:[%s177 + $0xf90] sm:$0xff]
                %678 = vst [vmem:[%s178 + $0x7c8] sm:$0xff] %v677
                %v679 = vld [vmem:[%s177 + $0xfa0] sm:$0xff]
                %680 = vst [vmem:[%s178 + $0x7d0] sm:$0xff] %v679
                %v681 = vld [vmem:[%s177 + $0xfb0] sm:$0xff]
                %682 = vst [vmem:[%s178 + $0x7d8] sm:$0xff] %v681
                %v683 = vld [vmem:[%s177 + $0xfc0] sm:$0xff]
                %684 = vst [vmem:[%s178 + $0x7e0] sm:$0xff] %v683
                %v685 = vld [vmem:[%s177 + $0xfd0] sm:$0xff]
                %686 = vst [vmem:[%s178 + $0x7e8] sm:$0xff] %v685
                %v687 = vld [vmem:[%s177 + $0xfe0] sm:$0xff]
                %688 = vst [vmem:[%s178 + $0x7f0] sm:$0xff] %v687
                %v689 = vld [vmem:[%s177 + $0xff0] sm:$0xff]
                %690 = vst [vmem:[%s178 + $0x7f8] sm:$0xff] %v689
                %v691 = vld [vmem:[%s177 + $0x1000] sm:$0xff]
                %692 = vst [vmem:[%s178 + $0x800] sm:$0xff] %v691
                %v693 = vld [vmem:[%s177 + $0x1010] sm:$0xff]
                %694 = vst [vmem:[%s178 + $0x808] sm:$0xff] %v693
                %v695 = vld [vmem:[%s177 + $0x1020] sm:$0xff]
                %696 = vst [vmem:[%s178 + $0x810] sm:$0xff] %v695
                %v697 = vld [vmem:[%s177 + $0x1030] sm:$0xff]
                %698 = vst [vmem:[%s178 + $0x818] sm:$0xff] %v697
                %v699 = vld [vmem:[%s177 + $0x1040] sm:$0xff]
                %700 = vst [vmem:[%s178 + $0x820] sm:$0xff] %v699
                %v701 = vld [vmem:[%s177 + $0x1050] sm:$0xff]
                %702 = vst [vmem:[%s178 + $0x828] sm:$0xff] %v701
                %v703 = vld [vmem:[%s177 + $0x1060] sm:$0xff]
                %704 = vst [vmem:[%s178 + $0x830] sm:$0xff] %v703
                %v705 = vld [vmem:[%s177 + $0x1070] sm:$0xff]
                %706 = vst [vmem:[%s178 + $0x838] sm:$0xff] %v705
                %v707 = vld [vmem:[%s177 + $0x1080] sm:$0xff]
                %708 = vst [vmem:[%s178 + $0x840] sm:$0xff] %v707
                %v709 = vld [vmem:[%s177 + $0x1090] sm:$0xff]
                %710 = vst [vmem:[%s178 + $0x848] sm:$0xff] %v709
                %v711 = vld [vmem:[%s177 + $0x10a0] sm:$0xff]
                %712 = vst [vmem:[%s178 + $0x850] sm:$0xff] %v711
                %v713 = vld [vmem:[%s177 + $0x10b0] sm:$0xff]
                %714 = vst [vmem:[%s178 + $0x858] sm:$0xff] %v713
                %v715 = vld [vmem:[%s177 + $0x10c0] sm:$0xff]
                %716 = vst [vmem:[%s178 + $0x860] sm:$0xff] %v715
                %v717 = vld [vmem:[%s177 + $0x10d0] sm:$0xff]
                %718 = vst [vmem:[%s178 + $0x868] sm:$0xff] %v717
                %v719 = vld [vmem:[%s177 + $0x10e0] sm:$0xff]
                %720 = vst [vmem:[%s178 + $0x870] sm:$0xff] %v719
                %v721 = vld [vmem:[%s177 + $0x10f0] sm:$0xff]
                %722 = vst [vmem:[%s178 + $0x878] sm:$0xff] %v721
                %v723 = vld [vmem:[%s177 + $0x1100] sm:$0xff]
                %724 = vst [vmem:[%s178 + $0x880] sm:$0xff] %v723
                %v725 = vld [vmem:[%s177 + $0x1110] sm:$0xff]
                %726 = vst [vmem:[%s178 + $0x888] sm:$0xff] %v725
                %v727 = vld [vmem:[%s177 + $0x1120] sm:$0xff]
                %728 = vst [vmem:[%s178 + $0x890] sm:$0xff] %v727
                %v729 = vld [vmem:[%s177 + $0x1130] sm:$0xff]
                %730 = vst [vmem:[%s178 + $0x898] sm:$0xff] %v729
                %v731 = vld [vmem:[%s177 + $0x1140] sm:$0xff]
                %732 = vst [vmem:[%s178 + $0x8a0] sm:$0xff] %v731
                %v733 = vld [vmem:[%s177 + $0x1150] sm:$0xff]
                %734 = vst [vmem:[%s178 + $0x8a8] sm:$0xff] %v733
                %v735 = vld [vmem:[%s177 + $0x1160] sm:$0xff]
                %736 = vst [vmem:[%s178 + $0x8b0] sm:$0xff] %v735
                %v737 = vld [vmem:[%s177 + $0x1170] sm:$0xff]
                %738 = vst [vmem:[%s178 + $0x8b8] sm:$0xff] %v737
                %v739 = vld [vmem:[%s177 + $0x1180] sm:$0xff]
                %740 = vst [vmem:[%s178 + $0x8c0] sm:$0xff] %v739
                %v741 = vld [vmem:[%s177 + $0x1190] sm:$0xff]
                %742 = vst [vmem:[%s178 + $0x8c8] sm:$0xff] %v741
                %v743 = vld [vmem:[%s177 + $0x11a0] sm:$0xff]
                %744 = vst [vmem:[%s178 + $0x8d0] sm:$0xff] %v743
                %v745 = vld [vmem:[%s177 + $0x11b0] sm:$0xff]
                %746 = vst [vmem:[%s178 + $0x8d8] sm:$0xff] %v745
                %v747 = vld [vmem:[%s177 + $0x11c0] sm:$0xff]
                %748 = vst [vmem:[%s178 + $0x8e0] sm:$0xff] %v747
                %v749 = vld [vmem:[%s177 + $0x11d0] sm:$0xff]
                %750 = vst [vmem:[%s178 + $0x8e8] sm:$0xff] %v749
                %v751 = vld [vmem:[%s177 + $0x11e0] sm:$0xff]
                %752 = vst [vmem:[%s178 + $0x8f0] sm:$0xff] %v751
                %v753 = vld [vmem:[%s177 + $0x11f0] sm:$0xff]
                %754 = vst [vmem:[%s178 + $0x8f8] sm:$0xff] %v753
                %v755 = vld [vmem:[%s177 + $0x1200] sm:$0xff]
                %756 = vst [vmem:[%s178 + $0x900] sm:$0xff] %v755
                %v757 = vld [vmem:[%s177 + $0x1210] sm:$0xff]
                %758 = vst [vmem:[%s178 + $0x908] sm:$0xff] %v757
                %v759 = vld [vmem:[%s177 + $0x1220] sm:$0xff]
                %760 = vst [vmem:[%s178 + $0x910] sm:$0xff] %v759
                %v761 = vld [vmem:[%s177 + $0x1230] sm:$0xff]
                %762 = vst [vmem:[%s178 + $0x918] sm:$0xff] %v761
                %v763 = vld [vmem:[%s177 + $0x1240] sm:$0xff]
                %764 = vst [vmem:[%s178 + $0x920] sm:$0xff] %v763
                %v765 = vld [vmem:[%s177 + $0x1250] sm:$0xff]
                %766 = vst [vmem:[%s178 + $0x928] sm:$0xff] %v765
                %v767 = vld [vmem:[%s177 + $0x1260] sm:$0xff]
                %768 = vst [vmem:[%s178 + $0x930] sm:$0xff] %v767
                %v769 = vld [vmem:[%s177 + $0x1270] sm:$0xff]
                %770 = vst [vmem:[%s178 + $0x938] sm:$0xff] %v769
                %v771 = vld [vmem:[%s177 + $0x1280] sm:$0xff]
                %772 = vst [vmem:[%s178 + $0x940] sm:$0xff] %v771
                %v773 = vld [vmem:[%s177 + $0x1290] sm:$0xff]
                %774 = vst [vmem:[%s178 + $0x948] sm:$0xff] %v773
                %v775 = vld [vmem:[%s177 + $0x12a0] sm:$0xff]
                %776 = vst [vmem:[%s178 + $0x950] sm:$0xff] %v775
                %v777 = vld [vmem:[%s177 + $0x12b0] sm:$0xff]
                %778 = vst [vmem:[%s178 + $0x958] sm:$0xff] %v777
                %v779 = vld [vmem:[%s177 + $0x12c0] sm:$0xff]
                %780 = vst [vmem:[%s178 + $0x960] sm:$0xff] %v779
                %v781 = vld [vmem:[%s177 + $0x12d0] sm:$0xff]
                %782 = vst [vmem:[%s178 + $0x968] sm:$0xff] %v781
                %v783 = vld [vmem:[%s177 + $0x12e0] sm:$0xff]
                %784 = vst [vmem:[%s178 + $0x970] sm:$0xff] %v783
                %v785 = vld [vmem:[%s177 + $0x12f0] sm:$0xff]
                %786 = vst [vmem:[%s178 + $0x978] sm:$0xff] %v785
                %v787 = vld [vmem:[%s177 + $0x1300] sm:$0xff]
                %788 = vst [vmem:[%s178 + $0x980] sm:$0xff] %v787
                %v789 = vld [vmem:[%s177 + $0x1310] sm:$0xff]
                %790 = vst [vmem:[%s178 + $0x988] sm:$0xff] %v789
                %v791 = vld [vmem:[%s177 + $0x1320] sm:$0xff]
                %792 = vst [vmem:[%s178 + $0x990] sm:$0xff] %v791
                %v793 = vld [vmem:[%s177 + $0x1330] sm:$0xff]
                %794 = vst [vmem:[%s178 + $0x998] sm:$0xff] %v793
                %v795 = vld [vmem:[%s177 + $0x1340] sm:$0xff]
                %796 = vst [vmem:[%s178 + $0x9a0] sm:$0xff] %v795
                %v797 = vld [vmem:[%s177 + $0x1350] sm:$0xff]
                %798 = vst [vmem:[%s178 + $0x9a8] sm:$0xff] %v797
                %v799 = vld [vmem:[%s177 + $0x1360] sm:$0xff]
                %800 = vst [vmem:[%s178 + $0x9b0] sm:$0xff] %v799
                %v801 = vld [vmem:[%s177 + $0x1370] sm:$0xff]
                %802 = vst [vmem:[%s178 + $0x9b8] sm:$0xff] %v801
                %v803 = vld [vmem:[%s177 + $0x1380] sm:$0xff]
                %804 = vst [vmem:[%s178 + $0x9c0] sm:$0xff] %v803
                %v805 = vld [vmem:[%s177 + $0x1390] sm:$0xff]
                %806 = vst [vmem:[%s178 + $0x9c8] sm:$0xff] %v805
                %v807 = vld [vmem:[%s177 + $0x13a0] sm:$0xff]
                %808 = vst [vmem:[%s178 + $0x9d0] sm:$0xff] %v807
                %v809 = vld [vmem:[%s177 + $0x13b0] sm:$0xff]
                %810 = vst [vmem:[%s178 + $0x9d8] sm:$0xff] %v809
                %v811 = vld [vmem:[%s177 + $0x13c0] sm:$0xff]
                %812 = vst [vmem:[%s178 + $0x9e0] sm:$0xff] %v811
                %v813 = vld [vmem:[%s177 + $0x13d0] sm:$0xff]
                %814 = vst [vmem:[%s178 + $0x9e8] sm:$0xff] %v813
                %v815 = vld [vmem:[%s177 + $0x13e0] sm:$0xff]
                %816 = vst [vmem:[%s178 + $0x9f0] sm:$0xff] %v815
                %v817 = vld [vmem:[%s177 + $0x13f0] sm:$0xff]
                %818 = vst [vmem:[%s178 + $0x9f8] sm:$0xff] %v817
                %v819 = vld [vmem:[%s177 + $0x1400] sm:$0xff]
                %820 = vst [vmem:[%s178 + $0xa00] sm:$0xff] %v819
                %v821 = vld [vmem:[%s177 + $0x1410] sm:$0xff]
                %822 = vst [vmem:[%s178 + $0xa08] sm:$0xff] %v821
                %v823 = vld [vmem:[%s177 + $0x1420] sm:$0xff]
                %824 = vst [vmem:[%s178 + $0xa10] sm:$0xff] %v823
                %v825 = vld [vmem:[%s177 + $0x1430] sm:$0xff]
                %826 = vst [vmem:[%s178 + $0xa18] sm:$0xff] %v825
                %v827 = vld [vmem:[%s177 + $0x1440] sm:$0xff]
                %828 = vst [vmem:[%s178 + $0xa20] sm:$0xff] %v827
                %v829 = vld [vmem:[%s177 + $0x1450] sm:$0xff]
                %830 = vst [vmem:[%s178 + $0xa28] sm:$0xff] %v829
                %v831 = vld [vmem:[%s177 + $0x1460] sm:$0xff]
                %832 = vst [vmem:[%s178 + $0xa30] sm:$0xff] %v831
                %v833 = vld [vmem:[%s177 + $0x1470] sm:$0xff]
                %834 = vst [vmem:[%s178 + $0xa38] sm:$0xff] %v833
                %v835 = vld [vmem:[%s177 + $0x1480] sm:$0xff]
                %836 = vst [vmem:[%s178 + $0xa40] sm:$0xff] %v835
                %v837 = vld [vmem:[%s177 + $0x1490] sm:$0xff]
                %838 = vst [vmem:[%s178 + $0xa48] sm:$0xff] %v837
                %v839 = vld [vmem:[%s177 + $0x14a0] sm:$0xff]
                %840 = vst [vmem:[%s178 + $0xa50] sm:$0xff] %v839
                %v841 = vld [vmem:[%s177 + $0x14b0] sm:$0xff]
                %842 = vst [vmem:[%s178 + $0xa58] sm:$0xff] %v841
                %v843 = vld [vmem:[%s177 + $0x14c0] sm:$0xff]
                %844 = vst [vmem:[%s178 + $0xa60] sm:$0xff] %v843
                %v845 = vld [vmem:[%s177 + $0x14d0] sm:$0xff]
                %846 = vst [vmem:[%s178 + $0xa68] sm:$0xff] %v845
                %v847 = vld [vmem:[%s177 + $0x14e0] sm:$0xff]
                %848 = vst [vmem:[%s178 + $0xa70] sm:$0xff] %v847
                %v849 = vld [vmem:[%s177 + $0x14f0] sm:$0xff]
                %850 = vst [vmem:[%s178 + $0xa78] sm:$0xff] %v849
                %v851 = vld [vmem:[%s177 + $0x1500] sm:$0xff]
                %852 = vst [vmem:[%s178 + $0xa80] sm:$0xff] %v851
                %v853 = vld [vmem:[%s177 + $0x1510] sm:$0xff]
                %854 = vst [vmem:[%s178 + $0xa88] sm:$0xff] %v853
                %v855 = vld [vmem:[%s177 + $0x1520] sm:$0xff]
                %856 = vst [vmem:[%s178 + $0xa90] sm:$0xff] %v855
                %v857 = vld [vmem:[%s177 + $0x1530] sm:$0xff]
                %858 = vst [vmem:[%s178 + $0xa98] sm:$0xff] %v857
                %v859 = vld [vmem:[%s177 + $0x1540] sm:$0xff]
                %860 = vst [vmem:[%s178 + $0xaa0] sm:$0xff] %v859
                %v861 = vld [vmem:[%s177 + $0x1550] sm:$0xff]
                %862 = vst [vmem:[%s178 + $0xaa8] sm:$0xff] %v861
                %v863 = vld [vmem:[%s177 + $0x1560] sm:$0xff]
                %864 = vst [vmem:[%s178 + $0xab0] sm:$0xff] %v863
                %v865 = vld [vmem:[%s177 + $0x1570] sm:$0xff]
                %866 = vst [vmem:[%s178 + $0xab8] sm:$0xff] %v865
                %v867 = vld [vmem:[%s177 + $0x1580] sm:$0xff]
                %868 = vst [vmem:[%s178 + $0xac0] sm:$0xff] %v867
                %v869 = vld [vmem:[%s177 + $0x1590] sm:$0xff]
                %870 = vst [vmem:[%s178 + $0xac8] sm:$0xff] %v869
                %v871 = vld [vmem:[%s177 + $0x15a0] sm:$0xff]
                %872 = vst [vmem:[%s178 + $0xad0] sm:$0xff] %v871
                %v873 = vld [vmem:[%s177 + $0x15b0] sm:$0xff]
                %874 = vst [vmem:[%s178 + $0xad8] sm:$0xff] %v873
                %v875 = vld [vmem:[%s177 + $0x15c0] sm:$0xff]
                %876 = vst [vmem:[%s178 + $0xae0] sm:$0xff] %v875
                %v877 = vld [vmem:[%s177 + $0x15d0] sm:$0xff]
                %878 = vst [vmem:[%s178 + $0xae8] sm:$0xff] %v877
                %v879 = vld [vmem:[%s177 + $0x15e0] sm:$0xff]
                %880 = vst [vmem:[%s178 + $0xaf0] sm:$0xff] %v879
                %v881 = vld [vmem:[%s177 + $0x15f0] sm:$0xff]
                %882 = vst [vmem:[%s178 + $0xaf8] sm:$0xff] %v881
                %v883 = vld [vmem:[%s177 + $0x1600] sm:$0xff]
                %884 = vst [vmem:[%s178 + $0xb00] sm:$0xff] %v883
                %v885 = vld [vmem:[%s177 + $0x1610] sm:$0xff]
                %886 = vst [vmem:[%s178 + $0xb08] sm:$0xff] %v885
                %v887 = vld [vmem:[%s177 + $0x1620] sm:$0xff]
                %888 = vst [vmem:[%s178 + $0xb10] sm:$0xff] %v887
                %v889 = vld [vmem:[%s177 + $0x1630] sm:$0xff]
                %890 = vst [vmem:[%s178 + $0xb18] sm:$0xff] %v889
                %v891 = vld [vmem:[%s177 + $0x1640] sm:$0xff]
                %892 = vst [vmem:[%s178 + $0xb20] sm:$0xff] %v891
                %v893 = vld [vmem:[%s177 + $0x1650] sm:$0xff]
                %894 = vst [vmem:[%s178 + $0xb28] sm:$0xff] %v893
                %v895 = vld [vmem:[%s177 + $0x1660] sm:$0xff]
                %896 = vst [vmem:[%s178 + $0xb30] sm:$0xff] %v895
                %v897 = vld [vmem:[%s177 + $0x1670] sm:$0xff]
                %898 = vst [vmem:[%s178 + $0xb38] sm:$0xff] %v897
                %v899 = vld [vmem:[%s177 + $0x1680] sm:$0xff]
                %900 = vst [vmem:[%s178 + $0xb40] sm:$0xff] %v899
                %v901 = vld [vmem:[%s177 + $0x1690] sm:$0xff]
                %902 = vst [vmem:[%s178 + $0xb48] sm:$0xff] %v901
                %v903 = vld [vmem:[%s177 + $0x16a0] sm:$0xff]
                %904 = vst [vmem:[%s178 + $0xb50] sm:$0xff] %v903
                %v905 = vld [vmem:[%s177 + $0x16b0] sm:$0xff]
                %906 = vst [vmem:[%s178 + $0xb58] sm:$0xff] %v905
                %v907 = vld [vmem:[%s177 + $0x16c0] sm:$0xff]
                %908 = vst [vmem:[%s178 + $0xb60] sm:$0xff] %v907
                %v909 = vld [vmem:[%s177 + $0x16d0] sm:$0xff]
                %910 = vst [vmem:[%s178 + $0xb68] sm:$0xff] %v909
                %v911 = vld [vmem:[%s177 + $0x16e0] sm:$0xff]
                %912 = vst [vmem:[%s178 + $0xb70] sm:$0xff] %v911
                %v913 = vld [vmem:[%s177 + $0x16f0] sm:$0xff]
                %914 = vst [vmem:[%s178 + $0xb78] sm:$0xff] %v913
                %v915 = vld [vmem:[%s177 + $0x1700] sm:$0xff]
                %916 = vst [vmem:[%s178 + $0xb80] sm:$0xff] %v915
                %v917 = vld [vmem:[%s177 + $0x1710] sm:$0xff]
                %918 = vst [vmem:[%s178 + $0xb88] sm:$0xff] %v917
                %v919 = vld [vmem:[%s177 + $0x1720] sm:$0xff]
                %920 = vst [vmem:[%s178 + $0xb90] sm:$0xff] %v919
                %v921 = vld [vmem:[%s177 + $0x1730] sm:$0xff]
                %922 = vst [vmem:[%s178 + $0xb98] sm:$0xff] %v921
                %v923 = vld [vmem:[%s177 + $0x1740] sm:$0xff]
                %924 = vst [vmem:[%s178 + $0xba0] sm:$0xff] %v923
                %v925 = vld [vmem:[%s177 + $0x1750] sm:$0xff]
                %926 = vst [vmem:[%s178 + $0xba8] sm:$0xff] %v925
                %v927 = vld [vmem:[%s177 + $0x1760] sm:$0xff]
                %928 = vst [vmem:[%s178 + $0xbb0] sm:$0xff] %v927
                %v929 = vld [vmem:[%s177 + $0x1770] sm:$0xff]
                %930 = vst [vmem:[%s178 + $0xbb8] sm:$0xff] %v929
                %v931 = vld [vmem:[%s177 + $0x1780] sm:$0xff]
                %932 = vst [vmem:[%s178 + $0xbc0] sm:$0xff] %v931
                %v933 = vld [vmem:[%s177 + $0x1790] sm:$0xff]
                %934 = vst [vmem:[%s178 + $0xbc8] sm:$0xff] %v933
                %v935 = vld [vmem:[%s177 + $0x17a0] sm:$0xff]
                %936 = vst [vmem:[%s178 + $0xbd0] sm:$0xff] %v935
                %v937 = vld [vmem:[%s177 + $0x17b0] sm:$0xff]
                %938 = vst [vmem:[%s178 + $0xbd8] sm:$0xff] %v937
                %v939 = vld [vmem:[%s177 + $0x17c0] sm:$0xff]
                %940 = vst [vmem:[%s178 + $0xbe0] sm:$0xff] %v939
                %v941 = vld [vmem:[%s177 + $0x17d0] sm:$0xff]
                %942 = vst [vmem:[%s178 + $0xbe8] sm:$0xff] %v941
                %v943 = vld [vmem:[%s177 + $0x17e0] sm:$0xff]
                %944 = vst [vmem:[%s178 + $0xbf0] sm:$0xff] %v943
                %v945 = vld [vmem:[%s177 + $0x17f0] sm:$0xff]
                %946 = vst [vmem:[%s178 + $0xbf8] sm:$0xff] %v945
                %v947 = vld [vmem:[%s177 + $0x1800] sm:$0xff]
                %948 = vst [vmem:[%s178 + $0xc00] sm:$0xff] %v947
                %v949 = vld [vmem:[%s177 + $0x1810] sm:$0xff]
                %950 = vst [vmem:[%s178 + $0xc08] sm:$0xff] %v949
                %v951 = vld [vmem:[%s177 + $0x1820] sm:$0xff]
                %952 = vst [vmem:[%s178 + $0xc10] sm:$0xff] %v951
                %v953 = vld [vmem:[%s177 + $0x1830] sm:$0xff]
                %954 = vst [vmem:[%s178 + $0xc18] sm:$0xff] %v953
                %v955 = vld [vmem:[%s177 + $0x1840] sm:$0xff]
                %956 = vst [vmem:[%s178 + $0xc20] sm:$0xff] %v955
                %v957 = vld [vmem:[%s177 + $0x1850] sm:$0xff]
                %958 = vst [vmem:[%s178 + $0xc28] sm:$0xff] %v957
                %v959 = vld [vmem:[%s177 + $0x1860] sm:$0xff]
                %960 = vst [vmem:[%s178 + $0xc30] sm:$0xff] %v959
                %v961 = vld [vmem:[%s177 + $0x1870] sm:$0xff]
                %962 = vst [vmem:[%s178 + $0xc38] sm:$0xff] %v961
              $region41: #{qnetwork_forward.8} parent=35 // loop_footer
                %s176 = sadd.s32 1, %s172
              $region42: #{qnetwork_forward.8} parent=35 // loop_footer_branch
                %171 = sbr.rel target = $region38
              $region43: #{qnetwork_forward.8} parent=35 // loop_exit
                _
            $region36: #{qnetwork_forward.8} parent=27 // pred_fallthru
              _
          $region28: #{qnetwork_forward.8} parent=23 // pred_fallthru
            _
          %1759 = vnop
        $region24: #{qnetwork_forward.8} parent=19 // pred_fallthru
          _
        // Predicated region
        $region59: #{qnetwork_forward.8} parent=19 // pred_check
          %p1760 = pneg %p93
        $region60: #{qnetwork_forward.8} parent=19 // pred_check_branch
          %1762 = sbr.rel (%p1760) target = $region62
        $region61: #{qnetwork_forward.8} parent=19 // pred_region
          %s1763 = smul.u32 2, %s17
          %p1764 = scmp.lt.s32.totalorder %s1763, 3
          %s1765 = scalar_select %p1764, %s1763, 3
          %s1766 = scalar_lea.vmem %s2, %s1765
          %s1767 = smul.u32 2, %s17
        $region62: #{qnetwork_forward.8} parent=19 // pred_fallthru
          _
      $region20: #{qnetwork_forward.8} parent=5 // pred_fallthru
        _
      %p1768 = scmp.le.s32.totalorder 1, %s9
      %p1769 = scmp.lt.s32.totalorder %s9, 3
      %p1770 = pnand %p1768, %p1769
      %p1771 = pneg %p1770
      // Predicated region
      $region63: #{qnetwork_forward.8} parent=5 // pred_check
        _
      $region64: #{qnetwork_forward.8} parent=5 // pred_check_branch
        %1773 = sbr.rel (%p1770) target = $region66
      $region65: #{qnetwork_forward.8} parent=5 // pred_region
        %s1774 = ssub.s32 %s9, 1
        %s1775 = sand.u32 %s60, 1
        %s1776 = sand.u32 %s60, 1
        %s1777 = smul.addr %s1776, 3136
        %s1778 = scalar_lea.vmem [#allocation2], %s1777
        // Predicated region
        $region67: #{qnetwork_forward.8} parent=65 // pred_check
          %p1779 = pneg %p73
        $region68: #{qnetwork_forward.8} parent=65 // pred_check_branch
          %1781 = sbr.rel (%p1779) target = $region70
        $region69: #{qnetwork_forward.8} parent=65 // pred_region
          _
        $region70: #{qnetwork_forward.8} parent=65 // pred_fallthru
          _
        %p1782 = scmp.lt.s32.totalorder %s18, 0
        %s1783 = scalar_select %p1782, %s18, 0
        %s1784 = smul.addr %s1783, 25
        %s1785 = smul.addr %s1784, 8
        %s1786 = scalar_lea.vmem %s0, %s1785
        %p1787 = pneg %p47
        %p1788 = pneg %p44
        %s1789 = sand.u32 %s60, 1
        %s1790 = sand.u32 %s60, 1
        %s1791 = smul.addr %s1790, 3136
        %s1792 = scalar_lea.vmem [#allocation2], %s1791
        %p1793 = pneg %p73
        %p1794 = pneg %p70
        %s1795 = smul.u32 2, %s19
        %p1796 = scmp.lt.s32.totalorder %s1795, 3
        %s1797 = scalar_select %p1796, %s1795, 3
        %s1798 = scalar_lea.vmem %s2, %s1797
        %p1799 = pneg %p99
        %p1800 = pneg %p96
        %p1801 = pneg %p127
        %p1802 = pneg %p124
        %s1803 = smul.u32 2, %s19
        %p1804 = scmp.lt.s32.totalorder %s18, 0
        %s1805 = scalar_select %p1804, %s18, 0
        %p1806 = scmp.lt.s32.totalorder %s1803, 3
        %s1807 = scalar_select %p1806, %s1803, 3
        %s1808 = smul.addr %s1805, 4
        %s1809 = sadd.s32 %s1807, %s1808
        %s1810 = smul.addr %s1809, 8
        %s1811 = scalar_lea.vmem %s3, %s1810
        %p1812 = scmp.lt.s32.totalorder %s18, 0
        %s1813 = scalar_select %p1812, %s18, 0
        %s1814 = smul.addr %s1813, 25
        %s1815 = smul.addr %s1814, 8
        %s1816 = scalar_lea.vmem %s0, %s1815
        %s1817 = smul.u32 2, %s19
        %s1818 = smul.u32 2, %s19
        %p1819 = scmp.lt.s32.totalorder %s1818, 3
        %s1820 = scalar_select %p1819, %s1818, 3
        %s1821 = scalar_lea.vmem %s2, %s1820
        %s1822 = smul.u32 2, %s19
        %s1823 = smul.u32 2, %s19
        %p1824 = scmp.lt.s32.totalorder %s18, 0
        %s1825 = scalar_select %p1824, %s18, 0
        %p1826 = scmp.lt.s32.totalorder %s1823, 3
        %s1827 = scalar_select %p1826, %s1823, 3
        %s1828 = smul.addr %s1825, 4
        %s1829 = sadd.s32 %s1827, %s1828
        %s1830 = smul.addr %s1829, 8
        %s1831 = scalar_lea.vmem %s3, %s1830
        %s1832 = smul.u32 2, %s19
        %v1834 = vld [vmem:[%s1816] sm:$0xff]
        %v1835 = vld [vmem:[%s1816 + $0x8] sm:$0xff]
        %v1836 = vld [vmem:[%s1816 + $0x10] sm:$0xff]
        %v1837 = vld [vmem:[%s1816 + $0x18] sm:$0xff]
        %v1838 = vld [vmem:[%s1816 + $0x20] sm:$0xff]
        %v1839 = vld [vmem:[%s1816 + $0x28] sm:$0xff]
        %v1840 = vld [vmem:[%s1816 + $0x30] sm:$0xff]
        %v1841 = vld [vmem:[%s1816 + $0x38] sm:$0xff]
        %v1842 = vld [vmem:[%s1816 + $0x40] sm:$0xff]
        %v1843 = vld [vmem:[%s1816 + $0x48] sm:$0xff]
        %v1844 = vld [vmem:[%s1816 + $0x50] sm:$0xff]
        %v1845 = vld [vmem:[%s1816 + $0x58] sm:$0xff]
        %v1846 = vld [vmem:[%s1816 + $0x60] sm:$0xff]
        %v1847 = vld [vmem:[%s1816 + $0x68] sm:$0xff]
        %v1848 = vld [vmem:[%s1816 + $0x70] sm:$0xff]
        %v1849 = vld [vmem:[%s1816 + $0x78] sm:$0xff]
        %v1850 = vld [vmem:[%s1816 + $0x80] sm:$0xff]
        %v1851 = vld [vmem:[%s1816 + $0x88] sm:$0xff]
        %v1852 = vld [vmem:[%s1816 + $0x90] sm:$0xff]
        %v1853 = vld [vmem:[%s1816 + $0x98] sm:$0xff]
        %v1854 = vld [vmem:[%s1816 + $0xa0] sm:$0xff]
        %v1855 = vld [vmem:[%s1816 + $0xa8] sm:$0xff]
        %v1856 = vld [vmem:[%s1816 + $0xb0] sm:$0xff]
        %v1857 = vld [vmem:[%s1816 + $0xb8] sm:$0xff]
        %v1858 = vld [vmem:[%s1816 + $0xc0] sm:$0xff]
        %v1859 = vpack.c.bf16 %v1834, %v1834
        %v1860 = vpack.c.bf16 %v1835, %v1835
        %v1861 = vpack.c.bf16 %v1836, %v1836
        %v1862 = vpack.c.bf16 %v1837, %v1837
        %v1863 = vpack.c.bf16 %v1838, %v1838
        %v1864 = vpack.c.bf16 %v1839, %v1839
        %v1865 = vpack.c.bf16 %v1840, %v1840
        %v1866 = vpack.c.bf16 %v1841, %v1841
        %v1867 = vpack.c.bf16 %v1842, %v1842
        %v1868 = vpack.c.bf16 %v1843, %v1843
        %v1869 = vpack.c.bf16 %v1844, %v1844
        %v1870 = vpack.c.bf16 %v1845, %v1845
        %v1871 = vpack.c.bf16 %v1846, %v1846
        %v1872 = vpack.c.bf16 %v1847, %v1847
        %v1873 = vpack.c.bf16 %v1848, %v1848
        %v1874 = vpack.c.bf16 %v1849, %v1849
        %v1875 = vpack.c.bf16 %v1850, %v1850
        %v1876 = vpack.c.bf16 %v1851, %v1851
        %v1877 = vpack.c.bf16 %v1852, %v1852
        %v1878 = vpack.c.bf16 %v1853, %v1853
        %v1879 = vpack.c.bf16 %v1854, %v1854
        %v1880 = vpack.c.bf16 %v1855, %v1855
        %v1881 = vpack.c.bf16 %v1856, %v1856
        %v1882 = vpack.c.bf16 %v1857, %v1857
        %v1883 = vpack.c.bf16 %v1858, %v1858
        %v1884 = vld [vmem:[%s1778] sm:$0xff]
        %v1885 = vld [vmem:[%s1778 + $0x8] sm:$0xff]
        %v1886 = vld [vmem:[%s1778 + $0x10] sm:$0xff]
        %v1887 = vld [vmem:[%s1778 + $0x18] sm:$0xff]
        %v1888 = vld [vmem:[%s1778 + $0x20] sm:$0xff]
        %v1889 = vld [vmem:[%s1778 + $0x28] sm:$0xff]
        %v1890 = vld [vmem:[%s1778 + $0x30] sm:$0xff]
        %v1891 = vld [vmem:[%s1778 + $0x38] sm:$0xff]
        %v1892 = vld [vmem:[%s1778 + $0x40] sm:$0xff]
        %v1893 = vld [vmem:[%s1778 + $0x48] sm:$0xff]
        %v1894 = vld [vmem:[%s1778 + $0x50] sm:$0xff]
        %v1895 = vld [vmem:[%s1778 + $0x58] sm:$0xff]
        %v1896 = vld [vmem:[%s1778 + $0x60] sm:$0xff]
        %v1897 = vld [vmem:[%s1778 + $0x68] sm:$0xff]
        %v1898 = vld [vmem:[%s1778 + $0x70] sm:$0xff]
        %v1899 = vld [vmem:[%s1778 + $0x78] sm:$0xff]
        %v1900 = vld [vmem:[%s1778 + $0x80] sm:$0xff]
        %v1901 = vld [vmem:[%s1778 + $0x88] sm:$0xff]
        %v1902 = vld [vmem:[%s1778 + $0x90] sm:$0xff]
        %v1903 = vld [vmem:[%s1778 + $0x98] sm:$0xff]
        %v1904 = vld [vmem:[%s1778 + $0xa0] sm:$0xff]
        %v1905 = vld [vmem:[%s1778 + $0xa8] sm:$0xff]
        %v1906 = vld [vmem:[%s1778 + $0xb0] sm:$0xff]
        %v1907 = vld [vmem:[%s1778 + $0xb8] sm:$0xff]
        %v1908 = vld [vmem:[%s1778 + $0xc0] sm:$0xff]
        %v1909 = vld [vmem:[%s1778 + $0xc8] sm:$0xff]
        %v1910 = vld [vmem:[%s1778 + $0xd0] sm:$0xff]
        %v1911 = vld [vmem:[%s1778 + $0xd8] sm:$0xff]
        %v1912 = vld [vmem:[%s1778 + $0xe0] sm:$0xff]
        %v1913 = vld [vmem:[%s1778 + $0xe8] sm:$0xff]
        %v1914 = vld [vmem:[%s1778 + $0xf0] sm:$0xff]
        %v1915 = vld [vmem:[%s1778 + $0xf8] sm:$0xff]
        %v1916 = vld [vmem:[%s1778 + $0x100] sm:$0xff]
        %v1917 = vld [vmem:[%s1778 + $0x108] sm:$0xff]
        %v1918 = vld [vmem:[%s1778 + $0x110] sm:$0xff]
        %v1919 = vld [vmem:[%s1778 + $0x118] sm:$0xff]
        %v1920 = vld [vmem:[%s1778 + $0x120] sm:$0xff]
        %v1921 = vld [vmem:[%s1778 + $0x128] sm:$0xff]
        %v1922 = vld [vmem:[%s1778 + $0x130] sm:$0xff]
        %v1923 = vld [vmem:[%s1778 + $0x138] sm:$0xff]
        %v1924 = vld [vmem:[%s1778 + $0x140] sm:$0xff]
        %v1925 = vld [vmem:[%s1778 + $0x148] sm:$0xff]
        %v1926 = vld [vmem:[%s1778 + $0x150] sm:$0xff]
        %v1927 = vld [vmem:[%s1778 + $0x158] sm:$0xff]
        %v1928 = vld [vmem:[%s1778 + $0x160] sm:$0xff]
        %v1929 = vld [vmem:[%s1778 + $0x168] sm:$0xff]
        %v1930 = vld [vmem:[%s1778 + $0x170] sm:$0xff]
        %v1931 = vld [vmem:[%s1778 + $0x178] sm:$0xff]
        %v1932 = vld [vmem:[%s1778 + $0x180] sm:$0xff]
        %v1933 = vld [vmem:[%s1778 + $0x188] sm:$0xff]
        %v1934 = vld [vmem:[%s1778 + $0x190] sm:$0xff]
        %v1935 = vld [vmem:[%s1778 + $0x198] sm:$0xff]
        %v1936 = vld [vmem:[%s1778 + $0x1a0] sm:$0xff]
        %v1937 = vld [vmem:[%s1778 + $0x1a8] sm:$0xff]
        %v1938 = vld [vmem:[%s1778 + $0x1b0] sm:$0xff]
        %v1939 = vld [vmem:[%s1778 + $0x1b8] sm:$0xff]
        %v1940 = vld [vmem:[%s1778 + $0x1c0] sm:$0xff]
        %v1941 = vld [vmem:[%s1778 + $0x1c8] sm:$0xff]
        %v1942 = vld [vmem:[%s1778 + $0x1d0] sm:$0xff]
        %v1943 = vld [vmem:[%s1778 + $0x1d8] sm:$0xff]
        %v1944 = vld [vmem:[%s1778 + $0x1e0] sm:$0xff]
        %v1945 = vld [vmem:[%s1778 + $0x1e8] sm:$0xff]
        %v1946 = vld [vmem:[%s1778 + $0x1f0] sm:$0xff]
        %v1947 = vld [vmem:[%s1778 + $0x1f8] sm:$0xff]
        %v1948 = vld [vmem:[%s1778 + $0x200] sm:$0xff]
        %v1949 = vld [vmem:[%s1778 + $0x208] sm:$0xff]
        %v1950 = vld [vmem:[%s1778 + $0x210] sm:$0xff]
        %v1951 = vld [vmem:[%s1778 + $0x218] sm:$0xff]
        %v1952 = vld [vmem:[%s1778 + $0x220] sm:$0xff]
        %v1953 = vld [vmem:[%s1778 + $0x228] sm:$0xff]
        %v1954 = vld [vmem:[%s1778 + $0x230] sm:$0xff]
        %v1955 = vld [vmem:[%s1778 + $0x238] sm:$0xff]
        %v1956 = vld [vmem:[%s1778 + $0x240] sm:$0xff]
        %v1957 = vld [vmem:[%s1778 + $0x248] sm:$0xff]
        %v1958 = vld [vmem:[%s1778 + $0x250] sm:$0xff]
        %v1959 = vld [vmem:[%s1778 + $0x258] sm:$0xff]
        %v1960 = vld [vmem:[%s1778 + $0x260] sm:$0xff]
        %v1961 = vld [vmem:[%s1778 + $0x268] sm:$0xff]
        %v1962 = vld [vmem:[%s1778 + $0x270] sm:$0xff]
        %v1963 = vld [vmem:[%s1778 + $0x278] sm:$0xff]
        %v1964 = vld [vmem:[%s1778 + $0x280] sm:$0xff]
        %v1965 = vld [vmem:[%s1778 + $0x288] sm:$0xff]
        %v1966 = vld [vmem:[%s1778 + $0x290] sm:$0xff]
        %v1967 = vld [vmem:[%s1778 + $0x298] sm:$0xff]
        %v1968 = vld [vmem:[%s1778 + $0x2a0] sm:$0xff]
        %v1969 = vld [vmem:[%s1778 + $0x2a8] sm:$0xff]
        %v1970 = vld [vmem:[%s1778 + $0x2b0] sm:$0xff]
        %v1971 = vld [vmem:[%s1778 + $0x2b8] sm:$0xff]
        %v1972 = vld [vmem:[%s1778 + $0x2c0] sm:$0xff]
        %v1973 = vld [vmem:[%s1778 + $0x2c8] sm:$0xff]
        %v1974 = vld [vmem:[%s1778 + $0x2d0] sm:$0xff]
        %v1975 = vld [vmem:[%s1778 + $0x2d8] sm:$0xff]
        %v1976 = vld [vmem:[%s1778 + $0x2e0] sm:$0xff]
        %v1977 = vld [vmem:[%s1778 + $0x2e8] sm:$0xff]
        %v1978 = vld [vmem:[%s1778 + $0x2f0] sm:$0xff]
        %v1979 = vld [vmem:[%s1778 + $0x2f8] sm:$0xff]
        %v1980 = vld [vmem:[%s1778 + $0x300] sm:$0xff]
        %v1981 = vld [vmem:[%s1778 + $0x308] sm:$0xff]
        %v1982 = vld [vmem:[%s1778 + $0x310] sm:$0xff]
        %v1983 = vld [vmem:[%s1778 + $0x318] sm:$0xff]
        %v1984 = vld [vmem:[%s1778 + $0x320] sm:$0xff]
        %v1985 = vld [vmem:[%s1778 + $0x328] sm:$0xff]
        %v1986 = vld [vmem:[%s1778 + $0x330] sm:$0xff]
        %v1987 = vld [vmem:[%s1778 + $0x338] sm:$0xff]
        %v1988 = vld [vmem:[%s1778 + $0x340] sm:$0xff]
        %v1989 = vld [vmem:[%s1778 + $0x348] sm:$0xff]
        %v1990 = vld [vmem:[%s1778 + $0x350] sm:$0xff]
        %v1991 = vld [vmem:[%s1778 + $0x358] sm:$0xff]
        %v1992 = vld [vmem:[%s1778 + $0x360] sm:$0xff]
        %v1993 = vld [vmem:[%s1778 + $0x368] sm:$0xff]
        %v1994 = vld [vmem:[%s1778 + $0x370] sm:$0xff]
        %v1995 = vld [vmem:[%s1778 + $0x378] sm:$0xff]
        %v1996 = vld [vmem:[%s1778 + $0x380] sm:$0xff]
        %v1997 = vld [vmem:[%s1778 + $0x388] sm:$0xff]
        %v1998 = vld [vmem:[%s1778 + $0x390] sm:$0xff]
        %v1999 = vld [vmem:[%s1778 + $0x398] sm:$0xff]
        %v2000 = vld [vmem:[%s1778 + $0x3a0] sm:$0xff]
        %v2001 = vld [vmem:[%s1778 + $0x3a8] sm:$0xff]
        %v2002 = vld [vmem:[%s1778 + $0x3b0] sm:$0xff]
        %v2003 = vld [vmem:[%s1778 + $0x3b8] sm:$0xff]
        %v2004 = vld [vmem:[%s1778 + $0x3c0] sm:$0xff]
        %v2005 = vld [vmem:[%s1778 + $0x3c8] sm:$0xff]
        %v2006 = vld [vmem:[%s1778 + $0x3d0] sm:$0xff]
        %v2007 = vld [vmem:[%s1778 + $0x3d8] sm:$0xff]
        %v2008 = vld [vmem:[%s1778 + $0x3e0] sm:$0xff]
        %v2009 = vld [vmem:[%s1778 + $0x3e8] sm:$0xff]
        %v2010 = vld [vmem:[%s1778 + $0x3f0] sm:$0xff]
        %v2011 = vld [vmem:[%s1778 + $0x3f8] sm:$0xff]
        %v2012 = vld [vmem:[%s1778 + $0x400] sm:$0xff]
        %v2013 = vld [vmem:[%s1778 + $0x408] sm:$0xff]
        %v2014 = vld [vmem:[%s1778 + $0x410] sm:$0xff]
        %v2015 = vld [vmem:[%s1778 + $0x418] sm:$0xff]
        %v2016 = vld [vmem:[%s1778 + $0x420] sm:$0xff]
        %v2017 = vld [vmem:[%s1778 + $0x428] sm:$0xff]
        %v2018 = vld [vmem:[%s1778 + $0x430] sm:$0xff]
        %v2019 = vld [vmem:[%s1778 + $0x438] sm:$0xff]
        %v2020 = vld [vmem:[%s1778 + $0x440] sm:$0xff]
        %v2021 = vld [vmem:[%s1778 + $0x448] sm:$0xff]
        %v2022 = vld [vmem:[%s1778 + $0x450] sm:$0xff]
        %v2023 = vld [vmem:[%s1778 + $0x458] sm:$0xff]
        %v2024 = vld [vmem:[%s1778 + $0x460] sm:$0xff]
        %v2025 = vld [vmem:[%s1778 + $0x468] sm:$0xff]
        %v2026 = vld [vmem:[%s1778 + $0x470] sm:$0xff]
        %v2027 = vld [vmem:[%s1778 + $0x478] sm:$0xff]
        %v2028 = vld [vmem:[%s1778 + $0x480] sm:$0xff]
        %v2029 = vld [vmem:[%s1778 + $0x488] sm:$0xff]
        %v2030 = vld [vmem:[%s1778 + $0x490] sm:$0xff]
        %v2031 = vld [vmem:[%s1778 + $0x498] sm:$0xff]
        %v2032 = vld [vmem:[%s1778 + $0x4a0] sm:$0xff]
        %v2033 = vld [vmem:[%s1778 + $0x4a8] sm:$0xff]
        %v2034 = vld [vmem:[%s1778 + $0x4b0] sm:$0xff]
        %v2035 = vld [vmem:[%s1778 + $0x4b8] sm:$0xff]
        %v2036 = vld [vmem:[%s1778 + $0x4c0] sm:$0xff]
        %v2037 = vld [vmem:[%s1778 + $0x4c8] sm:$0xff]
        %v2038 = vld [vmem:[%s1778 + $0x4d0] sm:$0xff]
        %v2039 = vld [vmem:[%s1778 + $0x4d8] sm:$0xff]
        %v2040 = vld [vmem:[%s1778 + $0x4e0] sm:$0xff]
        %v2041 = vld [vmem:[%s1778 + $0x4e8] sm:$0xff]
        %v2042 = vld [vmem:[%s1778 + $0x4f0] sm:$0xff]
        %v2043 = vld [vmem:[%s1778 + $0x4f8] sm:$0xff]
        %v2044 = vld [vmem:[%s1778 + $0x500] sm:$0xff]
        %v2045 = vld [vmem:[%s1778 + $0x508] sm:$0xff]
        %v2046 = vld [vmem:[%s1778 + $0x510] sm:$0xff]
        %v2047 = vld [vmem:[%s1778 + $0x518] sm:$0xff]
        %v2048 = vld [vmem:[%s1778 + $0x520] sm:$0xff]
        %v2049 = vld [vmem:[%s1778 + $0x528] sm:$0xff]
        %v2050 = vld [vmem:[%s1778 + $0x530] sm:$0xff]
        %v2051 = vld [vmem:[%s1778 + $0x538] sm:$0xff]
        %v2052 = vld [vmem:[%s1778 + $0x540] sm:$0xff]
        %v2053 = vld [vmem:[%s1778 + $0x548] sm:$0xff]
        %v2054 = vld [vmem:[%s1778 + $0x550] sm:$0xff]
        %v2055 = vld [vmem:[%s1778 + $0x558] sm:$0xff]
        %v2056 = vld [vmem:[%s1778 + $0x560] sm:$0xff]
        %v2057 = vld [vmem:[%s1778 + $0x568] sm:$0xff]
        %v2058 = vld [vmem:[%s1778 + $0x570] sm:$0xff]
        %v2059 = vld [vmem:[%s1778 + $0x578] sm:$0xff]
        %v2060 = vld [vmem:[%s1778 + $0x580] sm:$0xff]
        %v2061 = vld [vmem:[%s1778 + $0x588] sm:$0xff]
        %v2062 = vld [vmem:[%s1778 + $0x590] sm:$0xff]
        %v2063 = vld [vmem:[%s1778 + $0x598] sm:$0xff]
        %v2064 = vld [vmem:[%s1778 + $0x5a0] sm:$0xff]
        %v2065 = vld [vmem:[%s1778 + $0x5a8] sm:$0xff]
        %v2066 = vld [vmem:[%s1778 + $0x5b0] sm:$0xff]
        %v2067 = vld [vmem:[%s1778 + $0x5b8] sm:$0xff]
        %v2068 = vld [vmem:[%s1778 + $0x5c0] sm:$0xff]
        %v2069 = vld [vmem:[%s1778 + $0x5c8] sm:$0xff]
        %v2070 = vld [vmem:[%s1778 + $0x5d0] sm:$0xff]
        %v2071 = vld [vmem:[%s1778 + $0x5d8] sm:$0xff]
        %v2072 = vld [vmem:[%s1778 + $0x5e0] sm:$0xff]
        %v2073 = vld [vmem:[%s1778 + $0x5e8] sm:$0xff]
        %v2074 = vld [vmem:[%s1778 + $0x5f0] sm:$0xff]
        %v2075 = vld [vmem:[%s1778 + $0x5f8] sm:$0xff]
        %v2076 = vld [vmem:[%s1778 + $0x600] sm:$0xff]
        %v2077 = vld [vmem:[%s1778 + $0x608] sm:$0xff]
        %v2078 = vld [vmem:[%s1778 + $0x610] sm:$0xff]
        %v2079 = vld [vmem:[%s1778 + $0x618] sm:$0xff]
        %v2080 = vld [vmem:[%s1778 + $0x620] sm:$0xff]
        %v2081 = vld [vmem:[%s1778 + $0x628] sm:$0xff]
        %v2082 = vld [vmem:[%s1778 + $0x630] sm:$0xff]
        %v2083 = vld [vmem:[%s1778 + $0x638] sm:$0xff]
        %v2084 = vld [vmem:[%s1778 + $0x640] sm:$0xff]
        %v2085 = vld [vmem:[%s1778 + $0x648] sm:$0xff]
        %v2086 = vld [vmem:[%s1778 + $0x650] sm:$0xff]
        %v2087 = vld [vmem:[%s1778 + $0x658] sm:$0xff]
        %v2088 = vld [vmem:[%s1778 + $0x660] sm:$0xff]
        %v2089 = vld [vmem:[%s1778 + $0x668] sm:$0xff]
        %v2090 = vld [vmem:[%s1778 + $0x670] sm:$0xff]
        %v2091 = vld [vmem:[%s1778 + $0x678] sm:$0xff]
        %v2092 = vld [vmem:[%s1778 + $0x680] sm:$0xff]
        %v2093 = vld [vmem:[%s1778 + $0x688] sm:$0xff]
        %v2094 = vld [vmem:[%s1778 + $0x690] sm:$0xff]
        %v2095 = vld [vmem:[%s1778 + $0x698] sm:$0xff]
        %v2096 = vld [vmem:[%s1778 + $0x6a0] sm:$0xff]
        %v2097 = vld [vmem:[%s1778 + $0x6a8] sm:$0xff]
        %v2098 = vld [vmem:[%s1778 + $0x6b0] sm:$0xff]
        %v2099 = vld [vmem:[%s1778 + $0x6b8] sm:$0xff]
        %v2100 = vld [vmem:[%s1778 + $0x6c0] sm:$0xff]
        %v2101 = vld [vmem:[%s1778 + $0x6c8] sm:$0xff]
        %v2102 = vld [vmem:[%s1778 + $0x6d0] sm:$0xff]
        %v2103 = vld [vmem:[%s1778 + $0x6d8] sm:$0xff]
        %v2104 = vld [vmem:[%s1778 + $0x6e0] sm:$0xff]
        %v2105 = vld [vmem:[%s1778 + $0x6e8] sm:$0xff]
        %v2106 = vld [vmem:[%s1778 + $0x6f0] sm:$0xff]
        %v2107 = vld [vmem:[%s1778 + $0x6f8] sm:$0xff]
        %v2108 = vld [vmem:[%s1778 + $0x700] sm:$0xff]
        %v2109 = vld [vmem:[%s1778 + $0x708] sm:$0xff]
        %v2110 = vld [vmem:[%s1778 + $0x710] sm:$0xff]
        %v2111 = vld [vmem:[%s1778 + $0x718] sm:$0xff]
        %v2112 = vld [vmem:[%s1778 + $0x720] sm:$0xff]
        %v2113 = vld [vmem:[%s1778 + $0x728] sm:$0xff]
        %v2114 = vld [vmem:[%s1778 + $0x730] sm:$0xff]
        %v2115 = vld [vmem:[%s1778 + $0x738] sm:$0xff]
        %v2116 = vld [vmem:[%s1778 + $0x740] sm:$0xff]
        %v2117 = vld [vmem:[%s1778 + $0x748] sm:$0xff]
        %v2118 = vld [vmem:[%s1778 + $0x750] sm:$0xff]
        %v2119 = vld [vmem:[%s1778 + $0x758] sm:$0xff]
        %v2120 = vld [vmem:[%s1778 + $0x760] sm:$0xff]
        %v2121 = vld [vmem:[%s1778 + $0x768] sm:$0xff]
        %v2122 = vld [vmem:[%s1778 + $0x770] sm:$0xff]
        %v2123 = vld [vmem:[%s1778 + $0x778] sm:$0xff]
        %v2124 = vld [vmem:[%s1778 + $0x780] sm:$0xff]
        %v2125 = vld [vmem:[%s1778 + $0x788] sm:$0xff]
        %v2126 = vld [vmem:[%s1778 + $0x790] sm:$0xff]
        %v2127 = vld [vmem:[%s1778 + $0x798] sm:$0xff]
        %v2128 = vld [vmem:[%s1778 + $0x7a0] sm:$0xff]
        %v2129 = vld [vmem:[%s1778 + $0x7a8] sm:$0xff]
        %v2130 = vld [vmem:[%s1778 + $0x7b0] sm:$0xff]
        %v2131 = vld [vmem:[%s1778 + $0x7b8] sm:$0xff]
        %v2132 = vld [vmem:[%s1778 + $0x7c0] sm:$0xff]
        %v2133 = vld [vmem:[%s1778 + $0x7c8] sm:$0xff]
        %v2134 = vld [vmem:[%s1778 + $0x7d0] sm:$0xff]
        %v2135 = vld [vmem:[%s1778 + $0x7d8] sm:$0xff]
        %v2136 = vld [vmem:[%s1778 + $0x7e0] sm:$0xff]
        %v2137 = vld [vmem:[%s1778 + $0x7e8] sm:$0xff]
        %v2138 = vld [vmem:[%s1778 + $0x7f0] sm:$0xff]
        %v2139 = vld [vmem:[%s1778 + $0x7f8] sm:$0xff]
        %v2140 = vld [vmem:[%s1778 + $0x800] sm:$0xff]
        %v2141 = vld [vmem:[%s1778 + $0x808] sm:$0xff]
        %v2142 = vld [vmem:[%s1778 + $0x810] sm:$0xff]
        %v2143 = vld [vmem:[%s1778 + $0x818] sm:$0xff]
        %v2144 = vld [vmem:[%s1778 + $0x820] sm:$0xff]
        %v2145 = vld [vmem:[%s1778 + $0x828] sm:$0xff]
        %v2146 = vld [vmem:[%s1778 + $0x830] sm:$0xff]
        %v2147 = vld [vmem:[%s1778 + $0x838] sm:$0xff]
        %v2148 = vld [vmem:[%s1778 + $0x840] sm:$0xff]
        %v2149 = vld [vmem:[%s1778 + $0x848] sm:$0xff]
        %v2150 = vld [vmem:[%s1778 + $0x850] sm:$0xff]
        %v2151 = vld [vmem:[%s1778 + $0x858] sm:$0xff]
        %v2152 = vld [vmem:[%s1778 + $0x860] sm:$0xff]
        %v2153 = vld [vmem:[%s1778 + $0x868] sm:$0xff]
        %v2154 = vld [vmem:[%s1778 + $0x870] sm:$0xff]
        %v2155 = vld [vmem:[%s1778 + $0x878] sm:$0xff]
        %v2156 = vld [vmem:[%s1778 + $0x880] sm:$0xff]
        %v2157 = vld [vmem:[%s1778 + $0x888] sm:$0xff]
        %v2158 = vld [vmem:[%s1778 + $0x890] sm:$0xff]
        %v2159 = vld [vmem:[%s1778 + $0x898] sm:$0xff]
        %v2160 = vld [vmem:[%s1778 + $0x8a0] sm:$0xff]
        %v2161 = vld [vmem:[%s1778 + $0x8a8] sm:$0xff]
        %v2162 = vld [vmem:[%s1778 + $0x8b0] sm:$0xff]
        %v2163 = vld [vmem:[%s1778 + $0x8b8] sm:$0xff]
        %v2164 = vld [vmem:[%s1778 + $0x8c0] sm:$0xff]
        %v2165 = vld [vmem:[%s1778 + $0x8c8] sm:$0xff]
        %v2166 = vld [vmem:[%s1778 + $0x8d0] sm:$0xff]
        %v2167 = vld [vmem:[%s1778 + $0x8d8] sm:$0xff]
        %v2168 = vld [vmem:[%s1778 + $0x8e0] sm:$0xff]
        %v2169 = vld [vmem:[%s1778 + $0x8e8] sm:$0xff]
        %v2170 = vld [vmem:[%s1778 + $0x8f0] sm:$0xff]
        %v2171 = vld [vmem:[%s1778 + $0x8f8] sm:$0xff]
        %v2172 = vld [vmem:[%s1778 + $0x900] sm:$0xff]
        %v2173 = vld [vmem:[%s1778 + $0x908] sm:$0xff]
        %v2174 = vld [vmem:[%s1778 + $0x910] sm:$0xff]
        %v2175 = vld [vmem:[%s1778 + $0x918] sm:$0xff]
        %v2176 = vld [vmem:[%s1778 + $0x920] sm:$0xff]
        %v2177 = vld [vmem:[%s1778 + $0x928] sm:$0xff]
        %v2178 = vld [vmem:[%s1778 + $0x930] sm:$0xff]
        %v2179 = vld [vmem:[%s1778 + $0x938] sm:$0xff]
        %v2180 = vld [vmem:[%s1778 + $0x940] sm:$0xff]
        %v2181 = vld [vmem:[%s1778 + $0x948] sm:$0xff]
        %v2182 = vld [vmem:[%s1778 + $0x950] sm:$0xff]
        %v2183 = vld [vmem:[%s1778 + $0x958] sm:$0xff]
        %v2184 = vld [vmem:[%s1778 + $0x960] sm:$0xff]
        %v2185 = vld [vmem:[%s1778 + $0x968] sm:$0xff]
        %v2186 = vld [vmem:[%s1778 + $0x970] sm:$0xff]
        %v2187 = vld [vmem:[%s1778 + $0x978] sm:$0xff]
        %v2188 = vld [vmem:[%s1778 + $0x980] sm:$0xff]
        %v2189 = vld [vmem:[%s1778 + $0x988] sm:$0xff]
        %v2190 = vld [vmem:[%s1778 + $0x990] sm:$0xff]
        %v2191 = vld [vmem:[%s1778 + $0x998] sm:$0xff]
        %v2192 = vld [vmem:[%s1778 + $0x9a0] sm:$0xff]
        %v2193 = vld [vmem:[%s1778 + $0x9a8] sm:$0xff]
        %v2194 = vld [vmem:[%s1778 + $0x9b0] sm:$0xff]
        %v2195 = vld [vmem:[%s1778 + $0x9b8] sm:$0xff]
        %v2196 = vld [vmem:[%s1778 + $0x9c0] sm:$0xff]
        %v2197 = vld [vmem:[%s1778 + $0x9c8] sm:$0xff]
        %v2198 = vld [vmem:[%s1778 + $0x9d0] sm:$0xff]
        %v2199 = vld [vmem:[%s1778 + $0x9d8] sm:$0xff]
        %v2200 = vld [vmem:[%s1778 + $0x9e0] sm:$0xff]
        %v2201 = vld [vmem:[%s1778 + $0x9e8] sm:$0xff]
        %v2202 = vld [vmem:[%s1778 + $0x9f0] sm:$0xff]
        %v2203 = vld [vmem:[%s1778 + $0x9f8] sm:$0xff]
        %v2204 = vld [vmem:[%s1778 + $0xa00] sm:$0xff]
        %v2205 = vld [vmem:[%s1778 + $0xa08] sm:$0xff]
        %v2206 = vld [vmem:[%s1778 + $0xa10] sm:$0xff]
        %v2207 = vld [vmem:[%s1778 + $0xa18] sm:$0xff]
        %v2208 = vld [vmem:[%s1778 + $0xa20] sm:$0xff]
        %v2209 = vld [vmem:[%s1778 + $0xa28] sm:$0xff]
        %v2210 = vld [vmem:[%s1778 + $0xa30] sm:$0xff]
        %v2211 = vld [vmem:[%s1778 + $0xa38] sm:$0xff]
        %v2212 = vld [vmem:[%s1778 + $0xa40] sm:$0xff]
        %v2213 = vld [vmem:[%s1778 + $0xa48] sm:$0xff]
        %v2214 = vld [vmem:[%s1778 + $0xa50] sm:$0xff]
        %v2215 = vld [vmem:[%s1778 + $0xa58] sm:$0xff]
        %v2216 = vld [vmem:[%s1778 + $0xa60] sm:$0xff]
        %v2217 = vld [vmem:[%s1778 + $0xa68] sm:$0xff]
        %v2218 = vld [vmem:[%s1778 + $0xa70] sm:$0xff]
        %v2219 = vld [vmem:[%s1778 + $0xa78] sm:$0xff]
        %v2220 = vld [vmem:[%s1778 + $0xa80] sm:$0xff]
        %v2221 = vld [vmem:[%s1778 + $0xa88] sm:$0xff]
        %v2222 = vld [vmem:[%s1778 + $0xa90] sm:$0xff]
        %v2223 = vld [vmem:[%s1778 + $0xa98] sm:$0xff]
        %v2224 = vld [vmem:[%s1778 + $0xaa0] sm:$0xff]
        %v2225 = vld [vmem:[%s1778 + $0xaa8] sm:$0xff]
        %v2226 = vld [vmem:[%s1778 + $0xab0] sm:$0xff]
        %v2227 = vld [vmem:[%s1778 + $0xab8] sm:$0xff]
        %v2228 = vld [vmem:[%s1778 + $0xac0] sm:$0xff]
        %v2229 = vld [vmem:[%s1778 + $0xac8] sm:$0xff]
        %v2230 = vld [vmem:[%s1778 + $0xad0] sm:$0xff]
        %v2231 = vld [vmem:[%s1778 + $0xad8] sm:$0xff]
        %v2232 = vld [vmem:[%s1778 + $0xae0] sm:$0xff]
        %v2233 = vld [vmem:[%s1778 + $0xae8] sm:$0xff]
        %v2234 = vld [vmem:[%s1778 + $0xaf0] sm:$0xff]
        %v2235 = vld [vmem:[%s1778 + $0xaf8] sm:$0xff]
        %v2236 = vld [vmem:[%s1778 + $0xb00] sm:$0xff]
        %v2237 = vld [vmem:[%s1778 + $0xb08] sm:$0xff]
        %v2238 = vld [vmem:[%s1778 + $0xb10] sm:$0xff]
        %v2239 = vld [vmem:[%s1778 + $0xb18] sm:$0xff]
        %v2240 = vld [vmem:[%s1778 + $0xb20] sm:$0xff]
        %v2241 = vld [vmem:[%s1778 + $0xb28] sm:$0xff]
        %v2242 = vld [vmem:[%s1778 + $0xb30] sm:$0xff]
        %v2243 = vld [vmem:[%s1778 + $0xb38] sm:$0xff]
        %v2244 = vld [vmem:[%s1778 + $0xb40] sm:$0xff]
        %v2245 = vld [vmem:[%s1778 + $0xb48] sm:$0xff]
        %v2246 = vld [vmem:[%s1778 + $0xb50] sm:$0xff]
        %v2247 = vld [vmem:[%s1778 + $0xb58] sm:$0xff]
        %v2248 = vld [vmem:[%s1778 + $0xb60] sm:$0xff]
        %v2249 = vld [vmem:[%s1778 + $0xb68] sm:$0xff]
        %v2250 = vld [vmem:[%s1778 + $0xb70] sm:$0xff]
        %v2251 = vld [vmem:[%s1778 + $0xb78] sm:$0xff]
        %v2252 = vld [vmem:[%s1778 + $0xb80] sm:$0xff]
        %v2253 = vld [vmem:[%s1778 + $0xb88] sm:$0xff]
        %v2254 = vld [vmem:[%s1778 + $0xb90] sm:$0xff]
        %v2255 = vld [vmem:[%s1778 + $0xb98] sm:$0xff]
        %v2256 = vld [vmem:[%s1778 + $0xba0] sm:$0xff]
        %v2257 = vld [vmem:[%s1778 + $0xba8] sm:$0xff]
        %v2258 = vld [vmem:[%s1778 + $0xbb0] sm:$0xff]
        %v2259 = vld [vmem:[%s1778 + $0xbb8] sm:$0xff]
        %v2260 = vld [vmem:[%s1778 + $0xbc0] sm:$0xff]
        %v2261 = vld [vmem:[%s1778 + $0xbc8] sm:$0xff]
        %v2262 = vld [vmem:[%s1778 + $0xbd0] sm:$0xff]
        %v2263 = vld [vmem:[%s1778 + $0xbd8] sm:$0xff]
        %v2264 = vld [vmem:[%s1778 + $0xbe0] sm:$0xff]
        %v2265 = vld [vmem:[%s1778 + $0xbe8] sm:$0xff]
        %v2266 = vld [vmem:[%s1778 + $0xbf0] sm:$0xff]
        %v2267 = vld [vmem:[%s1778 + $0xbf8] sm:$0xff]
        %v2268 = vld [vmem:[%s1778 + $0xc00] sm:$0xff]
        %v2269 = vld [vmem:[%s1778 + $0xc08] sm:$0xff]
        %v2270 = vld [vmem:[%s1778 + $0xc10] sm:$0xff]
        %v2271 = vld [vmem:[%s1778 + $0xc18] sm:$0xff]
        %v2272 = vld [vmem:[%s1778 + $0xc20] sm:$0xff]
        %v2273 = vld [vmem:[%s1778 + $0xc28] sm:$0xff]
        %v2274 = vld [vmem:[%s1778 + $0xc30] sm:$0xff]
        %v2275 = vld [vmem:[%s1778 + $0xc38] sm:$0xff]
        %v2276 = vld [vmem:[%s1821] sm:$0x3]
        %v2278 = vlaneseq
        %v2279 = vshrl.u32 %v2278, 7
        %v2280 = vsub.s32 0, %v2279
        %v2281 = vrot.slane %v2276, %v2280
        %v2282 = vlaneseq
        %v2283 = vshrl.u32 %v2282, 7
        %v2284 = vsub.s32 1, %v2283
        %v2285 = vrot.slane %v2276, %v2284
        %v2680 = vunpack.c.l.b16 %v1884
        %v2681 = vunpack.c.h.b16 %v1884
        %v2682 = vunpack.c.l.b16 %v1885
        %v2683 = vunpack.c.h.b16 %v1885
        %v2684 = vunpack.c.l.b16 %v1886
        %v2685 = vunpack.c.h.b16 %v1886
        %v2686 = vunpack.c.l.b16 %v1887
        %v2687 = vunpack.c.h.b16 %v1887
        %v2688 = vunpack.c.l.b16 %v1888
        %v2689 = vunpack.c.h.b16 %v1888
        %v2690 = vunpack.c.l.b16 %v1889
        %v2691 = vunpack.c.h.b16 %v1889
        %v2692 = vunpack.c.l.b16 %v1890
        %v2693 = vunpack.c.h.b16 %v1890
        %v2694 = vunpack.c.l.b16 %v1891
        %v2695 = vunpack.c.h.b16 %v1891
        %v2696 = vunpack.c.l.b16 %v1892
        %v2697 = vunpack.c.h.b16 %v1892
        %v2698 = vunpack.c.l.b16 %v1893
        %v2699 = vunpack.c.h.b16 %v1893
        %v2700 = vunpack.c.l.b16 %v1894
        %v2701 = vunpack.c.h.b16 %v1894
        %v2702 = vunpack.c.l.b16 %v1895
        %v2703 = vunpack.c.h.b16 %v1895
        %v2704 = vunpack.c.l.b16 %v1896
        %v2705 = vunpack.c.h.b16 %v1896
        %v2706 = vunpack.c.l.b16 %v1897
        %v2707 = vunpack.c.h.b16 %v1897
        %v2708 = vunpack.c.l.b16 %v1898
        %v2709 = vunpack.c.h.b16 %v1898
        %v2710 = vunpack.c.l.b16 %v1899
        %v2711 = vunpack.c.h.b16 %v1899
        %v2712 = vunpack.c.l.b16 %v1900
        %v2713 = vunpack.c.h.b16 %v1900
        %v2714 = vunpack.c.l.b16 %v1901
        %v2715 = vunpack.c.h.b16 %v1901
        %v2716 = vunpack.c.l.b16 %v1902
        %v2717 = vunpack.c.h.b16 %v1902
        %v2718 = vunpack.c.l.b16 %v1903
        %v2719 = vunpack.c.h.b16 %v1903
        %v2720 = vunpack.c.l.b16 %v1904
        %v2721 = vunpack.c.h.b16 %v1904
        %v2722 = vunpack.c.l.b16 %v1905
        %v2723 = vunpack.c.h.b16 %v1905
        %v2724 = vunpack.c.l.b16 %v1906
        %v2725 = vunpack.c.h.b16 %v1906
        %v2726 = vunpack.c.l.b16 %v1907
        %v2727 = vunpack.c.h.b16 %v1907
        %v2728 = vunpack.c.l.b16 %v1908
        %v2729 = vunpack.c.h.b16 %v1908
        %v2730 = vunpack.c.l.b16 %v1909
        %v2731 = vunpack.c.h.b16 %v1909
        %v2732 = vunpack.c.l.b16 %v1910
        %v2733 = vunpack.c.h.b16 %v1910
        %v2734 = vunpack.c.l.b16 %v1911
        %v2735 = vunpack.c.h.b16 %v1911
        %v2736 = vunpack.c.l.b16 %v1912
        %v2737 = vunpack.c.h.b16 %v1912
        %v2738 = vunpack.c.l.b16 %v1913
        %v2739 = vunpack.c.h.b16 %v1913
        %v2740 = vunpack.c.l.b16 %v1914
        %v2741 = vunpack.c.h.b16 %v1914
        %v2742 = vunpack.c.l.b16 %v1915
        %v2743 = vunpack.c.h.b16 %v1915
        %v2744 = vunpack.c.l.b16 %v1916
        %v2745 = vunpack.c.h.b16 %v1916
        %v2746 = vunpack.c.l.b16 %v1917
        %v2747 = vunpack.c.h.b16 %v1917
        %v2748 = vunpack.c.l.b16 %v1918
        %v2749 = vunpack.c.h.b16 %v1918
        %v2750 = vunpack.c.l.b16 %v1919
        %v2751 = vunpack.c.h.b16 %v1919
        %v2752 = vunpack.c.l.b16 %v1920
        %v2753 = vunpack.c.h.b16 %v1920
        %v2754 = vunpack.c.l.b16 %v1921
        %v2755 = vunpack.c.h.b16 %v1921
        %v2756 = vunpack.c.l.b16 %v1922
        %v2757 = vunpack.c.h.b16 %v1922
        %v2758 = vunpack.c.l.b16 %v1923
        %v2759 = vunpack.c.h.b16 %v1923
        %v2760 = vunpack.c.l.b16 %v1924
        %v2761 = vunpack.c.h.b16 %v1924
        %v2762 = vunpack.c.l.b16 %v1925
        %v2763 = vunpack.c.h.b16 %v1925
        %v2764 = vunpack.c.l.b16 %v1926
        %v2765 = vunpack.c.h.b16 %v1926
        %v2766 = vunpack.c.l.b16 %v1927
        %v2767 = vunpack.c.h.b16 %v1927
        %v2768 = vunpack.c.l.b16 %v1928
        %v2769 = vunpack.c.h.b16 %v1928
        %v2770 = vunpack.c.l.b16 %v1929
        %v2771 = vunpack.c.h.b16 %v1929
        %v2772 = vunpack.c.l.b16 %v1930
        %v2773 = vunpack.c.h.b16 %v1930
        %v2774 = vunpack.c.l.b16 %v1931
        %v2775 = vunpack.c.h.b16 %v1931
        %v2776 = vunpack.c.l.b16 %v1932
        %v2777 = vunpack.c.h.b16 %v1932
        %v2778 = vunpack.c.l.b16 %v1933
        %v2779 = vunpack.c.h.b16 %v1933
        %v2780 = vunpack.c.l.b16 %v1934
        %v2781 = vunpack.c.h.b16 %v1934
        %v2782 = vunpack.c.l.b16 %v1935
        %v2783 = vunpack.c.h.b16 %v1935
        %v2784 = vunpack.c.l.b16 %v1936
        %v2785 = vunpack.c.h.b16 %v1936
        %v2786 = vunpack.c.l.b16 %v1937
        %v2787 = vunpack.c.h.b16 %v1937
        %v2788 = vunpack.c.l.b16 %v1938
        %v2789 = vunpack.c.h.b16 %v1938
        %v2790 = vunpack.c.l.b16 %v1939
        %v2791 = vunpack.c.h.b16 %v1939
        %v2792 = vunpack.c.l.b16 %v1940
        %v2793 = vunpack.c.h.b16 %v1940
        %v2794 = vunpack.c.l.b16 %v1941
        %v2795 = vunpack.c.h.b16 %v1941
        %v2796 = vunpack.c.l.b16 %v1942
        %v2797 = vunpack.c.h.b16 %v1942
        %v2798 = vunpack.c.l.b16 %v1943
        %v2799 = vunpack.c.h.b16 %v1943
        %v2800 = vunpack.c.l.b16 %v1944
        %v2801 = vunpack.c.h.b16 %v1944
        %v2802 = vunpack.c.l.b16 %v1945
        %v2803 = vunpack.c.h.b16 %v1945
        %v2804 = vunpack.c.l.b16 %v1946
        %v2805 = vunpack.c.h.b16 %v1946
        %v2806 = vunpack.c.l.b16 %v1947
        %v2807 = vunpack.c.h.b16 %v1947
        %v2808 = vunpack.c.l.b16 %v1948
        %v2809 = vunpack.c.h.b16 %v1948
        %v2810 = vunpack.c.l.b16 %v1949
        %v2811 = vunpack.c.h.b16 %v1949
        %v2812 = vunpack.c.l.b16 %v1950
        %v2813 = vunpack.c.h.b16 %v1950
        %v2814 = vunpack.c.l.b16 %v1951
        %v2815 = vunpack.c.h.b16 %v1951
        %v2816 = vunpack.c.l.b16 %v1952
        %v2817 = vunpack.c.h.b16 %v1952
        %v2818 = vunpack.c.l.b16 %v1953
        %v2819 = vunpack.c.h.b16 %v1953
        %v2820 = vunpack.c.l.b16 %v1954
        %v2821 = vunpack.c.h.b16 %v1954
        %v2822 = vunpack.c.l.b16 %v1955
        %v2823 = vunpack.c.h.b16 %v1955
        %v2824 = vunpack.c.l.b16 %v1956
        %v2825 = vunpack.c.h.b16 %v1956
        %v2826 = vunpack.c.l.b16 %v1957
        %v2827 = vunpack.c.h.b16 %v1957
        %v2828 = vunpack.c.l.b16 %v1958
        %v2829 = vunpack.c.h.b16 %v1958
        %v2830 = vunpack.c.l.b16 %v1959
        %v2831 = vunpack.c.h.b16 %v1959
        %v2832 = vunpack.c.l.b16 %v1960
        %v2833 = vunpack.c.h.b16 %v1960
        %v2834 = vunpack.c.l.b16 %v1961
        %v2835 = vunpack.c.h.b16 %v1961
        %v2836 = vunpack.c.l.b16 %v1962
        %v2837 = vunpack.c.h.b16 %v1962
        %v2838 = vunpack.c.l.b16 %v1963
        %v2839 = vunpack.c.h.b16 %v1963
        %v2840 = vunpack.c.l.b16 %v1964
        %v2841 = vunpack.c.h.b16 %v1964
        %v2842 = vunpack.c.l.b16 %v1965
        %v2843 = vunpack.c.h.b16 %v1965
        %v2844 = vunpack.c.l.b16 %v1966
        %v2845 = vunpack.c.h.b16 %v1966
        %v2846 = vunpack.c.l.b16 %v1967
        %v2847 = vunpack.c.h.b16 %v1967
        %v2848 = vunpack.c.l.b16 %v1968
        %v2849 = vunpack.c.h.b16 %v1968
        %v2850 = vunpack.c.l.b16 %v1969
        %v2851 = vunpack.c.h.b16 %v1969
        %v2852 = vunpack.c.l.b16 %v1970
        %v2853 = vunpack.c.h.b16 %v1970
        %v2854 = vunpack.c.l.b16 %v1971
        %v2855 = vunpack.c.h.b16 %v1971
        %v2856 = vunpack.c.l.b16 %v1972
        %v2857 = vunpack.c.h.b16 %v1972
        %v2858 = vunpack.c.l.b16 %v1973
        %v2859 = vunpack.c.h.b16 %v1973
        %v2860 = vunpack.c.l.b16 %v1974
        %v2861 = vunpack.c.h.b16 %v1974
        %v2862 = vunpack.c.l.b16 %v1975
        %v2863 = vunpack.c.h.b16 %v1975
        %v2864 = vunpack.c.l.b16 %v1976
        %v2865 = vunpack.c.h.b16 %v1976
        %v2866 = vunpack.c.l.b16 %v1977
        %v2867 = vunpack.c.h.b16 %v1977
        %v2868 = vunpack.c.l.b16 %v1978
        %v2869 = vunpack.c.h.b16 %v1978
        %v2870 = vunpack.c.l.b16 %v1979
        %v2871 = vunpack.c.h.b16 %v1979
        %v2872 = vunpack.c.l.b16 %v1980
        %v2873 = vunpack.c.h.b16 %v1980
        %v2874 = vunpack.c.l.b16 %v1981
        %v2875 = vunpack.c.h.b16 %v1981
        %v2876 = vunpack.c.l.b16 %v1982
        %v2877 = vunpack.c.h.b16 %v1982
        %v2878 = vunpack.c.l.b16 %v1983
        %v2879 = vunpack.c.h.b16 %v1983
        %v2880 = vunpack.c.l.b16 %v1984
        %v2881 = vunpack.c.h.b16 %v1984
        %v2882 = vunpack.c.l.b16 %v1985
        %v2883 = vunpack.c.h.b16 %v1985
        %v2884 = vunpack.c.l.b16 %v1986
        %v2885 = vunpack.c.h.b16 %v1986
        %v2886 = vunpack.c.l.b16 %v1987
        %v2887 = vunpack.c.h.b16 %v1987
        %v2888 = vunpack.c.l.b16 %v1988
        %v2889 = vunpack.c.h.b16 %v1988
        %v2890 = vunpack.c.l.b16 %v1989
        %v2891 = vunpack.c.h.b16 %v1989
        %v2892 = vunpack.c.l.b16 %v1990
        %v2893 = vunpack.c.h.b16 %v1990
        %v2894 = vunpack.c.l.b16 %v1991
        %v2895 = vunpack.c.h.b16 %v1991
        %v2896 = vunpack.c.l.b16 %v1992
        %v2897 = vunpack.c.h.b16 %v1992
        %v2898 = vunpack.c.l.b16 %v1993
        %v2899 = vunpack.c.h.b16 %v1993
        %v2900 = vunpack.c.l.b16 %v1994
        %v2901 = vunpack.c.h.b16 %v1994
        %v2902 = vunpack.c.l.b16 %v1995
        %v2903 = vunpack.c.h.b16 %v1995
        %v2904 = vunpack.c.l.b16 %v1996
        %v2905 = vunpack.c.h.b16 %v1996
        %v2906 = vunpack.c.l.b16 %v1997
        %v2907 = vunpack.c.h.b16 %v1997
        %v2908 = vunpack.c.l.b16 %v1998
        %v2909 = vunpack.c.h.b16 %v1998
        %v2910 = vunpack.c.l.b16 %v1999
        %v2911 = vunpack.c.h.b16 %v1999
        %v2912 = vunpack.c.l.b16 %v2000
        %v2913 = vunpack.c.h.b16 %v2000
        %v2914 = vunpack.c.l.b16 %v2001
        %v2915 = vunpack.c.h.b16 %v2001
        %v2916 = vunpack.c.l.b16 %v2002
        %v2917 = vunpack.c.h.b16 %v2002
        %v2918 = vunpack.c.l.b16 %v2003
        %v2919 = vunpack.c.h.b16 %v2003
        %v2920 = vunpack.c.l.b16 %v2004
        %v2921 = vunpack.c.h.b16 %v2004
        %v2922 = vunpack.c.l.b16 %v2005
        %v2923 = vunpack.c.h.b16 %v2005
        %v2924 = vunpack.c.l.b16 %v2006
        %v2925 = vunpack.c.h.b16 %v2006
        %v2926 = vunpack.c.l.b16 %v2007
        %v2927 = vunpack.c.h.b16 %v2007
        %v2928 = vunpack.c.l.b16 %v2008
        %v2929 = vunpack.c.h.b16 %v2008
        %v2930 = vunpack.c.l.b16 %v2009
        %v2931 = vunpack.c.h.b16 %v2009
        %v2932 = vunpack.c.l.b16 %v2010
        %v2933 = vunpack.c.h.b16 %v2010
        %v2934 = vunpack.c.l.b16 %v2011
        %v2935 = vunpack.c.h.b16 %v2011
        %v2936 = vunpack.c.l.b16 %v2012
        %v2937 = vunpack.c.h.b16 %v2012
        %v2938 = vunpack.c.l.b16 %v2013
        %v2939 = vunpack.c.h.b16 %v2013
        %v2940 = vunpack.c.l.b16 %v2014
        %v2941 = vunpack.c.h.b16 %v2014
        %v2942 = vunpack.c.l.b16 %v2015
        %v2943 = vunpack.c.h.b16 %v2015
        %v2944 = vunpack.c.l.b16 %v2016
        %v2945 = vunpack.c.h.b16 %v2016
        %v2946 = vunpack.c.l.b16 %v2017
        %v2947 = vunpack.c.h.b16 %v2017
        %v2948 = vunpack.c.l.b16 %v2018
        %v2949 = vunpack.c.h.b16 %v2018
        %v2950 = vunpack.c.l.b16 %v2019
        %v2951 = vunpack.c.h.b16 %v2019
        %v2952 = vunpack.c.l.b16 %v2020
        %v2953 = vunpack.c.h.b16 %v2020
        %v2954 = vunpack.c.l.b16 %v2021
        %v2955 = vunpack.c.h.b16 %v2021
        %v2956 = vunpack.c.l.b16 %v2022
        %v2957 = vunpack.c.h.b16 %v2022
        %v2958 = vunpack.c.l.b16 %v2023
        %v2959 = vunpack.c.h.b16 %v2023
        %v2960 = vunpack.c.l.b16 %v2024
        %v2961 = vunpack.c.h.b16 %v2024
        %v2962 = vunpack.c.l.b16 %v2025
        %v2963 = vunpack.c.h.b16 %v2025
        %v2964 = vunpack.c.l.b16 %v2026
        %v2965 = vunpack.c.h.b16 %v2026
        %v2966 = vunpack.c.l.b16 %v2027
        %v2967 = vunpack.c.h.b16 %v2027
        %v2968 = vunpack.c.l.b16 %v2028
        %v2969 = vunpack.c.h.b16 %v2028
        %v2970 = vunpack.c.l.b16 %v2029
        %v2971 = vunpack.c.h.b16 %v2029
        %v2972 = vunpack.c.l.b16 %v2030
        %v2973 = vunpack.c.h.b16 %v2030
        %v2974 = vunpack.c.l.b16 %v2031
        %v2975 = vunpack.c.h.b16 %v2031
        %v2976 = vunpack.c.l.b16 %v2032
        %v2977 = vunpack.c.h.b16 %v2032
        %v2978 = vunpack.c.l.b16 %v2033
        %v2979 = vunpack.c.h.b16 %v2033
        %v2980 = vunpack.c.l.b16 %v2034
        %v2981 = vunpack.c.h.b16 %v2034
        %v2982 = vunpack.c.l.b16 %v2035
        %v2983 = vunpack.c.h.b16 %v2035
        %v2984 = vunpack.c.l.b16 %v2036
        %v2985 = vunpack.c.h.b16 %v2036
        %v2986 = vunpack.c.l.b16 %v2037
        %v2987 = vunpack.c.h.b16 %v2037
        %v2988 = vunpack.c.l.b16 %v2038
        %v2989 = vunpack.c.h.b16 %v2038
        %v2990 = vunpack.c.l.b16 %v2039
        %v2991 = vunpack.c.h.b16 %v2039
        %v2992 = vunpack.c.l.b16 %v2040
        %v2993 = vunpack.c.h.b16 %v2040
        %v2994 = vunpack.c.l.b16 %v2041
        %v2995 = vunpack.c.h.b16 %v2041
        %v2996 = vunpack.c.l.b16 %v2042
        %v2997 = vunpack.c.h.b16 %v2042
        %v2998 = vunpack.c.l.b16 %v2043
        %v2999 = vunpack.c.h.b16 %v2043
        %v3000 = vunpack.c.l.b16 %v2044
        %v3001 = vunpack.c.h.b16 %v2044
        %v3002 = vunpack.c.l.b16 %v2045
        %v3003 = vunpack.c.h.b16 %v2045
        %v3004 = vunpack.c.l.b16 %v2046
        %v3005 = vunpack.c.h.b16 %v2046
        %v3006 = vunpack.c.l.b16 %v2047
        %v3007 = vunpack.c.h.b16 %v2047
        %v3008 = vunpack.c.l.b16 %v2048
        %v3009 = vunpack.c.h.b16 %v2048
        %v3010 = vunpack.c.l.b16 %v2049
        %v3011 = vunpack.c.h.b16 %v2049
        %v3012 = vunpack.c.l.b16 %v2050
        %v3013 = vunpack.c.h.b16 %v2050
        %v3014 = vunpack.c.l.b16 %v2051
        %v3015 = vunpack.c.h.b16 %v2051
        %v3016 = vunpack.c.l.b16 %v2052
        %v3017 = vunpack.c.h.b16 %v2052
        %v3018 = vunpack.c.l.b16 %v2053
        %v3019 = vunpack.c.h.b16 %v2053
        %v3020 = vunpack.c.l.b16 %v2054
        %v3021 = vunpack.c.h.b16 %v2054
        %v3022 = vunpack.c.l.b16 %v2055
        %v3023 = vunpack.c.h.b16 %v2055
        %v3024 = vunpack.c.l.b16 %v2056
        %v3025 = vunpack.c.h.b16 %v2056
        %v3026 = vunpack.c.l.b16 %v2057
        %v3027 = vunpack.c.h.b16 %v2057
        %v3028 = vunpack.c.l.b16 %v2058
        %v3029 = vunpack.c.h.b16 %v2058
        %v3030 = vunpack.c.l.b16 %v2059
        %v3031 = vunpack.c.h.b16 %v2059
        %v3032 = vunpack.c.l.b16 %v2060
        %v3033 = vunpack.c.h.b16 %v2060
        %v3034 = vunpack.c.l.b16 %v2061
        %v3035 = vunpack.c.h.b16 %v2061
        %v3036 = vunpack.c.l.b16 %v2062
        %v3037 = vunpack.c.h.b16 %v2062
        %v3038 = vunpack.c.l.b16 %v2063
        %v3039 = vunpack.c.h.b16 %v2063
        %v3040 = vunpack.c.l.b16 %v2064
        %v3041 = vunpack.c.h.b16 %v2064
        %v3042 = vunpack.c.l.b16 %v2065
        %v3043 = vunpack.c.h.b16 %v2065
        %v3044 = vunpack.c.l.b16 %v2066
        %v3045 = vunpack.c.h.b16 %v2066
        %v3046 = vunpack.c.l.b16 %v2067
        %v3047 = vunpack.c.h.b16 %v2067
        %v3048 = vunpack.c.l.b16 %v2068
        %v3049 = vunpack.c.h.b16 %v2068
        %v3050 = vunpack.c.l.b16 %v2069
        %v3051 = vunpack.c.h.b16 %v2069
        %v3052 = vunpack.c.l.b16 %v2070
        %v3053 = vunpack.c.h.b16 %v2070
        %v3054 = vunpack.c.l.b16 %v2071
        %v3055 = vunpack.c.h.b16 %v2071
        %v3056 = vunpack.c.l.b16 %v2072
        %v3057 = vunpack.c.h.b16 %v2072
        %v3058 = vunpack.c.l.b16 %v2073
        %v3059 = vunpack.c.h.b16 %v2073
        %v3060 = vunpack.c.l.b16 %v2074
        %v3061 = vunpack.c.h.b16 %v2074
        %v3062 = vunpack.c.l.b16 %v2075
        %v3063 = vunpack.c.h.b16 %v2075
        %v3064 = vunpack.c.l.b16 %v2076
        %v3065 = vunpack.c.h.b16 %v2076
        %v3066 = vunpack.c.l.b16 %v2077
        %v3067 = vunpack.c.h.b16 %v2077
        %v3068 = vunpack.c.l.b16 %v2078
        %v3069 = vunpack.c.h.b16 %v2078
        %v3070 = vunpack.c.l.b16 %v2079
        %v3071 = vunpack.c.h.b16 %v2079
        %v3072 = vunpack.c.l.b16 %v2080
        %v3073 = vunpack.c.h.b16 %v2080
        %v3074 = vunpack.c.l.b16 %v2081
        %v3075 = vunpack.c.h.b16 %v2081
        %v3076 = vunpack.c.l.b16 %v2082
        %v3077 = vunpack.c.h.b16 %v2082
        %v3078 = vunpack.c.l.b16 %v2083
        %v3079 = vunpack.c.h.b16 %v2083
        %v3080 = vunpack.c.l.b16 %v2084
        %v3081 = vunpack.c.h.b16 %v2084
        %v3082 = vunpack.c.l.b16 %v2085
        %v3083 = vunpack.c.h.b16 %v2085
        %v3084 = vunpack.c.l.b16 %v2086
        %v3085 = vunpack.c.h.b16 %v2086
        %v3086 = vunpack.c.l.b16 %v2087
        %v3087 = vunpack.c.h.b16 %v2087
        %v3088 = vunpack.c.l.b16 %v2088
        %v3089 = vunpack.c.h.b16 %v2088
        %v3090 = vunpack.c.l.b16 %v2089
        %v3091 = vunpack.c.h.b16 %v2089
        %v3092 = vunpack.c.l.b16 %v2090
        %v3093 = vunpack.c.h.b16 %v2090
        %v3094 = vunpack.c.l.b16 %v2091
        %v3095 = vunpack.c.h.b16 %v2091
        %v3096 = vunpack.c.l.b16 %v2092
        %v3097 = vunpack.c.h.b16 %v2092
        %v3098 = vunpack.c.l.b16 %v2093
        %v3099 = vunpack.c.h.b16 %v2093
        %v3100 = vunpack.c.l.b16 %v2094
        %v3101 = vunpack.c.h.b16 %v2094
        %v3102 = vunpack.c.l.b16 %v2095
        %v3103 = vunpack.c.h.b16 %v2095
        %v3104 = vunpack.c.l.b16 %v2096
        %v3105 = vunpack.c.h.b16 %v2096
        %v3106 = vunpack.c.l.b16 %v2097
        %v3107 = vunpack.c.h.b16 %v2097
        %v3108 = vunpack.c.l.b16 %v2098
        %v3109 = vunpack.c.h.b16 %v2098
        %v3110 = vunpack.c.l.b16 %v2099
        %v3111 = vunpack.c.h.b16 %v2099
        %v3112 = vunpack.c.l.b16 %v2100
        %v3113 = vunpack.c.h.b16 %v2100
        %v3114 = vunpack.c.l.b16 %v2101
        %v3115 = vunpack.c.h.b16 %v2101
        %v3116 = vunpack.c.l.b16 %v2102
        %v3117 = vunpack.c.h.b16 %v2102
        %v3118 = vunpack.c.l.b16 %v2103
        %v3119 = vunpack.c.h.b16 %v2103
        %v3120 = vunpack.c.l.b16 %v2104
        %v3121 = vunpack.c.h.b16 %v2104
        %v3122 = vunpack.c.l.b16 %v2105
        %v3123 = vunpack.c.h.b16 %v2105
        %v3124 = vunpack.c.l.b16 %v2106
        %v3125 = vunpack.c.h.b16 %v2106
        %v3126 = vunpack.c.l.b16 %v2107
        %v3127 = vunpack.c.h.b16 %v2107
        %v3128 = vunpack.c.l.b16 %v2108
        %v3129 = vunpack.c.h.b16 %v2108
        %v3130 = vunpack.c.l.b16 %v2109
        %v3131 = vunpack.c.h.b16 %v2109
        %v3132 = vunpack.c.l.b16 %v2110
        %v3133 = vunpack.c.h.b16 %v2110
        %v3134 = vunpack.c.l.b16 %v2111
        %v3135 = vunpack.c.h.b16 %v2111
        %v3136 = vunpack.c.l.b16 %v2112
        %v3137 = vunpack.c.h.b16 %v2112
        %v3138 = vunpack.c.l.b16 %v2113
        %v3139 = vunpack.c.h.b16 %v2113
        %v3140 = vunpack.c.l.b16 %v2114
        %v3141 = vunpack.c.h.b16 %v2114
        %v3142 = vunpack.c.l.b16 %v2115
        %v3143 = vunpack.c.h.b16 %v2115
        %v3144 = vunpack.c.l.b16 %v2116
        %v3145 = vunpack.c.h.b16 %v2116
        %v3146 = vunpack.c.l.b16 %v2117
        %v3147 = vunpack.c.h.b16 %v2117
        %v3148 = vunpack.c.l.b16 %v2118
        %v3149 = vunpack.c.h.b16 %v2118
        %v3150 = vunpack.c.l.b16 %v2119
        %v3151 = vunpack.c.h.b16 %v2119
        %v3152 = vunpack.c.l.b16 %v2120
        %v3153 = vunpack.c.h.b16 %v2120
        %v3154 = vunpack.c.l.b16 %v2121
        %v3155 = vunpack.c.h.b16 %v2121
        %v3156 = vunpack.c.l.b16 %v2122
        %v3157 = vunpack.c.h.b16 %v2122
        %v3158 = vunpack.c.l.b16 %v2123
        %v3159 = vunpack.c.h.b16 %v2123
        %v3160 = vunpack.c.l.b16 %v2124
        %v3161 = vunpack.c.h.b16 %v2124
        %v3162 = vunpack.c.l.b16 %v2125
        %v3163 = vunpack.c.h.b16 %v2125
        %v3164 = vunpack.c.l.b16 %v2126
        %v3165 = vunpack.c.h.b16 %v2126
        %v3166 = vunpack.c.l.b16 %v2127
        %v3167 = vunpack.c.h.b16 %v2127
        %v3168 = vunpack.c.l.b16 %v2128
        %v3169 = vunpack.c.h.b16 %v2128
        %v3170 = vunpack.c.l.b16 %v2129
        %v3171 = vunpack.c.h.b16 %v2129
        %v3172 = vunpack.c.l.b16 %v2130
        %v3173 = vunpack.c.h.b16 %v2130
        %v3174 = vunpack.c.l.b16 %v2131
        %v3175 = vunpack.c.h.b16 %v2131
        %v3176 = vunpack.c.l.b16 %v2132
        %v3177 = vunpack.c.h.b16 %v2132
        %v3178 = vunpack.c.l.b16 %v2133
        %v3179 = vunpack.c.h.b16 %v2133
        %v3180 = vunpack.c.l.b16 %v2134
        %v3181 = vunpack.c.h.b16 %v2134
        %v3182 = vunpack.c.l.b16 %v2135
        %v3183 = vunpack.c.h.b16 %v2135
        %v3184 = vunpack.c.l.b16 %v2136
        %v3185 = vunpack.c.h.b16 %v2136
        %v3186 = vunpack.c.l.b16 %v2137
        %v3187 = vunpack.c.h.b16 %v2137
        %v3188 = vunpack.c.l.b16 %v2138
        %v3189 = vunpack.c.h.b16 %v2138
        %v3190 = vunpack.c.l.b16 %v2139
        %v3191 = vunpack.c.h.b16 %v2139
        %v3192 = vunpack.c.l.b16 %v2140
        %v3193 = vunpack.c.h.b16 %v2140
        %v3194 = vunpack.c.l.b16 %v2141
        %v3195 = vunpack.c.h.b16 %v2141
        %v3196 = vunpack.c.l.b16 %v2142
        %v3197 = vunpack.c.h.b16 %v2142
        %v3198 = vunpack.c.l.b16 %v2143
        %v3199 = vunpack.c.h.b16 %v2143
        %v3200 = vunpack.c.l.b16 %v2144
        %v3201 = vunpack.c.h.b16 %v2144
        %v3202 = vunpack.c.l.b16 %v2145
        %v3203 = vunpack.c.h.b16 %v2145
        %v3204 = vunpack.c.l.b16 %v2146
        %v3205 = vunpack.c.h.b16 %v2146
        %v3206 = vunpack.c.l.b16 %v2147
        %v3207 = vunpack.c.h.b16 %v2147
        %v3208 = vunpack.c.l.b16 %v2148
        %v3209 = vunpack.c.h.b16 %v2148
        %v3210 = vunpack.c.l.b16 %v2149
        %v3211 = vunpack.c.h.b16 %v2149
        %v3212 = vunpack.c.l.b16 %v2150
        %v3213 = vunpack.c.h.b16 %v2150
        %v3214 = vunpack.c.l.b16 %v2151
        %v3215 = vunpack.c.h.b16 %v2151
        %v3216 = vunpack.c.l.b16 %v2152
        %v3217 = vunpack.c.h.b16 %v2152
        %v3218 = vunpack.c.l.b16 %v2153
        %v3219 = vunpack.c.h.b16 %v2153
        %v3220 = vunpack.c.l.b16 %v2154
        %v3221 = vunpack.c.h.b16 %v2154
        %v3222 = vunpack.c.l.b16 %v2155
        %v3223 = vunpack.c.h.b16 %v2155
        %v3224 = vunpack.c.l.b16 %v2156
        %v3225 = vunpack.c.h.b16 %v2156
        %v3226 = vunpack.c.l.b16 %v2157
        %v3227 = vunpack.c.h.b16 %v2157
        %v3228 = vunpack.c.l.b16 %v2158
        %v3229 = vunpack.c.h.b16 %v2158
        %v3230 = vunpack.c.l.b16 %v2159
        %v3231 = vunpack.c.h.b16 %v2159
        %v3232 = vunpack.c.l.b16 %v2160
        %v3233 = vunpack.c.h.b16 %v2160
        %v3234 = vunpack.c.l.b16 %v2161
        %v3235 = vunpack.c.h.b16 %v2161
        %v3236 = vunpack.c.l.b16 %v2162
        %v3237 = vunpack.c.h.b16 %v2162
        %v3238 = vunpack.c.l.b16 %v2163
        %v3239 = vunpack.c.h.b16 %v2163
        %v3240 = vunpack.c.l.b16 %v2164
        %v3241 = vunpack.c.h.b16 %v2164
        %v3242 = vunpack.c.l.b16 %v2165
        %v3243 = vunpack.c.h.b16 %v2165
        %v3244 = vunpack.c.l.b16 %v2166
        %v3245 = vunpack.c.h.b16 %v2166
        %v3246 = vunpack.c.l.b16 %v2167
        %v3247 = vunpack.c.h.b16 %v2167
        %v3248 = vunpack.c.l.b16 %v2168
        %v3249 = vunpack.c.h.b16 %v2168
        %v3250 = vunpack.c.l.b16 %v2169
        %v3251 = vunpack.c.h.b16 %v2169
        %v3252 = vunpack.c.l.b16 %v2170
        %v3253 = vunpack.c.h.b16 %v2170
        %v3254 = vunpack.c.l.b16 %v2171
        %v3255 = vunpack.c.h.b16 %v2171
        %v3256 = vunpack.c.l.b16 %v2172
        %v3257 = vunpack.c.h.b16 %v2172
        %v3258 = vunpack.c.l.b16 %v2173
        %v3259 = vunpack.c.h.b16 %v2173
        %v3260 = vunpack.c.l.b16 %v2174
        %v3261 = vunpack.c.h.b16 %v2174
        %v3262 = vunpack.c.l.b16 %v2175
        %v3263 = vunpack.c.h.b16 %v2175
        %v3264 = vunpack.c.l.b16 %v2176
        %v3265 = vunpack.c.h.b16 %v2176
        %v3266 = vunpack.c.l.b16 %v2177
        %v3267 = vunpack.c.h.b16 %v2177
        %v3268 = vunpack.c.l.b16 %v2178
        %v3269 = vunpack.c.h.b16 %v2178
        %v3270 = vunpack.c.l.b16 %v2179
        %v3271 = vunpack.c.h.b16 %v2179
        %v3272 = vunpack.c.l.b16 %v2180
        %v3273 = vunpack.c.h.b16 %v2180
        %v3274 = vunpack.c.l.b16 %v2181
        %v3275 = vunpack.c.h.b16 %v2181
        %v3276 = vunpack.c.l.b16 %v2182
        %v3277 = vunpack.c.h.b16 %v2182
        %v3278 = vunpack.c.l.b16 %v2183
        %v3279 = vunpack.c.h.b16 %v2183
        %v3280 = vunpack.c.l.b16 %v2184
        %v3281 = vunpack.c.h.b16 %v2184
        %v3282 = vunpack.c.l.b16 %v2185
        %v3283 = vunpack.c.h.b16 %v2185
        %v3284 = vunpack.c.l.b16 %v2186
        %v3285 = vunpack.c.h.b16 %v2186
        %v3286 = vunpack.c.l.b16 %v2187
        %v3287 = vunpack.c.h.b16 %v2187
        %v3288 = vunpack.c.l.b16 %v2188
        %v3289 = vunpack.c.h.b16 %v2188
        %v3290 = vunpack.c.l.b16 %v2189
        %v3291 = vunpack.c.h.b16 %v2189
        %v3292 = vunpack.c.l.b16 %v2190
        %v3293 = vunpack.c.h.b16 %v2190
        %v3294 = vunpack.c.l.b16 %v2191
        %v3295 = vunpack.c.h.b16 %v2191
        %v3296 = vunpack.c.l.b16 %v2192
        %v3297 = vunpack.c.h.b16 %v2192
        %v3298 = vunpack.c.l.b16 %v2193
        %v3299 = vunpack.c.h.b16 %v2193
        %v3300 = vunpack.c.l.b16 %v2194
        %v3301 = vunpack.c.h.b16 %v2194
        %v3302 = vunpack.c.l.b16 %v2195
        %v3303 = vunpack.c.h.b16 %v2195
        %v3304 = vunpack.c.l.b16 %v2196
        %v3305 = vunpack.c.h.b16 %v2196
        %v3306 = vunpack.c.l.b16 %v2197
        %v3307 = vunpack.c.h.b16 %v2197
        %v3308 = vunpack.c.l.b16 %v2198
        %v3309 = vunpack.c.h.b16 %v2198
        %v3310 = vunpack.c.l.b16 %v2199
        %v3311 = vunpack.c.h.b16 %v2199
        %v3312 = vunpack.c.l.b16 %v2200
        %v3313 = vunpack.c.h.b16 %v2200
        %v3314 = vunpack.c.l.b16 %v2201
        %v3315 = vunpack.c.h.b16 %v2201
        %v3316 = vunpack.c.l.b16 %v2202
        %v3317 = vunpack.c.h.b16 %v2202
        %v3318 = vunpack.c.l.b16 %v2203
        %v3319 = vunpack.c.h.b16 %v2203
        %v3320 = vunpack.c.l.b16 %v2204
        %v3321 = vunpack.c.h.b16 %v2204
        %v3322 = vunpack.c.l.b16 %v2205
        %v3323 = vunpack.c.h.b16 %v2205
        %v3324 = vunpack.c.l.b16 %v2206
        %v3325 = vunpack.c.h.b16 %v2206
        %v3326 = vunpack.c.l.b16 %v2207
        %v3327 = vunpack.c.h.b16 %v2207
        %v3328 = vunpack.c.l.b16 %v2208
        %v3329 = vunpack.c.h.b16 %v2208
        %v3330 = vunpack.c.l.b16 %v2209
        %v3331 = vunpack.c.h.b16 %v2209
        %v3332 = vunpack.c.l.b16 %v2210
        %v3333 = vunpack.c.h.b16 %v2210
        %v3334 = vunpack.c.l.b16 %v2211
        %v3335 = vunpack.c.h.b16 %v2211
        %v3336 = vunpack.c.l.b16 %v2212
        %v3337 = vunpack.c.h.b16 %v2212
        %v3338 = vunpack.c.l.b16 %v2213
        %v3339 = vunpack.c.h.b16 %v2213
        %v3340 = vunpack.c.l.b16 %v2214
        %v3341 = vunpack.c.h.b16 %v2214
        %v3342 = vunpack.c.l.b16 %v2215
        %v3343 = vunpack.c.h.b16 %v2215
        %v3344 = vunpack.c.l.b16 %v2216
        %v3345 = vunpack.c.h.b16 %v2216
        %v3346 = vunpack.c.l.b16 %v2217
        %v3347 = vunpack.c.h.b16 %v2217
        %v3348 = vunpack.c.l.b16 %v2218
        %v3349 = vunpack.c.h.b16 %v2218
        %v3350 = vunpack.c.l.b16 %v2219
        %v3351 = vunpack.c.h.b16 %v2219
        %v3352 = vunpack.c.l.b16 %v2220
        %v3353 = vunpack.c.h.b16 %v2220
        %v3354 = vunpack.c.l.b16 %v2221
        %v3355 = vunpack.c.h.b16 %v2221
        %v3356 = vunpack.c.l.b16 %v2222
        %v3357 = vunpack.c.h.b16 %v2222
        %v3358 = vunpack.c.l.b16 %v2223
        %v3359 = vunpack.c.h.b16 %v2223
        %v3360 = vunpack.c.l.b16 %v2224
        %v3361 = vunpack.c.h.b16 %v2224
        %v3362 = vunpack.c.l.b16 %v2225
        %v3363 = vunpack.c.h.b16 %v2225
        %v3364 = vunpack.c.l.b16 %v2226
        %v3365 = vunpack.c.h.b16 %v2226
        %v3366 = vunpack.c.l.b16 %v2227
        %v3367 = vunpack.c.h.b16 %v2227
        %v3368 = vunpack.c.l.b16 %v2228
        %v3369 = vunpack.c.h.b16 %v2228
        %v3370 = vunpack.c.l.b16 %v2229
        %v3371 = vunpack.c.h.b16 %v2229
        %v3372 = vunpack.c.l.b16 %v2230
        %v3373 = vunpack.c.h.b16 %v2230
        %v3374 = vunpack.c.l.b16 %v2231
        %v3375 = vunpack.c.h.b16 %v2231
        %v3376 = vunpack.c.l.b16 %v2232
        %v3377 = vunpack.c.h.b16 %v2232
        %v3378 = vunpack.c.l.b16 %v2233
        %v3379 = vunpack.c.h.b16 %v2233
        %v3380 = vunpack.c.l.b16 %v2234
        %v3381 = vunpack.c.h.b16 %v2234
        %v3382 = vunpack.c.l.b16 %v2235
        %v3383 = vunpack.c.h.b16 %v2235
        %v3384 = vunpack.c.l.b16 %v2236
        %v3385 = vunpack.c.h.b16 %v2236
        %v3386 = vunpack.c.l.b16 %v2237
        %v3387 = vunpack.c.h.b16 %v2237
        %v3388 = vunpack.c.l.b16 %v2238
        %v3389 = vunpack.c.h.b16 %v2238
        %v3390 = vunpack.c.l.b16 %v2239
        %v3391 = vunpack.c.h.b16 %v2239
        %v3392 = vunpack.c.l.b16 %v2240
        %v3393 = vunpack.c.h.b16 %v2240
        %v3394 = vunpack.c.l.b16 %v2241
        %v3395 = vunpack.c.h.b16 %v2241
        %v3396 = vunpack.c.l.b16 %v2242
        %v3397 = vunpack.c.h.b16 %v2242
        %v3398 = vunpack.c.l.b16 %v2243
        %v3399 = vunpack.c.h.b16 %v2243
        %v3400 = vunpack.c.l.b16 %v2244
        %v3401 = vunpack.c.h.b16 %v2244
        %v3402 = vunpack.c.l.b16 %v2245
        %v3403 = vunpack.c.h.b16 %v2245
        %v3404 = vunpack.c.l.b16 %v2246
        %v3405 = vunpack.c.h.b16 %v2246
        %v3406 = vunpack.c.l.b16 %v2247
        %v3407 = vunpack.c.h.b16 %v2247
        %v3408 = vunpack.c.l.b16 %v2248
        %v3409 = vunpack.c.h.b16 %v2248
        %v3410 = vunpack.c.l.b16 %v2249
        %v3411 = vunpack.c.h.b16 %v2249
        %v3412 = vunpack.c.l.b16 %v2250
        %v3413 = vunpack.c.h.b16 %v2250
        %v3414 = vunpack.c.l.b16 %v2251
        %v3415 = vunpack.c.h.b16 %v2251
        %v3416 = vunpack.c.l.b16 %v2252
        %v3417 = vunpack.c.h.b16 %v2252
        %v3418 = vunpack.c.l.b16 %v2253
        %v3419 = vunpack.c.h.b16 %v2253
        %v3420 = vunpack.c.l.b16 %v2254
        %v3421 = vunpack.c.h.b16 %v2254
        %v3422 = vunpack.c.l.b16 %v2255
        %v3423 = vunpack.c.h.b16 %v2255
        %v3424 = vunpack.c.l.b16 %v2256
        %v3425 = vunpack.c.h.b16 %v2256
        %v3426 = vunpack.c.l.b16 %v2257
        %v3427 = vunpack.c.h.b16 %v2257
        %v3428 = vunpack.c.l.b16 %v2258
        %v3429 = vunpack.c.h.b16 %v2258
        %v3430 = vunpack.c.l.b16 %v2259
        %v3431 = vunpack.c.h.b16 %v2259
        %v3432 = vunpack.c.l.b16 %v2260
        %v3433 = vunpack.c.h.b16 %v2260
        %v3434 = vunpack.c.l.b16 %v2261
        %v3435 = vunpack.c.h.b16 %v2261
        %v3436 = vunpack.c.l.b16 %v2262
        %v3437 = vunpack.c.h.b16 %v2262
        %v3438 = vunpack.c.l.b16 %v2263
        %v3439 = vunpack.c.h.b16 %v2263
        %v3440 = vunpack.c.l.b16 %v2264
        %v3441 = vunpack.c.h.b16 %v2264
        %v3442 = vunpack.c.l.b16 %v2265
        %v3443 = vunpack.c.h.b16 %v2265
        %v3444 = vunpack.c.l.b16 %v2266
        %v3445 = vunpack.c.h.b16 %v2266
        %v3446 = vunpack.c.l.b16 %v2267
        %v3447 = vunpack.c.h.b16 %v2267
        %v3448 = vunpack.c.l.b16 %v2268
        %v3449 = vunpack.c.h.b16 %v2268
        %v3450 = vunpack.c.l.b16 %v2269
        %v3451 = vunpack.c.h.b16 %v2269
        %v3452 = vunpack.c.l.b16 %v2270
        %v3453 = vunpack.c.h.b16 %v2270
        %v3454 = vunpack.c.l.b16 %v2271
        %v3455 = vunpack.c.h.b16 %v2271
        %v3456 = vunpack.c.l.b16 %v2272
        %v3457 = vunpack.c.h.b16 %v2272
        %v3458 = vunpack.c.l.b16 %v2273
        %v3459 = vunpack.c.h.b16 %v2273
        %v3460 = vunpack.c.l.b16 %v2274
        %v3461 = vunpack.c.h.b16 %v2274
        %v3462 = vunpack.c.l.b16 %v2275
        %v3463 = vunpack.c.h.b16 %v2275
        %v3464 = vpack.c.b16 %v2682, %v2680
        %v3465 = vpack.c.b16 %v2683, %v2681
        %v3466 = vpack.c.b16 %v2686, %v2684
        %v3467 = vpack.c.b16 %v2687, %v2685
        %v3468 = vpack.c.b16 %v2690, %v2688
        %v3469 = vpack.c.b16 %v2691, %v2689
        %v3470 = vpack.c.b16 %v2694, %v2692
        %v3471 = vpack.c.b16 %v2695, %v2693
        %v3472 = vpack.c.b16 %v2698, %v2696
        %v3473 = vpack.c.b16 %v2699, %v2697
        %v3474 = vpack.c.b16 %v2702, %v2700
        %v3475 = vpack.c.b16 %v2703, %v2701
        %v3476 = vpack.c.b16 %v2706, %v2704
        %v3477 = vpack.c.b16 %v2707, %v2705
        %v3478 = vpack.c.b16 %v2710, %v2708
        %v3479 = vpack.c.b16 %v2711, %v2709
        %v3480 = vpack.c.b16 %v2714, %v2712
        %v3481 = vpack.c.b16 %v2715, %v2713
        %v3482 = vpack.c.b16 %v2718, %v2716
        %v3483 = vpack.c.b16 %v2719, %v2717
        %v3484 = vpack.c.b16 %v2722, %v2720
        %v3485 = vpack.c.b16 %v2723, %v2721
        %v3486 = vpack.c.b16 %v2726, %v2724
        %v3487 = vpack.c.b16 %v2727, %v2725
        %v3488 = vpack.c.b16 %v2730, %v2728
        %v3489 = vpack.c.b16 %v2731, %v2729
        %v3490 = vpack.c.b16 %v2734, %v2732
        %v3491 = vpack.c.b16 %v2735, %v2733
        %v3492 = vpack.c.b16 %v2738, %v2736
        %v3493 = vpack.c.b16 %v2739, %v2737
        %v3494 = vpack.c.b16 %v2742, %v2740
        %v3495 = vpack.c.b16 %v2743, %v2741
        %v3496 = vpack.c.b16 %v2746, %v2744
        %v3497 = vpack.c.b16 %v2747, %v2745
        %v3498 = vpack.c.b16 %v2750, %v2748
        %v3499 = vpack.c.b16 %v2751, %v2749
        %v3500 = vpack.c.b16 %v2754, %v2752
        %v3501 = vpack.c.b16 %v2755, %v2753
        %v3502 = vpack.c.b16 %v2758, %v2756
        %v3503 = vpack.c.b16 %v2759, %v2757
        %v3504 = vpack.c.b16 %v2762, %v2760
        %v3505 = vpack.c.b16 %v2763, %v2761
        %v3506 = vpack.c.b16 %v2766, %v2764
        %v3507 = vpack.c.b16 %v2767, %v2765
        %v3508 = vpack.c.b16 %v2770, %v2768
        %v3509 = vpack.c.b16 %v2771, %v2769
        %v3510 = vpack.c.b16 %v2774, %v2772
        %v3511 = vpack.c.b16 %v2775, %v2773
        %v3512 = vpack.c.b16 %v2778, %v2776
        %v3513 = vpack.c.b16 %v2779, %v2777
        %v3514 = vpack.c.b16 %v2782, %v2780
        %v3515 = vpack.c.b16 %v2783, %v2781
        %v3516 = vpack.c.b16 %v2786, %v2784
        %v3517 = vpack.c.b16 %v2787, %v2785
        %v3518 = vpack.c.b16 %v2790, %v2788
        %v3519 = vpack.c.b16 %v2791, %v2789
        %v3520 = vpack.c.b16 %v2794, %v2792
        %v3521 = vpack.c.b16 %v2795, %v2793
        %v3522 = vpack.c.b16 %v2798, %v2796
        %v3523 = vpack.c.b16 %v2799, %v2797
        %v3524 = vpack.c.b16 %v2802, %v2800
        %v3525 = vpack.c.b16 %v2803, %v2801
        %v3526 = vpack.c.b16 %v2806, %v2804
        %v3527 = vpack.c.b16 %v2807, %v2805
        %v3528 = vpack.c.b16 %v2810, %v2808
        %v3529 = vpack.c.b16 %v2811, %v2809
        %v3530 = vpack.c.b16 %v2814, %v2812
        %v3531 = vpack.c.b16 %v2815, %v2813
        %v3532 = vpack.c.b16 %v2818, %v2816
        %v3533 = vpack.c.b16 %v2819, %v2817
        %v3534 = vpack.c.b16 %v2822, %v2820
        %v3535 = vpack.c.b16 %v2823, %v2821
        %v3536 = vpack.c.b16 %v2826, %v2824
        %v3537 = vpack.c.b16 %v2827, %v2825
        %v3538 = vpack.c.b16 %v2830, %v2828
        %v3539 = vpack.c.b16 %v2831, %v2829
        %v3540 = vpack.c.b16 %v2834, %v2832
        %v3541 = vpack.c.b16 %v2835, %v2833
        %v3542 = vpack.c.b16 %v2838, %v2836
        %v3543 = vpack.c.b16 %v2839, %v2837
        %v3544 = vpack.c.b16 %v2842, %v2840
        %v3545 = vpack.c.b16 %v2843, %v2841
        %v3546 = vpack.c.b16 %v2846, %v2844
        %v3547 = vpack.c.b16 %v2847, %v2845
        %v3548 = vpack.c.b16 %v2850, %v2848
        %v3549 = vpack.c.b16 %v2851, %v2849
        %v3550 = vpack.c.b16 %v2854, %v2852
        %v3551 = vpack.c.b16 %v2855, %v2853
        %v3552 = vpack.c.b16 %v2858, %v2856
        %v3553 = vpack.c.b16 %v2859, %v2857
        %v3554 = vpack.c.b16 %v2862, %v2860
        %v3555 = vpack.c.b16 %v2863, %v2861
        %v3556 = vpack.c.b16 %v2866, %v2864
        %v3557 = vpack.c.b16 %v2867, %v2865
        %v3558 = vpack.c.b16 %v2870, %v2868
        %v3559 = vpack.c.b16 %v2871, %v2869
        %v3560 = vpack.c.b16 %v2874, %v2872
        %v3561 = vpack.c.b16 %v2875, %v2873
        %v3562 = vpack.c.b16 %v2878, %v2876
        %v3563 = vpack.c.b16 %v2879, %v2877
        %v3564 = vpack.c.b16 %v2882, %v2880
        %v3565 = vpack.c.b16 %v2883, %v2881
        %v3566 = vpack.c.b16 %v2886, %v2884
        %v3567 = vpack.c.b16 %v2887, %v2885
        %v3568 = vpack.c.b16 %v2890, %v2888
        %v3569 = vpack.c.b16 %v2891, %v2889
        %v3570 = vpack.c.b16 %v2894, %v2892
        %v3571 = vpack.c.b16 %v2895, %v2893
        %v3572 = vpack.c.b16 %v2898, %v2896
        %v3573 = vpack.c.b16 %v2899, %v2897
        %v3574 = vpack.c.b16 %v2902, %v2900
        %v3575 = vpack.c.b16 %v2903, %v2901
        %v3576 = vpack.c.b16 %v2906, %v2904
        %v3577 = vpack.c.b16 %v2907, %v2905
        %v3578 = vpack.c.b16 %v2910, %v2908
        %v3579 = vpack.c.b16 %v2911, %v2909
        %v3580 = vpack.c.b16 %v2914, %v2912
        %v3581 = vpack.c.b16 %v2915, %v2913
        %v3582 = vpack.c.b16 %v2918, %v2916
        %v3583 = vpack.c.b16 %v2919, %v2917
        %v3584 = vpack.c.b16 %v2922, %v2920
        %v3585 = vpack.c.b16 %v2923, %v2921
        %v3586 = vpack.c.b16 %v2926, %v2924
        %v3587 = vpack.c.b16 %v2927, %v2925
        %v3588 = vpack.c.b16 %v2930, %v2928
        %v3589 = vpack.c.b16 %v2931, %v2929
        %v3590 = vpack.c.b16 %v2934, %v2932
        %v3591 = vpack.c.b16 %v2935, %v2933
        %v3592 = vpack.c.b16 %v2938, %v2936
        %v3593 = vpack.c.b16 %v2939, %v2937
        %v3594 = vpack.c.b16 %v2942, %v2940
        %v3595 = vpack.c.b16 %v2943, %v2941
        %v3596 = vpack.c.b16 %v2946, %v2944
        %v3597 = vpack.c.b16 %v2947, %v2945
        %v3598 = vpack.c.b16 %v2950, %v2948
        %v3599 = vpack.c.b16 %v2951, %v2949
        %v3600 = vpack.c.b16 %v2954, %v2952
        %v3601 = vpack.c.b16 %v2955, %v2953
        %v3602 = vpack.c.b16 %v2958, %v2956
        %v3603 = vpack.c.b16 %v2959, %v2957
        %v3604 = vpack.c.b16 %v2962, %v2960
        %v3605 = vpack.c.b16 %v2963, %v2961
        %v3606 = vpack.c.b16 %v2966, %v2964
        %v3607 = vpack.c.b16 %v2967, %v2965
        %v3608 = vpack.c.b16 %v2970, %v2968
        %v3609 = vpack.c.b16 %v2971, %v2969
        %v3610 = vpack.c.b16 %v2974, %v2972
        %v3611 = vpack.c.b16 %v2975, %v2973
        %v3612 = vpack.c.b16 %v2978, %v2976
        %v3613 = vpack.c.b16 %v2979, %v2977
        %v3614 = vpack.c.b16 %v2982, %v2980
        %v3615 = vpack.c.b16 %v2983, %v2981
        %v3616 = vpack.c.b16 %v2986, %v2984
        %v3617 = vpack.c.b16 %v2987, %v2985
        %v3618 = vpack.c.b16 %v2990, %v2988
        %v3619 = vpack.c.b16 %v2991, %v2989
        %v3620 = vpack.c.b16 %v2994, %v2992
        %v3621 = vpack.c.b16 %v2995, %v2993
        %v3622 = vpack.c.b16 %v2998, %v2996
        %v3623 = vpack.c.b16 %v2999, %v2997
        %v3624 = vpack.c.b16 %v3002, %v3000
        %v3625 = vpack.c.b16 %v3003, %v3001
        %v3626 = vpack.c.b16 %v3006, %v3004
        %v3627 = vpack.c.b16 %v3007, %v3005
        %v3628 = vpack.c.b16 %v3010, %v3008
        %v3629 = vpack.c.b16 %v3011, %v3009
        %v3630 = vpack.c.b16 %v3014, %v3012
        %v3631 = vpack.c.b16 %v3015, %v3013
        %v3632 = vpack.c.b16 %v3018, %v3016
        %v3633 = vpack.c.b16 %v3019, %v3017
        %v3634 = vpack.c.b16 %v3022, %v3020
        %v3635 = vpack.c.b16 %v3023, %v3021
        %v3636 = vpack.c.b16 %v3026, %v3024
        %v3637 = vpack.c.b16 %v3027, %v3025
        %v3638 = vpack.c.b16 %v3030, %v3028
        %v3639 = vpack.c.b16 %v3031, %v3029
        %v3640 = vpack.c.b16 %v3034, %v3032
        %v3641 = vpack.c.b16 %v3035, %v3033
        %v3642 = vpack.c.b16 %v3038, %v3036
        %v3643 = vpack.c.b16 %v3039, %v3037
        %v3644 = vpack.c.b16 %v3042, %v3040
        %v3645 = vpack.c.b16 %v3043, %v3041
        %v3646 = vpack.c.b16 %v3046, %v3044
        %v3647 = vpack.c.b16 %v3047, %v3045
        %v3648 = vpack.c.b16 %v3050, %v3048
        %v3649 = vpack.c.b16 %v3051, %v3049
        %v3650 = vpack.c.b16 %v3054, %v3052
        %v3651 = vpack.c.b16 %v3055, %v3053
        %v3652 = vpack.c.b16 %v3058, %v3056
        %v3653 = vpack.c.b16 %v3059, %v3057
        %v3654 = vpack.c.b16 %v3062, %v3060
        %v3655 = vpack.c.b16 %v3063, %v3061
        %v3656 = vpack.c.b16 %v3066, %v3064
        %v3657 = vpack.c.b16 %v3067, %v3065
        %v3658 = vpack.c.b16 %v3070, %v3068
        %v3659 = vpack.c.b16 %v3071, %v3069
        %v3660 = vpack.c.b16 %v3074, %v3072
        %v3661 = vpack.c.b16 %v3075, %v3073
        %v3662 = vpack.c.b16 %v3078, %v3076
        %v3663 = vpack.c.b16 %v3079, %v3077
        %v3664 = vpack.c.b16 %v3082, %v3080
        %v3665 = vpack.c.b16 %v3083, %v3081
        %v3666 = vpack.c.b16 %v3086, %v3084
        %v3667 = vpack.c.b16 %v3087, %v3085
        %v3668 = vpack.c.b16 %v3090, %v3088
        %v3669 = vpack.c.b16 %v3091, %v3089
        %v3670 = vpack.c.b16 %v3094, %v3092
        %v3671 = vpack.c.b16 %v3095, %v3093
        %v3672 = vpack.c.b16 %v3098, %v3096
        %v3673 = vpack.c.b16 %v3099, %v3097
        %v3674 = vpack.c.b16 %v3102, %v3100
        %v3675 = vpack.c.b16 %v3103, %v3101
        %v3676 = vpack.c.b16 %v3106, %v3104
        %v3677 = vpack.c.b16 %v3107, %v3105
        %v3678 = vpack.c.b16 %v3110, %v3108
        %v3679 = vpack.c.b16 %v3111, %v3109
        %v3680 = vpack.c.b16 %v3114, %v3112
        %v3681 = vpack.c.b16 %v3115, %v3113
        %v3682 = vpack.c.b16 %v3118, %v3116
        %v3683 = vpack.c.b16 %v3119, %v3117
        %v3684 = vpack.c.b16 %v3122, %v3120
        %v3685 = vpack.c.b16 %v3123, %v3121
        %v3686 = vpack.c.b16 %v3126, %v3124
        %v3687 = vpack.c.b16 %v3127, %v3125
        %v3688 = vpack.c.b16 %v3130, %v3128
        %v3689 = vpack.c.b16 %v3131, %v3129
        %v3690 = vpack.c.b16 %v3134, %v3132
        %v3691 = vpack.c.b16 %v3135, %v3133
        %v3692 = vpack.c.b16 %v3138, %v3136
        %v3693 = vpack.c.b16 %v3139, %v3137
        %v3694 = vpack.c.b16 %v3142, %v3140
        %v3695 = vpack.c.b16 %v3143, %v3141
        %v3696 = vpack.c.b16 %v3146, %v3144
        %v3697 = vpack.c.b16 %v3147, %v3145
        %v3698 = vpack.c.b16 %v3150, %v3148
        %v3699 = vpack.c.b16 %v3151, %v3149
        %v3700 = vpack.c.b16 %v3154, %v3152
        %v3701 = vpack.c.b16 %v3155, %v3153
        %v3702 = vpack.c.b16 %v3158, %v3156
        %v3703 = vpack.c.b16 %v3159, %v3157
        %v3704 = vpack.c.b16 %v3162, %v3160
        %v3705 = vpack.c.b16 %v3163, %v3161
        %v3706 = vpack.c.b16 %v3166, %v3164
        %v3707 = vpack.c.b16 %v3167, %v3165
        %v3708 = vpack.c.b16 %v3170, %v3168
        %v3709 = vpack.c.b16 %v3171, %v3169
        %v3710 = vpack.c.b16 %v3174, %v3172
        %v3711 = vpack.c.b16 %v3175, %v3173
        %v3712 = vpack.c.b16 %v3178, %v3176
        %v3713 = vpack.c.b16 %v3179, %v3177
        %v3714 = vpack.c.b16 %v3182, %v3180
        %v3715 = vpack.c.b16 %v3183, %v3181
        %v3716 = vpack.c.b16 %v3186, %v3184
        %v3717 = vpack.c.b16 %v3187, %v3185
        %v3718 = vpack.c.b16 %v3190, %v3188
        %v3719 = vpack.c.b16 %v3191, %v3189
        %v3720 = vpack.c.b16 %v3194, %v3192
        %v3721 = vpack.c.b16 %v3195, %v3193
        %v3722 = vpack.c.b16 %v3198, %v3196
        %v3723 = vpack.c.b16 %v3199, %v3197
        %v3724 = vpack.c.b16 %v3202, %v3200
        %v3725 = vpack.c.b16 %v3203, %v3201
        %v3726 = vpack.c.b16 %v3206, %v3204
        %v3727 = vpack.c.b16 %v3207, %v3205
        %v3728 = vpack.c.b16 %v3210, %v3208
        %v3729 = vpack.c.b16 %v3211, %v3209
        %v3730 = vpack.c.b16 %v3214, %v3212
        %v3731 = vpack.c.b16 %v3215, %v3213
        %v3732 = vpack.c.b16 %v3218, %v3216
        %v3733 = vpack.c.b16 %v3219, %v3217
        %v3734 = vpack.c.b16 %v3222, %v3220
        %v3735 = vpack.c.b16 %v3223, %v3221
        %v3736 = vpack.c.b16 %v3226, %v3224
        %v3737 = vpack.c.b16 %v3227, %v3225
        %v3738 = vpack.c.b16 %v3230, %v3228
        %v3739 = vpack.c.b16 %v3231, %v3229
        %v3740 = vpack.c.b16 %v3234, %v3232
        %v3741 = vpack.c.b16 %v3235, %v3233
        %v3742 = vpack.c.b16 %v3238, %v3236
        %v3743 = vpack.c.b16 %v3239, %v3237
        %v3744 = vpack.c.b16 %v3242, %v3240
        %v3745 = vpack.c.b16 %v3243, %v3241
        %v3746 = vpack.c.b16 %v3246, %v3244
        %v3747 = vpack.c.b16 %v3247, %v3245
        %v3748 = vpack.c.b16 %v3250, %v3248
        %v3749 = vpack.c.b16 %v3251, %v3249
        %v3750 = vpack.c.b16 %v3254, %v3252
        %v3751 = vpack.c.b16 %v3255, %v3253
        %v3752 = vpack.c.b16 %v3258, %v3256
        %v3753 = vpack.c.b16 %v3259, %v3257
        %v3754 = vpack.c.b16 %v3262, %v3260
        %v3755 = vpack.c.b16 %v3263, %v3261
        %v3756 = vpack.c.b16 %v3266, %v3264
        %v3757 = vpack.c.b16 %v3267, %v3265
        %v3758 = vpack.c.b16 %v3270, %v3268
        %v3759 = vpack.c.b16 %v3271, %v3269
        %v3760 = vpack.c.b16 %v3274, %v3272
        %v3761 = vpack.c.b16 %v3275, %v3273
        %v3762 = vpack.c.b16 %v3278, %v3276
        %v3763 = vpack.c.b16 %v3279, %v3277
        %v3764 = vpack.c.b16 %v3282, %v3280
        %v3765 = vpack.c.b16 %v3283, %v3281
        %v3766 = vpack.c.b16 %v3286, %v3284
        %v3767 = vpack.c.b16 %v3287, %v3285
        %v3768 = vpack.c.b16 %v3290, %v3288
        %v3769 = vpack.c.b16 %v3291, %v3289
        %v3770 = vpack.c.b16 %v3294, %v3292
        %v3771 = vpack.c.b16 %v3295, %v3293
        %v3772 = vpack.c.b16 %v3298, %v3296
        %v3773 = vpack.c.b16 %v3299, %v3297
        %v3774 = vpack.c.b16 %v3302, %v3300
        %v3775 = vpack.c.b16 %v3303, %v3301
        %v3776 = vpack.c.b16 %v3306, %v3304
        %v3777 = vpack.c.b16 %v3307, %v3305
        %v3778 = vpack.c.b16 %v3310, %v3308
        %v3779 = vpack.c.b16 %v3311, %v3309
        %v3780 = vpack.c.b16 %v3314, %v3312
        %v3781 = vpack.c.b16 %v3315, %v3313
        %v3782 = vpack.c.b16 %v3318, %v3316
        %v3783 = vpack.c.b16 %v3319, %v3317
        %v3784 = vpack.c.b16 %v3322, %v3320
        %v3785 = vpack.c.b16 %v3323, %v3321
        %v3786 = vpack.c.b16 %v3326, %v3324
        %v3787 = vpack.c.b16 %v3327, %v3325
        %v3788 = vpack.c.b16 %v3330, %v3328
        %v3789 = vpack.c.b16 %v3331, %v3329
        %v3790 = vpack.c.b16 %v3334, %v3332
        %v3791 = vpack.c.b16 %v3335, %v3333
        %v3792 = vpack.c.b16 %v3338, %v3336
        %v3793 = vpack.c.b16 %v3339, %v3337
        %v3794 = vpack.c.b16 %v3342, %v3340
        %v3795 = vpack.c.b16 %v3343, %v3341
        %v3796 = vpack.c.b16 %v3346, %v3344
        %v3797 = vpack.c.b16 %v3347, %v3345
        %v3798 = vpack.c.b16 %v3350, %v3348
        %v3799 = vpack.c.b16 %v3351, %v3349
        %v3800 = vpack.c.b16 %v3354, %v3352
        %v3801 = vpack.c.b16 %v3355, %v3353
        %v3802 = vpack.c.b16 %v3358, %v3356
        %v3803 = vpack.c.b16 %v3359, %v3357
        %v3804 = vpack.c.b16 %v3362, %v3360
        %v3805 = vpack.c.b16 %v3363, %v3361
        %v3806 = vpack.c.b16 %v3366, %v3364
        %v3807 = vpack.c.b16 %v3367, %v3365
        %v3808 = vpack.c.b16 %v3370, %v3368
        %v3809 = vpack.c.b16 %v3371, %v3369
        %v3810 = vpack.c.b16 %v3374, %v3372
        %v3811 = vpack.c.b16 %v3375, %v3373
        %v3812 = vpack.c.b16 %v3378, %v3376
        %v3813 = vpack.c.b16 %v3379, %v3377
        %v3814 = vpack.c.b16 %v3382, %v3380
        %v3815 = vpack.c.b16 %v3383, %v3381
        %v3816 = vpack.c.b16 %v3386, %v3384
        %v3817 = vpack.c.b16 %v3387, %v3385
        %v3818 = vpack.c.b16 %v3390, %v3388
        %v3819 = vpack.c.b16 %v3391, %v3389
        %v3820 = vpack.c.b16 %v3394, %v3392
        %v3821 = vpack.c.b16 %v3395, %v3393
        %v3822 = vpack.c.b16 %v3398, %v3396
        %v3823 = vpack.c.b16 %v3399, %v3397
        %v3824 = vpack.c.b16 %v3402, %v3400
        %v3825 = vpack.c.b16 %v3403, %v3401
        %v3826 = vpack.c.b16 %v3406, %v3404
        %v3827 = vpack.c.b16 %v3407, %v3405
        %v3828 = vpack.c.b16 %v3410, %v3408
        %v3829 = vpack.c.b16 %v3411, %v3409
        %v3830 = vpack.c.b16 %v3414, %v3412
        %v3831 = vpack.c.b16 %v3415, %v3413
        %v3832 = vpack.c.b16 %v3418, %v3416
        %v3833 = vpack.c.b16 %v3419, %v3417
        %v3834 = vpack.c.b16 %v3422, %v3420
        %v3835 = vpack.c.b16 %v3423, %v3421
        %v3836 = vpack.c.b16 %v3426, %v3424
        %v3837 = vpack.c.b16 %v3427, %v3425
        %v3838 = vpack.c.b16 %v3430, %v3428
        %v3839 = vpack.c.b16 %v3431, %v3429
        %v3840 = vpack.c.b16 %v3434, %v3432
        %v3841 = vpack.c.b16 %v3435, %v3433
        %v3842 = vpack.c.b16 %v3438, %v3436
        %v3843 = vpack.c.b16 %v3439, %v3437
        %v3844 = vpack.c.b16 %v3442, %v3440
        %v3845 = vpack.c.b16 %v3443, %v3441
        %v3846 = vpack.c.b16 %v3446, %v3444
        %v3847 = vpack.c.b16 %v3447, %v3445
        %v3848 = vpack.c.b16 %v3450, %v3448
        %v3849 = vpack.c.b16 %v3451, %v3449
        %v3850 = vpack.c.b16 %v3454, %v3452
        %v3851 = vpack.c.b16 %v3455, %v3453
        %v3852 = vpack.c.b16 %v3458, %v3456
        %v3853 = vpack.c.b16 %v3459, %v3457
        %v3854 = vpack.c.b16 %v3462, %v3460
        %v3855 = vpack.c.b16 %v3463, %v3461
        %vm4248 = vcmask 523264
        %v4250 = vsel %vm4248, %v1883, 0
        %4252 = vmatprep.subr.bf16.mxu0 %v3465
        %4253 = vmatpush1.bf16.msra.mxu0 %v3464
        %4254 = vmatprep.subr.bf16.mxu0 %v3467
        %4255 = vmatpush1.bf16.msra.mxu0 %v3466
        %4256 = vmatprep.subr.bf16.mxu0 %v3469
        %4257 = vmatpush1.bf16.msra.mxu0 %v3468
        %4258 = vmatprep.subr.bf16.mxu0 %v3471
        %4259 = vmatpush1.bf16.msra.mxu0 %v3470
        %4260 = vmatprep.subr.bf16.mxu0 %v3473
        %4261 = vmatpush1.bf16.msra.mxu0 %v3472
        %4262 = vmatprep.subr.bf16.mxu0 %v3475
        %4263 = vmatpush1.bf16.msra.mxu0 %v3474
        %4264 = vmatprep.subr.bf16.mxu0 %v3477
        %4265 = vmatpush1.bf16.msra.mxu0 %v3476
        %4266 = vmatprep.subr.bf16.mxu0 %v3479
        %4267 = vmatpush1.bf16.msra.mxu0 %v3478
        %4268 = vmatprep.subr.bf16.mxu0 %v3481
        %4269 = vmatpush1.bf16.msra.mxu0 %v3480
        %4270 = vmatprep.subr.bf16.mxu0 %v3483
        %4271 = vmatpush1.bf16.msra.mxu0 %v3482
        %4272 = vmatprep.subr.bf16.mxu0 %v3485
        %4273 = vmatpush1.bf16.msra.mxu0 %v3484
        %4274 = vmatprep.subr.bf16.mxu0 %v3487
        %4275 = vmatpush1.bf16.msra.mxu0 %v3486
        %4276 = vmatprep.subr.bf16.mxu0 %v3489
        %4277 = vmatpush1.bf16.msra.mxu0 %v3488
        %4278 = vmatprep.subr.bf16.mxu0 %v3491
        %4279 = vmatpush1.bf16.msra.mxu0 %v3490
        %4280 = vmatprep.subr.bf16.mxu0 %v3493
        %4281 = vmatpush1.bf16.msra.mxu0 %v3492
        %4282 = vmatprep.subr.bf16.mxu0 %v3495
        %4283 = vmatpush1.bf16.msra.mxu0 %v3494
        %4284 = vmatprep.mubr.bf16.mxu0 %v1860
        %4285 = vmatmul.mubr.bf16.gmra.mrb[0].mxu0 %v1859
        %v4286 = vpop.f32.mrb[0].mxu0
        %v4287 = vadd.f32 %v2281, %v4286
        %v4288 = vpop.f32.mrb[0].mxu0
        %v4289 = vadd.f32 %v2285, %v4288
        %v4290 = vpop.f32.mrb[0].mxu0
        %v4291 = vpop.f32.mrb[0].mxu0
        %4292 = vdwg.mxu0
        %4293 = vmatprep.subr.bf16.mxu0 %v3497
        %4294 = vmatpush1.bf16.msra.mxu0 %v3496
        %4295 = vmatprep.subr.bf16.mxu0 %v3499
        %4296 = vmatpush1.bf16.msra.mxu0 %v3498
        %4297 = vmatprep.subr.bf16.mxu0 %v3501
        %4298 = vmatpush1.bf16.msra.mxu0 %v3500
        %4299 = vmatprep.subr.bf16.mxu0 %v3503
        %4300 = vmatpush1.bf16.msra.mxu0 %v3502
        %4301 = vmatprep.subr.bf16.mxu0 %v3505
        %4302 = vmatpush1.bf16.msra.mxu0 %v3504
        %4303 = vmatprep.subr.bf16.mxu0 %v3507
        %4304 = vmatpush1.bf16.msra.mxu0 %v3506
        %4305 = vmatprep.subr.bf16.mxu0 %v3509
        %4306 = vmatpush1.bf16.msra.mxu0 %v3508
        %4307 = vmatprep.subr.bf16.mxu0 %v3511
        %4308 = vmatpush1.bf16.msra.mxu0 %v3510
        %4309 = vmatprep.subr.bf16.mxu0 %v3513
        %4310 = vmatpush1.bf16.msra.mxu0 %v3512
        %4311 = vmatprep.subr.bf16.mxu0 %v3515
        %4312 = vmatpush1.bf16.msra.mxu0 %v3514
        %4313 = vmatprep.subr.bf16.mxu0 %v3517
        %4314 = vmatpush1.bf16.msra.mxu0 %v3516
        %4315 = vmatprep.subr.bf16.mxu0 %v3519
        %4316 = vmatpush1.bf16.msra.mxu0 %v3518
        %4317 = vmatprep.subr.bf16.mxu0 %v3521
        %4318 = vmatpush1.bf16.msra.mxu0 %v3520
        %4319 = vmatprep.subr.bf16.mxu0 %v3523
        %4320 = vmatpush1.bf16.msra.mxu0 %v3522
        %4321 = vmatprep.subr.bf16.mxu0 %v3525
        %4322 = vmatpush1.bf16.msra.mxu0 %v3524
        %4323 = vmatprep.subr.bf16.mxu0 %v3527
        %4324 = vmatpush1.bf16.msra.mxu0 %v3526
        %4325 = vmatprep.mubr.bf16.mxu0 %v1862
        %4326 = vmatmul.mubr.bf16.gmra.mrb[0].mxu0 %v1861
        %v4327 = vpop.f32.mrb[0].mxu0
        %v4328 = vadd.f32 %v4287, %v4327
        %v4329 = vpop.f32.mrb[0].mxu0
        %v4330 = vadd.f32 %v4289, %v4329
        %v4331 = vpop.f32.mrb[0].mxu0
        %v4332 = vpop.f32.mrb[0].mxu0
        %4333 = vdwg.mxu0
        %4334 = vmatprep.subr.bf16.mxu0 %v3529
        %4335 = vmatpush1.bf16.msra.mxu0 %v3528
        %4336 = vmatprep.subr.bf16.mxu0 %v3531
        %4337 = vmatpush1.bf16.msra.mxu0 %v3530
        %4338 = vmatprep.subr.bf16.mxu0 %v3533
        %4339 = vmatpush1.bf16.msra.mxu0 %v3532
        %4340 = vmatprep.subr.bf16.mxu0 %v3535
        %4341 = vmatpush1.bf16.msra.mxu0 %v3534
        %4342 = vmatprep.subr.bf16.mxu0 %v3537
        %4343 = vmatpush1.bf16.msra.mxu0 %v3536
        %4344 = vmatprep.subr.bf16.mxu0 %v3539
        %4345 = vmatpush1.bf16.msra.mxu0 %v3538
        %4346 = vmatprep.subr.bf16.mxu0 %v3541
        %4347 = vmatpush1.bf16.msra.mxu0 %v3540
        %4348 = vmatprep.subr.bf16.mxu0 %v3543
        %4349 = vmatpush1.bf16.msra.mxu0 %v3542
        %4350 = vmatprep.subr.bf16.mxu0 %v3545
        %4351 = vmatpush1.bf16.msra.mxu0 %v3544
        %4352 = vmatprep.subr.bf16.mxu0 %v3547
        %4353 = vmatpush1.bf16.msra.mxu0 %v3546
        %4354 = vmatprep.subr.bf16.mxu0 %v3549
        %4355 = vmatpush1.bf16.msra.mxu0 %v3548
        %4356 = vmatprep.subr.bf16.mxu0 %v3551
        %4357 = vmatpush1.bf16.msra.mxu0 %v3550
        %4358 = vmatprep.subr.bf16.mxu0 %v3553
        %4359 = vmatpush1.bf16.msra.mxu0 %v3552
        %4360 = vmatprep.subr.bf16.mxu0 %v3555
        %4361 = vmatpush1.bf16.msra.mxu0 %v3554
        %4362 = vmatprep.subr.bf16.mxu0 %v3557
        %4363 = vmatpush1.bf16.msra.mxu0 %v3556
        %4364 = vmatprep.subr.bf16.mxu0 %v3559
        %4365 = vmatpush1.bf16.msra.mxu0 %v3558
        %4366 = vmatprep.mubr.bf16.mxu0 %v1864
        %4367 = vmatmul.mubr.bf16.gmra.mrb[0].mxu0 %v1863
        %v4368 = vpop.f32.mrb[0].mxu0
        %v4369 = vadd.f32 %v4328, %v4368
        %v4370 = vpop.f32.mrb[0].mxu0
        %v4371 = vadd.f32 %v4330, %v4370
        %v4372 = vpop.f32.mrb[0].mxu0
        %v4373 = vpop.f32.mrb[0].mxu0
        %4374 = vdwg.mxu0
        %4375 = vmatprep.subr.bf16.mxu0 %v3561
        %4376 = vmatpush1.bf16.msra.mxu0 %v3560
        %4377 = vmatprep.subr.bf16.mxu0 %v3563
        %4378 = vmatpush1.bf16.msra.mxu0 %v3562
        %4379 = vmatprep.subr.bf16.mxu0 %v3565
        %4380 = vmatpush1.bf16.msra.mxu0 %v3564
        %4381 = vmatprep.subr.bf16.mxu0 %v3567
        %4382 = vmatpush1.bf16.msra.mxu0 %v3566
        %4383 = vmatprep.subr.bf16.mxu0 %v3569
        %4384 = vmatpush1.bf16.msra.mxu0 %v3568
        %4385 = vmatprep.subr.bf16.mxu0 %v3571
        %4386 = vmatpush1.bf16.msra.mxu0 %v3570
        %4387 = vmatprep.subr.bf16.mxu0 %v3573
        %4388 = vmatpush1.bf16.msra.mxu0 %v3572
        %4389 = vmatprep.subr.bf16.mxu0 %v3575
        %4390 = vmatpush1.bf16.msra.mxu0 %v3574
        %4391 = vmatprep.subr.bf16.mxu0 %v3577
        %4392 = vmatpush1.bf16.msra.mxu0 %v3576
        %4393 = vmatprep.subr.bf16.mxu0 %v3579
        %4394 = vmatpush1.bf16.msra.mxu0 %v3578
        %4395 = vmatprep.subr.bf16.mxu0 %v3581
        %4396 = vmatpush1.bf16.msra.mxu0 %v3580
        %4397 = vmatprep.subr.bf16.mxu0 %v3583
        %4398 = vmatpush1.bf16.msra.mxu0 %v3582
        %4399 = vmatprep.subr.bf16.mxu0 %v3585
        %4400 = vmatpush1.bf16.msra.mxu0 %v3584
        %4401 = vmatprep.subr.bf16.mxu0 %v3587
        %4402 = vmatpush1.bf16.msra.mxu0 %v3586
        %4403 = vmatprep.subr.bf16.mxu0 %v3589
        %4404 = vmatpush1.bf16.msra.mxu0 %v3588
        %4405 = vmatprep.subr.bf16.mxu0 %v3591
        %4406 = vmatpush1.bf16.msra.mxu0 %v3590
        %4407 = vmatprep.mubr.bf16.mxu0 %v1866
        %4408 = vmatmul.mubr.bf16.gmra.mrb[0].mxu0 %v1865
        %v4409 = vpop.f32.mrb[0].mxu0
        %v4410 = vadd.f32 %v4369, %v4409
        %v4411 = vpop.f32.mrb[0].mxu0
        %v4412 = vadd.f32 %v4371, %v4411
        %v4413 = vpop.f32.mrb[0].mxu0
        %v4414 = vpop.f32.mrb[0].mxu0
        %4415 = vdwg.mxu0
        %4416 = vmatprep.subr.bf16.mxu0 %v3593
        %4417 = vmatpush1.bf16.msra.mxu0 %v3592
        %4418 = vmatprep.subr.bf16.mxu0 %v3595
        %4419 = vmatpush1.bf16.msra.mxu0 %v3594
        %4420 = vmatprep.subr.bf16.mxu0 %v3597
        %4421 = vmatpush1.bf16.msra.mxu0 %v3596
        %4422 = vmatprep.subr.bf16.mxu0 %v3599
        %4423 = vmatpush1.bf16.msra.mxu0 %v3598
        %4424 = vmatprep.subr.bf16.mxu0 %v3601
        %4425 = vmatpush1.bf16.msra.mxu0 %v3600
        %4426 = vmatprep.subr.bf16.mxu0 %v3603
        %4427 = vmatpush1.bf16.msra.mxu0 %v3602
        %4428 = vmatprep.subr.bf16.mxu0 %v3605
        %4429 = vmatpush1.bf16.msra.mxu0 %v3604
        %4430 = vmatprep.subr.bf16.mxu0 %v3607
        %4431 = vmatpush1.bf16.msra.mxu0 %v3606
        %4432 = vmatprep.subr.bf16.mxu0 %v3609
        %4433 = vmatpush1.bf16.msra.mxu0 %v3608
        %4434 = vmatprep.subr.bf16.mxu0 %v3611
        %4435 = vmatpush1.bf16.msra.mxu0 %v3610
        %4436 = vmatprep.subr.bf16.mxu0 %v3613
        %4437 = vmatpush1.bf16.msra.mxu0 %v3612
        %4438 = vmatprep.subr.bf16.mxu0 %v3615
        %4439 = vmatpush1.bf16.msra.mxu0 %v3614
        %4440 = vmatprep.subr.bf16.mxu0 %v3617
        %4441 = vmatpush1.bf16.msra.mxu0 %v3616
        %4442 = vmatprep.subr.bf16.mxu0 %v3619
        %4443 = vmatpush1.bf16.msra.mxu0 %v3618
        %4444 = vmatprep.subr.bf16.mxu0 %v3621
        %4445 = vmatpush1.bf16.msra.mxu0 %v3620
        %4446 = vmatprep.subr.bf16.mxu0 %v3623
        %4447 = vmatpush1.bf16.msra.mxu0 %v3622
        %4448 = vmatprep.mubr.bf16.mxu0 %v1868
        %4449 = vmatmul.mubr.bf16.gmra.mrb[0].mxu0 %v1867
        %v4450 = vpop.f32.mrb[0].mxu0
        %v4451 = vadd.f32 %v4410, %v4450
        %v4452 = vpop.f32.mrb[0].mxu0
        %v4453 = vadd.f32 %v4412, %v4452
        %v4454 = vpop.f32.mrb[0].mxu0
        %v4455 = vpop.f32.mrb[0].mxu0
        %4456 = vdwg.mxu0
        %4457 = vmatprep.subr.bf16.mxu0 %v3625
        %4458 = vmatpush1.bf16.msra.mxu0 %v3624
        %4459 = vmatprep.subr.bf16.mxu0 %v3627
        %4460 = vmatpush1.bf16.msra.mxu0 %v3626
        %4461 = vmatprep.subr.bf16.mxu0 %v3629
        %4462 = vmatpush1.bf16.msra.mxu0 %v3628
        %4463 = vmatprep.subr.bf16.mxu0 %v3631
        %4464 = vmatpush1.bf16.msra.mxu0 %v3630
        %4465 = vmatprep.subr.bf16.mxu0 %v3633
        %4466 = vmatpush1.bf16.msra.mxu0 %v3632
        %4467 = vmatprep.subr.bf16.mxu0 %v3635
        %4468 = vmatpush1.bf16.msra.mxu0 %v3634
        %4469 = vmatprep.subr.bf16.mxu0 %v3637
        %4470 = vmatpush1.bf16.msra.mxu0 %v3636
        %4471 = vmatprep.subr.bf16.mxu0 %v3639
        %4472 = vmatpush1.bf16.msra.mxu0 %v3638
        %4473 = vmatprep.subr.bf16.mxu0 %v3641
        %4474 = vmatpush1.bf16.msra.mxu0 %v3640
        %4475 = vmatprep.subr.bf16.mxu0 %v3643
        %4476 = vmatpush1.bf16.msra.mxu0 %v3642
        %4477 = vmatprep.subr.bf16.mxu0 %v3645
        %4478 = vmatpush1.bf16.msra.mxu0 %v3644
        %4479 = vmatprep.subr.bf16.mxu0 %v3647
        %4480 = vmatpush1.bf16.msra.mxu0 %v3646
        %4481 = vmatprep.subr.bf16.mxu0 %v3649
        %4482 = vmatpush1.bf16.msra.mxu0 %v3648
        %4483 = vmatprep.subr.bf16.mxu0 %v3651
        %4484 = vmatpush1.bf16.msra.mxu0 %v3650
        %4485 = vmatprep.subr.bf16.mxu0 %v3653
        %4486 = vmatpush1.bf16.msra.mxu0 %v3652
        %4487 = vmatprep.subr.bf16.mxu0 %v3655
        %4488 = vmatpush1.bf16.msra.mxu0 %v3654
        %4489 = vmatprep.mubr.bf16.mxu0 %v1870
        %4490 = vmatmul.mubr.bf16.gmra.mrb[0].mxu0 %v1869
        %v4491 = vpop.f32.mrb[0].mxu0
        %v4492 = vadd.f32 %v4451, %v4491
        %v4493 = vpop.f32.mrb[0].mxu0
        %v4494 = vadd.f32 %v4453, %v4493
        %v4495 = vpop.f32.mrb[0].mxu0
        %v4496 = vpop.f32.mrb[0].mxu0
        %4497 = vdwg.mxu0
        %4498 = vmatprep.subr.bf16.mxu0 %v3657
        %4499 = vmatpush1.bf16.msra.mxu0 %v3656
        %4500 = vmatprep.subr.bf16.mxu0 %v3659
        %4501 = vmatpush1.bf16.msra.mxu0 %v3658
        %4502 = vmatprep.subr.bf16.mxu0 %v3661
        %4503 = vmatpush1.bf16.msra.mxu0 %v3660
        %4504 = vmatprep.subr.bf16.mxu0 %v3663
        %4505 = vmatpush1.bf16.msra.mxu0 %v3662
        %4506 = vmatprep.subr.bf16.mxu0 %v3665
        %4507 = vmatpush1.bf16.msra.mxu0 %v3664
        %4508 = vmatprep.subr.bf16.mxu0 %v3667
        %4509 = vmatpush1.bf16.msra.mxu0 %v3666
        %4510 = vmatprep.subr.bf16.mxu0 %v3669
        %4511 = vmatpush1.bf16.msra.mxu0 %v3668
        %4512 = vmatprep.subr.bf16.mxu0 %v3671
        %4513 = vmatpush1.bf16.msra.mxu0 %v3670
        %4514 = vmatprep.subr.bf16.mxu0 %v3673
        %4515 = vmatpush1.bf16.msra.mxu0 %v3672
        %4516 = vmatprep.subr.bf16.mxu0 %v3675
        %4517 = vmatpush1.bf16.msra.mxu0 %v3674
        %4518 = vmatprep.subr.bf16.mxu0 %v3677
        %4519 = vmatpush1.bf16.msra.mxu0 %v3676
        %4520 = vmatprep.subr.bf16.mxu0 %v3679
        %4521 = vmatpush1.bf16.msra.mxu0 %v3678
        %4522 = vmatprep.subr.bf16.mxu0 %v3681
        %4523 = vmatpush1.bf16.msra.mxu0 %v3680
        %4524 = vmatprep.subr.bf16.mxu0 %v3683
        %4525 = vmatpush1.bf16.msra.mxu0 %v3682
        %4526 = vmatprep.subr.bf16.mxu0 %v3685
        %4527 = vmatpush1.bf16.msra.mxu0 %v3684
        %4528 = vmatprep.subr.bf16.mxu0 %v3687
        %4529 = vmatpush1.bf16.msra.mxu0 %v3686
        %4530 = vmatprep.mubr.bf16.mxu0 %v1872
        %4531 = vmatmul.mubr.bf16.gmra.mrb[0].mxu0 %v1871
        %v4532 = vpop.f32.mrb[0].mxu0
        %v4533 = vadd.f32 %v4492, %v4532
        %v4534 = vpop.f32.mrb[0].mxu0
        %v4535 = vadd.f32 %v4494, %v4534
        %v4536 = vpop.f32.mrb[0].mxu0
        %v4537 = vpop.f32.mrb[0].mxu0
        %4538 = vdwg.mxu0
        %4539 = vmatprep.subr.bf16.mxu0 %v3689
        %4540 = vmatpush1.bf16.msra.mxu0 %v3688
        %4541 = vmatprep.subr.bf16.mxu0 %v3691
        %4542 = vmatpush1.bf16.msra.mxu0 %v3690
        %4543 = vmatprep.subr.bf16.mxu0 %v3693
        %4544 = vmatpush1.bf16.msra.mxu0 %v3692
        %4545 = vmatprep.subr.bf16.mxu0 %v3695
        %4546 = vmatpush1.bf16.msra.mxu0 %v3694
        %4547 = vmatprep.subr.bf16.mxu0 %v3697
        %4548 = vmatpush1.bf16.msra.mxu0 %v3696
        %4549 = vmatprep.subr.bf16.mxu0 %v3699
        %4550 = vmatpush1.bf16.msra.mxu0 %v3698
        %4551 = vmatprep.subr.bf16.mxu0 %v3701
        %4552 = vmatpush1.bf16.msra.mxu0 %v3700
        %4553 = vmatprep.subr.bf16.mxu0 %v3703
        %4554 = vmatpush1.bf16.msra.mxu0 %v3702
        %4555 = vmatprep.subr.bf16.mxu0 %v3705
        %4556 = vmatpush1.bf16.msra.mxu0 %v3704
        %4557 = vmatprep.subr.bf16.mxu0 %v3707
        %4558 = vmatpush1.bf16.msra.mxu0 %v3706
        %4559 = vmatprep.subr.bf16.mxu0 %v3709
        %4560 = vmatpush1.bf16.msra.mxu0 %v3708
        %4561 = vmatprep.subr.bf16.mxu0 %v3711
        %4562 = vmatpush1.bf16.msra.mxu0 %v3710
        %4563 = vmatprep.subr.bf16.mxu0 %v3713
        %4564 = vmatpush1.bf16.msra.mxu0 %v3712
        %4565 = vmatprep.subr.bf16.mxu0 %v3715
        %4566 = vmatpush1.bf16.msra.mxu0 %v3714
        %4567 = vmatprep.subr.bf16.mxu0 %v3717
        %4568 = vmatpush1.bf16.msra.mxu0 %v3716
        %4569 = vmatprep.subr.bf16.mxu0 %v3719
        %4570 = vmatpush1.bf16.msra.mxu0 %v3718
        %4571 = vmatprep.mubr.bf16.mxu0 %v1874
        %4572 = vmatmul.mubr.bf16.gmra.mrb[0].mxu0 %v1873
        %v4573 = vpop.f32.mrb[0].mxu0
        %v4574 = vadd.f32 %v4533, %v4573
        %v4575 = vpop.f32.mrb[0].mxu0
        %v4576 = vadd.f32 %v4535, %v4575
        %v4577 = vpop.f32.mrb[0].mxu0
        %v4578 = vpop.f32.mrb[0].mxu0
        %4579 = vdwg.mxu0
        %4580 = vmatprep.subr.bf16.mxu0 %v3721
        %4581 = vmatpush1.bf16.msra.mxu0 %v3720
        %4582 = vmatprep.subr.bf16.mxu0 %v3723
        %4583 = vmatpush1.bf16.msra.mxu0 %v3722
        %4584 = vmatprep.subr.bf16.mxu0 %v3725
        %4585 = vmatpush1.bf16.msra.mxu0 %v3724
        %4586 = vmatprep.subr.bf16.mxu0 %v3727
        %4587 = vmatpush1.bf16.msra.mxu0 %v3726
        %4588 = vmatprep.subr.bf16.mxu0 %v3729
        %4589 = vmatpush1.bf16.msra.mxu0 %v3728
        %4590 = vmatprep.subr.bf16.mxu0 %v3731
        %4591 = vmatpush1.bf16.msra.mxu0 %v3730
        %4592 = vmatprep.subr.bf16.mxu0 %v3733
        %4593 = vmatpush1.bf16.msra.mxu0 %v3732
        %4594 = vmatprep.subr.bf16.mxu0 %v3735
        %4595 = vmatpush1.bf16.msra.mxu0 %v3734
        %4596 = vmatprep.subr.bf16.mxu0 %v3737
        %4597 = vmatpush1.bf16.msra.mxu0 %v3736
        %4598 = vmatprep.subr.bf16.mxu0 %v3739
        %4599 = vmatpush1.bf16.msra.mxu0 %v3738
        %4600 = vmatprep.subr.bf16.mxu0 %v3741
        %4601 = vmatpush1.bf16.msra.mxu0 %v3740
        %4602 = vmatprep.subr.bf16.mxu0 %v3743
        %4603 = vmatpush1.bf16.msra.mxu0 %v3742
        %4604 = vmatprep.subr.bf16.mxu0 %v3745
        %4605 = vmatpush1.bf16.msra.mxu0 %v3744
        %4606 = vmatprep.subr.bf16.mxu0 %v3747
        %4607 = vmatpush1.bf16.msra.mxu0 %v3746
        %4608 = vmatprep.subr.bf16.mxu0 %v3749
        %4609 = vmatpush1.bf16.msra.mxu0 %v3748
        %4610 = vmatprep.subr.bf16.mxu0 %v3751
        %4611 = vmatpush1.bf16.msra.mxu0 %v3750
        %4612 = vmatprep.mubr.bf16.mxu0 %v1876
        %4613 = vmatmul.mubr.bf16.gmra.mrb[0].mxu0 %v1875
        %v4614 = vpop.f32.mrb[0].mxu0
        %v4615 = vadd.f32 %v4574, %v4614
        %v4616 = vpop.f32.mrb[0].mxu0
        %v4617 = vadd.f32 %v4576, %v4616
        %v4618 = vpop.f32.mrb[0].mxu0
        %v4619 = vpop.f32.mrb[0].mxu0
        %4620 = vdwg.mxu0
        %4621 = vmatprep.subr.bf16.mxu0 %v3753
        %4622 = vmatpush1.bf16.msra.mxu0 %v3752
        %4623 = vmatprep.subr.bf16.mxu0 %v3755
        %4624 = vmatpush1.bf16.msra.mxu0 %v3754
        %4625 = vmatprep.subr.bf16.mxu0 %v3757
        %4626 = vmatpush1.bf16.msra.mxu0 %v3756
        %4627 = vmatprep.subr.bf16.mxu0 %v3759
        %4628 = vmatpush1.bf16.msra.mxu0 %v3758
        %4629 = vmatprep.subr.bf16.mxu0 %v3761
        %4630 = vmatpush1.bf16.msra.mxu0 %v3760
        %4631 = vmatprep.subr.bf16.mxu0 %v3763
        %4632 = vmatpush1.bf16.msra.mxu0 %v3762
        %4633 = vmatprep.subr.bf16.mxu0 %v3765
        %4634 = vmatpush1.bf16.msra.mxu0 %v3764
        %4635 = vmatprep.subr.bf16.mxu0 %v3767
        %4636 = vmatpush1.bf16.msra.mxu0 %v3766
        %4637 = vmatprep.subr.bf16.mxu0 %v3769
        %4638 = vmatpush1.bf16.msra.mxu0 %v3768
        %4639 = vmatprep.subr.bf16.mxu0 %v3771
        %4640 = vmatpush1.bf16.msra.mxu0 %v3770
        %4641 = vmatprep.subr.bf16.mxu0 %v3773
        %4642 = vmatpush1.bf16.msra.mxu0 %v3772
        %4643 = vmatprep.subr.bf16.mxu0 %v3775
        %4644 = vmatpush1.bf16.msra.mxu0 %v3774
        %4645 = vmatprep.subr.bf16.mxu0 %v3777
        %4646 = vmatpush1.bf16.msra.mxu0 %v3776
        %4647 = vmatprep.subr.bf16.mxu0 %v3779
        %4648 = vmatpush1.bf16.msra.mxu0 %v3778
        %4649 = vmatprep.subr.bf16.mxu0 %v3781
        %4650 = vmatpush1.bf16.msra.mxu0 %v3780
        %4651 = vmatprep.subr.bf16.mxu0 %v3783
        %4652 = vmatpush1.bf16.msra.mxu0 %v3782
        %4653 = vmatprep.mubr.bf16.mxu0 %v1878
        %4654 = vmatmul.mubr.bf16.gmra.mrb[0].mxu0 %v1877
        %v4655 = vpop.f32.mrb[0].mxu0
        %v4656 = vadd.f32 %v4615, %v4655
        %v4657 = vpop.f32.mrb[0].mxu0
        %v4658 = vadd.f32 %v4617, %v4657
        %v4659 = vpop.f32.mrb[0].mxu0
        %v4660 = vpop.f32.mrb[0].mxu0
        %4661 = vdwg.mxu0
        %4662 = vmatprep.subr.bf16.mxu0 %v3785
        %4663 = vmatpush1.bf16.msra.mxu0 %v3784
        %4664 = vmatprep.subr.bf16.mxu0 %v3787
        %4665 = vmatpush1.bf16.msra.mxu0 %v3786
        %4666 = vmatprep.subr.bf16.mxu0 %v3789
        %4667 = vmatpush1.bf16.msra.mxu0 %v3788
        %4668 = vmatprep.subr.bf16.mxu0 %v3791
        %4669 = vmatpush1.bf16.msra.mxu0 %v3790
        %4670 = vmatprep.subr.bf16.mxu0 %v3793
        %4671 = vmatpush1.bf16.msra.mxu0 %v3792
        %4672 = vmatprep.subr.bf16.mxu0 %v3795
        %4673 = vmatpush1.bf16.msra.mxu0 %v3794
        %4674 = vmatprep.subr.bf16.mxu0 %v3797
        %4675 = vmatpush1.bf16.msra.mxu0 %v3796
        %4676 = vmatprep.subr.bf16.mxu0 %v3799
        %4677 = vmatpush1.bf16.msra.mxu0 %v3798
        %4678 = vmatprep.subr.bf16.mxu0 %v3801
        %4679 = vmatpush1.bf16.msra.mxu0 %v3800
        %4680 = vmatprep.subr.bf16.mxu0 %v3803
        %4681 = vmatpush1.bf16.msra.mxu0 %v3802
        %4682 = vmatprep.subr.bf16.mxu0 %v3805
        %4683 = vmatpush1.bf16.msra.mxu0 %v3804
        %4684 = vmatprep.subr.bf16.mxu0 %v3807
        %4685 = vmatpush1.bf16.msra.mxu0 %v3806
        %4686 = vmatprep.subr.bf16.mxu0 %v3809
        %4687 = vmatpush1.bf16.msra.mxu0 %v3808
        %4688 = vmatprep.subr.bf16.mxu0 %v3811
        %4689 = vmatpush1.bf16.msra.mxu0 %v3810
        %4690 = vmatprep.subr.bf16.mxu0 %v3813
        %4691 = vmatpush1.bf16.msra.mxu0 %v3812
        %4692 = vmatprep.subr.bf16.mxu0 %v3815
        %4693 = vmatpush1.bf16.msra.mxu0 %v3814
        %4694 = vmatprep.mubr.bf16.mxu0 %v1880
        %4695 = vmatmul.mubr.bf16.gmra.mrb[0].mxu0 %v1879
        %v4696 = vpop.f32.mrb[0].mxu0
        %v4697 = vadd.f32 %v4656, %v4696
        %v4698 = vpop.f32.mrb[0].mxu0
        %v4699 = vadd.f32 %v4658, %v4698
        %v4700 = vpop.f32.mrb[0].mxu0
        %v4701 = vpop.f32.mrb[0].mxu0
        %4702 = vdwg.mxu0
        %4703 = vmatprep.subr.bf16.mxu0 %v3817
        %4704 = vmatpush1.bf16.msra.mxu0 %v3816
        %4705 = vmatprep.subr.bf16.mxu0 %v3819
        %4706 = vmatpush1.bf16.msra.mxu0 %v3818
        %4707 = vmatprep.subr.bf16.mxu0 %v3821
        %4708 = vmatpush1.bf16.msra.mxu0 %v3820
        %4709 = vmatprep.subr.bf16.mxu0 %v3823
        %4710 = vmatpush1.bf16.msra.mxu0 %v3822
        %4711 = vmatprep.subr.bf16.mxu0 %v3825
        %4712 = vmatpush1.bf16.msra.mxu0 %v3824
        %4713 = vmatprep.subr.bf16.mxu0 %v3827
        %4714 = vmatpush1.bf16.msra.mxu0 %v3826
        %4715 = vmatprep.subr.bf16.mxu0 %v3829
        %4716 = vmatpush1.bf16.msra.mxu0 %v3828
        %4717 = vmatprep.subr.bf16.mxu0 %v3831
        %4718 = vmatpush1.bf16.msra.mxu0 %v3830
        %4719 = vmatprep.subr.bf16.mxu0 %v3833
        %4720 = vmatpush1.bf16.msra.mxu0 %v3832
        %4721 = vmatprep.subr.bf16.mxu0 %v3835
        %4722 = vmatpush1.bf16.msra.mxu0 %v3834
        %4723 = vmatprep.subr.bf16.mxu0 %v3837
        %4724 = vmatpush1.bf16.msra.mxu0 %v3836
        %4725 = vmatprep.subr.bf16.mxu0 %v3839
        %4726 = vmatpush1.bf16.msra.mxu0 %v3838
        %4727 = vmatprep.subr.bf16.mxu0 %v3841
        %4728 = vmatpush1.bf16.msra.mxu0 %v3840
        %4729 = vmatprep.subr.bf16.mxu0 %v3843
        %4730 = vmatpush1.bf16.msra.mxu0 %v3842
        %4731 = vmatprep.subr.bf16.mxu0 %v3845
        %4732 = vmatpush1.bf16.msra.mxu0 %v3844
        %4733 = vmatprep.subr.bf16.mxu0 %v3847
        %4734 = vmatpush1.bf16.msra.mxu0 %v3846
        %4735 = vmatprep.mubr.bf16.mxu0 %v1882
        %4736 = vmatmul.mubr.bf16.gmra.mrb[0].mxu0 %v1881
        %v4737 = vpop.f32.mrb[0].mxu0
        %v4738 = vadd.f32 %v4697, %v4737
        %v4739 = vpop.f32.mrb[0].mxu0
        %v4740 = vadd.f32 %v4699, %v4739
        %v4741 = vpop.f32.mrb[0].mxu0
        %v4742 = vpop.f32.mrb[0].mxu0
        %4743 = vdwg.mxu0
        %4744 = vmatprep.subr.bf16.mxu0 %v3849
        %4745 = vmatpush1.bf16.msra.mxu0 %v3848
        %4746 = vmatprep.subr.bf16.mxu0 %v3851
        %4747 = vmatpush1.bf16.msra.mxu0 %v3850
        %4748 = vmatprep.subr.bf16.mxu0 %v3853
        %4749 = vmatpush1.bf16.msra.mxu0 %v3852
        %4750 = vmatprep.subr.bf16.mxu0 %v3855
        %4751 = vmatpush1.bf16.msra.mxu0 %v3854
        %4752 = vmatprep.subr.bf16.mxu0 0
        %4753 = vmatpush1.bf16.msra.mxu0 0
        %4754 = vmatprep.subr.bf16.mxu0 0
        %4755 = vmatpush1.bf16.msra.mxu0 0
        %4756 = vmatprep.subr.bf16.mxu0 0
        %4757 = vmatpush1.bf16.msra.mxu0 0
        %4758 = vmatprep.subr.bf16.mxu0 0
        %4759 = vmatpush1.bf16.msra.mxu0 0
        %4760 = vmatprep.subr.bf16.mxu0 0
        %4761 = vmatpush1.bf16.msra.mxu0 0
        %4762 = vmatprep.subr.bf16.mxu0 0
        %4763 = vmatpush1.bf16.msra.mxu0 0
        %4764 = vmatprep.subr.bf16.mxu0 0
        %4765 = vmatpush1.bf16.msra.mxu0 0
        %4766 = vmatprep.subr.bf16.mxu0 0
        %4767 = vmatpush1.bf16.msra.mxu0 0
        %4768 = vmatprep.subr.bf16.mxu0 0
        %4769 = vmatpush1.bf16.msra.mxu0 0
        %4770 = vmatprep.subr.bf16.mxu0 0
        %4771 = vmatpush1.bf16.msra.mxu0 0
        %4772 = vmatprep.subr.bf16.mxu0 0
        %4773 = vmatpush1.bf16.msra.mxu0 0
        %4774 = vmatprep.subr.bf16.mxu0 0
        %4775 = vmatpush1.bf16.msra.mxu0 0
        %4776 = vmatprep.mubr.bf16.mxu0 0
        %4777 = vmatmul.mubr.bf16.gmra.mrb[0].mxu0 %v4250
        %v4778 = vpop.f32.mrb[0].mxu0
        %v4779 = vadd.f32 %v4738, %v4778
        %v4780 = vpop.f32.mrb[0].mxu0
        %v4781 = vadd.f32 %v4740, %v4780
        %v4782 = vpop.f32.mrb[0].mxu0
        %v4783 = vpop.f32.mrb[0].mxu0
        %4784 = vdwg.mxu0
        %v4785 = vmax.f32 %v4779, 0.0
        %v4786 = vmax.f32 %v4781, 0.0
        %4787 = vst [vmem:[%s1831] sm:$0xff] %v4785
        %4788 = vst [vmem:[%s1831 + $0x8] sm:$0xff] %v4786
        %s4789 = smul.u32 2, %s19
        %p4790 = scmp.lt.s32.totalorder %s18, 0
        %s4791 = scalar_select %p4790, %s18, 0
        %p4792 = scmp.lt.s32.totalorder %s4789, 3
        %s4793 = scalar_select %p4792, %s4789, 3
        %s4794 = smul.addr %s4791, 4
        %s4795 = sadd.s32 %s4793, %s4794
        %s4796 = smul.addr %s4795, 8
        %s4797 = scalar_lea.vmem %s3, %s4796
        // Predicated region
        $region71: #{qnetwork_forward.8} parent=65 // pred_check
          %p4798 = pneg %p124
        $region72: #{qnetwork_forward.8} parent=65 // pred_check_branch
          %4800 = sbr.rel (%p4798) target = $region74
        $region73: #{qnetwork_forward.8} parent=65 // pred_region
          %s4801 = smul.u32 2, %s19
        $region74: #{qnetwork_forward.8} parent=65 // pred_fallthru
          _
      $region66: #{qnetwork_forward.8} parent=5 // pred_fallthru
        _
      %p4802 = scmp.le.s32.totalorder 2, %s9
      // Predicated region
      $region75: #{qnetwork_forward.8} parent=5 // pred_check
        %p4803 = pneg %p4802
      $region76: #{qnetwork_forward.8} parent=5 // pred_check_branch
        %4805 = sbr.rel (%p4803) target = $region78
      $region77: #{qnetwork_forward.8} parent=5 // pred_region
        %s4806 = ssub.s32 %s9, 2
        // Predicated region
        $region79: #{qnetwork_forward.8} parent=77 // pred_check
          %p4807 = pneg %p130
        $region80: #{qnetwork_forward.8} parent=77 // pred_check_branch
          %4809 = sbr.rel (%p4807) target = $region82
        $region81: #{qnetwork_forward.8} parent=77 // pred_region
          %s4810 = smul.u32 2, %s21
          %p4811 = scmp.lt.s32.totalorder %s20, 0
          %s4812 = scalar_select %p4811, %s20, 0
          %p4813 = scmp.lt.s32.totalorder %s4810, 3
          %s4814 = scalar_select %p4813, %s4810, 3
          %s4815 = smul.addr %s4812, 4
          %s4816 = sadd.s32 %s4814, %s4815
          %s4817 = smul.addr %s4816, 8
          %s4818 = scalar_lea.vmem %s3, %s4817
        $region82: #{qnetwork_forward.8} parent=77 // pred_fallthru
          _
      $region78: #{qnetwork_forward.8} parent=5 // pred_fallthru
        _
    $region6: #{qnetwork_forward.8} parent=1 // loop_footer
      %s13 = sadd.s32 1, %s9
    $region7: #{qnetwork_forward.8} parent=1 // loop_footer_branch
      %8 = sbr.rel target = $region3
    $region8: #{qnetwork_forward.8} parent=1 // loop_exit
      _

</llo_original>
